<compile_context>
chip_gen: v5e
topology: v5e:2x2
jax: 0.10.0
libtpu: 0.0.40
codegen_flags: <defaults>
</compile_context>

<pallas_src>
import jax
import jax.numpy as jnp
from jax.experimental import pallas as pl
from jax.experimental.pallas import tpu as pltpu

# sizes fixed by the module (fc1 expects 32*8*8 features -> 32x32 input)
K, PAD = 5, 2
H1, W1, C0, C1 = 32, 32, 3, 16                   # conv1: 3 -> 16
H2, W2, C2 = 16, 16, 32                          # conv2: 16 -> 32
BAND1, BAND2 = 128, W2 * C1                      # per-kh contraction bands: 128, 256
HALF1, HALF2 = (W1 // 2) * C1, (W2 // 2) * C2    # 256, 256 (w-pooled lane width)
F_IN, F_HID, F_HID_PAD = 2048, 1000, 1024
F_OUT, F_OUT_PAD = 10, 128


# ----------------------------------------------------------------------------
# Fused forward kernel
# ----------------------------------------------------------------------------
def cnn_fused_kernel(x_ref, w1_ref, b1_ref, w2_hbm, b2_ref, wf1_hbm, bf1_ref,
                     wf2_hbm, bf2_ref, o_ref,
                     w2_v, wf1_v, wf2_v, sem,
                     stk1_ref, pool1_ref, stk2_ref, pool2_ref, feats_ref):
    B = x_ref.shape[0]
    f32, bf16 = jnp.float32, jnp.bfloat16

    # ---- kick off the big weight DMAs so they stream behind the conv work ----
    cp_w2 = pltpu.make_async_copy(w2_hbm, w2_v, sem.at[0])
    cp_f1 = pltpu.make_async_copy(wf1_hbm, wf1_v, sem.at[1])
    cp_f2 = pltpu.make_async_copy(wf2_hbm, wf2_v, sem.at[2])
    cp_w2.start(); cp_f1.start(); cp_f2.start()

    # ---- conv1: build stacked LHS (one lane-aligned band per kh) ----
    stk1_ref[...] = jnp.zeros(stk1_ref.shape, f32)     # ~40 vregs; cheap
    for kh in range(K):                                 # static unroll
        lo, hi = max(0, PAD - kh), min(H1, H1 + PAD - kh)
        n = hi - lo
        stk1_ref[:, pl.ds(lo, n), pl.ds(kh * BAND1, W1 * C0)] = \
            x_ref[:, pl.ds(lo + kh - PAD, n), :]

    # ---- conv1: single stacked matmul + bias + ReLU (cols = [even-w | odd-w]) ----
    lhs = stk1_ref[...].reshape(B * H1, K * BAND1).astype(bf16)
    y = jnp.dot(lhs, w1_ref[...], preferred_element_type=f32)
    y = jnp.maximum(y + b1_ref[...], 0.0)               # (B*32, 512) f32

    # ---- maxpool 2x2/2: w via lane halves, h via one rows-merge reshape ----
    pw = jnp.maximum(y[:, :HALF1], y[:, HALF1:])        # (B*32, 256)
    t = pw.reshape(B * H2, 2 * HALF1)                   # rows-merge: (B*16, 512)
    pool1_ref[...] = jnp.maximum(t[:, :HALF1], t[:, HALF1:]).reshape(B, H2, HALF1)

    # ---- conv2: build stacked LHS from the pooled activations ----
    stk2_ref[...] = jnp.zeros(stk2_ref.shape, f32)
    for kh in range(K):
        lo, hi = max(0, PAD - kh), min(H2, H2 + PAD - kh)
        n = hi - lo
        stk2_ref[:, pl.ds(lo, n), pl.ds(kh * BAND2, W2 * C1)] = \
            pool1_ref[:, pl.ds(lo + kh - PAD, n), :]

    # ---- conv2: single stacked matmul + bias + ReLU ----
    cp_w2.wait()
    lhs = stk2_ref[...].reshape(B * H2, K * BAND2).astype(bf16)
    y = jnp.dot(lhs, w2_v[...], preferred_element_type=f32)
    y = jnp.maximum(y + b2_ref[...], 0.0)               # (B*16, 512) f32

    # ---- maxpool 2x2/2: w via lane halves; h fused with NHWC flatten ----
    pool2_ref[...] = jnp.maximum(y[:, :HALF2], y[:, HALF2:]).reshape(B, H2, HALF2)
    for j in range(H2 // 2):                            # 8 lane-aligned stores
        feats_ref[:, pl.ds(j * HALF2, HALF2)] = \
            jnp.maximum(pool2_ref[:, 2 * j, :], pool2_ref[:, 2 * j + 1, :])

    # ---- fc1 + ReLU, fc2 (hidden padded to 1024, output padded to 128 lanes) ----
    cp_f1.wait()
    h = jnp.dot(feats_ref[...].astype(bf16), wf1_v[...], preferred_element_type=f32)
    h = jnp.maximum(h + bf1_ref[...], 0.0)
    cp_f2.wait()
    out = jnp.dot(h.astype(bf16), wf2_v[...], preferred_element_type=f32) + bf2_ref[...]
    o_ref[...] = out.astype(o_ref.dtype)


def _full_spec(shape):
    zeros = (0,) * len(shape)
    return pl.BlockSpec(shape, lambda *_: zeros)


def cnn_pallas(prep, x_flat):
    B = x_flat.shape[0]
    return pl.pallas_call(
        cnn_fused_kernel,
        out_shape=jax.ShapeDtypeStruct((B, F_OUT_PAD), jnp.float32),
        in_specs=[
            _full_spec(x_flat.shape),
            _full_spec(prep["w1s"].shape), _full_spec(prep["b1t"].shape),
            pl.BlockSpec(memory_space=pl.ANY),                    # conv2 weights (manual DMA)
            _full_spec(prep["b2t"].shape),
            pl.BlockSpec(memory_space=pl.ANY),                    # fc1 weights  (manual DMA)
            _full_spec(prep["bf1"].shape),
            pl.BlockSpec(memory_space=pl.ANY),                    # fc2 weights  (manual DMA)
            _full_spec(prep["bf2"].shape),
        ],
        out_specs=_full_spec((B, F_OUT_PAD)),
        scratch_shapes=[
            pltpu.VMEM((K * BAND2, W2 * C2), jnp.bfloat16),       # conv2 weight landing buffer
            pltpu.VMEM((F_IN, F_HID_PAD), jnp.bfloat16),          # fc1 weight landing buffer
            pltpu.VMEM((F_HID_PAD, F_OUT_PAD), jnp.bfloat16),     # fc2 weight landing buffer
            pltpu.SemaphoreType.DMA((3,)),
            pltpu.VMEM((B, H1, K * BAND1), jnp.float32),          # conv1 stacked LHS
            pltpu.VMEM((B, H2, HALF1), jnp.float32),              # pooled conv1 output
            pltpu.VMEM((B, H2, K * BAND2), jnp.float32),          # conv2 stacked LHS
            pltpu.VMEM((B, H2, HALF2), jnp.float32),              # conv2 w-pooled output
            pltpu.VMEM((B, F_IN), jnp.float32),                   # flattened NHWC features
        ],
        compiler_params=pltpu.CompilerParams(vmem_limit_bytes=16 * 1024 * 1024),
    )(x_flat, prep["w1s"], prep["b1t"], prep["w2s"], prep["b2t"],
      prep["wf1"], prep["bf1"], prep["wf2"], prep["bf2"])


@jax.jit
def cnn_forward(prep, x_nchw):
    B = x_nchw.shape[0]
    x = jnp.transpose(x_nchw, (0, 2, 3, 1)).reshape(B, H1, W1 * C0)  # NCHW -> (b, h, w*c)
    return cnn_pallas(prep, x)[:, :F_OUT]


# ----------------------------------------------------------------------------
# Parameters: PyTorch-style init, then one-time transform into kernel layout
# ----------------------------------------------------------------------------
def init_params(key):
    ks = jax.random.split(key, 8)

    def u(k, shape, fan_in):
        bound = 1.0 / jnp.sqrt(jnp.float32(fan_in))
        return jax.random.uniform(k, shape, jnp.float32, -bound, bound)

    return {
        "w1": u(ks[0], (K, K, C0, C1), C0 * K * K),     # conv1, HWIO
        "b1": u(ks[1], (C1,), C0 * K * K),
        "w2": u(ks[2], (K, K, C1, C2), C1 * K * K),     # conv2, HWIO
        "b2": u(ks[3], (C2,), C1 * K * K),
        # fc1 rows are in NHWC (h, w, c) flatten order.
        # TODO(synk): when loading real PyTorch fc1 weights, permute the rows from the
        # NCHW (c, h, w) flatten order to NHWC (h, w, c) before calling prepare_params.
        "wf1": u(ks[4], (F_IN, F_HID), F_IN),
        "bf1": u(ks[5], (F_HID,), F_IN),
        "wf2": u(ks[6], (F_HID, F_OUT), F_HID),
        "bf2": u(ks[7], (F_OUT,), F_HID),
    }


def _stacked_conv_weight(w_hwio, w_dim, band_pad):
    """(K,K,Cin,Cout) -> (K*band_pad, w_dim*Cout) stacked banded matrix so that a
    'same'-padded conv on the channels-last (h, w*c) layout is ONE matmul:
      out = stacked_lhs @ M,  stacked_lhs band kh = input rows shifted by kh-PAD.
    Output column blocks are permuted to [even-w | odd-w] so the w-direction 2x2
    maxpool becomes a max of the two lane halves (pooled result lands in natural
    (w', c) order)."""
    k, _, cin, cout = w_hwio.shape
    bands = []
    for kh in range(k):
        m = jnp.zeros((w_dim * cin, w_dim * cout), jnp.float32)
        for kw in range(k):
            band = jnp.eye(w_dim, w_dim, k=PAD - kw, dtype=jnp.float32)  # col j = row + PAD - kw
            m = m + jnp.kron(band, w_hwio[kh, kw])
        m = jnp.pad(m, ((0, band_pad - w_dim * cin), (0, 0)))            # lane-pad the band
        bands.append(m)
    ws = jnp.concatenate(bands, axis=0)                                  # (K*band_pad, w_dim*cout)
    perm = jnp.concatenate([jnp.arange(0, w_dim, 2), jnp.arange(1, w_dim, 2)])
    ws = ws.reshape(k * band_pad, w_dim, cout)[:, perm, :].reshape(k * band_pad, w_dim * cout)
    return ws.astype(jnp.bfloat16)


def prepare_params(p):
    return {
        "w1s": _stacked_conv_weight(p["w1"], W1, BAND1),              # (640, 512) bf16
        "b1t": jnp.tile(p["b1"], (W1,)).reshape(1, W1 * C1),          # (1, 512) f32 (perm-invariant)
        "w2s": _stacked_conv_weight(p["w2"], W2, BAND2),              # (1280, 512) bf16
        "b2t": jnp.tile(p["b2"], (W2,)).reshape(1, W2 * C2),          # (1, 512) f32
        "wf1": jnp.pad(p["wf1"], ((0, 0), (0, F_HID_PAD - F_HID))).astype(jnp.bfloat16),
        "bf1": jnp.pad(p["bf1"], ((0, F_HID_PAD - F_HID),)).reshape(1, F_HID_PAD),
        "wf2": jnp.pad(p["wf2"], ((0, F_HID_PAD - F_HID),
                                  (0, F_OUT_PAD - F_OUT))).astype(jnp.bfloat16),
        "bf2": jnp.pad(p["bf2"], ((0, F_OUT_PAD - F_OUT),)).reshape(1, F_OUT_PAD),
    }


if __name__ == "__main__":
    key = jax.random.PRNGKey(0)
    k_params, k_x = jax.random.split(key)
    params = init_params(k_params)
    prep = prepare_params(params)                 # one-time weight transform
    x = jax.random.normal(k_x, (2, 3, 32, 32), dtype=jnp.float32)
    out = jax.block_until_ready(cnn_forward(prep, x))
    assert out.shape == (2, 10)
    print("KERNEL_OK")
</pallas_src>

<mosaic_0001>
module attributes {stable_mosaic.version = 11 : i64} {
  func.func @cnn_fused_kernel(%arg0: memref<2x32x96xf32, #tpu.memory_space<vmem>>, %arg1: memref<640x512xbf16, #tpu.memory_space<vmem>>, %arg2: memref<1x512xf32, #tpu.memory_space<vmem>>, %arg3: memref<1280x512xbf16, #tpu.memory_space<any>>, %arg4: memref<1x512xf32, #tpu.memory_space<vmem>>, %arg5: memref<2048x1024xbf16, #tpu.memory_space<any>>, %arg6: memref<1x1024xf32, #tpu.memory_space<vmem>>, %arg7: memref<1024x128xbf16, #tpu.memory_space<any>>, %arg8: memref<1x128xf32, #tpu.memory_space<vmem>>, %arg9: memref<2x128xf32, #tpu.memory_space<vmem>>, %arg10: memref<1280x512xbf16, #tpu.memory_space<vmem>>, %arg11: memref<2048x1024xbf16, #tpu.memory_space<vmem>>, %arg12: memref<1024x128xbf16, #tpu.memory_space<vmem>>, %arg13: memref<3x!tpu.dma_semaphore, #tpu.memory_space<semaphore_mem>>, %arg14: memref<2x32x640xf32, #tpu.memory_space<vmem>>, %arg15: memref<2x16x256xf32, #tpu.memory_space<vmem>>, %arg16: memref<2x16x1280xf32, #tpu.memory_space<vmem>>, %arg17: memref<2x16x256xf32, #tpu.memory_space<vmem>>, %arg18: memref<2x2048xf32, #tpu.memory_space<vmem>>) attributes {dimension_semantics = [], scalar_prefetch = 0 : i64, scratch_operands = 9 : i64, tpu.core_type = #tpu.core_type<tc>} {
    %c0_i32 = arith.constant 0 : i32
    %0 = tpu.memref_slice %arg13[%c0_i32] : memref<3x!tpu.dma_semaphore, #tpu.memory_space<semaphore_mem>> -> memref<1x!tpu.dma_semaphore, #tpu.memory_space<semaphore_mem>>
    %1 = tpu.memref_squeeze %0 : memref<1x!tpu.dma_semaphore, #tpu.memory_space<semaphore_mem>> -> memref<!tpu.dma_semaphore, #tpu.memory_space<semaphore_mem>>
    tpu.enqueue_dma source(%arg3 : memref<1280x512xbf16, #tpu.memory_space<any>>) target(%arg10 : memref<1280x512xbf16, #tpu.memory_space<vmem>>) target_semaphore(%1 : memref<!tpu.dma_semaphore, #tpu.memory_space<semaphore_mem>>)
    %c1_i32 = arith.constant 1 : i32
    %2 = tpu.memref_slice %arg13[%c1_i32] : memref<3x!tpu.dma_semaphore, #tpu.memory_space<semaphore_mem>> -> memref<1x!tpu.dma_semaphore, #tpu.memory_space<semaphore_mem>>
    %3 = tpu.memref_squeeze %2 : memref<1x!tpu.dma_semaphore, #tpu.memory_space<semaphore_mem>> -> memref<!tpu.dma_semaphore, #tpu.memory_space<semaphore_mem>>
    tpu.enqueue_dma source(%arg5 : memref<2048x1024xbf16, #tpu.memory_space<any>>) target(%arg11 : memref<2048x1024xbf16, #tpu.memory_space<vmem>>) target_semaphore(%3 : memref<!tpu.dma_semaphore, #tpu.memory_space<semaphore_mem>>)
    %c2_i32 = arith.constant 2 : i32
    %4 = tpu.memref_slice %arg13[%c2_i32] : memref<3x!tpu.dma_semaphore, #tpu.memory_space<semaphore_mem>> -> memref<1x!tpu.dma_semaphore, #tpu.memory_space<semaphore_mem>>
    %5 = tpu.memref_squeeze %4 : memref<1x!tpu.dma_semaphore, #tpu.memory_space<semaphore_mem>> -> memref<!tpu.dma_semaphore, #tpu.memory_space<semaphore_mem>>
    tpu.enqueue_dma source(%arg7 : memref<1024x128xbf16, #tpu.memory_space<any>>) target(%arg12 : memref<1024x128xbf16, #tpu.memory_space<vmem>>) target_semaphore(%5 : memref<!tpu.dma_semaphore, #tpu.memory_space<semaphore_mem>>)
    %cst = arith.constant 0.000000e+00 : f32
    %6 = vector.broadcast %cst : f32 to vector<2x32x640xf32>
    %c0 = arith.constant 0 : index
    %c0_0 = arith.constant 0 : index
    %c0_1 = arith.constant 0 : index
    %7 = vector.load %arg14[%c0, %c0_0, %c0_1] : memref<2x32x640xf32, #tpu.memory_space<vmem>>, vector<2x32x640xf32>
    tpu.vector_store %arg14[%c0, %c0_0, %c0_1], %6 {strides = array<i32>} : memref<2x32x640xf32, #tpu.memory_space<vmem>>, vector<2x32x640xf32>,
    %c0_2 = arith.constant 0 : index
    %c0_3 = arith.constant 0 : index
    %c0_4 = arith.constant 0 : index
    %8 = vector.load %arg0[%c0_2, %c0_3, %c0_4] : memref<2x32x96xf32, #tpu.memory_space<vmem>>, vector<2x30x96xf32>
    %c0_5 = arith.constant 0 : index
    %c2 = arith.constant 2 : index
    %c0_6 = arith.constant 0 : index
    %9 = vector.load %arg14[%c0_5, %c2, %c0_6] : memref<2x32x640xf32, #tpu.memory_space<vmem>>, vector<2x30x96xf32>
    tpu.vector_store %arg14[%c0_5, %c2, %c0_6], %8 {strides = array<i32>} : memref<2x32x640xf32, #tpu.memory_space<vmem>>, vector<2x30x96xf32>,
    %c0_7 = arith.constant 0 : index
    %c0_8 = arith.constant 0 : index
    %c0_9 = arith.constant 0 : index
    %10 = vector.load %arg0[%c0_7, %c0_8, %c0_9] : memref<2x32x96xf32, #tpu.memory_space<vmem>>, vector<2x31x96xf32>
    %c0_10 = arith.constant 0 : index
    %c1 = arith.constant 1 : index
    %c128 = arith.constant 128 : index
    %11 = vector.load %arg14[%c0_10, %c1, %c128] : memref<2x32x640xf32, #tpu.memory_space<vmem>>, vector<2x31x96xf32>
    tpu.vector_store %arg14[%c0_10, %c1, %c128], %10 {strides = array<i32>} : memref<2x32x640xf32, #tpu.memory_space<vmem>>, vector<2x31x96xf32>,
    %c0_11 = arith.constant 0 : index
    %c0_12 = arith.constant 0 : index
    %c0_13 = arith.constant 0 : index
    %12 = vector.load %arg0[%c0_11, %c0_12, %c0_13] : memref<2x32x96xf32, #tpu.memory_space<vmem>>, vector<2x32x96xf32>
    %c0_14 = arith.constant 0 : index
    %c0_15 = arith.constant 0 : index
    %c256 = arith.constant 256 : index
    %13 = vector.load %arg14[%c0_14, %c0_15, %c256] : memref<2x32x640xf32, #tpu.memory_space<vmem>>, vector<2x32x96xf32>
    tpu.vector_store %arg14[%c0_14, %c0_15, %c256], %12 {strides = array<i32>} : memref<2x32x640xf32, #tpu.memory_space<vmem>>, vector<2x32x96xf32>,
    %c0_16 = arith.constant 0 : index
    %c1_17 = arith.constant 1 : index
    %c0_18 = arith.constant 0 : index
    %14 = vector.load %arg0[%c0_16, %c1_17, %c0_18] : memref<2x32x96xf32, #tpu.memory_space<vmem>>, vector<2x31x96xf32>
    %c0_19 = arith.constant 0 : index
    %c0_20 = arith.constant 0 : index
    %c384 = arith.constant 384 : index
    %15 = vector.load %arg14[%c0_19, %c0_20, %c384] : memref<2x32x640xf32, #tpu.memory_space<vmem>>, vector<2x31x96xf32>
    tpu.vector_store %arg14[%c0_19, %c0_20, %c384], %14 {strides = array<i32>} : memref<2x32x640xf32, #tpu.memory_space<vmem>>, vector<2x31x96xf32>,
    %c0_21 = arith.constant 0 : index
    %c2_22 = arith.constant 2 : index
    %c0_23 = arith.constant 0 : index
    %16 = vector.load %arg0[%c0_21, %c2_22, %c0_23] : memref<2x32x96xf32, #tpu.memory_space<vmem>>, vector<2x30x96xf32>
    %c0_24 = arith.constant 0 : index
    %c0_25 = arith.constant 0 : index
    %c512 = arith.constant 512 : index
    %17 = vector.load %arg14[%c0_24, %c0_25, %c512] : memref<2x32x640xf32, #tpu.memory_space<vmem>>, vector<2x30x96xf32>
    tpu.vector_store %arg14[%c0_24, %c0_25, %c512], %16 {strides = array<i32>} : memref<2x32x640xf32, #tpu.memory_space<vmem>>, vector<2x30x96xf32>,
    %c0_26 = arith.constant 0 : index
    %c0_27 = arith.constant 0 : index
    %c0_28 = arith.constant 0 : index
    %18 = vector.load %arg14[%c0_26, %c0_27, %c0_28] : memref<2x32x640xf32, #tpu.memory_space<vmem>>, vector<2x32x640xf32>
    %19 = vector.shape_cast %18 : vector<2x32x640xf32> to vector<64x640xf32>
    %20 = arith.truncf %19 : vector<64x640xf32> to vector<64x640xbf16>
    %c0_29 = arith.constant 0 : index
    %c0_30 = arith.constant 0 : index
    %21 = vector.load %arg1[%c0_29, %c0_30] : memref<640x512xbf16, #tpu.memory_space<vmem>>, vector<640x512xbf16>
    %cst_31 = arith.constant dense<0.000000e+00> : vector<64x512xf32>
    %22 = tpu.matmul %20, %21, %cst_31 {dimension_numbers = #tpu.dot_dimension_numbers<[1], [0], [0], [1], [0, 0, 1, 1], [], []>} : vector<64x640xbf16>, vector<640x512xbf16>, vector<64x512xf32> -> vector<64x512xf32>
    %c0_32 = arith.constant 0 : index
    %c0_33 = arith.constant 0 : index
    %23 = vector.load %arg2[%c0_32, %c0_33] : memref<1x512xf32, #tpu.memory_space<vmem>>, vector<1x512xf32>
    %24 = vector.broadcast %23 : vector<1x512xf32> to vector<64x512xf32>
    %25 = arith.addf %22, %24 : vector<64x512xf32>
    %cst_34 = arith.constant 0.000000e+00 : f32
    %26 = vector.broadcast %cst_34 : f32 to vector<64x512xf32>
    %27 = arith.maximumf %25, %26 : vector<64x512xf32>
    %28 = vector.extract_strided_slice %27 {offsets = [0, 0], sizes = [64, 256], strides = [1, 1]} : vector<64x512xf32> to vector<64x256xf32>
    %29 = vector.extract_strided_slice %27 {offsets = [0, 256], sizes = [64, 256], strides = [1, 1]} : vector<64x512xf32> to vector<64x256xf32>
    %30 = arith.maximumf %28, %29 : vector<64x256xf32>
    %31 = vector.shape_cast %30 : vector<64x256xf32> to vector<32x512xf32>
    %32 = vector.extract_strided_slice %31 {offsets = [0, 0], sizes = [32, 256], strides = [1, 1]} : vector<32x512xf32> to vector<32x256xf32>
    %33 = vector.extract_strided_slice %31 {offsets = [0, 256], sizes = [32, 256], strides = [1, 1]} : vector<32x512xf32> to vector<32x256xf32>
    %34 = arith.maximumf %32, %33 : vector<32x256xf32>
    %35 = vector.shape_cast %34 : vector<32x256xf32> to vector<2x16x256xf32>
    %c0_35 = arith.constant 0 : index
    %c0_36 = arith.constant 0 : index
    %c0_37 = arith.constant 0 : index
    %36 = vector.load %arg15[%c0_35, %c0_36, %c0_37] : memref<2x16x256xf32, #tpu.memory_space<vmem>>, vector<2x16x256xf32>
    tpu.vector_store %arg15[%c0_35, %c0_36, %c0_37], %35 {strides = array<i32>} : memref<2x16x256xf32, #tpu.memory_space<vmem>>, vector<2x16x256xf32>,
    %cst_38 = arith.constant 0.000000e+00 : f32
    %37 = vector.broadcast %cst_38 : f32 to vector<2x16x1280xf32>
    %c0_39 = arith.constant 0 : index
    %c0_40 = arith.constant 0 : index
    %c0_41 = arith.constant 0 : index
    %38 = vector.load %arg16[%c0_39, %c0_40, %c0_41] : memref<2x16x1280xf32, #tpu.memory_space<vmem>>, vector<2x16x1280xf32>
    tpu.vector_store %arg16[%c0_39, %c0_40, %c0_41], %37 {strides = array<i32>} : memref<2x16x1280xf32, #tpu.memory_space<vmem>>, vector<2x16x1280xf32>,
    %c0_42 = arith.constant 0 : index
    %c0_43 = arith.constant 0 : index
    %c0_44 = arith.constant 0 : index
    %39 = vector.load %arg15[%c0_42, %c0_43, %c0_44] : memref<2x16x256xf32, #tpu.memory_space<vmem>>, vector<2x14x256xf32>
    %c0_45 = arith.constant 0 : index
    %c2_46 = arith.constant 2 : index
    %c0_47 = arith.constant 0 : index
    %40 = vector.load %arg16[%c0_45, %c2_46, %c0_47] : memref<2x16x1280xf32, #tpu.memory_space<vmem>>, vector<2x14x256xf32>
    tpu.vector_store %arg16[%c0_45, %c2_46, %c0_47], %39 {strides = array<i32>} : memref<2x16x1280xf32, #tpu.memory_space<vmem>>, vector<2x14x256xf32>,
    %c0_48 = arith.constant 0 : index
    %c0_49 = arith.constant 0 : index
    %c0_50 = arith.constant 0 : index
    %41 = vector.load %arg15[%c0_48, %c0_49, %c0_50] : memref<2x16x256xf32, #tpu.memory_space<vmem>>, vector<2x15x256xf32>
    %c0_51 = arith.constant 0 : index
    %c1_52 = arith.constant 1 : index
    %c256_53 = arith.constant 256 : index
    %42 = vector.load %arg16[%c0_51, %c1_52, %c256_53] : memref<2x16x1280xf32, #tpu.memory_space<vmem>>, vector<2x15x256xf32>
    tpu.vector_store %arg16[%c0_51, %c1_52, %c256_53], %41 {strides = array<i32>} : memref<2x16x1280xf32, #tpu.memory_space<vmem>>, vector<2x15x256xf32>,
    %c0_54 = arith.constant 0 : index
    %c0_55 = arith.constant 0 : index
    %c0_56 = arith.constant 0 : index
    %43 = vector.load %arg15[%c0_54, %c0_55, %c0_56] : memref<2x16x256xf32, #tpu.memory_space<vmem>>, vector<2x16x256xf32>
    %c0_57 = arith.constant 0 : index
    %c0_58 = arith.constant 0 : index
    %c512_59 = arith.constant 512 : index
    %44 = vector.load %arg16[%c0_57, %c0_58, %c512_59] : memref<2x16x1280xf32, #tpu.memory_space<vmem>>, vector<2x16x256xf32>
    tpu.vector_store %arg16[%c0_57, %c0_58, %c512_59], %43 {strides = array<i32>} : memref<2x16x1280xf32, #tpu.memory_space<vmem>>, vector<2x16x256xf32>,
    %c0_60 = arith.constant 0 : index
    %c1_61 = arith.constant 1 : index
    %c0_62 = arith.constant 0 : index
    %45 = vector.load %arg15[%c0_60, %c1_61, %c0_62] : memref<2x16x256xf32, #tpu.memory_space<vmem>>, vector<2x15x256xf32>
    %c0_63 = arith.constant 0 : index
    %c0_64 = arith.constant 0 : index
    %c768 = arith.constant 768 : index
    %46 = vector.load %arg16[%c0_63, %c0_64, %c768] : memref<2x16x1280xf32, #tpu.memory_space<vmem>>, vector<2x15x256xf32>
    tpu.vector_store %arg16[%c0_63, %c0_64, %c768], %45 {strides = array<i32>} : memref<2x16x1280xf32, #tpu.memory_space<vmem>>, vector<2x15x256xf32>,
    %c0_65 = arith.constant 0 : index
    %c2_66 = arith.constant 2 : index
    %c0_67 = arith.constant 0 : index
    %47 = vector.load %arg15[%c0_65, %c2_66, %c0_67] : memref<2x16x256xf32, #tpu.memory_space<vmem>>, vector<2x14x256xf32>
    %c0_68 = arith.constant 0 : index
    %c0_69 = arith.constant 0 : index
    %c1024 = arith.constant 1024 : index
    %48 = vector.load %arg16[%c0_68, %c0_69, %c1024] : memref<2x16x1280xf32, #tpu.memory_space<vmem>>, vector<2x14x256xf32>
    tpu.vector_store %arg16[%c0_68, %c0_69, %c1024], %47 {strides = array<i32>} : memref<2x16x1280xf32, #tpu.memory_space<vmem>>, vector<2x14x256xf32>,
    %c0_i32_70 = arith.constant 0 : i32
    %49 = tpu.memref_slice %arg13[%c0_i32_70] : memref<3x!tpu.dma_semaphore, #tpu.memory_space<semaphore_mem>> -> memref<1x!tpu.dma_semaphore, #tpu.memory_space<semaphore_mem>>
    %50 = tpu.memref_squeeze %49 : memref<1x!tpu.dma_semaphore, #tpu.memory_space<semaphore_mem>> -> memref<!tpu.dma_semaphore, #tpu.memory_space<semaphore_mem>>
    tpu.wait_dma2 semaphore(%50 : memref<!tpu.dma_semaphore, #tpu.memory_space<semaphore_mem>>) src(%arg3 : memref<1280x512xbf16, #tpu.memory_space<any>>) dst(%arg10 : memref<1280x512xbf16, #tpu.memory_space<vmem>>)
    %c0_71 = arith.constant 0 : index
    %c0_72 = arith.constant 0 : index
    %c0_73 = arith.constant 0 : index
    %51 = vector.load %arg16[%c0_71, %c0_72, %c0_73] : memref<2x16x1280xf32, #tpu.memory_space<vmem>>, vector<2x16x1280xf32>
    %52 = vector.shape_cast %51 : vector<2x16x1280xf32> to vector<32x1280xf32>
    %53 = arith.truncf %52 : vector<32x1280xf32> to vector<32x1280xbf16>
    %c0_74 = arith.constant 0 : index
    %c0_75 = arith.constant 0 : index
    %54 = vector.load %arg10[%c0_74, %c0_75] : memref<1280x512xbf16, #tpu.memory_space<vmem>>, vector<1280x512xbf16>
    %cst_76 = arith.constant dense<0.000000e+00> : vector<32x512xf32>
    %55 = tpu.matmul %53, %54, %cst_76 {dimension_numbers = #tpu.dot_dimension_numbers<[1], [0], [0], [1], [0, 0, 1, 1], [], []>} : vector<32x1280xbf16>, vector<1280x512xbf16>, vector<32x512xf32> -> vector<32x512xf32>
    %c0_77 = arith.constant 0 : index
    %c0_78 = arith.constant 0 : index
    %56 = vector.load %arg4[%c0_77, %c0_78] : memref<1x512xf32, #tpu.memory_space<vmem>>, vector<1x512xf32>
    %57 = vector.broadcast %56 : vector<1x512xf32> to vector<32x512xf32>
    %58 = arith.addf %55, %57 : vector<32x512xf32>
    %cst_79 = arith.constant 0.000000e+00 : f32
    %59 = vector.broadcast %cst_79 : f32 to vector<32x512xf32>
    %60 = arith.maximumf %58, %59 : vector<32x512xf32>
    %61 = vector.extract_strided_slice %60 {offsets = [0, 0], sizes = [32, 256], strides = [1, 1]} : vector<32x512xf32> to vector<32x256xf32>
    %62 = vector.extract_strided_slice %60 {offsets = [0, 256], sizes = [32, 256], strides = [1, 1]} : vector<32x512xf32> to vector<32x256xf32>
    %63 = arith.maximumf %61, %62 : vector<32x256xf32>
    %64 = vector.shape_cast %63 : vector<32x256xf32> to vector<2x16x256xf32>
    %c0_80 = arith.constant 0 : index
    %c0_81 = arith.constant 0 : index
    %c0_82 = arith.constant 0 : index
    %65 = vector.load %arg17[%c0_80, %c0_81, %c0_82] : memref<2x16x256xf32, #tpu.memory_space<vmem>>, vector<2x16x256xf32>
    tpu.vector_store %arg17[%c0_80, %c0_81, %c0_82], %64 {strides = array<i32>} : memref<2x16x256xf32, #tpu.memory_space<vmem>>, vector<2x16x256xf32>,
    %c0_83 = arith.constant 0 : index
    %c0_84 = arith.constant 0 : index
    %c0_85 = arith.constant 0 : index
    %66 = vector.load %arg17[%c0_83, %c0_84, %c0_85] : memref<2x16x256xf32, #tpu.memory_space<vmem>>, vector<2x1x256xf32>
    %67 = vector.shape_cast %66 : vector<2x1x256xf32> to vector<2x256xf32>
    %c0_86 = arith.constant 0 : index
    %c1_87 = arith.constant 1 : index
    %c0_88 = arith.constant 0 : index
    %68 = vector.load %arg17[%c0_86, %c1_87, %c0_88] : memref<2x16x256xf32, #tpu.memory_space<vmem>>, vector<2x1x256xf32>
    %69 = vector.shape_cast %68 : vector<2x1x256xf32> to vector<2x256xf32>
    %70 = arith.maximumf %67, %69 : vector<2x256xf32>
    %c0_89 = arith.constant 0 : index
    %c0_90 = arith.constant 0 : index
    %71 = vector.load %arg18[%c0_89, %c0_90] : memref<2x2048xf32, #tpu.memory_space<vmem>>, vector<2x256xf32>
    tpu.vector_store %arg18[%c0_89, %c0_90], %70 {strides = array<i32>} : memref<2x2048xf32, #tpu.memory_space<vmem>>, vector<2x256xf32>,
    %c0_91 = arith.constant 0 : index
    %c2_92 = arith.constant 2 : index
    %c0_93 = arith.constant 0 : index
    %72 = vector.load %arg17[%c0_91, %c2_92, %c0_93] : memref<2x16x256xf32, #tpu.memory_space<vmem>>, vector<2x1x256xf32>
    %73 = vector.shape_cast %72 : vector<2x1x256xf32> to vector<2x256xf32>
    %c0_94 = arith.constant 0 : index
    %c3 = arith.constant 3 : index
    %c0_95 = arith.constant 0 : index
    %74 = vector.load %arg17[%c0_94, %c3, %c0_95] : memref<2x16x256xf32, #tpu.memory_space<vmem>>, vector<2x1x256xf32>
    %75 = vector.shape_cast %74 : vector<2x1x256xf32> to vector<2x256xf32>
    %76 = arith.maximumf %73, %75 : vector<2x256xf32>
    %c0_96 = arith.constant 0 : index
    %c256_97 = arith.constant 256 : index
    %77 = vector.load %arg18[%c0_96, %c256_97] : memref<2x2048xf32, #tpu.memory_space<vmem>>, vector<2x256xf32>
    tpu.vector_store %arg18[%c0_96, %c256_97], %76 {strides = array<i32>} : memref<2x2048xf32, #tpu.memory_space<vmem>>, vector<2x256xf32>,
    %c0_98 = arith.constant 0 : index
    %c4 = arith.constant 4 : index
    %c0_99 = arith.constant 0 : index
    %78 = vector.load %arg17[%c0_98, %c4, %c0_99] : memref<2x16x256xf32, #tpu.memory_space<vmem>>, vector<2x1x256xf32>
    %79 = vector.shape_cast %78 : vector<2x1x256xf32> to vector<2x256xf32>
    %c0_100 = arith.constant 0 : index
    %c5 = arith.constant 5 : index
    %c0_101 = arith.constant 0 : index
    %80 = vector.load %arg17[%c0_100, %c5, %c0_101] : memref<2x16x256xf32, #tpu.memory_space<vmem>>, vector<2x1x256xf32>
    %81 = vector.shape_cast %80 : vector<2x1x256xf32> to vector<2x256xf32>
    %82 = arith.maximumf %79, %81 : vector<2x256xf32>
    %c0_102 = arith.constant 0 : index
    %c512_103 = arith.constant 512 : index
    %83 = vector.load %arg18[%c0_102, %c512_103] : memref<2x2048xf32, #tpu.memory_space<vmem>>, vector<2x256xf32>
    tpu.vector_store %arg18[%c0_102, %c512_103], %82 {strides = array<i32>} : memref<2x2048xf32, #tpu.memory_space<vmem>>, vector<2x256xf32>,
    %c0_104 = arith.constant 0 : index
    %c6 = arith.constant 6 : index
    %c0_105 = arith.constant 0 : index
    %84 = vector.load %arg17[%c0_104, %c6, %c0_105] : memref<2x16x256xf32, #tpu.memory_space<vmem>>, vector<2x1x256xf32>
    %85 = vector.shape_cast %84 : vector<2x1x256xf32> to vector<2x256xf32>
    %c0_106 = arith.constant 0 : index
    %c7 = arith.constant 7 : index
    %c0_107 = arith.constant 0 : index
    %86 = vector.load %arg17[%c0_106, %c7, %c0_107] : memref<2x16x256xf32, #tpu.memory_space<vmem>>, vector<2x1x256xf32>
    %87 = vector.shape_cast %86 : vector<2x1x256xf32> to vector<2x256xf32>
    %88 = arith.maximumf %85, %87 : vector<2x256xf32>
    %c0_108 = arith.constant 0 : index
    %c768_109 = arith.constant 768 : index
    %89 = vector.load %arg18[%c0_108, %c768_109] : memref<2x2048xf32, #tpu.memory_space<vmem>>, vector<2x256xf32>
    tpu.vector_store %arg18[%c0_108, %c768_109], %88 {strides = array<i32>} : memref<2x2048xf32, #tpu.memory_space<vmem>>, vector<2x256xf32>,
    %c0_110 = arith.constant 0 : index
    %c8 = arith.constant 8 : index
    %c0_111 = arith.constant 0 : index
    %90 = vector.load %arg17[%c0_110, %c8, %c0_111] : memref<2x16x256xf32, #tpu.memory_space<vmem>>, vector<2x1x256xf32>
    %91 = vector.shape_cast %90 : vector<2x1x256xf32> to vector<2x256xf32>
    %c0_112 = arith.constant 0 : index
    %c9 = arith.constant 9 : index
    %c0_113 = arith.constant 0 : index
    %92 = vector.load %arg17[%c0_112, %c9, %c0_113] : memref<2x16x256xf32, #tpu.memory_space<vmem>>, vector<2x1x256xf32>
    %93 = vector.shape_cast %92 : vector<2x1x256xf32> to vector<2x256xf32>
    %94 = arith.maximumf %91, %93 : vector<2x256xf32>
    %c0_114 = arith.constant 0 : index
    %c1024_115 = arith.constant 1024 : index
    %95 = vector.load %arg18[%c0_114, %c1024_115] : memref<2x2048xf32, #tpu.memory_space<vmem>>, vector<2x256xf32>
    tpu.vector_store %arg18[%c0_114, %c1024_115], %94 {strides = array<i32>} : memref<2x2048xf32, #tpu.memory_space<vmem>>, vector<2x256xf32>,
    %c0_116 = arith.constant 0 : index
    %c10 = arith.constant 10 : index
    %c0_117 = arith.constant 0 : index
    %96 = vector.load %arg17[%c0_116, %c10, %c0_117] : memref<2x16x256xf32, #tpu.memory_space<vmem>>, vector<2x1x256xf32>
    %97 = vector.shape_cast %96 : vector<2x1x256xf32> to vector<2x256xf32>
    %c0_118 = arith.constant 0 : index
    %c11 = arith.constant 11 : index
    %c0_119 = arith.constant 0 : index
    %98 = vector.load %arg17[%c0_118, %c11, %c0_119] : memref<2x16x256xf32, #tpu.memory_space<vmem>>, vector<2x1x256xf32>
    %99 = vector.shape_cast %98 : vector<2x1x256xf32> to vector<2x256xf32>
    %100 = arith.maximumf %97, %99 : vector<2x256xf32>
    %c0_120 = arith.constant 0 : index
    %c1280 = arith.constant 1280 : index
    %101 = vector.load %arg18[%c0_120, %c1280] : memref<2x2048xf32, #tpu.memory_space<vmem>>, vector<2x256xf32>
    tpu.vector_store %arg18[%c0_120, %c1280], %100 {strides = array<i32>} : memref<2x2048xf32, #tpu.memory_space<vmem>>, vector<2x256xf32>,
    %c0_121 = arith.constant 0 : index
    %c12 = arith.constant 12 : index
    %c0_122 = arith.constant 0 : index
    %102 = vector.load %arg17[%c0_121, %c12, %c0_122] : memref<2x16x256xf32, #tpu.memory_space<vmem>>, vector<2x1x256xf32>
    %103 = vector.shape_cast %102 : vector<2x1x256xf32> to vector<2x256xf32>
    %c0_123 = arith.constant 0 : index
    %c13 = arith.constant 13 : index
    %c0_124 = arith.constant 0 : index
    %104 = vector.load %arg17[%c0_123, %c13, %c0_124] : memref<2x16x256xf32, #tpu.memory_space<vmem>>, vector<2x1x256xf32>
    %105 = vector.shape_cast %104 : vector<2x1x256xf32> to vector<2x256xf32>
    %106 = arith.maximumf %103, %105 : vector<2x256xf32>
    %c0_125 = arith.constant 0 : index
    %c1536 = arith.constant 1536 : index
    %107 = vector.load %arg18[%c0_125, %c1536] : memref<2x2048xf32, #tpu.memory_space<vmem>>, vector<2x256xf32>
    tpu.vector_store %arg18[%c0_125, %c1536], %106 {strides = array<i32>} : memref<2x2048xf32, #tpu.memory_space<vmem>>, vector<2x256xf32>,
    %c0_126 = arith.constant 0 : index
    %c14 = arith.constant 14 : index
    %c0_127 = arith.constant 0 : index
    %108 = vector.load %arg17[%c0_126, %c14, %c0_127] : memref<2x16x256xf32, #tpu.memory_space<vmem>>, vector<2x1x256xf32>
    %109 = vector.shape_cast %108 : vector<2x1x256xf32> to vector<2x256xf32>
    %c0_128 = arith.constant 0 : index
    %c15 = arith.constant 15 : index
    %c0_129 = arith.constant 0 : index
    %110 = vector.load %arg17[%c0_128, %c15, %c0_129] : memref<2x16x256xf32, #tpu.memory_space<vmem>>, vector<2x1x256xf32>
    %111 = vector.shape_cast %110 : vector<2x1x256xf32> to vector<2x256xf32>
    %112 = arith.maximumf %109, %111 : vector<2x256xf32>
    %c0_130 = arith.constant 0 : index
    %c1792 = arith.constant 1792 : index
    %113 = vector.load %arg18[%c0_130, %c1792] : memref<2x2048xf32, #tpu.memory_space<vmem>>, vector<2x256xf32>
    tpu.vector_store %arg18[%c0_130, %c1792], %112 {strides = array<i32>} : memref<2x2048xf32, #tpu.memory_space<vmem>>, vector<2x256xf32>,
    %c1_i32_131 = arith.constant 1 : i32
    %114 = tpu.memref_slice %arg13[%c1_i32_131] : memref<3x!tpu.dma_semaphore, #tpu.memory_space<semaphore_mem>> -> memref<1x!tpu.dma_semaphore, #tpu.memory_space<semaphore_mem>>
    %115 = tpu.memref_squeeze %114 : memref<1x!tpu.dma_semaphore, #tpu.memory_space<semaphore_mem>> -> memref<!tpu.dma_semaphore, #tpu.memory_space<semaphore_mem>>
    tpu.wait_dma2 semaphore(%115 : memref<!tpu.dma_semaphore, #tpu.memory_space<semaphore_mem>>) src(%arg5 : memref<2048x1024xbf16, #tpu.memory_space<any>>) dst(%arg11 : memref<2048x1024xbf16, #tpu.memory_space<vmem>>)
    %c0_132 = arith.constant 0 : index
    %c0_133 = arith.constant 0 : index
    %116 = vector.load %arg18[%c0_132, %c0_133] : memref<2x2048xf32, #tpu.memory_space<vmem>>, vector<2x2048xf32>
    %117 = arith.truncf %116 : vector<2x2048xf32> to vector<2x2048xbf16>
    %c0_134 = arith.constant 0 : index
    %c0_135 = arith.constant 0 : index
    %118 = vector.load %arg11[%c0_134, %c0_135] : memref<2048x1024xbf16, #tpu.memory_space<vmem>>, vector<2048x1024xbf16>
    %cst_136 = arith.constant dense<0.000000e+00> : vector<2x1024xf32>
    %119 = tpu.matmul %117, %118, %cst_136 {dimension_numbers = #tpu.dot_dimension_numbers<[1], [0], [0], [1], [0, 0, 1, 1], [], []>} : vector<2x2048xbf16>, vector<2048x1024xbf16>, vector<2x1024xf32> -> vector<2x1024xf32>
    %c0_137 = arith.constant 0 : index
    %c0_138 = arith.constant 0 : index
    %120 = vector.load %arg6[%c0_137, %c0_138] : memref<1x1024xf32, #tpu.memory_space<vmem>>, vector<1x1024xf32>
    %121 = vector.broadcast %120 : vector<1x1024xf32> to vector<2x1024xf32>
    %122 = arith.addf %119, %121 : vector<2x1024xf32>
    %cst_139 = arith.constant 0.000000e+00 : f32
    %123 = vector.broadcast %cst_139 : f32 to vector<2x1024xf32>
    %124 = arith.maximumf %122, %123 : vector<2x1024xf32>
    %c2_i32_140 = arith.constant 2 : i32
    %125 = tpu.memref_slice %arg13[%c2_i32_140] : memref<3x!tpu.dma_semaphore, #tpu.memory_space<semaphore_mem>> -> memref<1x!tpu.dma_semaphore, #tpu.memory_space<semaphore_mem>>
    %126 = tpu.memref_squeeze %125 : memref<1x!tpu.dma_semaphore, #tpu.memory_space<semaphore_mem>> -> memref<!tpu.dma_semaphore, #tpu.memory_space<semaphore_mem>>
    tpu.wait_dma2 semaphore(%126 : memref<!tpu.dma_semaphore, #tpu.memory_space<semaphore_mem>>) src(%arg7 : memref<1024x128xbf16, #tpu.memory_space<any>>) dst(%arg12 : memref<1024x128xbf16, #tpu.memory_space<vmem>>)
    %127 = arith.truncf %124 : vector<2x1024xf32> to vector<2x1024xbf16>
    %c0_141 = arith.constant 0 : index
    %c0_142 = arith.constant 0 : index
    %128 = vector.load %arg12[%c0_141, %c0_142] : memref<1024x128xbf16, #tpu.memory_space<vmem>>, vector<1024x128xbf16>
    %cst_143 = arith.constant dense<0.000000e+00> : vector<2x128xf32>
    %129 = tpu.matmul %127, %128, %cst_143 {dimension_numbers = #tpu.dot_dimension_numbers<[1], [0], [0], [1], [0, 0, 1, 1], [], []>} : vector<2x1024xbf16>, vector<1024x128xbf16>, vector<2x128xf32> -> vector<2x128xf32>
    %c0_144 = arith.constant 0 : index
    %c0_145 = arith.constant 0 : index
    %130 = vector.load %arg8[%c0_144, %c0_145] : memref<1x128xf32, #tpu.memory_space<vmem>>, vector<1x128xf32>
    %131 = vector.broadcast %130 : vector<1x128xf32> to vector<2x128xf32>
    %132 = arith.addf %129, %131 : vector<2x128xf32>
    %c0_146 = arith.constant 0 : index
    %c0_147 = arith.constant 0 : index
    %133 = vector.load %arg9[%c0_146, %c0_147] : memref<2x128xf32, #tpu.memory_space<vmem>>, vector<2x128xf32>
    tpu.vector_store %arg9[%c0_146, %c0_147], %132 {strides = array<i32>} : memref<2x128xf32, #tpu.memory_space<vmem>>, vector<2x128xf32>,
    return
  }
}

</mosaic_0001>

<llo_original>
// kernel: cnn_forward.1
$region0: #{cnn_forward.1}
  #allocation0 [shape = 'u32[]', space=smem, size = 0x4, offset = 0x4, fixed_abs, tag = 'smem constant byte address 0x4 - core index']
  #allocation1 [shape = 'u32[72,128]{1,0:T(1,128)}', space=vmem, size = 0x9000, scoped, tag = 'internal scratch']
  #allocation2 [shape = 'bf16[1280,512]{1,0:T(8,128)(2,1)}', space=vmem, size = 0x140000, scoped, tag = 'scratch operand']
  #allocation3 [shape = 'bf16[2048,1024]{1,0:T(8,128)(2,1)}', space=vmem, size = 0x400000, scoped, tag = 'scratch operand']
  #allocation4 [shape = 'bf16[1024,128]{1,0:T(8,128)(2,1)}', space=vmem, size = 0x40000, scoped, tag = 'scratch operand']
  #allocation5 [shape = 's32[3]{0}', space=sflag, size = 0xc, scoped, tag = 'scratch operand']
  #allocation6 [shape = 'f32[2,32,640]{2,1,0:T(8,128)}', space=vmem, size = 0x28000, scoped, tag = 'scratch operand']
  #allocation7 [shape = 'f32[2,16,256]{2,1,0:T(8,128)}', space=vmem, size = 0x8000, scoped, tag = 'scratch operand']
  #allocation8 [shape = 'f32[2,16,1280]{2,1,0:T(8,128)}', space=vmem, size = 0x28000, scoped, tag = 'scratch operand']
  #allocation9 [shape = 'f32[2,16,256]{2,1,0:T(8,128)}', space=vmem, size = 0x8000, scoped, tag = 'scratch operand']
  #allocation10 [shape = 'f32[2,2048]{1,0:T(2,128)}', space=vmem, size = 0x4000, scoped, tag = 'scratch operand']
  #allocation21 [shape = 's32[]', space=sflag, size = 0x4, offset = 0, fixed_abs, tag = 'sflag constant byte address 0x0 - dummy sync flag']
  #allocation22 [shape = 's32[]', space=sflag, size = 0x4, offset = 0, fixed_abs, tag = 'sflag constant byte address 0x0 - dummy sync flag']
  #allocation23 [shape = 'u32[]', space=smem, size = 0x4, offset = 0x44, fixed_abs, tag = 'smem constant byte address 0x44 - assertion arg 0']
  #allocation24 [shape = 'u32[]', space=smem, size = 0x4, offset = 0x48, fixed_abs, tag = 'smem constant byte address 0x48 - assertion arg 1']
  #allocation25 [shape = 's32[]', space=sflag, size = 0x4, offset = 0, fixed_abs, tag = 'sflag constant byte address 0x0 - dummy sync flag']
  #allocation26 [shape = 's32[]', space=sflag, size = 0x4, offset = 0, fixed_abs, tag = 'sflag constant byte address 0x0 - dummy sync flag']
  #allocation27 [shape = 's32[]', space=sflag, size = 0x4, offset = 0, fixed_abs, tag = 'sflag constant byte address 0x0 - dummy sync flag']
  #allocation28 [shape = 's32[]', space=sflag, size = 0x4, offset = 0, fixed_abs, tag = 'sflag constant byte address 0x0 - dummy sync flag']
  %s0 = inlined_call_operand.vmem [shape: f32[2,32,96], index: 0, kind: input, shape index: {}]
  %s1 = inlined_call_operand.hbm [shape: bf16[640,512], index: 1, kind: input, shape index: {}]
  %s2 = inlined_call_operand.hbm [shape: f32[1,512], index: 2, kind: input, shape index: {}]
  %s3 = inlined_call_operand.hbm [shape: bf16[1280,512], index: 3, kind: input, shape index: {}]
  %s4 = inlined_call_operand.hbm [shape: f32[1,512], index: 4, kind: input, shape index: {}]
  %s5 = inlined_call_operand.hbm [shape: bf16[2048,1024], index: 5, kind: input, shape index: {}]
  %s6 = inlined_call_operand.hbm [shape: f32[1,1024], index: 6, kind: input, shape index: {}]
  %s7 = inlined_call_operand.hbm [shape: bf16[1024,128], index: 7, kind: input, shape index: {}]
  %s8 = inlined_call_operand.hbm [shape: f32[1,128], index: 8, kind: input, shape index: {}]
  %s9 = inlined_call_operand.hbm [shape: f32[2,128], index: 9, kind: output, shape index: {}]
  %s10 = sld [smem:[#allocation0]]
  $region66: #{cnn_forward.1} parent=0
    _
  %s12 = ssub.s32 1, %s10
  %s13 = scalar_select 0, %s12, %s10
  $region1: #{cnn_forward.1} parent=0
    #allocation11 [shape = 'u8[655360]{0}', space=vmem, size = 0xa0000, scoped, tag = 'input window, operand 1, single buffered']
    #allocation12 [shape = 's32[1]{0}', space=sflag, size = 0x4, scoped, tag = 'scoped memory for cnn_forward.1']
    #allocation13 [shape = 's32[1]{0}', space=sflag, size = 0x4, scoped, tag = 'scoped memory for cnn_forward.1']
    #allocation14 [shape = 'u8[2048]{0}', space=vmem, size = 0x800, scoped, tag = 'input window, operand 2, single buffered']
    #allocation15 [shape = 's32[1]{0}', space=sflag, size = 0x4, scoped, tag = 'scoped memory for cnn_forward.1']
    #allocation16 [shape = 'u8[2048]{0}', space=vmem, size = 0x800, scoped, tag = 'input window, operand 4, single buffered']
    #allocation17 [shape = 'u8[4096]{0}', space=vmem, size = 0x1000, scoped, tag = 'input window, operand 6, single buffered']
    #allocation18 [shape = 's32[1]{0}', space=sflag, size = 0x4, scoped, tag = 'scoped memory for cnn_forward.1']
    #allocation19 [shape = 'u8[512]{0}', space=vmem, size = 0x400, scoped, tag = 'input window, operand 8, single buffered']
    #allocation20 [shape = 'u8[1024]{0}', space=vmem, size = 0x400, scoped, tag = 'output window, operand 0, single buffered']
    %14 = vsyncpa [#allocation12], 0
    %15 = vsyncpa [#allocation15], 0
    %16 = vsyncpa [#allocation18], 0
    %17 = vsyncpa [#allocation13], 0
    // Predicated region
    $region2: #{cnn_forward.1} parent=1 // pred_check
      _
    $region3: #{cnn_forward.1} parent=1 // pred_check_branch
      %19 = sbr.rel (0) target = $region5
    $region4: #{cnn_forward.1} parent=1 // pred_region
      _
    $region5: #{cnn_forward.1} parent=1 // pred_fallthru
      _
    // Predicated region
    $region6: #{cnn_forward.1} parent=1 // pred_check
      _
    $region7: #{cnn_forward.1} parent=1 // pred_check_branch
      %21 = sbr.rel (0) target = $region9
    $region8: #{cnn_forward.1} parent=1 // pred_region
      %23 = vsyncadd [#allocation12], 0
      %s24 = sshll.u32 %s1, 4
      %s25 = int_to_ptr.hbm [resolvable:$true] %s24
      %s26 = sshll.u32 [#allocation11], 4
      %s27 = int_to_ptr.vmem [resolvable:$true] %s26
      %32 = dma.hbm_to_vmem [thread:$0]  %s25, 20480, %s27, [#allocation12], 256, 256, 16
    $region9: #{cnn_forward.1} parent=1 // pred_fallthru
      _
    // Predicated region
    $region10: #{cnn_forward.1} parent=1 // pred_check
      _
    $region11: #{cnn_forward.1} parent=1 // pred_check_branch
      %34 = sbr.rel (0) target = $region13
    $region12: #{cnn_forward.1} parent=1 // pred_region
      %36 = vsyncadd [#allocation15], 0
      %s38 = sshll.u32 %s2, 4
      %s39 = int_to_ptr.hbm [resolvable:$true] %s38
      %s40 = sshll.u32 [#allocation14], 4
      %s41 = int_to_ptr.vmem [resolvable:$true] %s40
      %43 = dma.hbm_to_vmem [thread:$0]  %s39, 64, %s41, [#allocation15]
    $region13: #{cnn_forward.1} parent=1 // pred_fallthru
      _
    // Predicated region
    $region14: #{cnn_forward.1} parent=1 // pred_check
      _
    $region15: #{cnn_forward.1} parent=1 // pred_check_branch
      %45 = sbr.rel (0) target = $region17
    $region16: #{cnn_forward.1} parent=1 // pred_region
      %47 = vsyncadd [#allocation15], 0
      %s49 = sshll.u32 %s4, 4
      %s50 = int_to_ptr.hbm [resolvable:$true] %s49
      %s51 = sshll.u32 [#allocation16], 4
      %s52 = int_to_ptr.vmem [resolvable:$true] %s51
      %54 = dma.hbm_to_vmem [thread:$0]  %s50, 64, %s52, [#allocation15]
    $region17: #{cnn_forward.1} parent=1 // pred_fallthru
      _
    // Predicated region
    $region18: #{cnn_forward.1} parent=1 // pred_check
      _
    $region19: #{cnn_forward.1} parent=1 // pred_check_branch
      %56 = sbr.rel (0) target = $region21
    $region20: #{cnn_forward.1} parent=1 // pred_region
      %58 = vsyncadd [#allocation18], 0
      %s60 = sshll.u32 %s6, 4
      %s61 = int_to_ptr.hbm [resolvable:$true] %s60
      %s62 = sshll.u32 [#allocation17], 4
      %s63 = int_to_ptr.vmem [resolvable:$true] %s62
      %65 = dma.hbm_to_vmem [thread:$0]  %s61, 128, %s63, [#allocation18]
    $region21: #{cnn_forward.1} parent=1 // pred_fallthru
      _
    // Predicated region
    $region22: #{cnn_forward.1} parent=1 // pred_check
      _
    $region23: #{cnn_forward.1} parent=1 // pred_check_branch
      %67 = sbr.rel (0) target = $region25
    $region24: #{cnn_forward.1} parent=1 // pred_region
      %69 = vsyncadd [#allocation18], 0
      %s71 = sshll.u32 %s8, 4
      %s72 = int_to_ptr.hbm [resolvable:$true] %s71
      %s73 = sshll.u32 [#allocation19], 4
      %s74 = int_to_ptr.vmem [resolvable:$true] %s73
      %76 = dma.hbm_to_vmem [thread:$0]  %s72, 16, %s74, [#allocation18]
    $region25: #{cnn_forward.1} parent=1 // pred_fallthru
      _
    // Predicated region
    $region26: #{cnn_forward.1} parent=1 // pred_check
      _
    $region27: #{cnn_forward.1} parent=1 // pred_check_branch
      %78 = sbr.rel (0) target = $region29
    $region28: #{cnn_forward.1} parent=1 // pred_region
      %80 = dma.done [#allocation12], 20480
    $region29: #{cnn_forward.1} parent=1 // pred_fallthru
      _
    // Predicated region
    $region30: #{cnn_forward.1} parent=1 // pred_check
      _
    $region31: #{cnn_forward.1} parent=1 // pred_check_branch
      %82 = sbr.rel (0) target = $region33
    $region32: #{cnn_forward.1} parent=1 // pred_region
      %84 = dma.done [#allocation15], 64
    $region33: #{cnn_forward.1} parent=1 // pred_fallthru
      _
    // Predicated region
    $region34: #{cnn_forward.1} parent=1 // pred_check
      _
    $region35: #{cnn_forward.1} parent=1 // pred_check_branch
      %86 = sbr.rel (0) target = $region37
    $region36: #{cnn_forward.1} parent=1 // pred_region
      %88 = dma.done [#allocation15], 64
    $region37: #{cnn_forward.1} parent=1 // pred_fallthru
      _
    // Predicated region
    $region38: #{cnn_forward.1} parent=1 // pred_check
      _
    $region39: #{cnn_forward.1} parent=1 // pred_check_branch
      %90 = sbr.rel (0) target = $region41
    $region40: #{cnn_forward.1} parent=1 // pred_region
      %92 = dma.done [#allocation18], 128
    $region41: #{cnn_forward.1} parent=1 // pred_fallthru
      _
    // Predicated region
    $region42: #{cnn_forward.1} parent=1 // pred_check
      _
    $region43: #{cnn_forward.1} parent=1 // pred_check_branch
      %94 = sbr.rel (0) target = $region45
    $region44: #{cnn_forward.1} parent=1 // pred_region
      %96 = dma.done [#allocation18], 16
    $region45: #{cnn_forward.1} parent=1 // pred_fallthru
      _
    // Predicated region
    $region46: #{cnn_forward.1} parent=1 // pred_check
      _
    $region47: #{cnn_forward.1} parent=1 // pred_check_branch
      %98 = sbr.rel target = $region49
    $region48: #{cnn_forward.1} parent=1 // pred_region
      %99 = sst [smem:[#allocation23]] [#allocation22]
      %100 = sst [smem:[#allocation24]] [#allocation21]
    $region49: #{cnn_forward.1} parent=1 // pred_fallthru
      _
    %102 = shalt.err (0)
    %s104 = sshll.u32 %s3, 4
    %s105 = int_to_ptr.hbm [resolvable:$true] %s104
    %s106 = sshll.u32 [#allocation2], 4
    %s107 = int_to_ptr.vmem [resolvable:$true] %s106
    %109 = dma.hbm_to_vmem [thread:$0]  %s105, 40960, %s107, [#allocation5]
    %s110 = scalar_lea.sflag [#allocation5], 1
    // Predicated region
    $region50: #{cnn_forward.1} parent=1 // pred_check
      _
    $region51: #{cnn_forward.1} parent=1 // pred_check_branch
      %112 = sbr.rel target = $region53
    $region52: #{cnn_forward.1} parent=1 // pred_region
      %113 = sst [smem:[#allocation23]] [#allocation26]
      %114 = sst [smem:[#allocation24]] [#allocation25]
    $region53: #{cnn_forward.1} parent=1 // pred_fallthru
      _
    %116 = shalt.err (0)
    %s118 = sshll.u32 %s5, 4
    %s119 = int_to_ptr.hbm [resolvable:$true] %s118
    %s120 = sshll.u32 [#allocation3], 4
    %s121 = int_to_ptr.vmem [resolvable:$true] %s120
    %123 = dma.hbm_to_vmem [thread:$0]  %s119, 131072, %s121, %s110
    %s124 = scalar_lea.sflag [#allocation5], 2
    // Predicated region
    $region54: #{cnn_forward.1} parent=1 // pred_check
      _
    $region55: #{cnn_forward.1} parent=1 // pred_check_branch
      %126 = sbr.rel target = $region57
    $region56: #{cnn_forward.1} parent=1 // pred_region
      %127 = sst [smem:[#allocation23]] [#allocation28]
      %128 = sst [smem:[#allocation24]] [#allocation27]
    $region57: #{cnn_forward.1} parent=1 // pred_fallthru
      _
    %130 = shalt.err (0)
    %s132 = sshll.u32 %s7, 4
    %s133 = int_to_ptr.hbm [resolvable:$true] %s132
    %s134 = sshll.u32 [#allocation4], 4
    %s135 = int_to_ptr.vmem [resolvable:$true] %s134
    %137 = dma.hbm_to_vmem [thread:$0]  %s133, 8192, %s135, %s124
    %138 = vst [vmem:[#allocation6] sm:$0xff] 0.0
    %139 = vst [vmem:[#allocation6 + $0x8] sm:$0xff] 0.0
    %140 = vst [vmem:[#allocation6 + $0x10] sm:$0xff] 0.0
    %141 = vst [vmem:[#allocation6 + $0x18] sm:$0xff] 0.0
    %142 = vst [vmem:[#allocation6 + $0x20] sm:$0xff] 0.0
    %143 = vst [vmem:[#allocation6 + $0x28] sm:$0xff] 0.0
    %144 = vst [vmem:[#allocation6 + $0x30] sm:$0xff] 0.0
    %145 = vst [vmem:[#allocation6 + $0x38] sm:$0xff] 0.0
    %146 = vst [vmem:[#allocation6 + $0x40] sm:$0xff] 0.0
    %147 = vst [vmem:[#allocation6 + $0x48] sm:$0xff] 0.0
    %148 = vst [vmem:[#allocation6 + $0x50] sm:$0xff] 0.0
    %149 = vst [vmem:[#allocation6 + $0x58] sm:$0xff] 0.0
    %150 = vst [vmem:[#allocation6 + $0x60] sm:$0xff] 0.0
    %151 = vst [vmem:[#allocation6 + $0x68] sm:$0xff] 0.0
    %152 = vst [vmem:[#allocation6 + $0x70] sm:$0xff] 0.0
    %153 = vst [vmem:[#allocation6 + $0x78] sm:$0xff] 0.0
    %154 = vst [vmem:[#allocation6 + $0x80] sm:$0xff] 0.0
    %155 = vst [vmem:[#allocation6 + $0x88] sm:$0xff] 0.0
    %156 = vst [vmem:[#allocation6 + $0x90] sm:$0xff] 0.0
    %157 = vst [vmem:[#allocation6 + $0x98] sm:$0xff] 0.0
    %158 = vst [vmem:[#allocation6 + $0xa0] sm:$0xff] 0.0
    %159 = vst [vmem:[#allocation6 + $0xa8] sm:$0xff] 0.0
    %160 = vst [vmem:[#allocation6 + $0xb0] sm:$0xff] 0.0
    %161 = vst [vmem:[#allocation6 + $0xb8] sm:$0xff] 0.0
    %162 = vst [vmem:[#allocation6 + $0xc0] sm:$0xff] 0.0
    %163 = vst [vmem:[#allocation6 + $0xc8] sm:$0xff] 0.0
    %164 = vst [vmem:[#allocation6 + $0xd0] sm:$0xff] 0.0
    %165 = vst [vmem:[#allocation6 + $0xd8] sm:$0xff] 0.0
    %166 = vst [vmem:[#allocation6 + $0xe0] sm:$0xff] 0.0
    %167 = vst [vmem:[#allocation6 + $0xe8] sm:$0xff] 0.0
    %168 = vst [vmem:[#allocation6 + $0xf0] sm:$0xff] 0.0
    %169 = vst [vmem:[#allocation6 + $0xf8] sm:$0xff] 0.0
    %170 = vst [vmem:[#allocation6 + $0x100] sm:$0xff] 0.0
    %171 = vst [vmem:[#allocation6 + $0x108] sm:$0xff] 0.0
    %172 = vst [vmem:[#allocation6 + $0x110] sm:$0xff] 0.0
    %173 = vst [vmem:[#allocation6 + $0x118] sm:$0xff] 0.0
    %174 = vst [vmem:[#allocation6 + $0x120] sm:$0xff] 0.0
    %175 = vst [vmem:[#allocation6 + $0x128] sm:$0xff] 0.0
    %176 = vst [vmem:[#allocation6 + $0x130] sm:$0xff] 0.0
    %177 = vst [vmem:[#allocation6 + $0x138] sm:$0xff] 0.0
    %v178 = vld [vmem:[%s0] sm:$0xff]
    %v179 = vld [vmem:[%s0 + $0x8] sm:$0xff]
    %v180 = vld [vmem:[%s0 + $0x10] sm:$0xff]
    %v181 = vld [vmem:[%s0 + $0x18] sm:$0x3f]
    %v182 = vld [vmem:[%s0 + $0x20] sm:$0xff]
    %v183 = vld [vmem:[%s0 + $0x28] sm:$0xff]
    %v184 = vld [vmem:[%s0 + $0x30] sm:$0xff]
    %v185 = vld [vmem:[%s0 + $0x38] sm:$0x3f]
    %vm194 = vcmask 1041408
    %v195 = vrot.slane %v178, 6
    %v196 = vrot.slane %v179, 6
    %v197 = vsel %vm194, %v195, %v196
    %v198 = vrot.slane %v180, 6
    %v199 = vsel %vm194, %v196, %v198
    %v200 = vrot.slane %v181, 6
    %v201 = vsel %vm194, %v198, %v200
    %v202 = vrot.slane %v182, 6
    %v203 = vrot.slane %v183, 6
    %v204 = vsel %vm194, %v202, %v203
    %v205 = vrot.slane %v184, 6
    %v206 = vsel %vm194, %v203, %v205
    %v207 = vrot.slane %v185, 6
    %v208 = vsel %vm194, %v205, %v207
    %vm217 = vcmask 785410
    %218 = vst.msk [vmem:[#allocation6] sm:$0xfc] %vm217, %v195
    %vm219 = vcmask 785408
    %220 = vst.msk [vmem:[#allocation6 + $0x28] sm:$0xff] %vm219, %v197
    %221 = vst.msk [vmem:[#allocation6 + $0x50] sm:$0xff] %vm219, %v199
    %222 = vst.msk [vmem:[#allocation6 + $0x78] sm:$0xff] %vm219, %v201
    %223 = vst.msk [vmem:[#allocation6 + $0xa0] sm:$0xfc] %vm217, %v202
    %224 = vst.msk [vmem:[#allocation6 + $0xc8] sm:$0xff] %vm219, %v204
    %225 = vst.msk [vmem:[#allocation6 + $0xf0] sm:$0xff] %vm219, %v206
    %226 = vst.msk [vmem:[#allocation6 + $0x118] sm:$0xff] %vm219, %v208
    %v227 = vld [vmem:[%s0] sm:$0xff]
    %v228 = vld [vmem:[%s0 + $0x8] sm:$0xff]
    %v229 = vld [vmem:[%s0 + $0x10] sm:$0xff]
    %v230 = vld [vmem:[%s0 + $0x18] sm:$0x7f]
    %v231 = vld [vmem:[%s0 + $0x20] sm:$0xff]
    %v232 = vld [vmem:[%s0 + $0x28] sm:$0xff]
    %v233 = vld [vmem:[%s0 + $0x30] sm:$0xff]
    %v234 = vld [vmem:[%s0 + $0x38] sm:$0x7f]
    %vm243 = vcmask 1040384
    %v244 = vrot.slane %v227, 7
    %v245 = vrot.slane %v228, 7
    %v246 = vsel %vm243, %v244, %v245
    %v247 = vrot.slane %v229, 7
    %v248 = vsel %vm243, %v245, %v247
    %v249 = vrot.slane %v230, 7
    %v250 = vsel %vm243, %v247, %v249
    %v251 = vrot.slane %v231, 7
    %v252 = vrot.slane %v232, 7
    %v253 = vsel %vm243, %v251, %v252
    %v254 = vrot.slane %v233, 7
    %v255 = vsel %vm243, %v252, %v254
    %v256 = vrot.slane %v234, 7
    %v257 = vsel %vm243, %v254, %v256
    %vm266 = vcmask 785409
    %267 = vst.msk [vmem:[#allocation6 + $0x8] sm:$0xfe] %vm266, %v244
    %268 = vst.msk [vmem:[#allocation6 + $0x30] sm:$0xff] %vm219, %v246
    %269 = vst.msk [vmem:[#allocation6 + $0x58] sm:$0xff] %vm219, %v248
    %270 = vst.msk [vmem:[#allocation6 + $0x80] sm:$0xff] %vm219, %v250
    %271 = vst.msk [vmem:[#allocation6 + $0xa8] sm:$0xfe] %vm266, %v251
    %272 = vst.msk [vmem:[#allocation6 + $0xd0] sm:$0xff] %vm219, %v253
    %273 = vst.msk [vmem:[#allocation6 + $0xf8] sm:$0xff] %vm219, %v255
    %274 = vst.msk [vmem:[#allocation6 + $0x120] sm:$0xff] %vm219, %v257
    %v275 = vld [vmem:[%s0] sm:$0xff]
    %v276 = vld [vmem:[%s0 + $0x8] sm:$0xff]
    %v277 = vld [vmem:[%s0 + $0x10] sm:$0xff]
    %v278 = vld [vmem:[%s0 + $0x18] sm:$0xff]
    %v279 = vld [vmem:[%s0 + $0x20] sm:$0xff]
    %v280 = vld [vmem:[%s0 + $0x28] sm:$0xff]
    %v281 = vld [vmem:[%s0 + $0x30] sm:$0xff]
    %v282 = vld [vmem:[%s0 + $0x38] sm:$0xff]
    %283 = vst.msk [vmem:[#allocation6 + $0x10] sm:$0xff] %vm219, %v275
    %284 = vst.msk [vmem:[#allocation6 + $0x38] sm:$0xff] %vm219, %v276
    %285 = vst.msk [vmem:[#allocation6 + $0x60] sm:$0xff] %vm219, %v277
    %286 = vst.msk [vmem:[#allocation6 + $0x88] sm:$0xff] %vm219, %v278
    %287 = vst.msk [vmem:[#allocation6 + $0xb0] sm:$0xff] %vm219, %v279
    %288 = vst.msk [vmem:[#allocation6 + $0xd8] sm:$0xff] %vm219, %v280
    %289 = vst.msk [vmem:[#allocation6 + $0x100] sm:$0xff] %vm219, %v281
    %290 = vst.msk [vmem:[#allocation6 + $0x128] sm:$0xff] %vm219, %v282
    %v291 = vld [vmem:[%s0 + $0x1] sm:$0xff]
    %v292 = vld [vmem:[%s0 + $0x9] sm:$0xff]
    %v293 = vld [vmem:[%s0 + $0x11] sm:$0xff]
    %v294 = vld [vmem:[%s0 + $0x19] sm:$0x7f]
    %v295 = vld [vmem:[%s0 + $0x21] sm:$0xff]
    %v296 = vld [vmem:[%s0 + $0x29] sm:$0xff]
    %v297 = vld [vmem:[%s0 + $0x31] sm:$0xff]
    %v298 = vld [vmem:[%s0 + $0x39] sm:$0x7f]
    %299 = vst.msk [vmem:[#allocation6 + $0x18] sm:$0xff] %vm219, %v291
    %300 = vst.msk [vmem:[#allocation6 + $0x40] sm:$0xff] %vm219, %v292
    %301 = vst.msk [vmem:[#allocation6 + $0x68] sm:$0xff] %vm219, %v293
    %vm302 = vcmask 784384
    %303 = vst.msk [vmem:[#allocation6 + $0x90] sm:$0x7f] %vm302, %v294
    %304 = vst.msk [vmem:[#allocation6 + $0xb8] sm:$0xff] %vm219, %v295
    %305 = vst.msk [vmem:[#allocation6 + $0xe0] sm:$0xff] %vm219, %v296
    %306 = vst.msk [vmem:[#allocation6 + $0x108] sm:$0xff] %vm219, %v297
    %307 = vst.msk [vmem:[#allocation6 + $0x130] sm:$0x7f] %vm302, %v298
    %v308 = vld [vmem:[%s0 + $0x2] sm:$0xff]
    %v309 = vld [vmem:[%s0 + $0xa] sm:$0xff]
    %v310 = vld [vmem:[%s0 + $0x12] sm:$0xff]
    %v311 = vld [vmem:[%s0 + $0x1a] sm:$0x3f]
    %v312 = vld [vmem:[%s0 + $0x22] sm:$0xff]
    %v313 = vld [vmem:[%s0 + $0x2a] sm:$0xff]
    %v314 = vld [vmem:[%s0 + $0x32] sm:$0xff]
    %v315 = vld [vmem:[%s0 + $0x3a] sm:$0x3f]
    %316 = vst.msk [vmem:[#allocation6 + $0x20] sm:$0xff] %vm219, %v308
    %317 = vst.msk [vmem:[#allocation6 + $0x48] sm:$0xff] %vm219, %v309
    %318 = vst.msk [vmem:[#allocation6 + $0x70] sm:$0xff] %vm219, %v310
    %vm319 = vcmask 783360
    %320 = vst.msk [vmem:[#allocation6 + $0x98] sm:$0x3f] %vm319, %v311
    %321 = vst.msk [vmem:[#allocation6 + $0xc0] sm:$0xff] %vm219, %v312
    %322 = vst.msk [vmem:[#allocation6 + $0xe8] sm:$0xff] %vm219, %v313
    %323 = vst.msk [vmem:[#allocation6 + $0x110] sm:$0xff] %vm219, %v314
    %324 = vst.msk [vmem:[#allocation6 + $0x138] sm:$0x3f] %vm319, %v315
    %v325 = vld [vmem:[#allocation6] sm:$0xff]
    %v326 = vld [vmem:[#allocation6 + $0x8] sm:$0xff]
    %v327 = vld [vmem:[#allocation6 + $0x10] sm:$0xff]
    %v328 = vld [vmem:[#allocation6 + $0x18] sm:$0xff]
    %v329 = vld [vmem:[#allocation6 + $0x20] sm:$0xff]
    %v330 = vld [vmem:[#allocation6 + $0x28] sm:$0xff]
    %v331 = vld [vmem:[#allocation6 + $0x30] sm:$0xff]
    %v332 = vld [vmem:[#allocation6 + $0x38] sm:$0xff]
    %v333 = vld [vmem:[#allocation6 + $0x40] sm:$0xff]
    %v334 = vld [vmem:[#allocation6 + $0x48] sm:$0xff]
    %v335 = vld [vmem:[#allocation6 + $0x50] sm:$0xff]
    %v336 = vld [vmem:[#allocation6 + $0x58] sm:$0xff]
    %v337 = vld [vmem:[#allocation6 + $0x60] sm:$0xff]
    %v338 = vld [vmem:[#allocation6 + $0x68] sm:$0xff]
    %v339 = vld [vmem:[#allocation6 + $0x70] sm:$0xff]
    %v340 = vld [vmem:[#allocation6 + $0x78] sm:$0xff]
    %v341 = vld [vmem:[#allocation6 + $0x80] sm:$0xff]
    %v342 = vld [vmem:[#allocation6 + $0x88] sm:$0xff]
    %v343 = vld [vmem:[#allocation6 + $0x90] sm:$0xff]
    %v344 = vld [vmem:[#allocation6 + $0x98] sm:$0xff]
    %v345 = vld [vmem:[#allocation6 + $0xa0] sm:$0xff]
    %v346 = vld [vmem:[#allocation6 + $0xa8] sm:$0xff]
    %v347 = vld [vmem:[#allocation6 + $0xb0] sm:$0xff]
    %v348 = vld [vmem:[#allocation6 + $0xb8] sm:$0xff]
    %v349 = vld [vmem:[#allocation6 + $0xc0] sm:$0xff]
    %v350 = vld [vmem:[#allocation6 + $0xc8] sm:$0xff]
    %v351 = vld [vmem:[#allocation6 + $0xd0] sm:$0xff]
    %v352 = vld [vmem:[#allocation6 + $0xd8] sm:$0xff]
    %v353 = vld [vmem:[#allocation6 + $0xe0] sm:$0xff]
    %v354 = vld [vmem:[#allocation6 + $0xe8] sm:$0xff]
    %v355 = vld [vmem:[#allocation6 + $0xf0] sm:$0xff]
    %v356 = vld [vmem:[#allocation6 + $0xf8] sm:$0xff]
    %v357 = vld [vmem:[#allocation6 + $0x100] sm:$0xff]
    %v358 = vld [vmem:[#allocation6 + $0x108] sm:$0xff]
    %v359 = vld [vmem:[#allocation6 + $0x110] sm:$0xff]
    %v360 = vld [vmem:[#allocation6 + $0x118] sm:$0xff]
    %v361 = vld [vmem:[#allocation6 + $0x120] sm:$0xff]
    %v362 = vld [vmem:[#allocation6 + $0x128] sm:$0xff]
    %v363 = vld [vmem:[#allocation6 + $0x130] sm:$0xff]
    %v364 = vld [vmem:[#allocation6 + $0x138] sm:$0xff]
    %v365 = vpack.c.bf16 %v330, %v325
    %v366 = vpack.c.bf16 %v331, %v326
    %v367 = vpack.c.bf16 %v332, %v327
    %v368 = vpack.c.bf16 %v333, %v328
    %v369 = vpack.c.bf16 %v334, %v329
    %v370 = vpack.c.bf16 %v340, %v335
    %v371 = vpack.c.bf16 %v341, %v336
    %v372 = vpack.c.bf16 %v342, %v337
    %v373 = vpack.c.bf16 %v343, %v338
    %v374 = vpack.c.bf16 %v344, %v339
    %v375 = vpack.c.bf16 %v350, %v345
    %v376 = vpack.c.bf16 %v351, %v346
    %v377 = vpack.c.bf16 %v352, %v347
    %v378 = vpack.c.bf16 %v353, %v348
    %v379 = vpack.c.bf16 %v354, %v349
    %v380 = vpack.c.bf16 %v360, %v355
    %v381 = vpack.c.bf16 %v361, %v356
    %v382 = vpack.c.bf16 %v362, %v357
    %v383 = vpack.c.bf16 %v363, %v358
    %v384 = vpack.c.bf16 %v364, %v359
    %v385 = vld [vmem:[#allocation11] sm:$0xff]
    %v386 = vld [vmem:[#allocation11 + $0x8] sm:$0xff]
    %v387 = vld [vmem:[#allocation11 + $0x10] sm:$0xff]
    %v388 = vld [vmem:[#allocation11 + $0x18] sm:$0xff]
    %v389 = vld [vmem:[#allocation11 + $0x20] sm:$0xff]
    %v390 = vld [vmem:[#allocation11 + $0x28] sm:$0xff]
    %v391 = vld [vmem:[#allocation11 + $0x30] sm:$0xff]
    %v392 = vld [vmem:[#allocation11 + $0x38] sm:$0xff]
    %v393 = vld [vmem:[#allocation11 + $0x40] sm:$0xff]
    %v394 = vld [vmem:[#allocation11 + $0x48] sm:$0xff]
    %v395 = vld [vmem:[#allocation11 + $0x50] sm:$0xff]
    %v396 = vld [vmem:[#allocation11 + $0x58] sm:$0xff]
    %v397 = vld [vmem:[#allocation11 + $0x60] sm:$0xff]
    %v398 = vld [vmem:[#allocation11 + $0x68] sm:$0xff]
    %v399 = vld [vmem:[#allocation11 + $0x70] sm:$0xff]
    %v400 = vld [vmem:[#allocation11 + $0x78] sm:$0xff]
    %v401 = vld [vmem:[#allocation11 + $0x80] sm:$0xff]
    %v402 = vld [vmem:[#allocation11 + $0x88] sm:$0xff]
    %v403 = vld [vmem:[#allocation11 + $0x90] sm:$0xff]
    %v404 = vld [vmem:[#allocation11 + $0x98] sm:$0xff]
    %v405 = vld [vmem:[#allocation11 + $0xa0] sm:$0xff]
    %v406 = vld [vmem:[#allocation11 + $0xa8] sm:$0xff]
    %v407 = vld [vmem:[#allocation11 + $0xb0] sm:$0xff]
    %v408 = vld [vmem:[#allocation11 + $0xb8] sm:$0xff]
    %v409 = vld [vmem:[#allocation11 + $0xc0] sm:$0xff]
    %v410 = vld [vmem:[#allocation11 + $0xc8] sm:$0xff]
    %v411 = vld [vmem:[#allocation11 + $0xd0] sm:$0xff]
    %v412 = vld [vmem:[#allocation11 + $0xd8] sm:$0xff]
    %v413 = vld [vmem:[#allocation11 + $0xe0] sm:$0xff]
    %v414 = vld [vmem:[#allocation11 + $0xe8] sm:$0xff]
    %v415 = vld [vmem:[#allocation11 + $0xf0] sm:$0xff]
    %v416 = vld [vmem:[#allocation11 + $0xf8] sm:$0xff]
    %v417 = vld [vmem:[#allocation11 + $0x100] sm:$0xff]
    %v418 = vld [vmem:[#allocation11 + $0x108] sm:$0xff]
    %v419 = vld [vmem:[#allocation11 + $0x110] sm:$0xff]
    %v420 = vld [vmem:[#allocation11 + $0x118] sm:$0xff]
    %v421 = vld [vmem:[#allocation11 + $0x120] sm:$0xff]
    %v422 = vld [vmem:[#allocation11 + $0x128] sm:$0xff]
    %v423 = vld [vmem:[#allocation11 + $0x130] sm:$0xff]
    %v424 = vld [vmem:[#allocation11 + $0x138] sm:$0xff]
    %v425 = vld [vmem:[#allocation11 + $0x140] sm:$0xff]
    %v426 = vld [vmem:[#allocation11 + $0x148] sm:$0xff]
    %v427 = vld [vmem:[#allocation11 + $0x150] sm:$0xff]
    %v428 = vld [vmem:[#allocation11 + $0x158] sm:$0xff]
    %v429 = vld [vmem:[#allocation11 + $0x160] sm:$0xff]
    %v430 = vld [vmem:[#allocation11 + $0x168] sm:$0xff]
    %v431 = vld [vmem:[#allocation11 + $0x170] sm:$0xff]
    %v432 = vld [vmem:[#allocation11 + $0x178] sm:$0xff]
    %v433 = vld [vmem:[#allocation11 + $0x180] sm:$0xff]
    %v434 = vld [vmem:[#allocation11 + $0x188] sm:$0xff]
    %v435 = vld [vmem:[#allocation11 + $0x190] sm:$0xff]
    %v436 = vld [vmem:[#allocation11 + $0x198] sm:$0xff]
    %v437 = vld [vmem:[#allocation11 + $0x1a0] sm:$0xff]
    %v438 = vld [vmem:[#allocation11 + $0x1a8] sm:$0xff]
    %v439 = vld [vmem:[#allocation11 + $0x1b0] sm:$0xff]
    %v440 = vld [vmem:[#allocation11 + $0x1b8] sm:$0xff]
    %v441 = vld [vmem:[#allocation11 + $0x1c0] sm:$0xff]
    %v442 = vld [vmem:[#allocation11 + $0x1c8] sm:$0xff]
    %v443 = vld [vmem:[#allocation11 + $0x1d0] sm:$0xff]
    %v444 = vld [vmem:[#allocation11 + $0x1d8] sm:$0xff]
    %v445 = vld [vmem:[#allocation11 + $0x1e0] sm:$0xff]
    %v446 = vld [vmem:[#allocation11 + $0x1e8] sm:$0xff]
    %v447 = vld [vmem:[#allocation11 + $0x1f0] sm:$0xff]
    %v448 = vld [vmem:[#allocation11 + $0x1f8] sm:$0xff]
    %v449 = vld [vmem:[#allocation11 + $0x200] sm:$0xff]
    %v450 = vld [vmem:[#allocation11 + $0x208] sm:$0xff]
    %v451 = vld [vmem:[#allocation11 + $0x210] sm:$0xff]
    %v452 = vld [vmem:[#allocation11 + $0x218] sm:$0xff]
    %v453 = vld [vmem:[#allocation11 + $0x220] sm:$0xff]
    %v454 = vld [vmem:[#allocation11 + $0x228] sm:$0xff]
    %v455 = vld [vmem:[#allocation11 + $0x230] sm:$0xff]
    %v456 = vld [vmem:[#allocation11 + $0x238] sm:$0xff]
    %v457 = vld [vmem:[#allocation11 + $0x240] sm:$0xff]
    %v458 = vld [vmem:[#allocation11 + $0x248] sm:$0xff]
    %v459 = vld [vmem:[#allocation11 + $0x250] sm:$0xff]
    %v460 = vld [vmem:[#allocation11 + $0x258] sm:$0xff]
    %v461 = vld [vmem:[#allocation11 + $0x260] sm:$0xff]
    %v462 = vld [vmem:[#allocation11 + $0x268] sm:$0xff]
    %v463 = vld [vmem:[#allocation11 + $0x270] sm:$0xff]
    %v464 = vld [vmem:[#allocation11 + $0x278] sm:$0xff]
    %v465 = vld [vmem:[#allocation11 + $0x280] sm:$0xff]
    %v466 = vld [vmem:[#allocation11 + $0x288] sm:$0xff]
    %v467 = vld [vmem:[#allocation11 + $0x290] sm:$0xff]
    %v468 = vld [vmem:[#allocation11 + $0x298] sm:$0xff]
    %v469 = vld [vmem:[#allocation11 + $0x2a0] sm:$0xff]
    %v470 = vld [vmem:[#allocation11 + $0x2a8] sm:$0xff]
    %v471 = vld [vmem:[#allocation11 + $0x2b0] sm:$0xff]
    %v472 = vld [vmem:[#allocation11 + $0x2b8] sm:$0xff]
    %v473 = vld [vmem:[#allocation11 + $0x2c0] sm:$0xff]
    %v474 = vld [vmem:[#allocation11 + $0x2c8] sm:$0xff]
    %v475 = vld [vmem:[#allocation11 + $0x2d0] sm:$0xff]
    %v476 = vld [vmem:[#allocation11 + $0x2d8] sm:$0xff]
    %v477 = vld [vmem:[#allocation11 + $0x2e0] sm:$0xff]
    %v478 = vld [vmem:[#allocation11 + $0x2e8] sm:$0xff]
    %v479 = vld [vmem:[#allocation11 + $0x2f0] sm:$0xff]
    %v480 = vld [vmem:[#allocation11 + $0x2f8] sm:$0xff]
    %v481 = vld [vmem:[#allocation11 + $0x300] sm:$0xff]
    %v482 = vld [vmem:[#allocation11 + $0x308] sm:$0xff]
    %v483 = vld [vmem:[#allocation11 + $0x310] sm:$0xff]
    %v484 = vld [vmem:[#allocation11 + $0x318] sm:$0xff]
    %v485 = vld [vmem:[#allocation11 + $0x320] sm:$0xff]
    %v486 = vld [vmem:[#allocation11 + $0x328] sm:$0xff]
    %v487 = vld [vmem:[#allocation11 + $0x330] sm:$0xff]
    %v488 = vld [vmem:[#allocation11 + $0x338] sm:$0xff]
    %v489 = vld [vmem:[#allocation11 + $0x340] sm:$0xff]
    %v490 = vld [vmem:[#allocation11 + $0x348] sm:$0xff]
    %v491 = vld [vmem:[#allocation11 + $0x350] sm:$0xff]
    %v492 = vld [vmem:[#allocation11 + $0x358] sm:$0xff]
    %v493 = vld [vmem:[#allocation11 + $0x360] sm:$0xff]
    %v494 = vld [vmem:[#allocation11 + $0x368] sm:$0xff]
    %v495 = vld [vmem:[#allocation11 + $0x370] sm:$0xff]
    %v496 = vld [vmem:[#allocation11 + $0x378] sm:$0xff]
    %v497 = vld [vmem:[#allocation11 + $0x380] sm:$0xff]
    %v498 = vld [vmem:[#allocation11 + $0x388] sm:$0xff]
    %v499 = vld [vmem:[#allocation11 + $0x390] sm:$0xff]
    %v500 = vld [vmem:[#allocation11 + $0x398] sm:$0xff]
    %v501 = vld [vmem:[#allocation11 + $0x3a0] sm:$0xff]
    %v502 = vld [vmem:[#allocation11 + $0x3a8] sm:$0xff]
    %v503 = vld [vmem:[#allocation11 + $0x3b0] sm:$0xff]
    %v504 = vld [vmem:[#allocation11 + $0x3b8] sm:$0xff]
    %v505 = vld [vmem:[#allocation11 + $0x3c0] sm:$0xff]
    %v506 = vld [vmem:[#allocation11 + $0x3c8] sm:$0xff]
    %v507 = vld [vmem:[#allocation11 + $0x3d0] sm:$0xff]
    %v508 = vld [vmem:[#allocation11 + $0x3d8] sm:$0xff]
    %v509 = vld [vmem:[#allocation11 + $0x3e0] sm:$0xff]
    %v510 = vld [vmem:[#allocation11 + $0x3e8] sm:$0xff]
    %v511 = vld [vmem:[#allocation11 + $0x3f0] sm:$0xff]
    %v512 = vld [vmem:[#allocation11 + $0x3f8] sm:$0xff]
    %v513 = vld [vmem:[#allocation11 + $0x400] sm:$0xff]
    %v514 = vld [vmem:[#allocation11 + $0x408] sm:$0xff]
    %v515 = vld [vmem:[#allocation11 + $0x410] sm:$0xff]
    %v516 = vld [vmem:[#allocation11 + $0x418] sm:$0xff]
    %v517 = vld [vmem:[#allocation11 + $0x420] sm:$0xff]
    %v518 = vld [vmem:[#allocation11 + $0x428] sm:$0xff]
    %v519 = vld [vmem:[#allocation11 + $0x430] sm:$0xff]
    %v520 = vld [vmem:[#allocation11 + $0x438] sm:$0xff]
    %v521 = vld [vmem:[#allocation11 + $0x440] sm:$0xff]
    %v522 = vld [vmem:[#allocation11 + $0x448] sm:$0xff]
    %v523 = vld [vmem:[#allocation11 + $0x450] sm:$0xff]
    %v524 = vld [vmem:[#allocation11 + $0x458] sm:$0xff]
    %v525 = vld [vmem:[#allocation11 + $0x460] sm:$0xff]
    %v526 = vld [vmem:[#allocation11 + $0x468] sm:$0xff]
    %v527 = vld [vmem:[#allocation11 + $0x470] sm:$0xff]
    %v528 = vld [vmem:[#allocation11 + $0x478] sm:$0xff]
    %v529 = vld [vmem:[#allocation11 + $0x480] sm:$0xff]
    %v530 = vld [vmem:[#allocation11 + $0x488] sm:$0xff]
    %v531 = vld [vmem:[#allocation11 + $0x490] sm:$0xff]
    %v532 = vld [vmem:[#allocation11 + $0x498] sm:$0xff]
    %v533 = vld [vmem:[#allocation11 + $0x4a0] sm:$0xff]
    %v534 = vld [vmem:[#allocation11 + $0x4a8] sm:$0xff]
    %v535 = vld [vmem:[#allocation11 + $0x4b0] sm:$0xff]
    %v536 = vld [vmem:[#allocation11 + $0x4b8] sm:$0xff]
    %v537 = vld [vmem:[#allocation11 + $0x4c0] sm:$0xff]
    %v538 = vld [vmem:[#allocation11 + $0x4c8] sm:$0xff]
    %v539 = vld [vmem:[#allocation11 + $0x4d0] sm:$0xff]
    %v540 = vld [vmem:[#allocation11 + $0x4d8] sm:$0xff]
    %v541 = vld [vmem:[#allocation11 + $0x4e0] sm:$0xff]
    %v542 = vld [vmem:[#allocation11 + $0x4e8] sm:$0xff]
    %v543 = vld [vmem:[#allocation11 + $0x4f0] sm:$0xff]
    %v544 = vld [vmem:[#allocation11 + $0x4f8] sm:$0xff]
    %v545 = vld [vmem:[#allocation14] sm:$0xf]
    %v547 = vperm.slane %v545, 0
    %v548 = vperm.slane %v545, 1
    %v549 = vperm.slane %v545, 2
    %v550 = vperm.slane %v545, 3
    %v715 = vunpack.c.l.b16 %v385
    %v716 = vunpack.c.h.b16 %v385
    %v717 = vunpack.c.l.b16 %v386
    %v718 = vunpack.c.h.b16 %v386
    %v719 = vunpack.c.l.b16 %v387
    %v720 = vunpack.c.h.b16 %v387
    %v721 = vunpack.c.l.b16 %v388
    %v722 = vunpack.c.h.b16 %v388
    %v723 = vunpack.c.l.b16 %v389
    %v724 = vunpack.c.h.b16 %v389
    %v725 = vunpack.c.l.b16 %v390
    %v726 = vunpack.c.h.b16 %v390
    %v727 = vunpack.c.l.b16 %v391
    %v728 = vunpack.c.h.b16 %v391
    %v729 = vunpack.c.l.b16 %v392
    %v730 = vunpack.c.h.b16 %v392
    %v731 = vunpack.c.l.b16 %v393
    %v732 = vunpack.c.h.b16 %v393
    %v733 = vunpack.c.l.b16 %v394
    %v734 = vunpack.c.h.b16 %v394
    %v735 = vunpack.c.l.b16 %v395
    %v736 = vunpack.c.h.b16 %v395
    %v737 = vunpack.c.l.b16 %v396
    %v738 = vunpack.c.h.b16 %v396
    %v739 = vunpack.c.l.b16 %v397
    %v740 = vunpack.c.h.b16 %v397
    %v741 = vunpack.c.l.b16 %v398
    %v742 = vunpack.c.h.b16 %v398
    %v743 = vunpack.c.l.b16 %v399
    %v744 = vunpack.c.h.b16 %v399
    %v745 = vunpack.c.l.b16 %v400
    %v746 = vunpack.c.h.b16 %v400
    %v747 = vunpack.c.l.b16 %v401
    %v748 = vunpack.c.h.b16 %v401
    %v749 = vunpack.c.l.b16 %v402
    %v750 = vunpack.c.h.b16 %v402
    %v751 = vunpack.c.l.b16 %v403
    %v752 = vunpack.c.h.b16 %v403
    %v753 = vunpack.c.l.b16 %v404
    %v754 = vunpack.c.h.b16 %v404
    %v755 = vunpack.c.l.b16 %v405
    %v756 = vunpack.c.h.b16 %v405
    %v757 = vunpack.c.l.b16 %v406
    %v758 = vunpack.c.h.b16 %v406
    %v759 = vunpack.c.l.b16 %v407
    %v760 = vunpack.c.h.b16 %v407
    %v761 = vunpack.c.l.b16 %v408
    %v762 = vunpack.c.h.b16 %v408
    %v763 = vunpack.c.l.b16 %v409
    %v764 = vunpack.c.h.b16 %v409
    %v765 = vunpack.c.l.b16 %v410
    %v766 = vunpack.c.h.b16 %v410
    %v767 = vunpack.c.l.b16 %v411
    %v768 = vunpack.c.h.b16 %v411
    %v769 = vunpack.c.l.b16 %v412
    %v770 = vunpack.c.h.b16 %v412
    %v771 = vunpack.c.l.b16 %v413
    %v772 = vunpack.c.h.b16 %v413
    %v773 = vunpack.c.l.b16 %v414
    %v774 = vunpack.c.h.b16 %v414
    %v775 = vunpack.c.l.b16 %v415
    %v776 = vunpack.c.h.b16 %v415
    %v777 = vunpack.c.l.b16 %v416
    %v778 = vunpack.c.h.b16 %v416
    %v779 = vunpack.c.l.b16 %v417
    %v780 = vunpack.c.h.b16 %v417
    %v781 = vunpack.c.l.b16 %v418
    %v782 = vunpack.c.h.b16 %v418
    %v783 = vunpack.c.l.b16 %v419
    %v784 = vunpack.c.h.b16 %v419
    %v785 = vunpack.c.l.b16 %v420
    %v786 = vunpack.c.h.b16 %v420
    %v787 = vunpack.c.l.b16 %v421
    %v788 = vunpack.c.h.b16 %v421
    %v789 = vunpack.c.l.b16 %v422
    %v790 = vunpack.c.h.b16 %v422
    %v791 = vunpack.c.l.b16 %v423
    %v792 = vunpack.c.h.b16 %v423
    %v793 = vunpack.c.l.b16 %v424
    %v794 = vunpack.c.h.b16 %v424
    %v795 = vunpack.c.l.b16 %v425
    %v796 = vunpack.c.h.b16 %v425
    %v797 = vunpack.c.l.b16 %v426
    %v798 = vunpack.c.h.b16 %v426
    %v799 = vunpack.c.l.b16 %v427
    %v800 = vunpack.c.h.b16 %v427
    %v801 = vunpack.c.l.b16 %v428
    %v802 = vunpack.c.h.b16 %v428
    %v803 = vunpack.c.l.b16 %v429
    %v804 = vunpack.c.h.b16 %v429
    %v805 = vunpack.c.l.b16 %v430
    %v806 = vunpack.c.h.b16 %v430
    %v807 = vunpack.c.l.b16 %v431
    %v808 = vunpack.c.h.b16 %v431
    %v809 = vunpack.c.l.b16 %v432
    %v810 = vunpack.c.h.b16 %v432
    %v811 = vunpack.c.l.b16 %v433
    %v812 = vunpack.c.h.b16 %v433
    %v813 = vunpack.c.l.b16 %v434
    %v814 = vunpack.c.h.b16 %v434
    %v815 = vunpack.c.l.b16 %v435
    %v816 = vunpack.c.h.b16 %v435
    %v817 = vunpack.c.l.b16 %v436
    %v818 = vunpack.c.h.b16 %v436
    %v819 = vunpack.c.l.b16 %v437
    %v820 = vunpack.c.h.b16 %v437
    %v821 = vunpack.c.l.b16 %v438
    %v822 = vunpack.c.h.b16 %v438
    %v823 = vunpack.c.l.b16 %v439
    %v824 = vunpack.c.h.b16 %v439
    %v825 = vunpack.c.l.b16 %v440
    %v826 = vunpack.c.h.b16 %v440
    %v827 = vunpack.c.l.b16 %v441
    %v828 = vunpack.c.h.b16 %v441
    %v829 = vunpack.c.l.b16 %v442
    %v830 = vunpack.c.h.b16 %v442
    %v831 = vunpack.c.l.b16 %v443
    %v832 = vunpack.c.h.b16 %v443
    %v833 = vunpack.c.l.b16 %v444
    %v834 = vunpack.c.h.b16 %v444
    %v835 = vunpack.c.l.b16 %v445
    %v836 = vunpack.c.h.b16 %v445
    %v837 = vunpack.c.l.b16 %v446
    %v838 = vunpack.c.h.b16 %v446
    %v839 = vunpack.c.l.b16 %v447
    %v840 = vunpack.c.h.b16 %v447
    %v841 = vunpack.c.l.b16 %v448
    %v842 = vunpack.c.h.b16 %v448
    %v843 = vunpack.c.l.b16 %v449
    %v844 = vunpack.c.h.b16 %v449
    %v845 = vunpack.c.l.b16 %v450
    %v846 = vunpack.c.h.b16 %v450
    %v847 = vunpack.c.l.b16 %v451
    %v848 = vunpack.c.h.b16 %v451
    %v849 = vunpack.c.l.b16 %v452
    %v850 = vunpack.c.h.b16 %v452
    %v851 = vunpack.c.l.b16 %v453
    %v852 = vunpack.c.h.b16 %v453
    %v853 = vunpack.c.l.b16 %v454
    %v854 = vunpack.c.h.b16 %v454
    %v855 = vunpack.c.l.b16 %v455
    %v856 = vunpack.c.h.b16 %v455
    %v857 = vunpack.c.l.b16 %v456
    %v858 = vunpack.c.h.b16 %v456
    %v859 = vunpack.c.l.b16 %v457
    %v860 = vunpack.c.h.b16 %v457
    %v861 = vunpack.c.l.b16 %v458
    %v862 = vunpack.c.h.b16 %v458
    %v863 = vunpack.c.l.b16 %v459
    %v864 = vunpack.c.h.b16 %v459
    %v865 = vunpack.c.l.b16 %v460
    %v866 = vunpack.c.h.b16 %v460
    %v867 = vunpack.c.l.b16 %v461
    %v868 = vunpack.c.h.b16 %v461
    %v869 = vunpack.c.l.b16 %v462
    %v870 = vunpack.c.h.b16 %v462
    %v871 = vunpack.c.l.b16 %v463
    %v872 = vunpack.c.h.b16 %v463
    %v873 = vunpack.c.l.b16 %v464
    %v874 = vunpack.c.h.b16 %v464
    %v875 = vunpack.c.l.b16 %v465
    %v876 = vunpack.c.h.b16 %v465
    %v877 = vunpack.c.l.b16 %v466
    %v878 = vunpack.c.h.b16 %v466
    %v879 = vunpack.c.l.b16 %v467
    %v880 = vunpack.c.h.b16 %v467
    %v881 = vunpack.c.l.b16 %v468
    %v882 = vunpack.c.h.b16 %v468
    %v883 = vunpack.c.l.b16 %v469
    %v884 = vunpack.c.h.b16 %v469
    %v885 = vunpack.c.l.b16 %v470
    %v886 = vunpack.c.h.b16 %v470
    %v887 = vunpack.c.l.b16 %v471
    %v888 = vunpack.c.h.b16 %v471
    %v889 = vunpack.c.l.b16 %v472
    %v890 = vunpack.c.h.b16 %v472
    %v891 = vunpack.c.l.b16 %v473
    %v892 = vunpack.c.h.b16 %v473
    %v893 = vunpack.c.l.b16 %v474
    %v894 = vunpack.c.h.b16 %v474
    %v895 = vunpack.c.l.b16 %v475
    %v896 = vunpack.c.h.b16 %v475
    %v897 = vunpack.c.l.b16 %v476
    %v898 = vunpack.c.h.b16 %v476
    %v899 = vunpack.c.l.b16 %v477
    %v900 = vunpack.c.h.b16 %v477
    %v901 = vunpack.c.l.b16 %v478
    %v902 = vunpack.c.h.b16 %v478
    %v903 = vunpack.c.l.b16 %v479
    %v904 = vunpack.c.h.b16 %v479
    %v905 = vunpack.c.l.b16 %v480
    %v906 = vunpack.c.h.b16 %v480
    %v907 = vunpack.c.l.b16 %v481
    %v908 = vunpack.c.h.b16 %v481
    %v909 = vunpack.c.l.b16 %v482
    %v910 = vunpack.c.h.b16 %v482
    %v911 = vunpack.c.l.b16 %v483
    %v912 = vunpack.c.h.b16 %v483
    %v913 = vunpack.c.l.b16 %v484
    %v914 = vunpack.c.h.b16 %v484
    %v915 = vunpack.c.l.b16 %v485
    %v916 = vunpack.c.h.b16 %v485
    %v917 = vunpack.c.l.b16 %v486
    %v918 = vunpack.c.h.b16 %v486
    %v919 = vunpack.c.l.b16 %v487
    %v920 = vunpack.c.h.b16 %v487
    %v921 = vunpack.c.l.b16 %v488
    %v922 = vunpack.c.h.b16 %v488
    %v923 = vunpack.c.l.b16 %v489
    %v924 = vunpack.c.h.b16 %v489
    %v925 = vunpack.c.l.b16 %v490
    %v926 = vunpack.c.h.b16 %v490
    %v927 = vunpack.c.l.b16 %v491
    %v928 = vunpack.c.h.b16 %v491
    %v929 = vunpack.c.l.b16 %v492
    %v930 = vunpack.c.h.b16 %v492
    %v931 = vunpack.c.l.b16 %v493
    %v932 = vunpack.c.h.b16 %v493
    %v933 = vunpack.c.l.b16 %v494
    %v934 = vunpack.c.h.b16 %v494
    %v935 = vunpack.c.l.b16 %v495
    %v936 = vunpack.c.h.b16 %v495
    %v937 = vunpack.c.l.b16 %v496
    %v938 = vunpack.c.h.b16 %v496
    %v939 = vunpack.c.l.b16 %v497
    %v940 = vunpack.c.h.b16 %v497
    %v941 = vunpack.c.l.b16 %v498
    %v942 = vunpack.c.h.b16 %v498
    %v943 = vunpack.c.l.b16 %v499
    %v944 = vunpack.c.h.b16 %v499
    %v945 = vunpack.c.l.b16 %v500
    %v946 = vunpack.c.h.b16 %v500
    %v947 = vunpack.c.l.b16 %v501
    %v948 = vunpack.c.h.b16 %v501
    %v949 = vunpack.c.l.b16 %v502
    %v950 = vunpack.c.h.b16 %v502
    %v951 = vunpack.c.l.b16 %v503
    %v952 = vunpack.c.h.b16 %v503
    %v953 = vunpack.c.l.b16 %v504
    %v954 = vunpack.c.h.b16 %v504
    %v955 = vunpack.c.l.b16 %v505
    %v956 = vunpack.c.h.b16 %v505
    %v957 = vunpack.c.l.b16 %v506
    %v958 = vunpack.c.h.b16 %v506
    %v959 = vunpack.c.l.b16 %v507
    %v960 = vunpack.c.h.b16 %v507
    %v961 = vunpack.c.l.b16 %v508
    %v962 = vunpack.c.h.b16 %v508
    %v963 = vunpack.c.l.b16 %v509
    %v964 = vunpack.c.h.b16 %v509
    %v965 = vunpack.c.l.b16 %v510
    %v966 = vunpack.c.h.b16 %v510
    %v967 = vunpack.c.l.b16 %v511
    %v968 = vunpack.c.h.b16 %v511
    %v969 = vunpack.c.l.b16 %v512
    %v970 = vunpack.c.h.b16 %v512
    %v971 = vunpack.c.l.b16 %v513
    %v972 = vunpack.c.h.b16 %v513
    %v973 = vunpack.c.l.b16 %v514
    %v974 = vunpack.c.h.b16 %v514
    %v975 = vunpack.c.l.b16 %v515
    %v976 = vunpack.c.h.b16 %v515
    %v977 = vunpack.c.l.b16 %v516
    %v978 = vunpack.c.h.b16 %v516
    %v979 = vunpack.c.l.b16 %v517
    %v980 = vunpack.c.h.b16 %v517
    %v981 = vunpack.c.l.b16 %v518
    %v982 = vunpack.c.h.b16 %v518
    %v983 = vunpack.c.l.b16 %v519
    %v984 = vunpack.c.h.b16 %v519
    %v985 = vunpack.c.l.b16 %v520
    %v986 = vunpack.c.h.b16 %v520
    %v987 = vunpack.c.l.b16 %v521
    %v988 = vunpack.c.h.b16 %v521
    %v989 = vunpack.c.l.b16 %v522
    %v990 = vunpack.c.h.b16 %v522
    %v991 = vunpack.c.l.b16 %v523
    %v992 = vunpack.c.h.b16 %v523
    %v993 = vunpack.c.l.b16 %v524
    %v994 = vunpack.c.h.b16 %v524
    %v995 = vunpack.c.l.b16 %v525
    %v996 = vunpack.c.h.b16 %v525
    %v997 = vunpack.c.l.b16 %v526
    %v998 = vunpack.c.h.b16 %v526
    %v999 = vunpack.c.l.b16 %v527
    %v1000 = vunpack.c.h.b16 %v527
    %v1001 = vunpack.c.l.b16 %v528
    %v1002 = vunpack.c.h.b16 %v528
    %v1003 = vunpack.c.l.b16 %v529
    %v1004 = vunpack.c.h.b16 %v529
    %v1005 = vunpack.c.l.b16 %v530
    %v1006 = vunpack.c.h.b16 %v530
    %v1007 = vunpack.c.l.b16 %v531
    %v1008 = vunpack.c.h.b16 %v531
    %v1009 = vunpack.c.l.b16 %v532
    %v1010 = vunpack.c.h.b16 %v532
    %v1011 = vunpack.c.l.b16 %v533
    %v1012 = vunpack.c.h.b16 %v533
    %v1013 = vunpack.c.l.b16 %v534
    %v1014 = vunpack.c.h.b16 %v534
    %v1015 = vunpack.c.l.b16 %v535
    %v1016 = vunpack.c.h.b16 %v535
    %v1017 = vunpack.c.l.b16 %v536
    %v1018 = vunpack.c.h.b16 %v536
    %v1019 = vunpack.c.l.b16 %v537
    %v1020 = vunpack.c.h.b16 %v537
    %v1021 = vunpack.c.l.b16 %v538
    %v1022 = vunpack.c.h.b16 %v538
    %v1023 = vunpack.c.l.b16 %v539
    %v1024 = vunpack.c.h.b16 %v539
    %v1025 = vunpack.c.l.b16 %v540
    %v1026 = vunpack.c.h.b16 %v540
    %v1027 = vunpack.c.l.b16 %v541
    %v1028 = vunpack.c.h.b16 %v541
    %v1029 = vunpack.c.l.b16 %v542
    %v1030 = vunpack.c.h.b16 %v542
    %v1031 = vunpack.c.l.b16 %v543
    %v1032 = vunpack.c.h.b16 %v543
    %v1033 = vunpack.c.l.b16 %v544
    %v1034 = vunpack.c.h.b16 %v544
    %v1035 = vpack.c.b16 %v719, %v715
    %v1036 = vpack.c.b16 %v720, %v716
    %v1037 = vpack.c.b16 %v721, %v717
    %v1038 = vpack.c.b16 %v722, %v718
    %v1039 = vpack.c.b16 %v727, %v723
    %v1040 = vpack.c.b16 %v728, %v724
    %v1041 = vpack.c.b16 %v729, %v725
    %v1042 = vpack.c.b16 %v730, %v726
    %v1043 = vpack.c.b16 %v735, %v731
    %v1044 = vpack.c.b16 %v736, %v732
    %v1045 = vpack.c.b16 %v737, %v733
    %v1046 = vpack.c.b16 %v738, %v734
    %v1047 = vpack.c.b16 %v743, %v739
    %v1048 = vpack.c.b16 %v744, %v740
    %v1049 = vpack.c.b16 %v745, %v741
    %v1050 = vpack.c.b16 %v746, %v742
    %v1051 = vpack.c.b16 %v751, %v747
    %v1052 = vpack.c.b16 %v752, %v748
    %v1053 = vpack.c.b16 %v753, %v749
    %v1054 = vpack.c.b16 %v754, %v750
    %v1055 = vpack.c.b16 %v759, %v755
    %v1056 = vpack.c.b16 %v760, %v756
    %v1057 = vpack.c.b16 %v761, %v757
    %v1058 = vpack.c.b16 %v762, %v758
    %v1059 = vpack.c.b16 %v767, %v763
    %v1060 = vpack.c.b16 %v768, %v764
    %v1061 = vpack.c.b16 %v769, %v765
    %v1062 = vpack.c.b16 %v770, %v766
    %v1063 = vpack.c.b16 %v775, %v771
    %v1064 = vpack.c.b16 %v776, %v772
    %v1065 = vpack.c.b16 %v777, %v773
    %v1066 = vpack.c.b16 %v778, %v774
    %v1067 = vpack.c.b16 %v783, %v779
    %v1068 = vpack.c.b16 %v784, %v780
    %v1069 = vpack.c.b16 %v785, %v781
    %v1070 = vpack.c.b16 %v786, %v782
    %v1071 = vpack.c.b16 %v791, %v787
    %v1072 = vpack.c.b16 %v792, %v788
    %v1073 = vpack.c.b16 %v793, %v789
    %v1074 = vpack.c.b16 %v794, %v790
    %v1075 = vpack.c.b16 %v799, %v795
    %v1076 = vpack.c.b16 %v800, %v796
    %v1077 = vpack.c.b16 %v801, %v797
    %v1078 = vpack.c.b16 %v802, %v798
    %v1079 = vpack.c.b16 %v807, %v803
    %v1080 = vpack.c.b16 %v808, %v804
    %v1081 = vpack.c.b16 %v809, %v805
    %v1082 = vpack.c.b16 %v810, %v806
    %v1083 = vpack.c.b16 %v815, %v811
    %v1084 = vpack.c.b16 %v816, %v812
    %v1085 = vpack.c.b16 %v817, %v813
    %v1086 = vpack.c.b16 %v818, %v814
    %v1087 = vpack.c.b16 %v823, %v819
    %v1088 = vpack.c.b16 %v824, %v820
    %v1089 = vpack.c.b16 %v825, %v821
    %v1090 = vpack.c.b16 %v826, %v822
    %v1091 = vpack.c.b16 %v831, %v827
    %v1092 = vpack.c.b16 %v832, %v828
    %v1093 = vpack.c.b16 %v833, %v829
    %v1094 = vpack.c.b16 %v834, %v830
    %v1095 = vpack.c.b16 %v839, %v835
    %v1096 = vpack.c.b16 %v840, %v836
    %v1097 = vpack.c.b16 %v841, %v837
    %v1098 = vpack.c.b16 %v842, %v838
    %v1099 = vpack.c.b16 %v847, %v843
    %v1100 = vpack.c.b16 %v848, %v844
    %v1101 = vpack.c.b16 %v849, %v845
    %v1102 = vpack.c.b16 %v850, %v846
    %v1103 = vpack.c.b16 %v855, %v851
    %v1104 = vpack.c.b16 %v856, %v852
    %v1105 = vpack.c.b16 %v857, %v853
    %v1106 = vpack.c.b16 %v858, %v854
    %v1107 = vpack.c.b16 %v863, %v859
    %v1108 = vpack.c.b16 %v864, %v860
    %v1109 = vpack.c.b16 %v865, %v861
    %v1110 = vpack.c.b16 %v866, %v862
    %v1111 = vpack.c.b16 %v871, %v867
    %v1112 = vpack.c.b16 %v872, %v868
    %v1113 = vpack.c.b16 %v873, %v869
    %v1114 = vpack.c.b16 %v874, %v870
    %v1115 = vpack.c.b16 %v879, %v875
    %v1116 = vpack.c.b16 %v880, %v876
    %v1117 = vpack.c.b16 %v881, %v877
    %v1118 = vpack.c.b16 %v882, %v878
    %v1119 = vpack.c.b16 %v887, %v883
    %v1120 = vpack.c.b16 %v888, %v884
    %v1121 = vpack.c.b16 %v889, %v885
    %v1122 = vpack.c.b16 %v890, %v886
    %v1123 = vpack.c.b16 %v895, %v891
    %v1124 = vpack.c.b16 %v896, %v892
    %v1125 = vpack.c.b16 %v897, %v893
    %v1126 = vpack.c.b16 %v898, %v894
    %v1127 = vpack.c.b16 %v903, %v899
    %v1128 = vpack.c.b16 %v904, %v900
    %v1129 = vpack.c.b16 %v905, %v901
    %v1130 = vpack.c.b16 %v906, %v902
    %v1131 = vpack.c.b16 %v911, %v907
    %v1132 = vpack.c.b16 %v912, %v908
    %v1133 = vpack.c.b16 %v913, %v909
    %v1134 = vpack.c.b16 %v914, %v910
    %v1135 = vpack.c.b16 %v919, %v915
    %v1136 = vpack.c.b16 %v920, %v916
    %v1137 = vpack.c.b16 %v921, %v917
    %v1138 = vpack.c.b16 %v922, %v918
    %v1139 = vpack.c.b16 %v927, %v923
    %v1140 = vpack.c.b16 %v928, %v924
    %v1141 = vpack.c.b16 %v929, %v925
    %v1142 = vpack.c.b16 %v930, %v926
    %v1143 = vpack.c.b16 %v935, %v931
    %v1144 = vpack.c.b16 %v936, %v932
    %v1145 = vpack.c.b16 %v937, %v933
    %v1146 = vpack.c.b16 %v938, %v934
    %v1147 = vpack.c.b16 %v943, %v939
    %v1148 = vpack.c.b16 %v944, %v940
    %v1149 = vpack.c.b16 %v945, %v941
    %v1150 = vpack.c.b16 %v946, %v942
    %v1151 = vpack.c.b16 %v951, %v947
    %v1152 = vpack.c.b16 %v952, %v948
    %v1153 = vpack.c.b16 %v953, %v949
    %v1154 = vpack.c.b16 %v954, %v950
    %v1155 = vpack.c.b16 %v959, %v955
    %v1156 = vpack.c.b16 %v960, %v956
    %v1157 = vpack.c.b16 %v961, %v957
    %v1158 = vpack.c.b16 %v962, %v958
    %v1159 = vpack.c.b16 %v967, %v963
    %v1160 = vpack.c.b16 %v968, %v964
    %v1161 = vpack.c.b16 %v969, %v965
    %v1162 = vpack.c.b16 %v970, %v966
    %v1163 = vpack.c.b16 %v975, %v971
    %v1164 = vpack.c.b16 %v976, %v972
    %v1165 = vpack.c.b16 %v977, %v973
    %v1166 = vpack.c.b16 %v978, %v974
    %v1167 = vpack.c.b16 %v983, %v979
    %v1168 = vpack.c.b16 %v984, %v980
    %v1169 = vpack.c.b16 %v985, %v981
    %v1170 = vpack.c.b16 %v986, %v982
    %v1171 = vpack.c.b16 %v991, %v987
    %v1172 = vpack.c.b16 %v992, %v988
    %v1173 = vpack.c.b16 %v993, %v989
    %v1174 = vpack.c.b16 %v994, %v990
    %v1175 = vpack.c.b16 %v999, %v995
    %v1176 = vpack.c.b16 %v1000, %v996
    %v1177 = vpack.c.b16 %v1001, %v997
    %v1178 = vpack.c.b16 %v1002, %v998
    %v1179 = vpack.c.b16 %v1007, %v1003
    %v1180 = vpack.c.b16 %v1008, %v1004
    %v1181 = vpack.c.b16 %v1009, %v1005
    %v1182 = vpack.c.b16 %v1010, %v1006
    %v1183 = vpack.c.b16 %v1015, %v1011
    %v1184 = vpack.c.b16 %v1016, %v1012
    %v1185 = vpack.c.b16 %v1017, %v1013
    %v1186 = vpack.c.b16 %v1018, %v1014
    %v1187 = vpack.c.b16 %v1023, %v1019
    %v1188 = vpack.c.b16 %v1024, %v1020
    %v1189 = vpack.c.b16 %v1025, %v1021
    %v1190 = vpack.c.b16 %v1026, %v1022
    %v1191 = vpack.c.b16 %v1031, %v1027
    %v1192 = vpack.c.b16 %v1032, %v1028
    %v1193 = vpack.c.b16 %v1033, %v1029
    %v1194 = vpack.c.b16 %v1034, %v1030
    %1355 = vmatpush.bf16.msra.mxu0 %v1063
    %1356 = vmatpush.bf16.msra.mxu0 %v1059
    %1357 = vmatpush.bf16.msra.mxu0 %v1055
    %1358 = vmatpush.bf16.msra.mxu0 %v1051
    %1359 = vmatpush.bf16.msra.mxu0 %v1047
    %1360 = vmatpush.bf16.msra.mxu0 %v1043
    %1361 = vmatpush.bf16.msra.mxu0 %v1039
    %1362 = vmatpush.bf16.msra.mxu0 %v1035
    %1363 = vmatmul.bf16.gmra.mxu0 %v365
    %v1364 = vpop.f32.mrf.mxu0
    %v1365 = vadd.f32 %v547, %v1364
    %v1366 = vpop.f32.mrf.mxu0
    %v1367 = vadd.f32 %v547, %v1366
    %1368 = vmatmul.bf16.gmra.mxu0 %v370
    %v1369 = vpop.f32.mrf.mxu0
    %v1370 = vadd.f32 %v547, %v1369
    %v1371 = vpop.f32.mrf.mxu0
    %v1372 = vadd.f32 %v547, %v1371
    %1373 = vmatmul.bf16.gmra.mxu0 %v375
    %v1374 = vpop.f32.mrf.mxu0
    %v1375 = vadd.f32 %v547, %v1374
    %v1376 = vpop.f32.mrf.mxu0
    %v1377 = vadd.f32 %v547, %v1376
    %1378 = vmatmul.bf16.gmra.mxu0 %v380
    %v1379 = vpop.f32.mrf.mxu0
    %v1380 = vadd.f32 %v547, %v1379
    %v1381 = vpop.f32.mrf.mxu0
    %v1382 = vadd.f32 %v547, %v1381
    %1383 = vdwg.mxu0
    %1384 = vmatpush.bf16.msra.mxu0 %v1095
    %1385 = vmatpush.bf16.msra.mxu0 %v1091
    %1386 = vmatpush.bf16.msra.mxu0 %v1087
    %1387 = vmatpush.bf16.msra.mxu0 %v1083
    %1388 = vmatpush.bf16.msra.mxu0 %v1079
    %1389 = vmatpush.bf16.msra.mxu0 %v1075
    %1390 = vmatpush.bf16.msra.mxu0 %v1071
    %1391 = vmatpush.bf16.msra.mxu0 %v1067
    %1392 = vmatmul.bf16.gmra.mxu0 %v366
    %v1393 = vpop.f32.mrf.mxu0
    %v1394 = vadd.f32 %v1365, %v1393
    %v1395 = vpop.f32.mrf.mxu0
    %v1396 = vadd.f32 %v1367, %v1395
    %1397 = vmatmul.bf16.gmra.mxu0 %v371
    %v1398 = vpop.f32.mrf.mxu0
    %v1399 = vadd.f32 %v1370, %v1398
    %v1400 = vpop.f32.mrf.mxu0
    %v1401 = vadd.f32 %v1372, %v1400
    %1402 = vmatmul.bf16.gmra.mxu0 %v376
    %v1403 = vpop.f32.mrf.mxu0
    %v1404 = vadd.f32 %v1375, %v1403
    %v1405 = vpop.f32.mrf.mxu0
    %v1406 = vadd.f32 %v1377, %v1405
    %1407 = vmatmul.bf16.gmra.mxu0 %v381
    %v1408 = vpop.f32.mrf.mxu0
    %v1409 = vadd.f32 %v1380, %v1408
    %v1410 = vpop.f32.mrf.mxu0
    %v1411 = vadd.f32 %v1382, %v1410
    %1412 = vdwg.mxu0
    %1413 = vmatpush.bf16.msra.mxu0 %v1127
    %1414 = vmatpush.bf16.msra.mxu0 %v1123
    %1415 = vmatpush.bf16.msra.mxu0 %v1119
    %1416 = vmatpush.bf16.msra.mxu0 %v1115
    %1417 = vmatpush.bf16.msra.mxu0 %v1111
    %1418 = vmatpush.bf16.msra.mxu0 %v1107
    %1419 = vmatpush.bf16.msra.mxu0 %v1103
    %1420 = vmatpush.bf16.msra.mxu0 %v1099
    %1421 = vmatmul.bf16.gmra.mxu0 %v367
    %v1422 = vpop.f32.mrf.mxu0
    %v1423 = vadd.f32 %v1394, %v1422
    %v1424 = vpop.f32.mrf.mxu0
    %v1425 = vadd.f32 %v1396, %v1424
    %1426 = vmatmul.bf16.gmra.mxu0 %v372
    %v1427 = vpop.f32.mrf.mxu0
    %v1428 = vadd.f32 %v1399, %v1427
    %v1429 = vpop.f32.mrf.mxu0
    %v1430 = vadd.f32 %v1401, %v1429
    %1431 = vmatmul.bf16.gmra.mxu0 %v377
    %v1432 = vpop.f32.mrf.mxu0
    %v1433 = vadd.f32 %v1404, %v1432
    %v1434 = vpop.f32.mrf.mxu0
    %v1435 = vadd.f32 %v1406, %v1434
    %1436 = vmatmul.bf16.gmra.mxu0 %v382
    %v1437 = vpop.f32.mrf.mxu0
    %v1438 = vadd.f32 %v1409, %v1437
    %v1439 = vpop.f32.mrf.mxu0
    %v1440 = vadd.f32 %v1411, %v1439
    %1441 = vdwg.mxu0
    %1442 = vmatpush.bf16.msra.mxu0 %v1159
    %1443 = vmatpush.bf16.msra.mxu0 %v1155
    %1444 = vmatpush.bf16.msra.mxu0 %v1151
    %1445 = vmatpush.bf16.msra.mxu0 %v1147
    %1446 = vmatpush.bf16.msra.mxu0 %v1143
    %1447 = vmatpush.bf16.msra.mxu0 %v1139
    %1448 = vmatpush.bf16.msra.mxu0 %v1135
    %1449 = vmatpush.bf16.msra.mxu0 %v1131
    %1450 = vmatmul.bf16.gmra.mxu0 %v368
    %v1451 = vpop.f32.mrf.mxu0
    %v1452 = vadd.f32 %v1423, %v1451
    %v1453 = vpop.f32.mrf.mxu0
    %v1454 = vadd.f32 %v1425, %v1453
    %1455 = vmatmul.bf16.gmra.mxu0 %v373
    %v1456 = vpop.f32.mrf.mxu0
    %v1457 = vadd.f32 %v1428, %v1456
    %v1458 = vpop.f32.mrf.mxu0
    %v1459 = vadd.f32 %v1430, %v1458
    %1460 = vmatmul.bf16.gmra.mxu0 %v378
    %v1461 = vpop.f32.mrf.mxu0
    %v1462 = vadd.f32 %v1433, %v1461
    %v1463 = vpop.f32.mrf.mxu0
    %v1464 = vadd.f32 %v1435, %v1463
    %1465 = vmatmul.bf16.gmra.mxu0 %v383
    %v1466 = vpop.f32.mrf.mxu0
    %v1467 = vadd.f32 %v1438, %v1466
    %v1468 = vpop.f32.mrf.mxu0
    %v1469 = vadd.f32 %v1440, %v1468
    %1470 = vdwg.mxu0
    %1471 = vmatpush.bf16.msra.mxu0 %v1191
    %1472 = vmatpush.bf16.msra.mxu0 %v1187
    %1473 = vmatpush.bf16.msra.mxu0 %v1183
    %1474 = vmatpush.bf16.msra.mxu0 %v1179
    %1475 = vmatpush.bf16.msra.mxu0 %v1175
    %1476 = vmatpush.bf16.msra.mxu0 %v1171
    %1477 = vmatpush.bf16.msra.mxu0 %v1167
    %1478 = vmatpush.bf16.msra.mxu0 %v1163
    %1479 = vmatmul.bf16.gmra.mxu0 %v369
    %v1480 = vpop.f32.mrf.mxu0
    %v1481 = vadd.f32 %v1452, %v1480
    %v1482 = vpop.f32.mrf.mxu0
    %v1483 = vadd.f32 %v1454, %v1482
    %1484 = vmatmul.bf16.gmra.mxu0 %v374
    %v1485 = vpop.f32.mrf.mxu0
    %v1486 = vadd.f32 %v1457, %v1485
    %v1487 = vpop.f32.mrf.mxu0
    %v1488 = vadd.f32 %v1459, %v1487
    %1489 = vmatmul.bf16.gmra.mxu0 %v379
    %v1490 = vpop.f32.mrf.mxu0
    %v1491 = vadd.f32 %v1462, %v1490
    %v1492 = vpop.f32.mrf.mxu0
    %v1493 = vadd.f32 %v1464, %v1492
    %1494 = vmatmul.bf16.gmra.mxu0 %v384
    %v1495 = vpop.f32.mrf.mxu0
    %v1496 = vadd.f32 %v1467, %v1495
    %v1497 = vpop.f32.mrf.mxu0
    %v1498 = vadd.f32 %v1469, %v1497
    %1499 = vdwg.mxu0
    %1500 = vmatpush.bf16.msra.mxu0 %v1064
    %1501 = vmatpush.bf16.msra.mxu0 %v1060
    %1502 = vmatpush.bf16.msra.mxu0 %v1056
    %1503 = vmatpush.bf16.msra.mxu0 %v1052
    %1504 = vmatpush.bf16.msra.mxu0 %v1048
    %1505 = vmatpush.bf16.msra.mxu0 %v1044
    %1506 = vmatpush.bf16.msra.mxu0 %v1040
    %1507 = vmatpush.bf16.msra.mxu0 %v1036
    %1508 = vmatmul.bf16.gmra.mxu0 %v365
    %v1509 = vpop.f32.mrf.mxu0
    %v1510 = vadd.f32 %v548, %v1509
    %v1511 = vpop.f32.mrf.mxu0
    %v1512 = vadd.f32 %v548, %v1511
    %1513 = vmatmul.bf16.gmra.mxu0 %v370
    %v1514 = vpop.f32.mrf.mxu0
    %v1515 = vadd.f32 %v548, %v1514
    %v1516 = vpop.f32.mrf.mxu0
    %v1517 = vadd.f32 %v548, %v1516
    %1518 = vmatmul.bf16.gmra.mxu0 %v375
    %v1519 = vpop.f32.mrf.mxu0
    %v1520 = vadd.f32 %v548, %v1519
    %v1521 = vpop.f32.mrf.mxu0
    %v1522 = vadd.f32 %v548, %v1521
    %1523 = vmatmul.bf16.gmra.mxu0 %v380
    %v1524 = vpop.f32.mrf.mxu0
    %v1525 = vadd.f32 %v548, %v1524
    %v1526 = vpop.f32.mrf.mxu0
    %v1527 = vadd.f32 %v548, %v1526
    %1528 = vdwg.mxu0
    %1529 = vmatpush.bf16.msra.mxu0 %v1096
    %1530 = vmatpush.bf16.msra.mxu0 %v1092
    %1531 = vmatpush.bf16.msra.mxu0 %v1088
    %1532 = vmatpush.bf16.msra.mxu0 %v1084
    %1533 = vmatpush.bf16.msra.mxu0 %v1080
    %1534 = vmatpush.bf16.msra.mxu0 %v1076
    %1535 = vmatpush.bf16.msra.mxu0 %v1072
    %1536 = vmatpush.bf16.msra.mxu0 %v1068
    %1537 = vmatmul.bf16.gmra.mxu0 %v366
    %v1538 = vpop.f32.mrf.mxu0
    %v1539 = vadd.f32 %v1510, %v1538
    %v1540 = vpop.f32.mrf.mxu0
    %v1541 = vadd.f32 %v1512, %v1540
    %1542 = vmatmul.bf16.gmra.mxu0 %v371
    %v1543 = vpop.f32.mrf.mxu0
    %v1544 = vadd.f32 %v1515, %v1543
    %v1545 = vpop.f32.mrf.mxu0
    %v1546 = vadd.f32 %v1517, %v1545
    %1547 = vmatmul.bf16.gmra.mxu0 %v376
    %v1548 = vpop.f32.mrf.mxu0
    %v1549 = vadd.f32 %v1520, %v1548
    %v1550 = vpop.f32.mrf.mxu0
    %v1551 = vadd.f32 %v1522, %v1550
    %1552 = vmatmul.bf16.gmra.mxu0 %v381
    %v1553 = vpop.f32.mrf.mxu0
    %v1554 = vadd.f32 %v1525, %v1553
    %v1555 = vpop.f32.mrf.mxu0
    %v1556 = vadd.f32 %v1527, %v1555
    %1557 = vdwg.mxu0
    %1558 = vmatpush.bf16.msra.mxu0 %v1128
    %1559 = vmatpush.bf16.msra.mxu0 %v1124
    %1560 = vmatpush.bf16.msra.mxu0 %v1120
    %1561 = vmatpush.bf16.msra.mxu0 %v1116
    %1562 = vmatpush.bf16.msra.mxu0 %v1112
    %1563 = vmatpush.bf16.msra.mxu0 %v1108
    %1564 = vmatpush.bf16.msra.mxu0 %v1104
    %1565 = vmatpush.bf16.msra.mxu0 %v1100
    %1566 = vmatmul.bf16.gmra.mxu0 %v367
    %v1567 = vpop.f32.mrf.mxu0
    %v1568 = vadd.f32 %v1539, %v1567
    %v1569 = vpop.f32.mrf.mxu0
    %v1570 = vadd.f32 %v1541, %v1569
    %1571 = vmatmul.bf16.gmra.mxu0 %v372
    %v1572 = vpop.f32.mrf.mxu0
    %v1573 = vadd.f32 %v1544, %v1572
    %v1574 = vpop.f32.mrf.mxu0
    %v1575 = vadd.f32 %v1546, %v1574
    %1576 = vmatmul.bf16.gmra.mxu0 %v377
    %v1577 = vpop.f32.mrf.mxu0
    %v1578 = vadd.f32 %v1549, %v1577
    %v1579 = vpop.f32.mrf.mxu0
    %v1580 = vadd.f32 %v1551, %v1579
    %1581 = vmatmul.bf16.gmra.mxu0 %v382
    %v1582 = vpop.f32.mrf.mxu0
    %v1583 = vadd.f32 %v1554, %v1582
    %v1584 = vpop.f32.mrf.mxu0
    %v1585 = vadd.f32 %v1556, %v1584
    %1586 = vdwg.mxu0
    %1587 = vmatpush.bf16.msra.mxu0 %v1160
    %1588 = vmatpush.bf16.msra.mxu0 %v1156
    %1589 = vmatpush.bf16.msra.mxu0 %v1152
    %1590 = vmatpush.bf16.msra.mxu0 %v1148
    %1591 = vmatpush.bf16.msra.mxu0 %v1144
    %1592 = vmatpush.bf16.msra.mxu0 %v1140
    %1593 = vmatpush.bf16.msra.mxu0 %v1136
    %1594 = vmatpush.bf16.msra.mxu0 %v1132
    %1595 = vmatmul.bf16.gmra.mxu0 %v368
    %v1596 = vpop.f32.mrf.mxu0
    %v1597 = vadd.f32 %v1568, %v1596
    %v1598 = vpop.f32.mrf.mxu0
    %v1599 = vadd.f32 %v1570, %v1598
    %1600 = vmatmul.bf16.gmra.mxu0 %v373
    %v1601 = vpop.f32.mrf.mxu0
    %v1602 = vadd.f32 %v1573, %v1601
    %v1603 = vpop.f32.mrf.mxu0
    %v1604 = vadd.f32 %v1575, %v1603
    %1605 = vmatmul.bf16.gmra.mxu0 %v378
    %v1606 = vpop.f32.mrf.mxu0
    %v1607 = vadd.f32 %v1578, %v1606
    %v1608 = vpop.f32.mrf.mxu0
    %v1609 = vadd.f32 %v1580, %v1608
    %1610 = vmatmul.bf16.gmra.mxu0 %v383
    %v1611 = vpop.f32.mrf.mxu0
    %v1612 = vadd.f32 %v1583, %v1611
    %v1613 = vpop.f32.mrf.mxu0
    %v1614 = vadd.f32 %v1585, %v1613
    %1615 = vdwg.mxu0
    %1616 = vmatpush.bf16.msra.mxu0 %v1192
    %1617 = vmatpush.bf16.msra.mxu0 %v1188
    %1618 = vmatpush.bf16.msra.mxu0 %v1184
    %1619 = vmatpush.bf16.msra.mxu0 %v1180
    %1620 = vmatpush.bf16.msra.mxu0 %v1176
    %1621 = vmatpush.bf16.msra.mxu0 %v1172
    %1622 = vmatpush.bf16.msra.mxu0 %v1168
    %1623 = vmatpush.bf16.msra.mxu0 %v1164
    %1624 = vmatmul.bf16.gmra.mxu0 %v369
    %v1625 = vpop.f32.mrf.mxu0
    %v1626 = vadd.f32 %v1597, %v1625
    %v1627 = vpop.f32.mrf.mxu0
    %v1628 = vadd.f32 %v1599, %v1627
    %1629 = vmatmul.bf16.gmra.mxu0 %v374
    %v1630 = vpop.f32.mrf.mxu0
    %v1631 = vadd.f32 %v1602, %v1630
    %v1632 = vpop.f32.mrf.mxu0
    %v1633 = vadd.f32 %v1604, %v1632
    %1634 = vmatmul.bf16.gmra.mxu0 %v379
    %v1635 = vpop.f32.mrf.mxu0
    %v1636 = vadd.f32 %v1607, %v1635
    %v1637 = vpop.f32.mrf.mxu0
    %v1638 = vadd.f32 %v1609, %v1637
    %1639 = vmatmul.bf16.gmra.mxu0 %v384
    %v1640 = vpop.f32.mrf.mxu0
    %v1641 = vadd.f32 %v1612, %v1640
    %v1642 = vpop.f32.mrf.mxu0
    %v1643 = vadd.f32 %v1614, %v1642
    %1644 = vdwg.mxu0
    %1645 = vmatpush.bf16.msra.mxu0 %v1065
    %1646 = vmatpush.bf16.msra.mxu0 %v1061
    %1647 = vmatpush.bf16.msra.mxu0 %v1057
    %1648 = vmatpush.bf16.msra.mxu0 %v1053
    %1649 = vmatpush.bf16.msra.mxu0 %v1049
    %1650 = vmatpush.bf16.msra.mxu0 %v1045
    %1651 = vmatpush.bf16.msra.mxu0 %v1041
    %1652 = vmatpush.bf16.msra.mxu0 %v1037
    %1653 = vmatmul.bf16.gmra.mxu0 %v365
    %v1654 = vpop.f32.mrf.mxu0
    %v1655 = vadd.f32 %v549, %v1654
    %v1656 = vpop.f32.mrf.mxu0
    %v1657 = vadd.f32 %v549, %v1656
    %1658 = vmatmul.bf16.gmra.mxu0 %v370
    %v1659 = vpop.f32.mrf.mxu0
    %v1660 = vadd.f32 %v549, %v1659
    %v1661 = vpop.f32.mrf.mxu0
    %v1662 = vadd.f32 %v549, %v1661
    %1663 = vmatmul.bf16.gmra.mxu0 %v375
    %v1664 = vpop.f32.mrf.mxu0
    %v1665 = vadd.f32 %v549, %v1664
    %v1666 = vpop.f32.mrf.mxu0
    %v1667 = vadd.f32 %v549, %v1666
    %1668 = vmatmul.bf16.gmra.mxu0 %v380
    %v1669 = vpop.f32.mrf.mxu0
    %v1670 = vadd.f32 %v549, %v1669
    %v1671 = vpop.f32.mrf.mxu0
    %v1672 = vadd.f32 %v549, %v1671
    %1673 = vdwg.mxu0
    %1674 = vmatpush.bf16.msra.mxu0 %v1097
    %1675 = vmatpush.bf16.msra.mxu0 %v1093
    %1676 = vmatpush.bf16.msra.mxu0 %v1089
    %1677 = vmatpush.bf16.msra.mxu0 %v1085
    %1678 = vmatpush.bf16.msra.mxu0 %v1081
    %1679 = vmatpush.bf16.msra.mxu0 %v1077
    %1680 = vmatpush.bf16.msra.mxu0 %v1073
    %1681 = vmatpush.bf16.msra.mxu0 %v1069
    %1682 = vmatmul.bf16.gmra.mxu0 %v366
    %v1683 = vpop.f32.mrf.mxu0
    %v1684 = vadd.f32 %v1655, %v1683
    %v1685 = vpop.f32.mrf.mxu0
    %v1686 = vadd.f32 %v1657, %v1685
    %1687 = vmatmul.bf16.gmra.mxu0 %v371
    %v1688 = vpop.f32.mrf.mxu0
    %v1689 = vadd.f32 %v1660, %v1688
    %v1690 = vpop.f32.mrf.mxu0
    %v1691 = vadd.f32 %v1662, %v1690
    %1692 = vmatmul.bf16.gmra.mxu0 %v376
    %v1693 = vpop.f32.mrf.mxu0
    %v1694 = vadd.f32 %v1665, %v1693
    %v1695 = vpop.f32.mrf.mxu0
    %v1696 = vadd.f32 %v1667, %v1695
    %1697 = vmatmul.bf16.gmra.mxu0 %v381
    %v1698 = vpop.f32.mrf.mxu0
    %v1699 = vadd.f32 %v1670, %v1698
    %v1700 = vpop.f32.mrf.mxu0
    %v1701 = vadd.f32 %v1672, %v1700
    %1702 = vdwg.mxu0
    %1703 = vmatpush.bf16.msra.mxu0 %v1129
    %1704 = vmatpush.bf16.msra.mxu0 %v1125
    %1705 = vmatpush.bf16.msra.mxu0 %v1121
    %1706 = vmatpush.bf16.msra.mxu0 %v1117
    %1707 = vmatpush.bf16.msra.mxu0 %v1113
    %1708 = vmatpush.bf16.msra.mxu0 %v1109
    %1709 = vmatpush.bf16.msra.mxu0 %v1105
    %1710 = vmatpush.bf16.msra.mxu0 %v1101
    %1711 = vmatmul.bf16.gmra.mxu0 %v367
    %v1712 = vpop.f32.mrf.mxu0
    %v1713 = vadd.f32 %v1684, %v1712
    %v1714 = vpop.f32.mrf.mxu0
    %v1715 = vadd.f32 %v1686, %v1714
    %1716 = vmatmul.bf16.gmra.mxu0 %v372
    %v1717 = vpop.f32.mrf.mxu0
    %v1718 = vadd.f32 %v1689, %v1717
    %v1719 = vpop.f32.mrf.mxu0
    %v1720 = vadd.f32 %v1691, %v1719
    %1721 = vmatmul.bf16.gmra.mxu0 %v377
    %v1722 = vpop.f32.mrf.mxu0
    %v1723 = vadd.f32 %v1694, %v1722
    %v1724 = vpop.f32.mrf.mxu0
    %v1725 = vadd.f32 %v1696, %v1724
    %1726 = vmatmul.bf16.gmra.mxu0 %v382
    %v1727 = vpop.f32.mrf.mxu0
    %v1728 = vadd.f32 %v1699, %v1727
    %v1729 = vpop.f32.mrf.mxu0
    %v1730 = vadd.f32 %v1701, %v1729
    %1731 = vdwg.mxu0
    %1732 = vmatpush.bf16.msra.mxu0 %v1161
    %1733 = vmatpush.bf16.msra.mxu0 %v1157
    %1734 = vmatpush.bf16.msra.mxu0 %v1153
    %1735 = vmatpush.bf16.msra.mxu0 %v1149
    %1736 = vmatpush.bf16.msra.mxu0 %v1145
    %1737 = vmatpush.bf16.msra.mxu0 %v1141
    %1738 = vmatpush.bf16.msra.mxu0 %v1137
    %1739 = vmatpush.bf16.msra.mxu0 %v1133
    %1740 = vmatmul.bf16.gmra.mxu0 %v368
    %v1741 = vpop.f32.mrf.mxu0
    %v1742 = vadd.f32 %v1713, %v1741
    %v1743 = vpop.f32.mrf.mxu0
    %v1744 = vadd.f32 %v1715, %v1743
    %1745 = vmatmul.bf16.gmra.mxu0 %v373
    %v1746 = vpop.f32.mrf.mxu0
    %v1747 = vadd.f32 %v1718, %v1746
    %v1748 = vpop.f32.mrf.mxu0
    %v1749 = vadd.f32 %v1720, %v1748
    %1750 = vmatmul.bf16.gmra.mxu0 %v378
    %v1751 = vpop.f32.mrf.mxu0
    %v1752 = vadd.f32 %v1723, %v1751
    %v1753 = vpop.f32.mrf.mxu0
    %v1754 = vadd.f32 %v1725, %v1753
    %1755 = vmatmul.bf16.gmra.mxu0 %v383
    %v1756 = vpop.f32.mrf.mxu0
    %v1757 = vadd.f32 %v1728, %v1756
    %v1758 = vpop.f32.mrf.mxu0
    %v1759 = vadd.f32 %v1730, %v1758
    %1760 = vdwg.mxu0
    %1761 = vmatpush.bf16.msra.mxu0 %v1193
    %1762 = vmatpush.bf16.msra.mxu0 %v1189
    %1763 = vmatpush.bf16.msra.mxu0 %v1185
    %1764 = vmatpush.bf16.msra.mxu0 %v1181
    %1765 = vmatpush.bf16.msra.mxu0 %v1177
    %1766 = vmatpush.bf16.msra.mxu0 %v1173
    %1767 = vmatpush.bf16.msra.mxu0 %v1169
    %1768 = vmatpush.bf16.msra.mxu0 %v1165
    %1769 = vmatmul.bf16.gmra.mxu0 %v369
    %v1770 = vpop.f32.mrf.mxu0
    %v1771 = vadd.f32 %v1742, %v1770
    %v1772 = vpop.f32.mrf.mxu0
    %v1773 = vadd.f32 %v1744, %v1772
    %1774 = vmatmul.bf16.gmra.mxu0 %v374
    %v1775 = vpop.f32.mrf.mxu0
    %v1776 = vadd.f32 %v1747, %v1775
    %v1777 = vpop.f32.mrf.mxu0
    %v1778 = vadd.f32 %v1749, %v1777
    %1779 = vmatmul.bf16.gmra.mxu0 %v379
    %v1780 = vpop.f32.mrf.mxu0
    %v1781 = vadd.f32 %v1752, %v1780
    %v1782 = vpop.f32.mrf.mxu0
    %v1783 = vadd.f32 %v1754, %v1782
    %1784 = vmatmul.bf16.gmra.mxu0 %v384
    %v1785 = vpop.f32.mrf.mxu0
    %v1786 = vadd.f32 %v1757, %v1785
    %v1787 = vpop.f32.mrf.mxu0
    %v1788 = vadd.f32 %v1759, %v1787
    %1789 = vdwg.mxu0
    %1790 = vmatpush.bf16.msra.mxu0 %v1066
    %1791 = vmatpush.bf16.msra.mxu0 %v1062
    %1792 = vmatpush.bf16.msra.mxu0 %v1058
    %1793 = vmatpush.bf16.msra.mxu0 %v1054
    %1794 = vmatpush.bf16.msra.mxu0 %v1050
    %1795 = vmatpush.bf16.msra.mxu0 %v1046
    %1796 = vmatpush.bf16.msra.mxu0 %v1042
    %1797 = vmatpush.bf16.msra.mxu0 %v1038
    %1798 = vmatmul.bf16.gmra.mxu0 %v365
    %v1799 = vpop.f32.mrf.mxu0
    %v1800 = vadd.f32 %v550, %v1799
    %v1801 = vpop.f32.mrf.mxu0
    %v1802 = vadd.f32 %v550, %v1801
    %1803 = vmatmul.bf16.gmra.mxu0 %v370
    %v1804 = vpop.f32.mrf.mxu0
    %v1805 = vadd.f32 %v550, %v1804
    %v1806 = vpop.f32.mrf.mxu0
    %v1807 = vadd.f32 %v550, %v1806
    %1808 = vmatmul.bf16.gmra.mxu0 %v375
    %v1809 = vpop.f32.mrf.mxu0
    %v1810 = vadd.f32 %v550, %v1809
    %v1811 = vpop.f32.mrf.mxu0
    %v1812 = vadd.f32 %v550, %v1811
    %1813 = vmatmul.bf16.gmra.mxu0 %v380
    %v1814 = vpop.f32.mrf.mxu0
    %v1815 = vadd.f32 %v550, %v1814
    %v1816 = vpop.f32.mrf.mxu0
    %v1817 = vadd.f32 %v550, %v1816
    %1818 = vdwg.mxu0
    %1819 = vmatpush.bf16.msra.mxu0 %v1098
    %1820 = vmatpush.bf16.msra.mxu0 %v1094
    %1821 = vmatpush.bf16.msra.mxu0 %v1090
    %1822 = vmatpush.bf16.msra.mxu0 %v1086
    %1823 = vmatpush.bf16.msra.mxu0 %v1082
    %1824 = vmatpush.bf16.msra.mxu0 %v1078
    %1825 = vmatpush.bf16.msra.mxu0 %v1074
    %1826 = vmatpush.bf16.msra.mxu0 %v1070
    %1827 = vmatmul.bf16.gmra.mxu0 %v366
    %v1828 = vpop.f32.mrf.mxu0
    %v1829 = vadd.f32 %v1800, %v1828
    %v1830 = vpop.f32.mrf.mxu0
    %v1831 = vadd.f32 %v1802, %v1830
    %1832 = vmatmul.bf16.gmra.mxu0 %v371
    %v1833 = vpop.f32.mrf.mxu0
    %v1834 = vadd.f32 %v1805, %v1833
    %v1835 = vpop.f32.mrf.mxu0
    %v1836 = vadd.f32 %v1807, %v1835
    %1837 = vmatmul.bf16.gmra.mxu0 %v376
    %v1838 = vpop.f32.mrf.mxu0
    %v1839 = vadd.f32 %v1810, %v1838
    %v1840 = vpop.f32.mrf.mxu0
    %v1841 = vadd.f32 %v1812, %v1840
    %1842 = vmatmul.bf16.gmra.mxu0 %v381
    %v1843 = vpop.f32.mrf.mxu0
    %v1844 = vadd.f32 %v1815, %v1843
    %v1845 = vpop.f32.mrf.mxu0
    %v1846 = vadd.f32 %v1817, %v1845
    %1847 = vdwg.mxu0
    %1848 = vmatpush.bf16.msra.mxu0 %v1130
    %1849 = vmatpush.bf16.msra.mxu0 %v1126
    %1850 = vmatpush.bf16.msra.mxu0 %v1122
    %1851 = vmatpush.bf16.msra.mxu0 %v1118
    %1852 = vmatpush.bf16.msra.mxu0 %v1114
    %1853 = vmatpush.bf16.msra.mxu0 %v1110
    %1854 = vmatpush.bf16.msra.mxu0 %v1106
    %1855 = vmatpush.bf16.msra.mxu0 %v1102
    %1856 = vmatmul.bf16.gmra.mxu0 %v367
    %v1857 = vpop.f32.mrf.mxu0
    %v1858 = vadd.f32 %v1829, %v1857
    %v1859 = vpop.f32.mrf.mxu0
    %v1860 = vadd.f32 %v1831, %v1859
    %1861 = vmatmul.bf16.gmra.mxu0 %v372
    %v1862 = vpop.f32.mrf.mxu0
    %v1863 = vadd.f32 %v1834, %v1862
    %v1864 = vpop.f32.mrf.mxu0
    %v1865 = vadd.f32 %v1836, %v1864
    %1866 = vmatmul.bf16.gmra.mxu0 %v377
    %v1867 = vpop.f32.mrf.mxu0
    %v1868 = vadd.f32 %v1839, %v1867
    %v1869 = vpop.f32.mrf.mxu0
    %v1870 = vadd.f32 %v1841, %v1869
    %1871 = vmatmul.bf16.gmra.mxu0 %v382
    %v1872 = vpop.f32.mrf.mxu0
    %v1873 = vadd.f32 %v1844, %v1872
    %v1874 = vpop.f32.mrf.mxu0
    %v1875 = vadd.f32 %v1846, %v1874
    %1876 = vdwg.mxu0
    %1877 = vmatpush.bf16.msra.mxu0 %v1162
    %1878 = vmatpush.bf16.msra.mxu0 %v1158
    %1879 = vmatpush.bf16.msra.mxu0 %v1154
    %1880 = vmatpush.bf16.msra.mxu0 %v1150
    %1881 = vmatpush.bf16.msra.mxu0 %v1146
    %1882 = vmatpush.bf16.msra.mxu0 %v1142
    %1883 = vmatpush.bf16.msra.mxu0 %v1138
    %1884 = vmatpush.bf16.msra.mxu0 %v1134
    %1885 = vmatmul.bf16.gmra.mxu0 %v368
    %v1886 = vpop.f32.mrf.mxu0
    %v1887 = vadd.f32 %v1858, %v1886
    %v1888 = vpop.f32.mrf.mxu0
    %v1889 = vadd.f32 %v1860, %v1888
    %1890 = vmatmul.bf16.gmra.mxu0 %v373
    %v1891 = vpop.f32.mrf.mxu0
    %v1892 = vadd.f32 %v1863, %v1891
    %v1893 = vpop.f32.mrf.mxu0
    %v1894 = vadd.f32 %v1865, %v1893
    %1895 = vmatmul.bf16.gmra.mxu0 %v378
    %v1896 = vpop.f32.mrf.mxu0
    %v1897 = vadd.f32 %v1868, %v1896
    %v1898 = vpop.f32.mrf.mxu0
    %v1899 = vadd.f32 %v1870, %v1898
    %1900 = vmatmul.bf16.gmra.mxu0 %v383
    %v1901 = vpop.f32.mrf.mxu0
    %v1902 = vadd.f32 %v1873, %v1901
    %v1903 = vpop.f32.mrf.mxu0
    %v1904 = vadd.f32 %v1875, %v1903
    %1905 = vdwg.mxu0
    %1906 = vmatpush.bf16.msra.mxu0 %v1194
    %1907 = vmatpush.bf16.msra.mxu0 %v1190
    %1908 = vmatpush.bf16.msra.mxu0 %v1186
    %1909 = vmatpush.bf16.msra.mxu0 %v1182
    %1910 = vmatpush.bf16.msra.mxu0 %v1178
    %1911 = vmatpush.bf16.msra.mxu0 %v1174
    %1912 = vmatpush.bf16.msra.mxu0 %v1170
    %1913 = vmatpush.bf16.msra.mxu0 %v1166
    %1914 = vmatmul.bf16.gmra.mxu0 %v369
    %v1915 = vpop.f32.mrf.mxu0
    %v1916 = vadd.f32 %v1887, %v1915
    %v1917 = vpop.f32.mrf.mxu0
    %v1918 = vadd.f32 %v1889, %v1917
    %1919 = vmatmul.bf16.gmra.mxu0 %v374
    %v1920 = vpop.f32.mrf.mxu0
    %v1921 = vadd.f32 %v1892, %v1920
    %v1922 = vpop.f32.mrf.mxu0
    %v1923 = vadd.f32 %v1894, %v1922
    %1924 = vmatmul.bf16.gmra.mxu0 %v379
    %v1925 = vpop.f32.mrf.mxu0
    %v1926 = vadd.f32 %v1897, %v1925
    %v1927 = vpop.f32.mrf.mxu0
    %v1928 = vadd.f32 %v1899, %v1927
    %1929 = vmatmul.bf16.gmra.mxu0 %v384
    %v1930 = vpop.f32.mrf.mxu0
    %v1931 = vadd.f32 %v1902, %v1930
    %v1932 = vpop.f32.mrf.mxu0
    %v1933 = vadd.f32 %v1904, %v1932
    %1934 = vdwg.mxu0
    %v1935 = vmax.f32 %v1481, 0.0
    %v1936 = vmax.f32 %v1626, 0.0
    %v1937 = vmax.f32 %v1771, 0.0
    %v1938 = vmax.f32 %v1916, 0.0
    %v1939 = vmax.f32 %v1483, 0.0
    %v1940 = vmax.f32 %v1628, 0.0
    %v1941 = vmax.f32 %v1773, 0.0
    %v1942 = vmax.f32 %v1918, 0.0
    %v1943 = vmax.f32 %v1486, 0.0
    %v1944 = vmax.f32 %v1631, 0.0
    %v1945 = vmax.f32 %v1776, 0.0
    %v1946 = vmax.f32 %v1921, 0.0
    %v1947 = vmax.f32 %v1488, 0.0
    %v1948 = vmax.f32 %v1633, 0.0
    %v1949 = vmax.f32 %v1778, 0.0
    %v1950 = vmax.f32 %v1923, 0.0
    %v1951 = vmax.f32 %v1491, 0.0
    %v1952 = vmax.f32 %v1636, 0.0
    %v1953 = vmax.f32 %v1781, 0.0
    %v1954 = vmax.f32 %v1926, 0.0
    %v1955 = vmax.f32 %v1493, 0.0
    %v1956 = vmax.f32 %v1638, 0.0
    %v1957 = vmax.f32 %v1783, 0.0
    %v1958 = vmax.f32 %v1928, 0.0
    %v1959 = vmax.f32 %v1496, 0.0
    %v1960 = vmax.f32 %v1641, 0.0
    %v1961 = vmax.f32 %v1786, 0.0
    %v1962 = vmax.f32 %v1931, 0.0
    %v1963 = vmax.f32 %v1498, 0.0
    %v1964 = vmax.f32 %v1643, 0.0
    %v1965 = vmax.f32 %v1788, 0.0
    %v1966 = vmax.f32 %v1933, 0.0
    %v1967 = vmax.f32 %v1935, %v1937
    %v1968 = vmax.f32 %v1936, %v1938
    %v1969 = vmax.f32 %v1939, %v1941
    %v1970 = vmax.f32 %v1940, %v1942
    %v1971 = vmax.f32 %v1943, %v1945
    %v1972 = vmax.f32 %v1944, %v1946
    %v1973 = vmax.f32 %v1947, %v1949
    %v1974 = vmax.f32 %v1948, %v1950
    %v1975 = vmax.f32 %v1951, %v1953
    %v1976 = vmax.f32 %v1952, %v1954
    %v1977 = vmax.f32 %v1955, %v1957
    %v1978 = vmax.f32 %v1956, %v1958
    %v1979 = vmax.f32 %v1959, %v1961
    %v1980 = vmax.f32 %v1960, %v1962
    %v1981 = vmax.f32 %v1963, %v1965
    %v1982 = vmax.f32 %v1964, %v1966
    %v1999 = vrot.slane %v1968, 4
    %v2000 = vrot.slane %v1970, 4
    %v2001 = vrot.slane %v1972, 4
    %v2002 = vrot.slane %v1974, 4
    %v2003 = vrot.slane %v1976, 4
    %v2004 = vrot.slane %v1978, 4
    %v2005 = vrot.slane %v1980, 4
    %v2006 = vrot.slane %v1982, 4
    %vm2007 = vcmask 1043456
    %v2008 = vsel %vm2007, %v1967, %v1999
    %v2009 = vsel %vm2007, %v1999, %v1967
    %v2010 = vrot.slane %v2009, 4
    %v2011 = vsel %vm2007, %v1969, %v2000
    %v2012 = vsel %vm2007, %v2000, %v1969
    %v2013 = vrot.slane %v2012, 4
    %v2014 = vsel %vm2007, %v1971, %v2001
    %v2015 = vsel %vm2007, %v2001, %v1971
    %v2016 = vrot.slane %v2015, 4
    %v2017 = vsel %vm2007, %v1973, %v2002
    %v2018 = vsel %vm2007, %v2002, %v1973
    %v2019 = vrot.slane %v2018, 4
    %v2020 = vsel %vm2007, %v1975, %v2003
    %v2021 = vsel %vm2007, %v2003, %v1975
    %v2022 = vrot.slane %v2021, 4
    %v2023 = vsel %vm2007, %v1977, %v2004
    %v2024 = vsel %vm2007, %v2004, %v1977
    %v2025 = vrot.slane %v2024, 4
    %v2026 = vsel %vm2007, %v1979, %v2005
    %v2027 = vsel %vm2007, %v2005, %v1979
    %v2028 = vrot.slane %v2027, 4
    %v2029 = vsel %vm2007, %v1981, %v2006
    %v2030 = vsel %vm2007, %v2006, %v1981
    %v2031 = vrot.slane %v2030, 4
    %v2049 = vunpack.c.l.s4 1966171168
    %v2050 = vunpack.c.0.s8 %v2049
    %v2051 = vperm.slane %v2008, %v2050
    %v2053 = vunpack.c.l.s4 1966171168
    %v2054 = vunpack.c.0.s8 %v2053
    %v2055 = vperm.slane %v2010, %v2054
    %v2057 = vunpack.c.l.s4 1966171168
    %v2058 = vunpack.c.0.s8 %v2057
    %v2059 = vperm.slane %v2011, %v2058
    %v2061 = vunpack.c.l.s4 1966171168
    %v2062 = vunpack.c.0.s8 %v2061
    %v2063 = vperm.slane %v2013, %v2062
    %v2065 = vunpack.c.l.s4 1966171168
    %v2066 = vunpack.c.0.s8 %v2065
    %v2067 = vperm.slane %v2014, %v2066
    %v2069 = vunpack.c.l.s4 1966171168
    %v2070 = vunpack.c.0.s8 %v2069
    %v2071 = vperm.slane %v2016, %v2070
    %v2073 = vunpack.c.l.s4 1966171168
    %v2074 = vunpack.c.0.s8 %v2073
    %v2075 = vperm.slane %v2017, %v2074
    %v2077 = vunpack.c.l.s4 1966171168
    %v2078 = vunpack.c.0.s8 %v2077
    %v2079 = vperm.slane %v2019, %v2078
    %v2081 = vunpack.c.l.s4 1966171168
    %v2082 = vunpack.c.0.s8 %v2081
    %v2083 = vperm.slane %v2020, %v2082
    %v2085 = vunpack.c.l.s4 1966171168
    %v2086 = vunpack.c.0.s8 %v2085
    %v2087 = vperm.slane %v2022, %v2086
    %v2089 = vunpack.c.l.s4 1966171168
    %v2090 = vunpack.c.0.s8 %v2089
    %v2091 = vperm.slane %v2023, %v2090
    %v2093 = vunpack.c.l.s4 1966171168
    %v2094 = vunpack.c.0.s8 %v2093
    %v2095 = vperm.slane %v2025, %v2094
    %v2097 = vunpack.c.l.s4 1966171168
    %v2098 = vunpack.c.0.s8 %v2097
    %v2099 = vperm.slane %v2026, %v2098
    %v2101 = vunpack.c.l.s4 1966171168
    %v2102 = vunpack.c.0.s8 %v2101
    %v2103 = vperm.slane %v2028, %v2102
    %v2105 = vunpack.c.l.s4 1966171168
    %v2106 = vunpack.c.0.s8 %v2105
    %v2107 = vperm.slane %v2029, %v2106
    %v2109 = vunpack.c.l.s4 1966171168
    %v2110 = vunpack.c.0.s8 %v2109
    %v2111 = vperm.slane %v2031, %v2110
    %v2128 = vrot.slane %v2051, 4
    %v2129 = vrot.slane %v2055, 4
    %v2130 = vrot.slane %v2059, 4
    %v2131 = vrot.slane %v2063, 4
    %v2132 = vrot.slane %v2067, 4
    %v2133 = vrot.slane %v2071, 4
    %v2134 = vrot.slane %v2075, 4
    %v2135 = vrot.slane %v2079, 4
    %v2136 = vrot.slane %v2083, 4
    %v2137 = vrot.slane %v2087, 4
    %v2138 = vrot.slane %v2091, 4
    %v2139 = vrot.slane %v2095, 4
    %v2140 = vrot.slane %v2099, 4
    %v2141 = vrot.slane %v2103, 4
    %v2142 = vrot.slane %v2107, 4
    %v2143 = vrot.slane %v2111, 4
    %v2160 = vmax.f32 %v2051, %v2128
    %v2161 = vmax.f32 %v2055, %v2129
    %v2162 = vmax.f32 %v2059, %v2130
    %v2163 = vmax.f32 %v2063, %v2131
    %v2164 = vmax.f32 %v2067, %v2132
    %v2165 = vmax.f32 %v2071, %v2133
    %v2166 = vmax.f32 %v2075, %v2134
    %v2167 = vmax.f32 %v2079, %v2135
    %v2168 = vmax.f32 %v2083, %v2136
    %v2169 = vmax.f32 %v2087, %v2137
    %v2170 = vmax.f32 %v2091, %v2138
    %v2171 = vmax.f32 %v2095, %v2139
    %v2172 = vmax.f32 %v2099, %v2140
    %v2173 = vmax.f32 %v2103, %v2141
    %v2174 = vmax.f32 %v2107, %v2142
    %v2175 = vmax.f32 %v2111, %v2143
    %2192 = vst [vmem:[#allocation1] ss:$4 sm:$0xff] %v2160
    %s2193 = scalar_lea.vmem [#allocation1], 1
    %2194 = vst [vmem:[%s2193] ss:$4 sm:$0xff] %v2161
    %s2195 = scalar_lea.vmem [#allocation1], 2
    %2196 = vst [vmem:[%s2195] ss:$4 sm:$0xff] %v2162
    %s2197 = scalar_lea.vmem [#allocation1], 3
    %2198 = vst [vmem:[%s2197] ss:$4 sm:$0xff] %v2163
    %s2199 = scalar_lea.vmem [#allocation1], 32
    %2200 = vst [vmem:[%s2199] ss:$4 sm:$0xff] %v2164
    %s2201 = scalar_lea.vmem [#allocation1], 33
    %2202 = vst [vmem:[%s2201] ss:$4 sm:$0xff] %v2165
    %s2203 = scalar_lea.vmem [#allocation1], 34
    %2204 = vst [vmem:[%s2203] ss:$4 sm:$0xff] %v2166
    %s2205 = scalar_lea.vmem [#allocation1], 35
    %2206 = vst [vmem:[%s2205] ss:$4 sm:$0xff] %v2167
    %v2207 = vld.sshfl [vmem:[#allocation1] sm:$0xff pattern:$0x73625140]
    %v2208 = vld.sshfl [vmem:[#allocation1 + $0x8] sm:$0xff pattern:$0x73625140]
    %v2209 = vld.sshfl [vmem:[#allocation1 + $0x20] sm:$0xff pattern:$0x73625140]
    %v2210 = vld.sshfl [vmem:[#allocation1 + $0x28] sm:$0xff pattern:$0x73625140]
    %2211 = vst [vmem:[#allocation1] ss:$4 sm:$0xff] %v2168
    %2212 = vst [vmem:[%s2193] ss:$4 sm:$0xff] %v2169
    %2213 = vst [vmem:[%s2195] ss:$4 sm:$0xff] %v2170
    %2214 = vst [vmem:[%s2197] ss:$4 sm:$0xff] %v2171
    %2215 = vst [vmem:[%s2199] ss:$4 sm:$0xff] %v2172
    %2216 = vst [vmem:[%s2201] ss:$4 sm:$0xff] %v2173
    %2217 = vst [vmem:[%s2203] ss:$4 sm:$0xff] %v2174
    %2218 = vst [vmem:[%s2205] ss:$4 sm:$0xff] %v2175
    %v2219 = vld.sshfl [vmem:[#allocation1] sm:$0xff pattern:$0x73625140]
    %v2220 = vld.sshfl [vmem:[#allocation1 + $0x8] sm:$0xff pattern:$0x73625140]
    %v2221 = vld.sshfl [vmem:[#allocation1 + $0x20] sm:$0xff pattern:$0x73625140]
    %v2222 = vld.sshfl [vmem:[#allocation1 + $0x28] sm:$0xff pattern:$0x73625140]
    %2231 = vst [vmem:[#allocation7] sm:$0xff] %v2207
    %2232 = vst [vmem:[#allocation7 + $0x8] sm:$0xff] %v2208
    %2233 = vst [vmem:[#allocation7 + $0x10] sm:$0xff] %v2209
    %2234 = vst [vmem:[#allocation7 + $0x18] sm:$0xff] %v2210
    %2235 = vst [vmem:[#allocation7 + $0x20] sm:$0xff] %v2219
    %2236 = vst [vmem:[#allocation7 + $0x28] sm:$0xff] %v2220
    %2237 = vst [vmem:[#allocation7 + $0x30] sm:$0xff] %v2221
    %2238 = vst [vmem:[#allocation7 + $0x38] sm:$0xff] %v2222
    %2239 = vst [vmem:[#allocation8] sm:$0xff] 0.0
    %2240 = vst [vmem:[#allocation8 + $0x8] sm:$0xff] 0.0
    %2241 = vst [vmem:[#allocation8 + $0x10] sm:$0xff] 0.0
    %2242 = vst [vmem:[#allocation8 + $0x18] sm:$0xff] 0.0
    %2243 = vst [vmem:[#allocation8 + $0x20] sm:$0xff] 0.0
    %2244 = vst [vmem:[#allocation8 + $0x28] sm:$0xff] 0.0
    %2245 = vst [vmem:[#allocation8 + $0x30] sm:$0xff] 0.0
    %2246 = vst [vmem:[#allocation8 + $0x38] sm:$0xff] 0.0
    %2247 = vst [vmem:[#allocation8 + $0x40] sm:$0xff] 0.0
    %2248 = vst [vmem:[#allocation8 + $0x48] sm:$0xff] 0.0
    %2249 = vst [vmem:[#allocation8 + $0x50] sm:$0xff] 0.0
    %2250 = vst [vmem:[#allocation8 + $0x58] sm:$0xff] 0.0
    %2251 = vst [vmem:[#allocation8 + $0x60] sm:$0xff] 0.0
    %2252 = vst [vmem:[#allocation8 + $0x68] sm:$0xff] 0.0
    %2253 = vst [vmem:[#allocation8 + $0x70] sm:$0xff] 0.0
    %2254 = vst [vmem:[#allocation8 + $0x78] sm:$0xff] 0.0
    %2255 = vst [vmem:[#allocation8 + $0x80] sm:$0xff] 0.0
    %2256 = vst [vmem:[#allocation8 + $0x88] sm:$0xff] 0.0
    %2257 = vst [vmem:[#allocation8 + $0x90] sm:$0xff] 0.0
    %2258 = vst [vmem:[#allocation8 + $0x98] sm:$0xff] 0.0
    %2259 = vst [vmem:[#allocation8 + $0xa0] sm:$0xff] 0.0
    %2260 = vst [vmem:[#allocation8 + $0xa8] sm:$0xff] 0.0
    %2261 = vst [vmem:[#allocation8 + $0xb0] sm:$0xff] 0.0
    %2262 = vst [vmem:[#allocation8 + $0xb8] sm:$0xff] 0.0
    %2263 = vst [vmem:[#allocation8 + $0xc0] sm:$0xff] 0.0
    %2264 = vst [vmem:[#allocation8 + $0xc8] sm:$0xff] 0.0
    %2265 = vst [vmem:[#allocation8 + $0xd0] sm:$0xff] 0.0
    %2266 = vst [vmem:[#allocation8 + $0xd8] sm:$0xff] 0.0
    %2267 = vst [vmem:[#allocation8 + $0xe0] sm:$0xff] 0.0
    %2268 = vst [vmem:[#allocation8 + $0xe8] sm:$0xff] 0.0
    %2269 = vst [vmem:[#allocation8 + $0xf0] sm:$0xff] 0.0
    %2270 = vst [vmem:[#allocation8 + $0xf8] sm:$0xff] 0.0
    %2271 = vst [vmem:[#allocation8 + $0x100] sm:$0xff] 0.0
    %2272 = vst [vmem:[#allocation8 + $0x108] sm:$0xff] 0.0
    %2273 = vst [vmem:[#allocation8 + $0x110] sm:$0xff] 0.0
    %2274 = vst [vmem:[#allocation8 + $0x118] sm:$0xff] 0.0
    %2275 = vst [vmem:[#allocation8 + $0x120] sm:$0xff] 0.0
    %2276 = vst [vmem:[#allocation8 + $0x128] sm:$0xff] 0.0
    %2277 = vst [vmem:[#allocation8 + $0x130] sm:$0xff] 0.0
    %2278 = vst [vmem:[#allocation8 + $0x138] sm:$0xff] 0.0
    %v2279 = vld [vmem:[#allocation7] sm:$0xff]
    %v2280 = vld [vmem:[#allocation7 + $0x8] sm:$0xff]
    %v2281 = vld [vmem:[#allocation7 + $0x10] sm:$0x3f]
    %v2282 = vld [vmem:[#allocation7 + $0x18] sm:$0x3f]
    %v2283 = vld [vmem:[#allocation7 + $0x20] sm:$0xff]
    %v2284 = vld [vmem:[#allocation7 + $0x28] sm:$0xff]
    %v2285 = vld [vmem:[#allocation7 + $0x30] sm:$0x3f]
    %v2286 = vld [vmem:[#allocation7 + $0x38] sm:$0x3f]
    %v2295 = vrot.slane %v2279, 6
    %v2296 = vrot.slane %v2280, 6
    %v2297 = vrot.slane %v2281, 6
    %v2298 = vsel %vm194, %v2295, %v2297
    %v2299 = vrot.slane %v2282, 6
    %v2300 = vsel %vm194, %v2296, %v2299
    %v2301 = vrot.slane %v2283, 6
    %v2302 = vrot.slane %v2284, 6
    %v2303 = vrot.slane %v2285, 6
    %v2304 = vsel %vm194, %v2301, %v2303
    %v2305 = vrot.slane %v2286, 6
    %v2306 = vsel %vm194, %v2302, %v2305
    %2315 = vst [vmem:[#allocation8] sm:$0xfc] %v2295
    %2316 = vst [vmem:[#allocation8 + $0x8] sm:$0xfc] %v2296
    %2317 = vst [vmem:[#allocation8 + $0x50] sm:$0xff] %v2298
    %2318 = vst [vmem:[#allocation8 + $0x58] sm:$0xff] %v2300
    %2319 = vst [vmem:[#allocation8 + $0xa0] sm:$0xfc] %v2301
    %2320 = vst [vmem:[#allocation8 + $0xa8] sm:$0xfc] %v2302
    %2321 = vst [vmem:[#allocation8 + $0xf0] sm:$0xff] %v2304
    %2322 = vst [vmem:[#allocation8 + $0xf8] sm:$0xff] %v2306
    %v2323 = vld [vmem:[#allocation7] sm:$0xff]
    %v2324 = vld [vmem:[#allocation7 + $0x8] sm:$0xff]
    %v2325 = vld [vmem:[#allocation7 + $0x10] sm:$0x7f]
    %v2326 = vld [vmem:[#allocation7 + $0x18] sm:$0x7f]
    %v2327 = vld [vmem:[#allocation7 + $0x20] sm:$0xff]
    %v2328 = vld [vmem:[#allocation7 + $0x28] sm:$0xff]
    %v2329 = vld [vmem:[#allocation7 + $0x30] sm:$0x7f]
    %v2330 = vld [vmem:[#allocation7 + $0x38] sm:$0x7f]
    %v2339 = vrot.slane %v2323, 7
    %v2340 = vrot.slane %v2324, 7
    %v2341 = vrot.slane %v2325, 7
    %v2342 = vsel %vm243, %v2339, %v2341
    %v2343 = vrot.slane %v2326, 7
    %v2344 = vsel %vm243, %v2340, %v2343
    %v2345 = vrot.slane %v2327, 7
    %v2346 = vrot.slane %v2328, 7
    %v2347 = vrot.slane %v2329, 7
    %v2348 = vsel %vm243, %v2345, %v2347
    %v2349 = vrot.slane %v2330, 7
    %v2350 = vsel %vm243, %v2346, %v2349
    %2359 = vst [vmem:[#allocation8 + $0x10] sm:$0xfe] %v2339
    %2360 = vst [vmem:[#allocation8 + $0x18] sm:$0xfe] %v2340
    %2361 = vst [vmem:[#allocation8 + $0x60] sm:$0xff] %v2342
    %2362 = vst [vmem:[#allocation8 + $0x68] sm:$0xff] %v2344
    %2363 = vst [vmem:[#allocation8 + $0xb0] sm:$0xfe] %v2345
    %2364 = vst [vmem:[#allocation8 + $0xb8] sm:$0xfe] %v2346
    %2365 = vst [vmem:[#allocation8 + $0x100] sm:$0xff] %v2348
    %2366 = vst [vmem:[#allocation8 + $0x108] sm:$0xff] %v2350
    %v2367 = vld [vmem:[#allocation7] sm:$0xff]
    %v2368 = vld [vmem:[#allocation7 + $0x8] sm:$0xff]
    %v2369 = vld [vmem:[#allocation7 + $0x10] sm:$0xff]
    %v2370 = vld [vmem:[#allocation7 + $0x18] sm:$0xff]
    %v2371 = vld [vmem:[#allocation7 + $0x20] sm:$0xff]
    %v2372 = vld [vmem:[#allocation7 + $0x28] sm:$0xff]
    %v2373 = vld [vmem:[#allocation7 + $0x30] sm:$0xff]
    %v2374 = vld [vmem:[#allocation7 + $0x38] sm:$0xff]
    %2375 = vst [vmem:[#allocation8 + $0x20] sm:$0xff] %v2367
    %2376 = vst [vmem:[#allocation8 + $0x28] sm:$0xff] %v2368
    %2377 = vst [vmem:[#allocation8 + $0x70] sm:$0xff] %v2369
    %2378 = vst [vmem:[#allocation8 + $0x78] sm:$0xff] %v2370
    %2379 = vst [vmem:[#allocation8 + $0xc0] sm:$0xff] %v2371
    %2380 = vst [vmem:[#allocation8 + $0xc8] sm:$0xff] %v2372
    %2381 = vst [vmem:[#allocation8 + $0x110] sm:$0xff] %v2373
    %2382 = vst [vmem:[#allocation8 + $0x118] sm:$0xff] %v2374
    %v2383 = vld [vmem:[#allocation7] sm:$0xfe]
    %v2384 = vld [vmem:[#allocation7 + $0x8] sm:$0xfe]
    %v2385 = vld [vmem:[#allocation7 + $0x10] sm:$0xff]
    %v2386 = vld [vmem:[#allocation7 + $0x18] sm:$0xff]
    %v2387 = vld [vmem:[#allocation7 + $0x20] sm:$0xfe]
    %v2388 = vld [vmem:[#allocation7 + $0x28] sm:$0xfe]
    %v2389 = vld [vmem:[#allocation7 + $0x30] sm:$0xff]
    %v2390 = vld [vmem:[#allocation7 + $0x38] sm:$0xff]
    %vm2399 = vcmask 1046528
    %v2400 = vrot.slane %v2383, 1
    %v2401 = vrot.slane %v2385, 1
    %v2402 = vsel %vm2399, %v2400, %v2401
    %v2403 = vrot.slane %v2384, 1
    %v2404 = vrot.slane %v2386, 1
    %v2405 = vsel %vm2399, %v2403, %v2404
    %v2406 = vrot.slane %v2387, 1
    %v2407 = vrot.slane %v2389, 1
    %v2408 = vsel %vm2399, %v2406, %v2407
    %v2409 = vrot.slane %v2388, 1
    %v2410 = vrot.slane %v2390, 1
    %v2411 = vsel %vm2399, %v2409, %v2410
    %2420 = vst [vmem:[#allocation8 + $0x30] sm:$0xff] %v2402
    %2421 = vst [vmem:[#allocation8 + $0x38] sm:$0xff] %v2405
    %2422 = vst [vmem:[#allocation8 + $0x80] sm:$0x7f] %v2401
    %2423 = vst [vmem:[#allocation8 + $0x88] sm:$0x7f] %v2404
    %2424 = vst [vmem:[#allocation8 + $0xd0] sm:$0xff] %v2408
    %2425 = vst [vmem:[#allocation8 + $0xd8] sm:$0xff] %v2411
    %2426 = vst [vmem:[#allocation8 + $0x120] sm:$0x7f] %v2407
    %2427 = vst [vmem:[#allocation8 + $0x128] sm:$0x7f] %v2410
    %v2428 = vld [vmem:[#allocation7] sm:$0xfc]
    %v2429 = vld [vmem:[#allocation7 + $0x8] sm:$0xfc]
    %v2430 = vld [vmem:[#allocation7 + $0x10] sm:$0xff]
    %v2431 = vld [vmem:[#allocation7 + $0x18] sm:$0xff]
    %v2432 = vld [vmem:[#allocation7 + $0x20] sm:$0xfc]
    %v2433 = vld [vmem:[#allocation7 + $0x28] sm:$0xfc]
    %v2434 = vld [vmem:[#allocation7 + $0x30] sm:$0xff]
    %v2435 = vld [vmem:[#allocation7 + $0x38] sm:$0xff]
    %vm2444 = vcmask 1045504
    %v2445 = vrot.slane %v2428, 2
    %v2446 = vrot.slane %v2430, 2
    %v2447 = vsel %vm2444, %v2445, %v2446
    %v2448 = vrot.slane %v2429, 2
    %v2449 = vrot.slane %v2431, 2
    %v2450 = vsel %vm2444, %v2448, %v2449
    %v2451 = vrot.slane %v2432, 2
    %v2452 = vrot.slane %v2434, 2
    %v2453 = vsel %vm2444, %v2451, %v2452
    %v2454 = vrot.slane %v2433, 2
    %v2455 = vrot.slane %v2435, 2
    %v2456 = vsel %vm2444, %v2454, %v2455
    %2465 = vst [vmem:[#allocation8 + $0x40] sm:$0xff] %v2447
    %2466 = vst [vmem:[#allocation8 + $0x48] sm:$0xff] %v2450
    %2467 = vst [vmem:[#allocation8 + $0x90] sm:$0x3f] %v2446
    %2468 = vst [vmem:[#allocation8 + $0x98] sm:$0x3f] %v2449
    %2469 = vst [vmem:[#allocation8 + $0xe0] sm:$0xff] %v2453
    %2470 = vst [vmem:[#allocation8 + $0xe8] sm:$0xff] %v2456
    %2471 = vst [vmem:[#allocation8 + $0x130] sm:$0x3f] %v2452
    %2472 = vst [vmem:[#allocation8 + $0x138] sm:$0x3f] %v2455
    %s2473 = smul.u32 4, 160
    %s2474 = smul.u32 %s2473, 4
    %s2475 = sshll.u32 %s2474, 4
    %2476 = dma.done [#allocation5], %s2475
    %v2477 = vld [vmem:[#allocation8] sm:$0xff]
    %v2478 = vld [vmem:[#allocation8 + $0x8] sm:$0xff]
    %v2479 = vld [vmem:[#allocation8 + $0x10] sm:$0xff]
    %v2480 = vld [vmem:[#allocation8 + $0x18] sm:$0xff]
    %v2481 = vld [vmem:[#allocation8 + $0x20] sm:$0xff]
    %v2482 = vld [vmem:[#allocation8 + $0x28] sm:$0xff]
    %v2483 = vld [vmem:[#allocation8 + $0x30] sm:$0xff]
    %v2484 = vld [vmem:[#allocation8 + $0x38] sm:$0xff]
    %v2485 = vld [vmem:[#allocation8 + $0x40] sm:$0xff]
    %v2486 = vld [vmem:[#allocation8 + $0x48] sm:$0xff]
    %v2487 = vld [vmem:[#allocation8 + $0x50] sm:$0xff]
    %v2488 = vld [vmem:[#allocation8 + $0x58] sm:$0xff]
    %v2489 = vld [vmem:[#allocation8 + $0x60] sm:$0xff]
    %v2490 = vld [vmem:[#allocation8 + $0x68] sm:$0xff]
    %v2491 = vld [vmem:[#allocation8 + $0x70] sm:$0xff]
    %v2492 = vld [vmem:[#allocation8 + $0x78] sm:$0xff]
    %v2493 = vld [vmem:[#allocation8 + $0x80] sm:$0xff]
    %v2494 = vld [vmem:[#allocation8 + $0x88] sm:$0xff]
    %v2495 = vld [vmem:[#allocation8 + $0x90] sm:$0xff]
    %v2496 = vld [vmem:[#allocation8 + $0x98] sm:$0xff]
    %v2497 = vld [vmem:[#allocation8 + $0xa0] sm:$0xff]
    %v2498 = vld [vmem:[#allocation8 + $0xa8] sm:$0xff]
    %v2499 = vld [vmem:[#allocation8 + $0xb0] sm:$0xff]
    %v2500 = vld [vmem:[#allocation8 + $0xb8] sm:$0xff]
    %v2501 = vld [vmem:[#allocation8 + $0xc0] sm:$0xff]
    %v2502 = vld [vmem:[#allocation8 + $0xc8] sm:$0xff]
    %v2503 = vld [vmem:[#allocation8 + $0xd0] sm:$0xff]
    %v2504 = vld [vmem:[#allocation8 + $0xd8] sm:$0xff]
    %v2505 = vld [vmem:[#allocation8 + $0xe0] sm:$0xff]
    %v2506 = vld [vmem:[#allocation8 + $0xe8] sm:$0xff]
    %v2507 = vld [vmem:[#allocation8 + $0xf0] sm:$0xff]
    %v2508 = vld [vmem:[#allocation8 + $0xf8] sm:$0xff]
    %v2509 = vld [vmem:[#allocation8 + $0x100] sm:$0xff]
    %v2510 = vld [vmem:[#allocation8 + $0x108] sm:$0xff]
    %v2511 = vld [vmem:[#allocation8 + $0x110] sm:$0xff]
    %v2512 = vld [vmem:[#allocation8 + $0x118] sm:$0xff]
    %v2513 = vld [vmem:[#allocation8 + $0x120] sm:$0xff]
    %v2514 = vld [vmem:[#allocation8 + $0x128] sm:$0xff]
    %v2515 = vld [vmem:[#allocation8 + $0x130] sm:$0xff]
    %v2516 = vld [vmem:[#allocation8 + $0x138] sm:$0xff]
    %v2517 = vpack.c.bf16 %v2487, %v2477
    %v2518 = vpack.c.bf16 %v2488, %v2478
    %v2519 = vpack.c.bf16 %v2489, %v2479
    %v2520 = vpack.c.bf16 %v2490, %v2480
    %v2521 = vpack.c.bf16 %v2491, %v2481
    %v2522 = vpack.c.bf16 %v2492, %v2482
    %v2523 = vpack.c.bf16 %v2493, %v2483
    %v2524 = vpack.c.bf16 %v2494, %v2484
    %v2525 = vpack.c.bf16 %v2495, %v2485
    %v2526 = vpack.c.bf16 %v2496, %v2486
    %v2527 = vpack.c.bf16 %v2507, %v2497
    %v2528 = vpack.c.bf16 %v2508, %v2498
    %v2529 = vpack.c.bf16 %v2509, %v2499
    %v2530 = vpack.c.bf16 %v2510, %v2500
    %v2531 = vpack.c.bf16 %v2511, %v2501
    %v2532 = vpack.c.bf16 %v2512, %v2502
    %v2533 = vpack.c.bf16 %v2513, %v2503
    %v2534 = vpack.c.bf16 %v2514, %v2504
    %v2535 = vpack.c.bf16 %v2515, %v2505
    %v2536 = vpack.c.bf16 %v2516, %v2506
    %v2537 = vld [vmem:[#allocation2] sm:$0xff]
    %v2538 = vld [vmem:[#allocation2 + $0x8] sm:$0xff]
    %v2539 = vld [vmem:[#allocation2 + $0x10] sm:$0xff]
    %v2540 = vld [vmem:[#allocation2 + $0x18] sm:$0xff]
    %v2541 = vld [vmem:[#allocation2 + $0x20] sm:$0xff]
    %v2542 = vld [vmem:[#allocation2 + $0x28] sm:$0xff]
    %v2543 = vld [vmem:[#allocation2 + $0x30] sm:$0xff]
    %v2544 = vld [vmem:[#allocation2 + $0x38] sm:$0xff]
    %v2545 = vld [vmem:[#allocation2 + $0x40] sm:$0xff]
    %v2546 = vld [vmem:[#allocation2 + $0x48] sm:$0xff]
    %v2547 = vld [vmem:[#allocation2 + $0x50] sm:$0xff]
    %v2548 = vld [vmem:[#allocation2 + $0x58] sm:$0xff]
    %v2549 = vld [vmem:[#allocation2 + $0x60] sm:$0xff]
    %v2550 = vld [vmem:[#allocation2 + $0x68] sm:$0xff]
    %v2551 = vld [vmem:[#allocation2 + $0x70] sm:$0xff]
    %v2552 = vld [vmem:[#allocation2 + $0x78] sm:$0xff]
    %v2553 = vld [vmem:[#allocation2 + $0x80] sm:$0xff]
    %v2554 = vld [vmem:[#allocation2 + $0x88] sm:$0xff]
    %v2555 = vld [vmem:[#allocation2 + $0x90] sm:$0xff]
    %v2556 = vld [vmem:[#allocation2 + $0x98] sm:$0xff]
    %v2557 = vld [vmem:[#allocation2 + $0xa0] sm:$0xff]
    %v2558 = vld [vmem:[#allocation2 + $0xa8] sm:$0xff]
    %v2559 = vld [vmem:[#allocation2 + $0xb0] sm:$0xff]
    %v2560 = vld [vmem:[#allocation2 + $0xb8] sm:$0xff]
    %v2561 = vld [vmem:[#allocation2 + $0xc0] sm:$0xff]
    %v2562 = vld [vmem:[#allocation2 + $0xc8] sm:$0xff]
    %v2563 = vld [vmem:[#allocation2 + $0xd0] sm:$0xff]
    %v2564 = vld [vmem:[#allocation2 + $0xd8] sm:$0xff]
    %v2565 = vld [vmem:[#allocation2 + $0xe0] sm:$0xff]
    %v2566 = vld [vmem:[#allocation2 + $0xe8] sm:$0xff]
    %v2567 = vld [vmem:[#allocation2 + $0xf0] sm:$0xff]
    %v2568 = vld [vmem:[#allocation2 + $0xf8] sm:$0xff]
    %v2569 = vld [vmem:[#allocation2 + $0x100] sm:$0xff]
    %v2570 = vld [vmem:[#allocation2 + $0x108] sm:$0xff]
    %v2571 = vld [vmem:[#allocation2 + $0x110] sm:$0xff]
    %v2572 = vld [vmem:[#allocation2 + $0x118] sm:$0xff]
    %v2573 = vld [vmem:[#allocation2 + $0x120] sm:$0xff]
    %v2574 = vld [vmem:[#allocation2 + $0x128] sm:$0xff]
    %v2575 = vld [vmem:[#allocation2 + $0x130] sm:$0xff]
    %v2576 = vld [vmem:[#allocation2 + $0x138] sm:$0xff]
    %v2577 = vld [vmem:[#allocation2 + $0x140] sm:$0xff]
    %v2578 = vld [vmem:[#allocation2 + $0x148] sm:$0xff]
    %v2579 = vld [vmem:[#allocation2 + $0x150] sm:$0xff]
    %v2580 = vld [vmem:[#allocation2 + $0x158] sm:$0xff]
    %v2581 = vld [vmem:[#allocation2 + $0x160] sm:$0xff]
    %v2582 = vld [vmem:[#allocation2 + $0x168] sm:$0xff]
    %v2583 = vld [vmem:[#allocation2 + $0x170] sm:$0xff]
    %v2584 = vld [vmem:[#allocation2 + $0x178] sm:$0xff]
    %v2585 = vld [vmem:[#allocation2 + $0x180] sm:$0xff]
    %v2586 = vld [vmem:[#allocation2 + $0x188] sm:$0xff]
    %v2587 = vld [vmem:[#allocation2 + $0x190] sm:$0xff]
    %v2588 = vld [vmem:[#allocation2 + $0x198] sm:$0xff]
    %v2589 = vld [vmem:[#allocation2 + $0x1a0] sm:$0xff]
    %v2590 = vld [vmem:[#allocation2 + $0x1a8] sm:$0xff]
    %v2591 = vld [vmem:[#allocation2 + $0x1b0] sm:$0xff]
    %v2592 = vld [vmem:[#allocation2 + $0x1b8] sm:$0xff]
    %v2593 = vld [vmem:[#allocation2 + $0x1c0] sm:$0xff]
    %v2594 = vld [vmem:[#allocation2 + $0x1c8] sm:$0xff]
    %v2595 = vld [vmem:[#allocation2 + $0x1d0] sm:$0xff]
    %v2596 = vld [vmem:[#allocation2 + $0x1d8] sm:$0xff]
    %v2597 = vld [vmem:[#allocation2 + $0x1e0] sm:$0xff]
    %v2598 = vld [vmem:[#allocation2 + $0x1e8] sm:$0xff]
    %v2599 = vld [vmem:[#allocation2 + $0x1f0] sm:$0xff]
    %v2600 = vld [vmem:[#allocation2 + $0x1f8] sm:$0xff]
    %v2601 = vld [vmem:[#allocation2 + $0x200] sm:$0xff]
    %v2602 = vld [vmem:[#allocation2 + $0x208] sm:$0xff]
    %v2603 = vld [vmem:[#allocation2 + $0x210] sm:$0xff]
    %v2604 = vld [vmem:[#allocation2 + $0x218] sm:$0xff]
    %v2605 = vld [vmem:[#allocation2 + $0x220] sm:$0xff]
    %v2606 = vld [vmem:[#allocation2 + $0x228] sm:$0xff]
    %v2607 = vld [vmem:[#allocation2 + $0x230] sm:$0xff]
    %v2608 = vld [vmem:[#allocation2 + $0x238] sm:$0xff]
    %v2609 = vld [vmem:[#allocation2 + $0x240] sm:$0xff]
    %v2610 = vld [vmem:[#allocation2 + $0x248] sm:$0xff]
    %v2611 = vld [vmem:[#allocation2 + $0x250] sm:$0xff]
    %v2612 = vld [vmem:[#allocation2 + $0x258] sm:$0xff]
    %v2613 = vld [vmem:[#allocation2 + $0x260] sm:$0xff]
    %v2614 = vld [vmem:[#allocation2 + $0x268] sm:$0xff]
    %v2615 = vld [vmem:[#allocation2 + $0x270] sm:$0xff]
    %v2616 = vld [vmem:[#allocation2 + $0x278] sm:$0xff]
    %v2617 = vld [vmem:[#allocation2 + $0x280] sm:$0xff]
    %v2618 = vld [vmem:[#allocation2 + $0x288] sm:$0xff]
    %v2619 = vld [vmem:[#allocation2 + $0x290] sm:$0xff]
    %v2620 = vld [vmem:[#allocation2 + $0x298] sm:$0xff]
    %v2621 = vld [vmem:[#allocation2 + $0x2a0] sm:$0xff]
    %v2622 = vld [vmem:[#allocation2 + $0x2a8] sm:$0xff]
    %v2623 = vld [vmem:[#allocation2 + $0x2b0] sm:$0xff]
    %v2624 = vld [vmem:[#allocation2 + $0x2b8] sm:$0xff]
    %v2625 = vld [vmem:[#allocation2 + $0x2c0] sm:$0xff]
    %v2626 = vld [vmem:[#allocation2 + $0x2c8] sm:$0xff]
    %v2627 = vld [vmem:[#allocation2 + $0x2d0] sm:$0xff]
    %v2628 = vld [vmem:[#allocation2 + $0x2d8] sm:$0xff]
    %v2629 = vld [vmem:[#allocation2 + $0x2e0] sm:$0xff]
    %v2630 = vld [vmem:[#allocation2 + $0x2e8] sm:$0xff]
    %v2631 = vld [vmem:[#allocation2 + $0x2f0] sm:$0xff]
    %v2632 = vld [vmem:[#allocation2 + $0x2f8] sm:$0xff]
    %v2633 = vld [vmem:[#allocation2 + $0x300] sm:$0xff]
    %v2634 = vld [vmem:[#allocation2 + $0x308] sm:$0xff]
    %v2635 = vld [vmem:[#allocation2 + $0x310] sm:$0xff]
    %v2636 = vld [vmem:[#allocation2 + $0x318] sm:$0xff]
    %v2637 = vld [vmem:[#allocation2 + $0x320] sm:$0xff]
    %v2638 = vld [vmem:[#allocation2 + $0x328] sm:$0xff]
    %v2639 = vld [vmem:[#allocation2 + $0x330] sm:$0xff]
    %v2640 = vld [vmem:[#allocation2 + $0x338] sm:$0xff]
    %v2641 = vld [vmem:[#allocation2 + $0x340] sm:$0xff]
    %v2642 = vld [vmem:[#allocation2 + $0x348] sm:$0xff]
    %v2643 = vld [vmem:[#allocation2 + $0x350] sm:$0xff]
    %v2644 = vld [vmem:[#allocation2 + $0x358] sm:$0xff]
    %v2645 = vld [vmem:[#allocation2 + $0x360] sm:$0xff]
    %v2646 = vld [vmem:[#allocation2 + $0x368] sm:$0xff]
    %v2647 = vld [vmem:[#allocation2 + $0x370] sm:$0xff]
    %v2648 = vld [vmem:[#allocation2 + $0x378] sm:$0xff]
    %v2649 = vld [vmem:[#allocation2 + $0x380] sm:$0xff]
    %v2650 = vld [vmem:[#allocation2 + $0x388] sm:$0xff]
    %v2651 = vld [vmem:[#allocation2 + $0x390] sm:$0xff]
    %v2652 = vld [vmem:[#allocation2 + $0x398] sm:$0xff]
    %v2653 = vld [vmem:[#allocation2 + $0x3a0] sm:$0xff]
    %v2654 = vld [vmem:[#allocation2 + $0x3a8] sm:$0xff]
    %v2655 = vld [vmem:[#allocation2 + $0x3b0] sm:$0xff]
    %v2656 = vld [vmem:[#allocation2 + $0x3b8] sm:$0xff]
    %v2657 = vld [vmem:[#allocation2 + $0x3c0] sm:$0xff]
    %v2658 = vld [vmem:[#allocation2 + $0x3c8] sm:$0xff]
    %v2659 = vld [vmem:[#allocation2 + $0x3d0] sm:$0xff]
    %v2660 = vld [vmem:[#allocation2 + $0x3d8] sm:$0xff]
    %v2661 = vld [vmem:[#allocation2 + $0x3e0] sm:$0xff]
    %v2662 = vld [vmem:[#allocation2 + $0x3e8] sm:$0xff]
    %v2663 = vld [vmem:[#allocation2 + $0x3f0] sm:$0xff]
    %v2664 = vld [vmem:[#allocation2 + $0x3f8] sm:$0xff]
    %v2665 = vld [vmem:[#allocation2 + $0x400] sm:$0xff]
    %v2666 = vld [vmem:[#allocation2 + $0x408] sm:$0xff]
    %v2667 = vld [vmem:[#allocation2 + $0x410] sm:$0xff]
    %v2668 = vld [vmem:[#allocation2 + $0x418] sm:$0xff]
    %v2669 = vld [vmem:[#allocation2 + $0x420] sm:$0xff]
    %v2670 = vld [vmem:[#allocation2 + $0x428] sm:$0xff]
    %v2671 = vld [vmem:[#allocation2 + $0x430] sm:$0xff]
    %v2672 = vld [vmem:[#allocation2 + $0x438] sm:$0xff]
    %v2673 = vld [vmem:[#allocation2 + $0x440] sm:$0xff]
    %v2674 = vld [vmem:[#allocation2 + $0x448] sm:$0xff]
    %v2675 = vld [vmem:[#allocation2 + $0x450] sm:$0xff]
    %v2676 = vld [vmem:[#allocation2 + $0x458] sm:$0xff]
    %v2677 = vld [vmem:[#allocation2 + $0x460] sm:$0xff]
    %v2678 = vld [vmem:[#allocation2 + $0x468] sm:$0xff]
    %v2679 = vld [vmem:[#allocation2 + $0x470] sm:$0xff]
    %v2680 = vld [vmem:[#allocation2 + $0x478] sm:$0xff]
    %v2681 = vld [vmem:[#allocation2 + $0x480] sm:$0xff]
    %v2682 = vld [vmem:[#allocation2 + $0x488] sm:$0xff]
    %v2683 = vld [vmem:[#allocation2 + $0x490] sm:$0xff]
    %v2684 = vld [vmem:[#allocation2 + $0x498] sm:$0xff]
    %v2685 = vld [vmem:[#allocation2 + $0x4a0] sm:$0xff]
    %v2686 = vld [vmem:[#allocation2 + $0x4a8] sm:$0xff]
    %v2687 = vld [vmem:[#allocation2 + $0x4b0] sm:$0xff]
    %v2688 = vld [vmem:[#allocation2 + $0x4b8] sm:$0xff]
    %v2689 = vld [vmem:[#allocation2 + $0x4c0] sm:$0xff]
    %v2690 = vld [vmem:[#allocation2 + $0x4c8] sm:$0xff]
    %v2691 = vld [vmem:[#allocation2 + $0x4d0] sm:$0xff]
    %v2692 = vld [vmem:[#allocation2 + $0x4d8] sm:$0xff]
    %v2693 = vld [vmem:[#allocation2 + $0x4e0] sm:$0xff]
    %v2694 = vld [vmem:[#allocation2 + $0x4e8] sm:$0xff]
    %v2695 = vld [vmem:[#allocation2 + $0x4f0] sm:$0xff]
    %v2696 = vld [vmem:[#allocation2 + $0x4f8] sm:$0xff]
    %v2697 = vld [vmem:[#allocation2 + $0x500] sm:$0xff]
    %v2698 = vld [vmem:[#allocation2 + $0x508] sm:$0xff]
    %v2699 = vld [vmem:[#allocation2 + $0x510] sm:$0xff]
    %v2700 = vld [vmem:[#allocation2 + $0x518] sm:$0xff]
    %v2701 = vld [vmem:[#allocation2 + $0x520] sm:$0xff]
    %v2702 = vld [vmem:[#allocation2 + $0x528] sm:$0xff]
    %v2703 = vld [vmem:[#allocation2 + $0x530] sm:$0xff]
    %v2704 = vld [vmem:[#allocation2 + $0x538] sm:$0xff]
    %v2705 = vld [vmem:[#allocation2 + $0x540] sm:$0xff]
    %v2706 = vld [vmem:[#allocation2 + $0x548] sm:$0xff]
    %v2707 = vld [vmem:[#allocation2 + $0x550] sm:$0xff]
    %v2708 = vld [vmem:[#allocation2 + $0x558] sm:$0xff]
    %v2709 = vld [vmem:[#allocation2 + $0x560] sm:$0xff]
    %v2710 = vld [vmem:[#allocation2 + $0x568] sm:$0xff]
    %v2711 = vld [vmem:[#allocation2 + $0x570] sm:$0xff]
    %v2712 = vld [vmem:[#allocation2 + $0x578] sm:$0xff]
    %v2713 = vld [vmem:[#allocation2 + $0x580] sm:$0xff]
    %v2714 = vld [vmem:[#allocation2 + $0x588] sm:$0xff]
    %v2715 = vld [vmem:[#allocation2 + $0x590] sm:$0xff]
    %v2716 = vld [vmem:[#allocation2 + $0x598] sm:$0xff]
    %v2717 = vld [vmem:[#allocation2 + $0x5a0] sm:$0xff]
    %v2718 = vld [vmem:[#allocation2 + $0x5a8] sm:$0xff]
    %v2719 = vld [vmem:[#allocation2 + $0x5b0] sm:$0xff]
    %v2720 = vld [vmem:[#allocation2 + $0x5b8] sm:$0xff]
    %v2721 = vld [vmem:[#allocation2 + $0x5c0] sm:$0xff]
    %v2722 = vld [vmem:[#allocation2 + $0x5c8] sm:$0xff]
    %v2723 = vld [vmem:[#allocation2 + $0x5d0] sm:$0xff]
    %v2724 = vld [vmem:[#allocation2 + $0x5d8] sm:$0xff]
    %v2725 = vld [vmem:[#allocation2 + $0x5e0] sm:$0xff]
    %v2726 = vld [vmem:[#allocation2 + $0x5e8] sm:$0xff]
    %v2727 = vld [vmem:[#allocation2 + $0x5f0] sm:$0xff]
    %v2728 = vld [vmem:[#allocation2 + $0x5f8] sm:$0xff]
    %v2729 = vld [vmem:[#allocation2 + $0x600] sm:$0xff]
    %v2730 = vld [vmem:[#allocation2 + $0x608] sm:$0xff]
    %v2731 = vld [vmem:[#allocation2 + $0x610] sm:$0xff]
    %v2732 = vld [vmem:[#allocation2 + $0x618] sm:$0xff]
    %v2733 = vld [vmem:[#allocation2 + $0x620] sm:$0xff]
    %v2734 = vld [vmem:[#allocation2 + $0x628] sm:$0xff]
    %v2735 = vld [vmem:[#allocation2 + $0x630] sm:$0xff]
    %v2736 = vld [vmem:[#allocation2 + $0x638] sm:$0xff]
    %v2737 = vld [vmem:[#allocation2 + $0x640] sm:$0xff]
    %v2738 = vld [vmem:[#allocation2 + $0x648] sm:$0xff]
    %v2739 = vld [vmem:[#allocation2 + $0x650] sm:$0xff]
    %v2740 = vld [vmem:[#allocation2 + $0x658] sm:$0xff]
    %v2741 = vld [vmem:[#allocation2 + $0x660] sm:$0xff]
    %v2742 = vld [vmem:[#allocation2 + $0x668] sm:$0xff]
    %v2743 = vld [vmem:[#allocation2 + $0x670] sm:$0xff]
    %v2744 = vld [vmem:[#allocation2 + $0x678] sm:$0xff]
    %v2745 = vld [vmem:[#allocation2 + $0x680] sm:$0xff]
    %v2746 = vld [vmem:[#allocation2 + $0x688] sm:$0xff]
    %v2747 = vld [vmem:[#allocation2 + $0x690] sm:$0xff]
    %v2748 = vld [vmem:[#allocation2 + $0x698] sm:$0xff]
    %v2749 = vld [vmem:[#allocation2 + $0x6a0] sm:$0xff]
    %v2750 = vld [vmem:[#allocation2 + $0x6a8] sm:$0xff]
    %v2751 = vld [vmem:[#allocation2 + $0x6b0] sm:$0xff]
    %v2752 = vld [vmem:[#allocation2 + $0x6b8] sm:$0xff]
    %v2753 = vld [vmem:[#allocation2 + $0x6c0] sm:$0xff]
    %v2754 = vld [vmem:[#allocation2 + $0x6c8] sm:$0xff]
    %v2755 = vld [vmem:[#allocation2 + $0x6d0] sm:$0xff]
    %v2756 = vld [vmem:[#allocation2 + $0x6d8] sm:$0xff]
    %v2757 = vld [vmem:[#allocation2 + $0x6e0] sm:$0xff]
    %v2758 = vld [vmem:[#allocation2 + $0x6e8] sm:$0xff]
    %v2759 = vld [vmem:[#allocation2 + $0x6f0] sm:$0xff]
    %v2760 = vld [vmem:[#allocation2 + $0x6f8] sm:$0xff]
    %v2761 = vld [vmem:[#allocation2 + $0x700] sm:$0xff]
    %v2762 = vld [vmem:[#allocation2 + $0x708] sm:$0xff]
    %v2763 = vld [vmem:[#allocation2 + $0x710] sm:$0xff]
    %v2764 = vld [vmem:[#allocation2 + $0x718] sm:$0xff]
    %v2765 = vld [vmem:[#allocation2 + $0x720] sm:$0xff]
    %v2766 = vld [vmem:[#allocation2 + $0x728] sm:$0xff]
    %v2767 = vld [vmem:[#allocation2 + $0x730] sm:$0xff]
    %v2768 = vld [vmem:[#allocation2 + $0x738] sm:$0xff]
    %v2769 = vld [vmem:[#allocation2 + $0x740] sm:$0xff]
    %v2770 = vld [vmem:[#allocation2 + $0x748] sm:$0xff]
    %v2771 = vld [vmem:[#allocation2 + $0x750] sm:$0xff]
    %v2772 = vld [vmem:[#allocation2 + $0x758] sm:$0xff]
    %v2773 = vld [vmem:[#allocation2 + $0x760] sm:$0xff]
    %v2774 = vld [vmem:[#allocation2 + $0x768] sm:$0xff]
    %v2775 = vld [vmem:[#allocation2 + $0x770] sm:$0xff]
    %v2776 = vld [vmem:[#allocation2 + $0x778] sm:$0xff]
    %v2777 = vld [vmem:[#allocation2 + $0x780] sm:$0xff]
    %v2778 = vld [vmem:[#allocation2 + $0x788] sm:$0xff]
    %v2779 = vld [vmem:[#allocation2 + $0x790] sm:$0xff]
    %v2780 = vld [vmem:[#allocation2 + $0x798] sm:$0xff]
    %v2781 = vld [vmem:[#allocation2 + $0x7a0] sm:$0xff]
    %v2782 = vld [vmem:[#allocation2 + $0x7a8] sm:$0xff]
    %v2783 = vld [vmem:[#allocation2 + $0x7b0] sm:$0xff]
    %v2784 = vld [vmem:[#allocation2 + $0x7b8] sm:$0xff]
    %v2785 = vld [vmem:[#allocation2 + $0x7c0] sm:$0xff]
    %v2786 = vld [vmem:[#allocation2 + $0x7c8] sm:$0xff]
    %v2787 = vld [vmem:[#allocation2 + $0x7d0] sm:$0xff]
    %v2788 = vld [vmem:[#allocation2 + $0x7d8] sm:$0xff]
    %v2789 = vld [vmem:[#allocation2 + $0x7e0] sm:$0xff]
    %v2790 = vld [vmem:[#allocation2 + $0x7e8] sm:$0xff]
    %v2791 = vld [vmem:[#allocation2 + $0x7f0] sm:$0xff]
    %v2792 = vld [vmem:[#allocation2 + $0x7f8] sm:$0xff]
    %v2793 = vld [vmem:[#allocation2 + $0x800] sm:$0xff]
    %v2794 = vld [vmem:[#allocation2 + $0x808] sm:$0xff]
    %v2795 = vld [vmem:[#allocation2 + $0x810] sm:$0xff]
    %v2796 = vld [vmem:[#allocation2 + $0x818] sm:$0xff]
    %v2797 = vld [vmem:[#allocation2 + $0x820] sm:$0xff]
    %v2798 = vld [vmem:[#allocation2 + $0x828] sm:$0xff]
    %v2799 = vld [vmem:[#allocation2 + $0x830] sm:$0xff]
    %v2800 = vld [vmem:[#allocation2 + $0x838] sm:$0xff]
    %v2801 = vld [vmem:[#allocation2 + $0x840] sm:$0xff]
    %v2802 = vld [vmem:[#allocation2 + $0x848] sm:$0xff]
    %v2803 = vld [vmem:[#allocation2 + $0x850] sm:$0xff]
    %v2804 = vld [vmem:[#allocation2 + $0x858] sm:$0xff]
    %v2805 = vld [vmem:[#allocation2 + $0x860] sm:$0xff]
    %v2806 = vld [vmem:[#allocation2 + $0x868] sm:$0xff]
    %v2807 = vld [vmem:[#allocation2 + $0x870] sm:$0xff]
    %v2808 = vld [vmem:[#allocation2 + $0x878] sm:$0xff]
    %v2809 = vld [vmem:[#allocation2 + $0x880] sm:$0xff]
    %v2810 = vld [vmem:[#allocation2 + $0x888] sm:$0xff]
    %v2811 = vld [vmem:[#allocation2 + $0x890] sm:$0xff]
    %v2812 = vld [vmem:[#allocation2 + $0x898] sm:$0xff]
    %v2813 = vld [vmem:[#allocation2 + $0x8a0] sm:$0xff]
    %v2814 = vld [vmem:[#allocation2 + $0x8a8] sm:$0xff]
    %v2815 = vld [vmem:[#allocation2 + $0x8b0] sm:$0xff]
    %v2816 = vld [vmem:[#allocation2 + $0x8b8] sm:$0xff]
    %v2817 = vld [vmem:[#allocation2 + $0x8c0] sm:$0xff]
    %v2818 = vld [vmem:[#allocation2 + $0x8c8] sm:$0xff]
    %v2819 = vld [vmem:[#allocation2 + $0x8d0] sm:$0xff]
    %v2820 = vld [vmem:[#allocation2 + $0x8d8] sm:$0xff]
    %v2821 = vld [vmem:[#allocation2 + $0x8e0] sm:$0xff]
    %v2822 = vld [vmem:[#allocation2 + $0x8e8] sm:$0xff]
    %v2823 = vld [vmem:[#allocation2 + $0x8f0] sm:$0xff]
    %v2824 = vld [vmem:[#allocation2 + $0x8f8] sm:$0xff]
    %v2825 = vld [vmem:[#allocation2 + $0x900] sm:$0xff]
    %v2826 = vld [vmem:[#allocation2 + $0x908] sm:$0xff]
    %v2827 = vld [vmem:[#allocation2 + $0x910] sm:$0xff]
    %v2828 = vld [vmem:[#allocation2 + $0x918] sm:$0xff]
    %v2829 = vld [vmem:[#allocation2 + $0x920] sm:$0xff]
    %v2830 = vld [vmem:[#allocation2 + $0x928] sm:$0xff]
    %v2831 = vld [vmem:[#allocation2 + $0x930] sm:$0xff]
    %v2832 = vld [vmem:[#allocation2 + $0x938] sm:$0xff]
    %v2833 = vld [vmem:[#allocation2 + $0x940] sm:$0xff]
    %v2834 = vld [vmem:[#allocation2 + $0x948] sm:$0xff]
    %v2835 = vld [vmem:[#allocation2 + $0x950] sm:$0xff]
    %v2836 = vld [vmem:[#allocation2 + $0x958] sm:$0xff]
    %v2837 = vld [vmem:[#allocation2 + $0x960] sm:$0xff]
    %v2838 = vld [vmem:[#allocation2 + $0x968] sm:$0xff]
    %v2839 = vld [vmem:[#allocation2 + $0x970] sm:$0xff]
    %v2840 = vld [vmem:[#allocation2 + $0x978] sm:$0xff]
    %v2841 = vld [vmem:[#allocation2 + $0x980] sm:$0xff]
    %v2842 = vld [vmem:[#allocation2 + $0x988] sm:$0xff]
    %v2843 = vld [vmem:[#allocation2 + $0x990] sm:$0xff]
    %v2844 = vld [vmem:[#allocation2 + $0x998] sm:$0xff]
    %v2845 = vld [vmem:[#allocation2 + $0x9a0] sm:$0xff]
    %v2846 = vld [vmem:[#allocation2 + $0x9a8] sm:$0xff]
    %v2847 = vld [vmem:[#allocation2 + $0x9b0] sm:$0xff]
    %v2848 = vld [vmem:[#allocation2 + $0x9b8] sm:$0xff]
    %v2849 = vld [vmem:[#allocation2 + $0x9c0] sm:$0xff]
    %v2850 = vld [vmem:[#allocation2 + $0x9c8] sm:$0xff]
    %v2851 = vld [vmem:[#allocation2 + $0x9d0] sm:$0xff]
    %v2852 = vld [vmem:[#allocation2 + $0x9d8] sm:$0xff]
    %v2853 = vld [vmem:[#allocation2 + $0x9e0] sm:$0xff]
    %v2854 = vld [vmem:[#allocation2 + $0x9e8] sm:$0xff]
    %v2855 = vld [vmem:[#allocation2 + $0x9f0] sm:$0xff]
    %v2856 = vld [vmem:[#allocation2 + $0x9f8] sm:$0xff]
    %v2857 = vld [vmem:[#allocation16] sm:$0xf]
    %v2859 = vperm.slane %v2857, 0
    %v2860 = vperm.slane %v2857, 1
    %v2861 = vperm.slane %v2857, 2
    %v2862 = vperm.slane %v2857, 3
    %v3187 = vunpack.c.l.b16 %v2537
    %v3188 = vunpack.c.h.b16 %v2537
    %v3189 = vunpack.c.l.b16 %v2538
    %v3190 = vunpack.c.h.b16 %v2538
    %v3191 = vunpack.c.l.b16 %v2539
    %v3192 = vunpack.c.h.b16 %v2539
    %v3193 = vunpack.c.l.b16 %v2540
    %v3194 = vunpack.c.h.b16 %v2540
    %v3195 = vunpack.c.l.b16 %v2541
    %v3196 = vunpack.c.h.b16 %v2541
    %v3197 = vunpack.c.l.b16 %v2542
    %v3198 = vunpack.c.h.b16 %v2542
    %v3199 = vunpack.c.l.b16 %v2543
    %v3200 = vunpack.c.h.b16 %v2543
    %v3201 = vunpack.c.l.b16 %v2544
    %v3202 = vunpack.c.h.b16 %v2544
    %v3203 = vunpack.c.l.b16 %v2545
    %v3204 = vunpack.c.h.b16 %v2545
    %v3205 = vunpack.c.l.b16 %v2546
    %v3206 = vunpack.c.h.b16 %v2546
    %v3207 = vunpack.c.l.b16 %v2547
    %v3208 = vunpack.c.h.b16 %v2547
    %v3209 = vunpack.c.l.b16 %v2548
    %v3210 = vunpack.c.h.b16 %v2548
    %v3211 = vunpack.c.l.b16 %v2549
    %v3212 = vunpack.c.h.b16 %v2549
    %v3213 = vunpack.c.l.b16 %v2550
    %v3214 = vunpack.c.h.b16 %v2550
    %v3215 = vunpack.c.l.b16 %v2551
    %v3216 = vunpack.c.h.b16 %v2551
    %v3217 = vunpack.c.l.b16 %v2552
    %v3218 = vunpack.c.h.b16 %v2552
    %v3219 = vunpack.c.l.b16 %v2553
    %v3220 = vunpack.c.h.b16 %v2553
    %v3221 = vunpack.c.l.b16 %v2554
    %v3222 = vunpack.c.h.b16 %v2554
    %v3223 = vunpack.c.l.b16 %v2555
    %v3224 = vunpack.c.h.b16 %v2555
    %v3225 = vunpack.c.l.b16 %v2556
    %v3226 = vunpack.c.h.b16 %v2556
    %v3227 = vunpack.c.l.b16 %v2557
    %v3228 = vunpack.c.h.b16 %v2557
    %v3229 = vunpack.c.l.b16 %v2558
    %v3230 = vunpack.c.h.b16 %v2558
    %v3231 = vunpack.c.l.b16 %v2559
    %v3232 = vunpack.c.h.b16 %v2559
    %v3233 = vunpack.c.l.b16 %v2560
    %v3234 = vunpack.c.h.b16 %v2560
    %v3235 = vunpack.c.l.b16 %v2561
    %v3236 = vunpack.c.h.b16 %v2561
    %v3237 = vunpack.c.l.b16 %v2562
    %v3238 = vunpack.c.h.b16 %v2562
    %v3239 = vunpack.c.l.b16 %v2563
    %v3240 = vunpack.c.h.b16 %v2563
    %v3241 = vunpack.c.l.b16 %v2564
    %v3242 = vunpack.c.h.b16 %v2564
    %v3243 = vunpack.c.l.b16 %v2565
    %v3244 = vunpack.c.h.b16 %v2565
    %v3245 = vunpack.c.l.b16 %v2566
    %v3246 = vunpack.c.h.b16 %v2566
    %v3247 = vunpack.c.l.b16 %v2567
    %v3248 = vunpack.c.h.b16 %v2567
    %v3249 = vunpack.c.l.b16 %v2568
    %v3250 = vunpack.c.h.b16 %v2568
    %v3251 = vunpack.c.l.b16 %v2569
    %v3252 = vunpack.c.h.b16 %v2569
    %v3253 = vunpack.c.l.b16 %v2570
    %v3254 = vunpack.c.h.b16 %v2570
    %v3255 = vunpack.c.l.b16 %v2571
    %v3256 = vunpack.c.h.b16 %v2571
    %v3257 = vunpack.c.l.b16 %v2572
    %v3258 = vunpack.c.h.b16 %v2572
    %v3259 = vunpack.c.l.b16 %v2573
    %v3260 = vunpack.c.h.b16 %v2573
    %v3261 = vunpack.c.l.b16 %v2574
    %v3262 = vunpack.c.h.b16 %v2574
    %v3263 = vunpack.c.l.b16 %v2575
    %v3264 = vunpack.c.h.b16 %v2575
    %v3265 = vunpack.c.l.b16 %v2576
    %v3266 = vunpack.c.h.b16 %v2576
    %v3267 = vunpack.c.l.b16 %v2577
    %v3268 = vunpack.c.h.b16 %v2577
    %v3269 = vunpack.c.l.b16 %v2578
    %v3270 = vunpack.c.h.b16 %v2578
    %v3271 = vunpack.c.l.b16 %v2579
    %v3272 = vunpack.c.h.b16 %v2579
    %v3273 = vunpack.c.l.b16 %v2580
    %v3274 = vunpack.c.h.b16 %v2580
    %v3275 = vunpack.c.l.b16 %v2581
    %v3276 = vunpack.c.h.b16 %v2581
    %v3277 = vunpack.c.l.b16 %v2582
    %v3278 = vunpack.c.h.b16 %v2582
    %v3279 = vunpack.c.l.b16 %v2583
    %v3280 = vunpack.c.h.b16 %v2583
    %v3281 = vunpack.c.l.b16 %v2584
    %v3282 = vunpack.c.h.b16 %v2584
    %v3283 = vunpack.c.l.b16 %v2585
    %v3284 = vunpack.c.h.b16 %v2585
    %v3285 = vunpack.c.l.b16 %v2586
    %v3286 = vunpack.c.h.b16 %v2586
    %v3287 = vunpack.c.l.b16 %v2587
    %v3288 = vunpack.c.h.b16 %v2587
    %v3289 = vunpack.c.l.b16 %v2588
    %v3290 = vunpack.c.h.b16 %v2588
    %v3291 = vunpack.c.l.b16 %v2589
    %v3292 = vunpack.c.h.b16 %v2589
    %v3293 = vunpack.c.l.b16 %v2590
    %v3294 = vunpack.c.h.b16 %v2590
    %v3295 = vunpack.c.l.b16 %v2591
    %v3296 = vunpack.c.h.b16 %v2591
    %v3297 = vunpack.c.l.b16 %v2592
    %v3298 = vunpack.c.h.b16 %v2592
    %v3299 = vunpack.c.l.b16 %v2593
    %v3300 = vunpack.c.h.b16 %v2593
    %v3301 = vunpack.c.l.b16 %v2594
    %v3302 = vunpack.c.h.b16 %v2594
    %v3303 = vunpack.c.l.b16 %v2595
    %v3304 = vunpack.c.h.b16 %v2595
    %v3305 = vunpack.c.l.b16 %v2596
    %v3306 = vunpack.c.h.b16 %v2596
    %v3307 = vunpack.c.l.b16 %v2597
    %v3308 = vunpack.c.h.b16 %v2597
    %v3309 = vunpack.c.l.b16 %v2598
    %v3310 = vunpack.c.h.b16 %v2598
    %v3311 = vunpack.c.l.b16 %v2599
    %v3312 = vunpack.c.h.b16 %v2599
    %v3313 = vunpack.c.l.b16 %v2600
    %v3314 = vunpack.c.h.b16 %v2600
    %v3315 = vunpack.c.l.b16 %v2601
    %v3316 = vunpack.c.h.b16 %v2601
    %v3317 = vunpack.c.l.b16 %v2602
    %v3318 = vunpack.c.h.b16 %v2602
    %v3319 = vunpack.c.l.b16 %v2603
    %v3320 = vunpack.c.h.b16 %v2603
    %v3321 = vunpack.c.l.b16 %v2604
    %v3322 = vunpack.c.h.b16 %v2604
    %v3323 = vunpack.c.l.b16 %v2605
    %v3324 = vunpack.c.h.b16 %v2605
    %v3325 = vunpack.c.l.b16 %v2606
    %v3326 = vunpack.c.h.b16 %v2606
    %v3327 = vunpack.c.l.b16 %v2607
    %v3328 = vunpack.c.h.b16 %v2607
    %v3329 = vunpack.c.l.b16 %v2608
    %v3330 = vunpack.c.h.b16 %v2608
    %v3331 = vunpack.c.l.b16 %v2609
    %v3332 = vunpack.c.h.b16 %v2609
    %v3333 = vunpack.c.l.b16 %v2610
    %v3334 = vunpack.c.h.b16 %v2610
    %v3335 = vunpack.c.l.b16 %v2611
    %v3336 = vunpack.c.h.b16 %v2611
    %v3337 = vunpack.c.l.b16 %v2612
    %v3338 = vunpack.c.h.b16 %v2612
    %v3339 = vunpack.c.l.b16 %v2613
    %v3340 = vunpack.c.h.b16 %v2613
    %v3341 = vunpack.c.l.b16 %v2614
    %v3342 = vunpack.c.h.b16 %v2614
    %v3343 = vunpack.c.l.b16 %v2615
    %v3344 = vunpack.c.h.b16 %v2615
    %v3345 = vunpack.c.l.b16 %v2616
    %v3346 = vunpack.c.h.b16 %v2616
    %v3347 = vunpack.c.l.b16 %v2617
    %v3348 = vunpack.c.h.b16 %v2617
    %v3349 = vunpack.c.l.b16 %v2618
    %v3350 = vunpack.c.h.b16 %v2618
    %v3351 = vunpack.c.l.b16 %v2619
    %v3352 = vunpack.c.h.b16 %v2619
    %v3353 = vunpack.c.l.b16 %v2620
    %v3354 = vunpack.c.h.b16 %v2620
    %v3355 = vunpack.c.l.b16 %v2621
    %v3356 = vunpack.c.h.b16 %v2621
    %v3357 = vunpack.c.l.b16 %v2622
    %v3358 = vunpack.c.h.b16 %v2622
    %v3359 = vunpack.c.l.b16 %v2623
    %v3360 = vunpack.c.h.b16 %v2623
    %v3361 = vunpack.c.l.b16 %v2624
    %v3362 = vunpack.c.h.b16 %v2624
    %v3363 = vunpack.c.l.b16 %v2625
    %v3364 = vunpack.c.h.b16 %v2625
    %v3365 = vunpack.c.l.b16 %v2626
    %v3366 = vunpack.c.h.b16 %v2626
    %v3367 = vunpack.c.l.b16 %v2627
    %v3368 = vunpack.c.h.b16 %v2627
    %v3369 = vunpack.c.l.b16 %v2628
    %v3370 = vunpack.c.h.b16 %v2628
    %v3371 = vunpack.c.l.b16 %v2629
    %v3372 = vunpack.c.h.b16 %v2629
    %v3373 = vunpack.c.l.b16 %v2630
    %v3374 = vunpack.c.h.b16 %v2630
    %v3375 = vunpack.c.l.b16 %v2631
    %v3376 = vunpack.c.h.b16 %v2631
    %v3377 = vunpack.c.l.b16 %v2632
    %v3378 = vunpack.c.h.b16 %v2632
    %v3379 = vunpack.c.l.b16 %v2633
    %v3380 = vunpack.c.h.b16 %v2633
    %v3381 = vunpack.c.l.b16 %v2634
    %v3382 = vunpack.c.h.b16 %v2634
    %v3383 = vunpack.c.l.b16 %v2635
    %v3384 = vunpack.c.h.b16 %v2635
    %v3385 = vunpack.c.l.b16 %v2636
    %v3386 = vunpack.c.h.b16 %v2636
    %v3387 = vunpack.c.l.b16 %v2637
    %v3388 = vunpack.c.h.b16 %v2637
    %v3389 = vunpack.c.l.b16 %v2638
    %v3390 = vunpack.c.h.b16 %v2638
    %v3391 = vunpack.c.l.b16 %v2639
    %v3392 = vunpack.c.h.b16 %v2639
    %v3393 = vunpack.c.l.b16 %v2640
    %v3394 = vunpack.c.h.b16 %v2640
    %v3395 = vunpack.c.l.b16 %v2641
    %v3396 = vunpack.c.h.b16 %v2641
    %v3397 = vunpack.c.l.b16 %v2642
    %v3398 = vunpack.c.h.b16 %v2642
    %v3399 = vunpack.c.l.b16 %v2643
    %v3400 = vunpack.c.h.b16 %v2643
    %v3401 = vunpack.c.l.b16 %v2644
    %v3402 = vunpack.c.h.b16 %v2644
    %v3403 = vunpack.c.l.b16 %v2645
    %v3404 = vunpack.c.h.b16 %v2645
    %v3405 = vunpack.c.l.b16 %v2646
    %v3406 = vunpack.c.h.b16 %v2646
    %v3407 = vunpack.c.l.b16 %v2647
    %v3408 = vunpack.c.h.b16 %v2647
    %v3409 = vunpack.c.l.b16 %v2648
    %v3410 = vunpack.c.h.b16 %v2648
    %v3411 = vunpack.c.l.b16 %v2649
    %v3412 = vunpack.c.h.b16 %v2649
    %v3413 = vunpack.c.l.b16 %v2650
    %v3414 = vunpack.c.h.b16 %v2650
    %v3415 = vunpack.c.l.b16 %v2651
    %v3416 = vunpack.c.h.b16 %v2651
    %v3417 = vunpack.c.l.b16 %v2652
    %v3418 = vunpack.c.h.b16 %v2652
    %v3419 = vunpack.c.l.b16 %v2653
    %v3420 = vunpack.c.h.b16 %v2653
    %v3421 = vunpack.c.l.b16 %v2654
    %v3422 = vunpack.c.h.b16 %v2654
    %v3423 = vunpack.c.l.b16 %v2655
    %v3424 = vunpack.c.h.b16 %v2655
    %v3425 = vunpack.c.l.b16 %v2656
    %v3426 = vunpack.c.h.b16 %v2656
    %v3427 = vunpack.c.l.b16 %v2657
    %v3428 = vunpack.c.h.b16 %v2657
    %v3429 = vunpack.c.l.b16 %v2658
    %v3430 = vunpack.c.h.b16 %v2658
    %v3431 = vunpack.c.l.b16 %v2659
    %v3432 = vunpack.c.h.b16 %v2659
    %v3433 = vunpack.c.l.b16 %v2660
    %v3434 = vunpack.c.h.b16 %v2660
    %v3435 = vunpack.c.l.b16 %v2661
    %v3436 = vunpack.c.h.b16 %v2661
    %v3437 = vunpack.c.l.b16 %v2662
    %v3438 = vunpack.c.h.b16 %v2662
    %v3439 = vunpack.c.l.b16 %v2663
    %v3440 = vunpack.c.h.b16 %v2663
    %v3441 = vunpack.c.l.b16 %v2664
    %v3442 = vunpack.c.h.b16 %v2664
    %v3443 = vunpack.c.l.b16 %v2665
    %v3444 = vunpack.c.h.b16 %v2665
    %v3445 = vunpack.c.l.b16 %v2666
    %v3446 = vunpack.c.h.b16 %v2666
    %v3447 = vunpack.c.l.b16 %v2667
    %v3448 = vunpack.c.h.b16 %v2667
    %v3449 = vunpack.c.l.b16 %v2668
    %v3450 = vunpack.c.h.b16 %v2668
    %v3451 = vunpack.c.l.b16 %v2669
    %v3452 = vunpack.c.h.b16 %v2669
    %v3453 = vunpack.c.l.b16 %v2670
    %v3454 = vunpack.c.h.b16 %v2670
    %v3455 = vunpack.c.l.b16 %v2671
    %v3456 = vunpack.c.h.b16 %v2671
    %v3457 = vunpack.c.l.b16 %v2672
    %v3458 = vunpack.c.h.b16 %v2672
    %v3459 = vunpack.c.l.b16 %v2673
    %v3460 = vunpack.c.h.b16 %v2673
    %v3461 = vunpack.c.l.b16 %v2674
    %v3462 = vunpack.c.h.b16 %v2674
    %v3463 = vunpack.c.l.b16 %v2675
    %v3464 = vunpack.c.h.b16 %v2675
    %v3465 = vunpack.c.l.b16 %v2676
    %v3466 = vunpack.c.h.b16 %v2676
    %v3467 = vunpack.c.l.b16 %v2677
    %v3468 = vunpack.c.h.b16 %v2677
    %v3469 = vunpack.c.l.b16 %v2678
    %v3470 = vunpack.c.h.b16 %v2678
    %v3471 = vunpack.c.l.b16 %v2679
    %v3472 = vunpack.c.h.b16 %v2679
    %v3473 = vunpack.c.l.b16 %v2680
    %v3474 = vunpack.c.h.b16 %v2680
    %v3475 = vunpack.c.l.b16 %v2681
    %v3476 = vunpack.c.h.b16 %v2681
    %v3477 = vunpack.c.l.b16 %v2682
    %v3478 = vunpack.c.h.b16 %v2682
    %v3479 = vunpack.c.l.b16 %v2683
    %v3480 = vunpack.c.h.b16 %v2683
    %v3481 = vunpack.c.l.b16 %v2684
    %v3482 = vunpack.c.h.b16 %v2684
    %v3483 = vunpack.c.l.b16 %v2685
    %v3484 = vunpack.c.h.b16 %v2685
    %v3485 = vunpack.c.l.b16 %v2686
    %v3486 = vunpack.c.h.b16 %v2686
    %v3487 = vunpack.c.l.b16 %v2687
    %v3488 = vunpack.c.h.b16 %v2687
    %v3489 = vunpack.c.l.b16 %v2688
    %v3490 = vunpack.c.h.b16 %v2688
    %v3491 = vunpack.c.l.b16 %v2689
    %v3492 = vunpack.c.h.b16 %v2689
    %v3493 = vunpack.c.l.b16 %v2690
    %v3494 = vunpack.c.h.b16 %v2690
    %v3495 = vunpack.c.l.b16 %v2691
    %v3496 = vunpack.c.h.b16 %v2691
    %v3497 = vunpack.c.l.b16 %v2692
    %v3498 = vunpack.c.h.b16 %v2692
    %v3499 = vunpack.c.l.b16 %v2693
    %v3500 = vunpack.c.h.b16 %v2693
    %v3501 = vunpack.c.l.b16 %v2694
    %v3502 = vunpack.c.h.b16 %v2694
    %v3503 = vunpack.c.l.b16 %v2695
    %v3504 = vunpack.c.h.b16 %v2695
    %v3505 = vunpack.c.l.b16 %v2696
    %v3506 = vunpack.c.h.b16 %v2696
    %v3507 = vunpack.c.l.b16 %v2697
    %v3508 = vunpack.c.h.b16 %v2697
    %v3509 = vunpack.c.l.b16 %v2698
    %v3510 = vunpack.c.h.b16 %v2698
    %v3511 = vunpack.c.l.b16 %v2699
    %v3512 = vunpack.c.h.b16 %v2699
    %v3513 = vunpack.c.l.b16 %v2700
    %v3514 = vunpack.c.h.b16 %v2700
    %v3515 = vunpack.c.l.b16 %v2701
    %v3516 = vunpack.c.h.b16 %v2701
    %v3517 = vunpack.c.l.b16 %v2702
    %v3518 = vunpack.c.h.b16 %v2702
    %v3519 = vunpack.c.l.b16 %v2703
    %v3520 = vunpack.c.h.b16 %v2703
    %v3521 = vunpack.c.l.b16 %v2704
    %v3522 = vunpack.c.h.b16 %v2704
    %v3523 = vunpack.c.l.b16 %v2705
    %v3524 = vunpack.c.h.b16 %v2705
    %v3525 = vunpack.c.l.b16 %v2706
    %v3526 = vunpack.c.h.b16 %v2706
    %v3527 = vunpack.c.l.b16 %v2707
    %v3528 = vunpack.c.h.b16 %v2707
    %v3529 = vunpack.c.l.b16 %v2708
    %v3530 = vunpack.c.h.b16 %v2708
    %v3531 = vunpack.c.l.b16 %v2709
    %v3532 = vunpack.c.h.b16 %v2709
    %v3533 = vunpack.c.l.b16 %v2710
    %v3534 = vunpack.c.h.b16 %v2710
    %v3535 = vunpack.c.l.b16 %v2711
    %v3536 = vunpack.c.h.b16 %v2711
    %v3537 = vunpack.c.l.b16 %v2712
    %v3538 = vunpack.c.h.b16 %v2712
    %v3539 = vunpack.c.l.b16 %v2713
    %v3540 = vunpack.c.h.b16 %v2713
    %v3541 = vunpack.c.l.b16 %v2714
    %v3542 = vunpack.c.h.b16 %v2714
    %v3543 = vunpack.c.l.b16 %v2715
    %v3544 = vunpack.c.h.b16 %v2715
    %v3545 = vunpack.c.l.b16 %v2716
    %v3546 = vunpack.c.h.b16 %v2716
    %v3547 = vunpack.c.l.b16 %v2717
    %v3548 = vunpack.c.h.b16 %v2717
    %v3549 = vunpack.c.l.b16 %v2718
    %v3550 = vunpack.c.h.b16 %v2718
    %v3551 = vunpack.c.l.b16 %v2719
    %v3552 = vunpack.c.h.b16 %v2719
    %v3553 = vunpack.c.l.b16 %v2720
    %v3554 = vunpack.c.h.b16 %v2720
    %v3555 = vunpack.c.l.b16 %v2721
    %v3556 = vunpack.c.h.b16 %v2721
    %v3557 = vunpack.c.l.b16 %v2722
    %v3558 = vunpack.c.h.b16 %v2722
    %v3559 = vunpack.c.l.b16 %v2723
    %v3560 = vunpack.c.h.b16 %v2723
    %v3561 = vunpack.c.l.b16 %v2724
    %v3562 = vunpack.c.h.b16 %v2724
    %v3563 = vunpack.c.l.b16 %v2725
    %v3564 = vunpack.c.h.b16 %v2725
    %v3565 = vunpack.c.l.b16 %v2726
    %v3566 = vunpack.c.h.b16 %v2726
    %v3567 = vunpack.c.l.b16 %v2727
    %v3568 = vunpack.c.h.b16 %v2727
    %v3569 = vunpack.c.l.b16 %v2728
    %v3570 = vunpack.c.h.b16 %v2728
    %v3571 = vunpack.c.l.b16 %v2729
    %v3572 = vunpack.c.h.b16 %v2729
    %v3573 = vunpack.c.l.b16 %v2730
    %v3574 = vunpack.c.h.b16 %v2730
    %v3575 = vunpack.c.l.b16 %v2731
    %v3576 = vunpack.c.h.b16 %v2731
    %v3577 = vunpack.c.l.b16 %v2732
    %v3578 = vunpack.c.h.b16 %v2732
    %v3579 = vunpack.c.l.b16 %v2733
    %v3580 = vunpack.c.h.b16 %v2733
    %v3581 = vunpack.c.l.b16 %v2734
    %v3582 = vunpack.c.h.b16 %v2734
    %v3583 = vunpack.c.l.b16 %v2735
    %v3584 = vunpack.c.h.b16 %v2735
    %v3585 = vunpack.c.l.b16 %v2736
    %v3586 = vunpack.c.h.b16 %v2736
    %v3587 = vunpack.c.l.b16 %v2737
    %v3588 = vunpack.c.h.b16 %v2737
    %v3589 = vunpack.c.l.b16 %v2738
    %v3590 = vunpack.c.h.b16 %v2738
    %v3591 = vunpack.c.l.b16 %v2739
    %v3592 = vunpack.c.h.b16 %v2739
    %v3593 = vunpack.c.l.b16 %v2740
    %v3594 = vunpack.c.h.b16 %v2740
    %v3595 = vunpack.c.l.b16 %v2741
    %v3596 = vunpack.c.h.b16 %v2741
    %v3597 = vunpack.c.l.b16 %v2742
    %v3598 = vunpack.c.h.b16 %v2742
    %v3599 = vunpack.c.l.b16 %v2743
    %v3600 = vunpack.c.h.b16 %v2743
    %v3601 = vunpack.c.l.b16 %v2744
    %v3602 = vunpack.c.h.b16 %v2744
    %v3603 = vunpack.c.l.b16 %v2745
    %v3604 = vunpack.c.h.b16 %v2745
    %v3605 = vunpack.c.l.b16 %v2746
    %v3606 = vunpack.c.h.b16 %v2746
    %v3607 = vunpack.c.l.b16 %v2747
    %v3608 = vunpack.c.h.b16 %v2747
    %v3609 = vunpack.c.l.b16 %v2748
    %v3610 = vunpack.c.h.b16 %v2748
    %v3611 = vunpack.c.l.b16 %v2749
    %v3612 = vunpack.c.h.b16 %v2749
    %v3613 = vunpack.c.l.b16 %v2750
    %v3614 = vunpack.c.h.b16 %v2750
    %v3615 = vunpack.c.l.b16 %v2751
    %v3616 = vunpack.c.h.b16 %v2751
    %v3617 = vunpack.c.l.b16 %v2752
    %v3618 = vunpack.c.h.b16 %v2752
    %v3619 = vunpack.c.l.b16 %v2753
    %v3620 = vunpack.c.h.b16 %v2753
    %v3621 = vunpack.c.l.b16 %v2754
    %v3622 = vunpack.c.h.b16 %v2754
    %v3623 = vunpack.c.l.b16 %v2755
    %v3624 = vunpack.c.h.b16 %v2755
    %v3625 = vunpack.c.l.b16 %v2756
    %v3626 = vunpack.c.h.b16 %v2756
    %v3627 = vunpack.c.l.b16 %v2757
    %v3628 = vunpack.c.h.b16 %v2757
    %v3629 = vunpack.c.l.b16 %v2758
    %v3630 = vunpack.c.h.b16 %v2758
    %v3631 = vunpack.c.l.b16 %v2759
    %v3632 = vunpack.c.h.b16 %v2759
    %v3633 = vunpack.c.l.b16 %v2760
    %v3634 = vunpack.c.h.b16 %v2760
    %v3635 = vunpack.c.l.b16 %v2761
    %v3636 = vunpack.c.h.b16 %v2761
    %v3637 = vunpack.c.l.b16 %v2762
    %v3638 = vunpack.c.h.b16 %v2762
    %v3639 = vunpack.c.l.b16 %v2763
    %v3640 = vunpack.c.h.b16 %v2763
    %v3641 = vunpack.c.l.b16 %v2764
    %v3642 = vunpack.c.h.b16 %v2764
    %v3643 = vunpack.c.l.b16 %v2765
    %v3644 = vunpack.c.h.b16 %v2765
    %v3645 = vunpack.c.l.b16 %v2766
    %v3646 = vunpack.c.h.b16 %v2766
    %v3647 = vunpack.c.l.b16 %v2767
    %v3648 = vunpack.c.h.b16 %v2767
    %v3649 = vunpack.c.l.b16 %v2768
    %v3650 = vunpack.c.h.b16 %v2768
    %v3651 = vunpack.c.l.b16 %v2769
    %v3652 = vunpack.c.h.b16 %v2769
    %v3653 = vunpack.c.l.b16 %v2770
    %v3654 = vunpack.c.h.b16 %v2770
    %v3655 = vunpack.c.l.b16 %v2771
    %v3656 = vunpack.c.h.b16 %v2771
    %v3657 = vunpack.c.l.b16 %v2772
    %v3658 = vunpack.c.h.b16 %v2772
    %v3659 = vunpack.c.l.b16 %v2773
    %v3660 = vunpack.c.h.b16 %v2773
    %v3661 = vunpack.c.l.b16 %v2774
    %v3662 = vunpack.c.h.b16 %v2774
    %v3663 = vunpack.c.l.b16 %v2775
    %v3664 = vunpack.c.h.b16 %v2775
    %v3665 = vunpack.c.l.b16 %v2776
    %v3666 = vunpack.c.h.b16 %v2776
    %v3667 = vunpack.c.l.b16 %v2777
    %v3668 = vunpack.c.h.b16 %v2777
    %v3669 = vunpack.c.l.b16 %v2778
    %v3670 = vunpack.c.h.b16 %v2778
    %v3671 = vunpack.c.l.b16 %v2779
    %v3672 = vunpack.c.h.b16 %v2779
    %v3673 = vunpack.c.l.b16 %v2780
    %v3674 = vunpack.c.h.b16 %v2780
    %v3675 = vunpack.c.l.b16 %v2781
    %v3676 = vunpack.c.h.b16 %v2781
    %v3677 = vunpack.c.l.b16 %v2782
    %v3678 = vunpack.c.h.b16 %v2782
    %v3679 = vunpack.c.l.b16 %v2783
    %v3680 = vunpack.c.h.b16 %v2783
    %v3681 = vunpack.c.l.b16 %v2784
    %v3682 = vunpack.c.h.b16 %v2784
    %v3683 = vunpack.c.l.b16 %v2785
    %v3684 = vunpack.c.h.b16 %v2785
    %v3685 = vunpack.c.l.b16 %v2786
    %v3686 = vunpack.c.h.b16 %v2786
    %v3687 = vunpack.c.l.b16 %v2787
    %v3688 = vunpack.c.h.b16 %v2787
    %v3689 = vunpack.c.l.b16 %v2788
    %v3690 = vunpack.c.h.b16 %v2788
    %v3691 = vunpack.c.l.b16 %v2789
    %v3692 = vunpack.c.h.b16 %v2789
    %v3693 = vunpack.c.l.b16 %v2790
    %v3694 = vunpack.c.h.b16 %v2790
    %v3695 = vunpack.c.l.b16 %v2791
    %v3696 = vunpack.c.h.b16 %v2791
    %v3697 = vunpack.c.l.b16 %v2792
    %v3698 = vunpack.c.h.b16 %v2792
    %v3699 = vunpack.c.l.b16 %v2793
    %v3700 = vunpack.c.h.b16 %v2793
    %v3701 = vunpack.c.l.b16 %v2794
    %v3702 = vunpack.c.h.b16 %v2794
    %v3703 = vunpack.c.l.b16 %v2795
    %v3704 = vunpack.c.h.b16 %v2795
    %v3705 = vunpack.c.l.b16 %v2796
    %v3706 = vunpack.c.h.b16 %v2796
    %v3707 = vunpack.c.l.b16 %v2797
    %v3708 = vunpack.c.h.b16 %v2797
    %v3709 = vunpack.c.l.b16 %v2798
    %v3710 = vunpack.c.h.b16 %v2798
    %v3711 = vunpack.c.l.b16 %v2799
    %v3712 = vunpack.c.h.b16 %v2799
    %v3713 = vunpack.c.l.b16 %v2800
    %v3714 = vunpack.c.h.b16 %v2800
    %v3715 = vunpack.c.l.b16 %v2801
    %v3716 = vunpack.c.h.b16 %v2801
    %v3717 = vunpack.c.l.b16 %v2802
    %v3718 = vunpack.c.h.b16 %v2802
    %v3719 = vunpack.c.l.b16 %v2803
    %v3720 = vunpack.c.h.b16 %v2803
    %v3721 = vunpack.c.l.b16 %v2804
    %v3722 = vunpack.c.h.b16 %v2804
    %v3723 = vunpack.c.l.b16 %v2805
    %v3724 = vunpack.c.h.b16 %v2805
    %v3725 = vunpack.c.l.b16 %v2806
    %v3726 = vunpack.c.h.b16 %v2806
    %v3727 = vunpack.c.l.b16 %v2807
    %v3728 = vunpack.c.h.b16 %v2807
    %v3729 = vunpack.c.l.b16 %v2808
    %v3730 = vunpack.c.h.b16 %v2808
    %v3731 = vunpack.c.l.b16 %v2809
    %v3732 = vunpack.c.h.b16 %v2809
    %v3733 = vunpack.c.l.b16 %v2810
    %v3734 = vunpack.c.h.b16 %v2810
    %v3735 = vunpack.c.l.b16 %v2811
    %v3736 = vunpack.c.h.b16 %v2811
    %v3737 = vunpack.c.l.b16 %v2812
    %v3738 = vunpack.c.h.b16 %v2812
    %v3739 = vunpack.c.l.b16 %v2813
    %v3740 = vunpack.c.h.b16 %v2813
    %v3741 = vunpack.c.l.b16 %v2814
    %v3742 = vunpack.c.h.b16 %v2814
    %v3743 = vunpack.c.l.b16 %v2815
    %v3744 = vunpack.c.h.b16 %v2815
    %v3745 = vunpack.c.l.b16 %v2816
    %v3746 = vunpack.c.h.b16 %v2816
    %v3747 = vunpack.c.l.b16 %v2817
    %v3748 = vunpack.c.h.b16 %v2817
    %v3749 = vunpack.c.l.b16 %v2818
    %v3750 = vunpack.c.h.b16 %v2818
    %v3751 = vunpack.c.l.b16 %v2819
    %v3752 = vunpack.c.h.b16 %v2819
    %v3753 = vunpack.c.l.b16 %v2820
    %v3754 = vunpack.c.h.b16 %v2820
    %v3755 = vunpack.c.l.b16 %v2821
    %v3756 = vunpack.c.h.b16 %v2821
    %v3757 = vunpack.c.l.b16 %v2822
    %v3758 = vunpack.c.h.b16 %v2822
    %v3759 = vunpack.c.l.b16 %v2823
    %v3760 = vunpack.c.h.b16 %v2823
    %v3761 = vunpack.c.l.b16 %v2824
    %v3762 = vunpack.c.h.b16 %v2824
    %v3763 = vunpack.c.l.b16 %v2825
    %v3764 = vunpack.c.h.b16 %v2825
    %v3765 = vunpack.c.l.b16 %v2826
    %v3766 = vunpack.c.h.b16 %v2826
    %v3767 = vunpack.c.l.b16 %v2827
    %v3768 = vunpack.c.h.b16 %v2827
    %v3769 = vunpack.c.l.b16 %v2828
    %v3770 = vunpack.c.h.b16 %v2828
    %v3771 = vunpack.c.l.b16 %v2829
    %v3772 = vunpack.c.h.b16 %v2829
    %v3773 = vunpack.c.l.b16 %v2830
    %v3774 = vunpack.c.h.b16 %v2830
    %v3775 = vunpack.c.l.b16 %v2831
    %v3776 = vunpack.c.h.b16 %v2831
    %v3777 = vunpack.c.l.b16 %v2832
    %v3778 = vunpack.c.h.b16 %v2832
    %v3779 = vunpack.c.l.b16 %v2833
    %v3780 = vunpack.c.h.b16 %v2833
    %v3781 = vunpack.c.l.b16 %v2834
    %v3782 = vunpack.c.h.b16 %v2834
    %v3783 = vunpack.c.l.b16 %v2835
    %v3784 = vunpack.c.h.b16 %v2835
    %v3785 = vunpack.c.l.b16 %v2836
    %v3786 = vunpack.c.h.b16 %v2836
    %v3787 = vunpack.c.l.b16 %v2837
    %v3788 = vunpack.c.h.b16 %v2837
    %v3789 = vunpack.c.l.b16 %v2838
    %v3790 = vunpack.c.h.b16 %v2838
    %v3791 = vunpack.c.l.b16 %v2839
    %v3792 = vunpack.c.h.b16 %v2839
    %v3793 = vunpack.c.l.b16 %v2840
    %v3794 = vunpack.c.h.b16 %v2840
    %v3795 = vunpack.c.l.b16 %v2841
    %v3796 = vunpack.c.h.b16 %v2841
    %v3797 = vunpack.c.l.b16 %v2842
    %v3798 = vunpack.c.h.b16 %v2842
    %v3799 = vunpack.c.l.b16 %v2843
    %v3800 = vunpack.c.h.b16 %v2843
    %v3801 = vunpack.c.l.b16 %v2844
    %v3802 = vunpack.c.h.b16 %v2844
    %v3803 = vunpack.c.l.b16 %v2845
    %v3804 = vunpack.c.h.b16 %v2845
    %v3805 = vunpack.c.l.b16 %v2846
    %v3806 = vunpack.c.h.b16 %v2846
    %v3807 = vunpack.c.l.b16 %v2847
    %v3808 = vunpack.c.h.b16 %v2847
    %v3809 = vunpack.c.l.b16 %v2848
    %v3810 = vunpack.c.h.b16 %v2848
    %v3811 = vunpack.c.l.b16 %v2849
    %v3812 = vunpack.c.h.b16 %v2849
    %v3813 = vunpack.c.l.b16 %v2850
    %v3814 = vunpack.c.h.b16 %v2850
    %v3815 = vunpack.c.l.b16 %v2851
    %v3816 = vunpack.c.h.b16 %v2851
    %v3817 = vunpack.c.l.b16 %v2852
    %v3818 = vunpack.c.h.b16 %v2852
    %v3819 = vunpack.c.l.b16 %v2853
    %v3820 = vunpack.c.h.b16 %v2853
    %v3821 = vunpack.c.l.b16 %v2854
    %v3822 = vunpack.c.h.b16 %v2854
    %v3823 = vunpack.c.l.b16 %v2855
    %v3824 = vunpack.c.h.b16 %v2855
    %v3825 = vunpack.c.l.b16 %v2856
    %v3826 = vunpack.c.h.b16 %v2856
    %v3827 = vpack.c.b16 %v3191, %v3187
    %v3828 = vpack.c.b16 %v3192, %v3188
    %v3829 = vpack.c.b16 %v3193, %v3189
    %v3830 = vpack.c.b16 %v3194, %v3190
    %v3831 = vpack.c.b16 %v3199, %v3195
    %v3832 = vpack.c.b16 %v3200, %v3196
    %v3833 = vpack.c.b16 %v3201, %v3197
    %v3834 = vpack.c.b16 %v3202, %v3198
    %v3835 = vpack.c.b16 %v3207, %v3203
    %v3836 = vpack.c.b16 %v3208, %v3204
    %v3837 = vpack.c.b16 %v3209, %v3205
    %v3838 = vpack.c.b16 %v3210, %v3206
    %v3839 = vpack.c.b16 %v3215, %v3211
    %v3840 = vpack.c.b16 %v3216, %v3212
    %v3841 = vpack.c.b16 %v3217, %v3213
    %v3842 = vpack.c.b16 %v3218, %v3214
    %v3843 = vpack.c.b16 %v3223, %v3219
    %v3844 = vpack.c.b16 %v3224, %v3220
    %v3845 = vpack.c.b16 %v3225, %v3221
    %v3846 = vpack.c.b16 %v3226, %v3222
    %v3847 = vpack.c.b16 %v3231, %v3227
    %v3848 = vpack.c.b16 %v3232, %v3228
    %v3849 = vpack.c.b16 %v3233, %v3229
    %v3850 = vpack.c.b16 %v3234, %v3230
    %v3851 = vpack.c.b16 %v3239, %v3235
    %v3852 = vpack.c.b16 %v3240, %v3236
    %v3853 = vpack.c.b16 %v3241, %v3237
    %v3854 = vpack.c.b16 %v3242, %v3238
    %v3855 = vpack.c.b16 %v3247, %v3243
    %v3856 = vpack.c.b16 %v3248, %v3244
    %v3857 = vpack.c.b16 %v3249, %v3245
    %v3858 = vpack.c.b16 %v3250, %v3246
    %v3859 = vpack.c.b16 %v3255, %v3251
    %v3860 = vpack.c.b16 %v3256, %v3252
    %v3861 = vpack.c.b16 %v3257, %v3253
    %v3862 = vpack.c.b16 %v3258, %v3254
    %v3863 = vpack.c.b16 %v3263, %v3259
    %v3864 = vpack.c.b16 %v3264, %v3260
    %v3865 = vpack.c.b16 %v3265, %v3261
    %v3866 = vpack.c.b16 %v3266, %v3262
    %v3867 = vpack.c.b16 %v3271, %v3267
    %v3868 = vpack.c.b16 %v3272, %v3268
    %v3869 = vpack.c.b16 %v3273, %v3269
    %v3870 = vpack.c.b16 %v3274, %v3270
    %v3871 = vpack.c.b16 %v3279, %v3275
    %v3872 = vpack.c.b16 %v3280, %v3276
    %v3873 = vpack.c.b16 %v3281, %v3277
    %v3874 = vpack.c.b16 %v3282, %v3278
    %v3875 = vpack.c.b16 %v3287, %v3283
    %v3876 = vpack.c.b16 %v3288, %v3284
    %v3877 = vpack.c.b16 %v3289, %v3285
    %v3878 = vpack.c.b16 %v3290, %v3286
    %v3879 = vpack.c.b16 %v3295, %v3291
    %v3880 = vpack.c.b16 %v3296, %v3292
    %v3881 = vpack.c.b16 %v3297, %v3293
    %v3882 = vpack.c.b16 %v3298, %v3294
    %v3883 = vpack.c.b16 %v3303, %v3299
    %v3884 = vpack.c.b16 %v3304, %v3300
    %v3885 = vpack.c.b16 %v3305, %v3301
    %v3886 = vpack.c.b16 %v3306, %v3302
    %v3887 = vpack.c.b16 %v3311, %v3307
    %v3888 = vpack.c.b16 %v3312, %v3308
    %v3889 = vpack.c.b16 %v3313, %v3309
    %v3890 = vpack.c.b16 %v3314, %v3310
    %v3891 = vpack.c.b16 %v3319, %v3315
    %v3892 = vpack.c.b16 %v3320, %v3316
    %v3893 = vpack.c.b16 %v3321, %v3317
    %v3894 = vpack.c.b16 %v3322, %v3318
    %v3895 = vpack.c.b16 %v3327, %v3323
    %v3896 = vpack.c.b16 %v3328, %v3324
    %v3897 = vpack.c.b16 %v3329, %v3325
    %v3898 = vpack.c.b16 %v3330, %v3326
    %v3899 = vpack.c.b16 %v3335, %v3331
    %v3900 = vpack.c.b16 %v3336, %v3332
    %v3901 = vpack.c.b16 %v3337, %v3333
    %v3902 = vpack.c.b16 %v3338, %v3334
    %v3903 = vpack.c.b16 %v3343, %v3339
    %v3904 = vpack.c.b16 %v3344, %v3340
    %v3905 = vpack.c.b16 %v3345, %v3341
    %v3906 = vpack.c.b16 %v3346, %v3342
    %v3907 = vpack.c.b16 %v3351, %v3347
    %v3908 = vpack.c.b16 %v3352, %v3348
    %v3909 = vpack.c.b16 %v3353, %v3349
    %v3910 = vpack.c.b16 %v3354, %v3350
    %v3911 = vpack.c.b16 %v3359, %v3355
    %v3912 = vpack.c.b16 %v3360, %v3356
    %v3913 = vpack.c.b16 %v3361, %v3357
    %v3914 = vpack.c.b16 %v3362, %v3358
    %v3915 = vpack.c.b16 %v3367, %v3363
    %v3916 = vpack.c.b16 %v3368, %v3364
    %v3917 = vpack.c.b16 %v3369, %v3365
    %v3918 = vpack.c.b16 %v3370, %v3366
    %v3919 = vpack.c.b16 %v3375, %v3371
    %v3920 = vpack.c.b16 %v3376, %v3372
    %v3921 = vpack.c.b16 %v3377, %v3373
    %v3922 = vpack.c.b16 %v3378, %v3374
    %v3923 = vpack.c.b16 %v3383, %v3379
    %v3924 = vpack.c.b16 %v3384, %v3380
    %v3925 = vpack.c.b16 %v3385, %v3381
    %v3926 = vpack.c.b16 %v3386, %v3382
    %v3927 = vpack.c.b16 %v3391, %v3387
    %v3928 = vpack.c.b16 %v3392, %v3388
    %v3929 = vpack.c.b16 %v3393, %v3389
    %v3930 = vpack.c.b16 %v3394, %v3390
    %v3931 = vpack.c.b16 %v3399, %v3395
    %v3932 = vpack.c.b16 %v3400, %v3396
    %v3933 = vpack.c.b16 %v3401, %v3397
    %v3934 = vpack.c.b16 %v3402, %v3398
    %v3935 = vpack.c.b16 %v3407, %v3403
    %v3936 = vpack.c.b16 %v3408, %v3404
    %v3937 = vpack.c.b16 %v3409, %v3405
    %v3938 = vpack.c.b16 %v3410, %v3406
    %v3939 = vpack.c.b16 %v3415, %v3411
    %v3940 = vpack.c.b16 %v3416, %v3412
    %v3941 = vpack.c.b16 %v3417, %v3413
    %v3942 = vpack.c.b16 %v3418, %v3414
    %v3943 = vpack.c.b16 %v3423, %v3419
    %v3944 = vpack.c.b16 %v3424, %v3420
    %v3945 = vpack.c.b16 %v3425, %v3421
    %v3946 = vpack.c.b16 %v3426, %v3422
    %v3947 = vpack.c.b16 %v3431, %v3427
    %v3948 = vpack.c.b16 %v3432, %v3428
    %v3949 = vpack.c.b16 %v3433, %v3429
    %v3950 = vpack.c.b16 %v3434, %v3430
    %v3951 = vpack.c.b16 %v3439, %v3435
    %v3952 = vpack.c.b16 %v3440, %v3436
    %v3953 = vpack.c.b16 %v3441, %v3437
    %v3954 = vpack.c.b16 %v3442, %v3438
    %v3955 = vpack.c.b16 %v3447, %v3443
    %v3956 = vpack.c.b16 %v3448, %v3444
    %v3957 = vpack.c.b16 %v3449, %v3445
    %v3958 = vpack.c.b16 %v3450, %v3446
    %v3959 = vpack.c.b16 %v3455, %v3451
    %v3960 = vpack.c.b16 %v3456, %v3452
    %v3961 = vpack.c.b16 %v3457, %v3453
    %v3962 = vpack.c.b16 %v3458, %v3454
    %v3963 = vpack.c.b16 %v3463, %v3459
    %v3964 = vpack.c.b16 %v3464, %v3460
    %v3965 = vpack.c.b16 %v3465, %v3461
    %v3966 = vpack.c.b16 %v3466, %v3462
    %v3967 = vpack.c.b16 %v3471, %v3467
    %v3968 = vpack.c.b16 %v3472, %v3468
    %v3969 = vpack.c.b16 %v3473, %v3469
    %v3970 = vpack.c.b16 %v3474, %v3470
    %v3971 = vpack.c.b16 %v3479, %v3475
    %v3972 = vpack.c.b16 %v3480, %v3476
    %v3973 = vpack.c.b16 %v3481, %v3477
    %v3974 = vpack.c.b16 %v3482, %v3478
    %v3975 = vpack.c.b16 %v3487, %v3483
    %v3976 = vpack.c.b16 %v3488, %v3484
    %v3977 = vpack.c.b16 %v3489, %v3485
    %v3978 = vpack.c.b16 %v3490, %v3486
    %v3979 = vpack.c.b16 %v3495, %v3491
    %v3980 = vpack.c.b16 %v3496, %v3492
    %v3981 = vpack.c.b16 %v3497, %v3493
    %v3982 = vpack.c.b16 %v3498, %v3494
    %v3983 = vpack.c.b16 %v3503, %v3499
    %v3984 = vpack.c.b16 %v3504, %v3500
    %v3985 = vpack.c.b16 %v3505, %v3501
    %v3986 = vpack.c.b16 %v3506, %v3502
    %v3987 = vpack.c.b16 %v3511, %v3507
    %v3988 = vpack.c.b16 %v3512, %v3508
    %v3989 = vpack.c.b16 %v3513, %v3509
    %v3990 = vpack.c.b16 %v3514, %v3510
    %v3991 = vpack.c.b16 %v3519, %v3515
    %v3992 = vpack.c.b16 %v3520, %v3516
    %v3993 = vpack.c.b16 %v3521, %v3517
    %v3994 = vpack.c.b16 %v3522, %v3518
    %v3995 = vpack.c.b16 %v3527, %v3523
    %v3996 = vpack.c.b16 %v3528, %v3524
    %v3997 = vpack.c.b16 %v3529, %v3525
    %v3998 = vpack.c.b16 %v3530, %v3526
    %v3999 = vpack.c.b16 %v3535, %v3531
    %v4000 = vpack.c.b16 %v3536, %v3532
    %v4001 = vpack.c.b16 %v3537, %v3533
    %v4002 = vpack.c.b16 %v3538, %v3534
    %v4003 = vpack.c.b16 %v3543, %v3539
    %v4004 = vpack.c.b16 %v3544, %v3540
    %v4005 = vpack.c.b16 %v3545, %v3541
    %v4006 = vpack.c.b16 %v3546, %v3542
    %v4007 = vpack.c.b16 %v3551, %v3547
    %v4008 = vpack.c.b16 %v3552, %v3548
    %v4009 = vpack.c.b16 %v3553, %v3549
    %v4010 = vpack.c.b16 %v3554, %v3550
    %v4011 = vpack.c.b16 %v3559, %v3555
    %v4012 = vpack.c.b16 %v3560, %v3556
    %v4013 = vpack.c.b16 %v3561, %v3557
    %v4014 = vpack.c.b16 %v3562, %v3558
    %v4015 = vpack.c.b16 %v3567, %v3563
    %v4016 = vpack.c.b16 %v3568, %v3564
    %v4017 = vpack.c.b16 %v3569, %v3565
    %v4018 = vpack.c.b16 %v3570, %v3566
    %v4019 = vpack.c.b16 %v3575, %v3571
    %v4020 = vpack.c.b16 %v3576, %v3572
    %v4021 = vpack.c.b16 %v3577, %v3573
    %v4022 = vpack.c.b16 %v3578, %v3574
    %v4023 = vpack.c.b16 %v3583, %v3579
    %v4024 = vpack.c.b16 %v3584, %v3580
    %v4025 = vpack.c.b16 %v3585, %v3581
    %v4026 = vpack.c.b16 %v3586, %v3582
    %v4027 = vpack.c.b16 %v3591, %v3587
    %v4028 = vpack.c.b16 %v3592, %v3588
    %v4029 = vpack.c.b16 %v3593, %v3589
    %v4030 = vpack.c.b16 %v3594, %v3590
    %v4031 = vpack.c.b16 %v3599, %v3595
    %v4032 = vpack.c.b16 %v3600, %v3596
    %v4033 = vpack.c.b16 %v3601, %v3597
    %v4034 = vpack.c.b16 %v3602, %v3598
    %v4035 = vpack.c.b16 %v3607, %v3603
    %v4036 = vpack.c.b16 %v3608, %v3604
    %v4037 = vpack.c.b16 %v3609, %v3605
    %v4038 = vpack.c.b16 %v3610, %v3606
    %v4039 = vpack.c.b16 %v3615, %v3611
    %v4040 = vpack.c.b16 %v3616, %v3612
    %v4041 = vpack.c.b16 %v3617, %v3613
    %v4042 = vpack.c.b16 %v3618, %v3614
    %v4043 = vpack.c.b16 %v3623, %v3619
    %v4044 = vpack.c.b16 %v3624, %v3620
    %v4045 = vpack.c.b16 %v3625, %v3621
    %v4046 = vpack.c.b16 %v3626, %v3622
    %v4047 = vpack.c.b16 %v3631, %v3627
    %v4048 = vpack.c.b16 %v3632, %v3628
    %v4049 = vpack.c.b16 %v3633, %v3629
    %v4050 = vpack.c.b16 %v3634, %v3630
    %v4051 = vpack.c.b16 %v3639, %v3635
    %v4052 = vpack.c.b16 %v3640, %v3636
    %v4053 = vpack.c.b16 %v3641, %v3637
    %v4054 = vpack.c.b16 %v3642, %v3638
    %v4055 = vpack.c.b16 %v3647, %v3643
    %v4056 = vpack.c.b16 %v3648, %v3644
    %v4057 = vpack.c.b16 %v3649, %v3645
    %v4058 = vpack.c.b16 %v3650, %v3646
    %v4059 = vpack.c.b16 %v3655, %v3651
    %v4060 = vpack.c.b16 %v3656, %v3652
    %v4061 = vpack.c.b16 %v3657, %v3653
    %v4062 = vpack.c.b16 %v3658, %v3654
    %v4063 = vpack.c.b16 %v3663, %v3659
    %v4064 = vpack.c.b16 %v3664, %v3660
    %v4065 = vpack.c.b16 %v3665, %v3661
    %v4066 = vpack.c.b16 %v3666, %v3662
    %v4067 = vpack.c.b16 %v3671, %v3667
    %v4068 = vpack.c.b16 %v3672, %v3668
    %v4069 = vpack.c.b16 %v3673, %v3669
    %v4070 = vpack.c.b16 %v3674, %v3670
    %v4071 = vpack.c.b16 %v3679, %v3675
    %v4072 = vpack.c.b16 %v3680, %v3676
    %v4073 = vpack.c.b16 %v3681, %v3677
    %v4074 = vpack.c.b16 %v3682, %v3678
    %v4075 = vpack.c.b16 %v3687, %v3683
    %v4076 = vpack.c.b16 %v3688, %v3684
    %v4077 = vpack.c.b16 %v3689, %v3685
    %v4078 = vpack.c.b16 %v3690, %v3686
    %v4079 = vpack.c.b16 %v3695, %v3691
    %v4080 = vpack.c.b16 %v3696, %v3692
    %v4081 = vpack.c.b16 %v3697, %v3693
    %v4082 = vpack.c.b16 %v3698, %v3694
    %v4083 = vpack.c.b16 %v3703, %v3699
    %v4084 = vpack.c.b16 %v3704, %v3700
    %v4085 = vpack.c.b16 %v3705, %v3701
    %v4086 = vpack.c.b16 %v3706, %v3702
    %v4087 = vpack.c.b16 %v3711, %v3707
    %v4088 = vpack.c.b16 %v3712, %v3708
    %v4089 = vpack.c.b16 %v3713, %v3709
    %v4090 = vpack.c.b16 %v3714, %v3710
    %v4091 = vpack.c.b16 %v3719, %v3715
    %v4092 = vpack.c.b16 %v3720, %v3716
    %v4093 = vpack.c.b16 %v3721, %v3717
    %v4094 = vpack.c.b16 %v3722, %v3718
    %v4095 = vpack.c.b16 %v3727, %v3723
    %v4096 = vpack.c.b16 %v3728, %v3724
    %v4097 = vpack.c.b16 %v3729, %v3725
    %v4098 = vpack.c.b16 %v3730, %v3726
    %v4099 = vpack.c.b16 %v3735, %v3731
    %v4100 = vpack.c.b16 %v3736, %v3732
    %v4101 = vpack.c.b16 %v3737, %v3733
    %v4102 = vpack.c.b16 %v3738, %v3734
    %v4103 = vpack.c.b16 %v3743, %v3739
    %v4104 = vpack.c.b16 %v3744, %v3740
    %v4105 = vpack.c.b16 %v3745, %v3741
    %v4106 = vpack.c.b16 %v3746, %v3742
    %v4107 = vpack.c.b16 %v3751, %v3747
    %v4108 = vpack.c.b16 %v3752, %v3748
    %v4109 = vpack.c.b16 %v3753, %v3749
    %v4110 = vpack.c.b16 %v3754, %v3750
    %v4111 = vpack.c.b16 %v3759, %v3755
    %v4112 = vpack.c.b16 %v3760, %v3756
    %v4113 = vpack.c.b16 %v3761, %v3757
    %v4114 = vpack.c.b16 %v3762, %v3758
    %v4115 = vpack.c.b16 %v3767, %v3763
    %v4116 = vpack.c.b16 %v3768, %v3764
    %v4117 = vpack.c.b16 %v3769, %v3765
    %v4118 = vpack.c.b16 %v3770, %v3766
    %v4119 = vpack.c.b16 %v3775, %v3771
    %v4120 = vpack.c.b16 %v3776, %v3772
    %v4121 = vpack.c.b16 %v3777, %v3773
    %v4122 = vpack.c.b16 %v3778, %v3774
    %v4123 = vpack.c.b16 %v3783, %v3779
    %v4124 = vpack.c.b16 %v3784, %v3780
    %v4125 = vpack.c.b16 %v3785, %v3781
    %v4126 = vpack.c.b16 %v3786, %v3782
    %v4127 = vpack.c.b16 %v3791, %v3787
    %v4128 = vpack.c.b16 %v3792, %v3788
    %v4129 = vpack.c.b16 %v3793, %v3789
    %v4130 = vpack.c.b16 %v3794, %v3790
    %v4131 = vpack.c.b16 %v3799, %v3795
    %v4132 = vpack.c.b16 %v3800, %v3796
    %v4133 = vpack.c.b16 %v3801, %v3797
    %v4134 = vpack.c.b16 %v3802, %v3798
    %v4135 = vpack.c.b16 %v3807, %v3803
    %v4136 = vpack.c.b16 %v3808, %v3804
    %v4137 = vpack.c.b16 %v3809, %v3805
    %v4138 = vpack.c.b16 %v3810, %v3806
    %v4139 = vpack.c.b16 %v3815, %v3811
    %v4140 = vpack.c.b16 %v3816, %v3812
    %v4141 = vpack.c.b16 %v3817, %v3813
    %v4142 = vpack.c.b16 %v3818, %v3814
    %v4143 = vpack.c.b16 %v3823, %v3819
    %v4144 = vpack.c.b16 %v3824, %v3820
    %v4145 = vpack.c.b16 %v3825, %v3821
    %v4146 = vpack.c.b16 %v3826, %v3822
    %4467 = vmatpush.bf16.msra.mxu0 %v3855
    %4468 = vmatpush.bf16.msra.mxu0 %v3851
    %4469 = vmatpush.bf16.msra.mxu0 %v3847
    %4470 = vmatpush.bf16.msra.mxu0 %v3843
    %4471 = vmatpush.bf16.msra.mxu0 %v3839
    %4472 = vmatpush.bf16.msra.mxu0 %v3835
    %4473 = vmatpush.bf16.msra.mxu0 %v3831
    %4474 = vmatpush.bf16.msra.mxu0 %v3827
    %4475 = vmatmul.bf16.gmra.mxu0 %v2517
    %v4476 = vpop.f32.mrf.mxu0
    %v4477 = vadd.f32 %v2859, %v4476
    %v4478 = vpop.f32.mrf.mxu0
    %v4479 = vadd.f32 %v2859, %v4478
    %4480 = vmatmul.bf16.gmra.mxu0 %v2527
    %v4481 = vpop.f32.mrf.mxu0
    %v4482 = vadd.f32 %v2859, %v4481
    %v4483 = vpop.f32.mrf.mxu0
    %v4484 = vadd.f32 %v2859, %v4483
    %4485 = vdwg.mxu0
    %4486 = vmatpush.bf16.msra.mxu0 %v3887
    %4487 = vmatpush.bf16.msra.mxu0 %v3883
    %4488 = vmatpush.bf16.msra.mxu0 %v3879
    %4489 = vmatpush.bf16.msra.mxu0 %v3875
    %4490 = vmatpush.bf16.msra.mxu0 %v3871
    %4491 = vmatpush.bf16.msra.mxu0 %v3867
    %4492 = vmatpush.bf16.msra.mxu0 %v3863
    %4493 = vmatpush.bf16.msra.mxu0 %v3859
    %4494 = vmatmul.bf16.gmra.mxu0 %v2518
    %v4495 = vpop.f32.mrf.mxu0
    %v4496 = vadd.f32 %v4477, %v4495
    %v4497 = vpop.f32.mrf.mxu0
    %v4498 = vadd.f32 %v4479, %v4497
    %4499 = vmatmul.bf16.gmra.mxu0 %v2528
    %v4500 = vpop.f32.mrf.mxu0
    %v4501 = vadd.f32 %v4482, %v4500
    %v4502 = vpop.f32.mrf.mxu0
    %v4503 = vadd.f32 %v4484, %v4502
    %4504 = vdwg.mxu0
    %4505 = vmatpush.bf16.msra.mxu0 %v3919
    %4506 = vmatpush.bf16.msra.mxu0 %v3915
    %4507 = vmatpush.bf16.msra.mxu0 %v3911
    %4508 = vmatpush.bf16.msra.mxu0 %v3907
    %4509 = vmatpush.bf16.msra.mxu0 %v3903
    %4510 = vmatpush.bf16.msra.mxu0 %v3899
    %4511 = vmatpush.bf16.msra.mxu0 %v3895
    %4512 = vmatpush.bf16.msra.mxu0 %v3891
    %4513 = vmatmul.bf16.gmra.mxu0 %v2519
    %v4514 = vpop.f32.mrf.mxu0
    %v4515 = vadd.f32 %v4496, %v4514
    %v4516 = vpop.f32.mrf.mxu0
    %v4517 = vadd.f32 %v4498, %v4516
    %4518 = vmatmul.bf16.gmra.mxu0 %v2529
    %v4519 = vpop.f32.mrf.mxu0
    %v4520 = vadd.f32 %v4501, %v4519
    %v4521 = vpop.f32.mrf.mxu0
    %v4522 = vadd.f32 %v4503, %v4521
    %4523 = vdwg.mxu0
    %4524 = vmatpush.bf16.msra.mxu0 %v3951
    %4525 = vmatpush.bf16.msra.mxu0 %v3947
    %4526 = vmatpush.bf16.msra.mxu0 %v3943
    %4527 = vmatpush.bf16.msra.mxu0 %v3939
    %4528 = vmatpush.bf16.msra.mxu0 %v3935
    %4529 = vmatpush.bf16.msra.mxu0 %v3931
    %4530 = vmatpush.bf16.msra.mxu0 %v3927
    %4531 = vmatpush.bf16.msra.mxu0 %v3923
    %4532 = vmatmul.bf16.gmra.mxu0 %v2520
    %v4533 = vpop.f32.mrf.mxu0
    %v4534 = vadd.f32 %v4515, %v4533
    %v4535 = vpop.f32.mrf.mxu0
    %v4536 = vadd.f32 %v4517, %v4535
    %4537 = vmatmul.bf16.gmra.mxu0 %v2530
    %v4538 = vpop.f32.mrf.mxu0
    %v4539 = vadd.f32 %v4520, %v4538
    %v4540 = vpop.f32.mrf.mxu0
    %v4541 = vadd.f32 %v4522, %v4540
    %4542 = vdwg.mxu0
    %4543 = vmatpush.bf16.msra.mxu0 %v3983
    %4544 = vmatpush.bf16.msra.mxu0 %v3979
    %4545 = vmatpush.bf16.msra.mxu0 %v3975
    %4546 = vmatpush.bf16.msra.mxu0 %v3971
    %4547 = vmatpush.bf16.msra.mxu0 %v3967
    %4548 = vmatpush.bf16.msra.mxu0 %v3963
    %4549 = vmatpush.bf16.msra.mxu0 %v3959
    %4550 = vmatpush.bf16.msra.mxu0 %v3955
    %4551 = vmatmul.bf16.gmra.mxu0 %v2521
    %v4552 = vpop.f32.mrf.mxu0
    %v4553 = vadd.f32 %v4534, %v4552
    %v4554 = vpop.f32.mrf.mxu0
    %v4555 = vadd.f32 %v4536, %v4554
    %4556 = vmatmul.bf16.gmra.mxu0 %v2531
    %v4557 = vpop.f32.mrf.mxu0
    %v4558 = vadd.f32 %v4539, %v4557
    %v4559 = vpop.f32.mrf.mxu0
    %v4560 = vadd.f32 %v4541, %v4559
    %4561 = vdwg.mxu0
    %4562 = vmatpush.bf16.msra.mxu0 %v4015
    %4563 = vmatpush.bf16.msra.mxu0 %v4011
    %4564 = vmatpush.bf16.msra.mxu0 %v4007
    %4565 = vmatpush.bf16.msra.mxu0 %v4003
    %4566 = vmatpush.bf16.msra.mxu0 %v3999
    %4567 = vmatpush.bf16.msra.mxu0 %v3995
    %4568 = vmatpush.bf16.msra.mxu0 %v3991
    %4569 = vmatpush.bf16.msra.mxu0 %v3987
    %4570 = vmatmul.bf16.gmra.mxu0 %v2522
    %v4571 = vpop.f32.mrf.mxu0
    %v4572 = vadd.f32 %v4553, %v4571
    %v4573 = vpop.f32.mrf.mxu0
    %v4574 = vadd.f32 %v4555, %v4573
    %4575 = vmatmul.bf16.gmra.mxu0 %v2532
    %v4576 = vpop.f32.mrf.mxu0
    %v4577 = vadd.f32 %v4558, %v4576
    %v4578 = vpop.f32.mrf.mxu0
    %v4579 = vadd.f32 %v4560, %v4578
    %4580 = vdwg.mxu0
    %4581 = vmatpush.bf16.msra.mxu0 %v4047
    %4582 = vmatpush.bf16.msra.mxu0 %v4043
    %4583 = vmatpush.bf16.msra.mxu0 %v4039
    %4584 = vmatpush.bf16.msra.mxu0 %v4035
    %4585 = vmatpush.bf16.msra.mxu0 %v4031
    %4586 = vmatpush.bf16.msra.mxu0 %v4027
    %4587 = vmatpush.bf16.msra.mxu0 %v4023
    %4588 = vmatpush.bf16.msra.mxu0 %v4019
    %4589 = vmatmul.bf16.gmra.mxu0 %v2523
    %v4590 = vpop.f32.mrf.mxu0
    %v4591 = vadd.f32 %v4572, %v4590
    %v4592 = vpop.f32.mrf.mxu0
    %v4593 = vadd.f32 %v4574, %v4592
    %4594 = vmatmul.bf16.gmra.mxu0 %v2533
    %v4595 = vpop.f32.mrf.mxu0
    %v4596 = vadd.f32 %v4577, %v4595
    %v4597 = vpop.f32.mrf.mxu0
    %v4598 = vadd.f32 %v4579, %v4597
    %4599 = vdwg.mxu0
    %4600 = vmatpush.bf16.msra.mxu0 %v4079
    %4601 = vmatpush.bf16.msra.mxu0 %v4075
    %4602 = vmatpush.bf16.msra.mxu0 %v4071
    %4603 = vmatpush.bf16.msra.mxu0 %v4067
    %4604 = vmatpush.bf16.msra.mxu0 %v4063
    %4605 = vmatpush.bf16.msra.mxu0 %v4059
    %4606 = vmatpush.bf16.msra.mxu0 %v4055
    %4607 = vmatpush.bf16.msra.mxu0 %v4051
    %4608 = vmatmul.bf16.gmra.mxu0 %v2524
    %v4609 = vpop.f32.mrf.mxu0
    %v4610 = vadd.f32 %v4591, %v4609
    %v4611 = vpop.f32.mrf.mxu0
    %v4612 = vadd.f32 %v4593, %v4611
    %4613 = vmatmul.bf16.gmra.mxu0 %v2534
    %v4614 = vpop.f32.mrf.mxu0
    %v4615 = vadd.f32 %v4596, %v4614
    %v4616 = vpop.f32.mrf.mxu0
    %v4617 = vadd.f32 %v4598, %v4616
    %4618 = vdwg.mxu0
    %4619 = vmatpush.bf16.msra.mxu0 %v4111
    %4620 = vmatpush.bf16.msra.mxu0 %v4107
    %4621 = vmatpush.bf16.msra.mxu0 %v4103
    %4622 = vmatpush.bf16.msra.mxu0 %v4099
    %4623 = vmatpush.bf16.msra.mxu0 %v4095
    %4624 = vmatpush.bf16.msra.mxu0 %v4091
    %4625 = vmatpush.bf16.msra.mxu0 %v4087
    %4626 = vmatpush.bf16.msra.mxu0 %v4083
    %4627 = vmatmul.bf16.gmra.mxu0 %v2525
    %v4628 = vpop.f32.mrf.mxu0
    %v4629 = vadd.f32 %v4610, %v4628
    %v4630 = vpop.f32.mrf.mxu0
    %v4631 = vadd.f32 %v4612, %v4630
    %4632 = vmatmul.bf16.gmra.mxu0 %v2535
    %v4633 = vpop.f32.mrf.mxu0
    %v4634 = vadd.f32 %v4615, %v4633
    %v4635 = vpop.f32.mrf.mxu0
    %v4636 = vadd.f32 %v4617, %v4635
    %4637 = vdwg.mxu0
    %4638 = vmatpush.bf16.msra.mxu0 %v4143
    %4639 = vmatpush.bf16.msra.mxu0 %v4139
    %4640 = vmatpush.bf16.msra.mxu0 %v4135
    %4641 = vmatpush.bf16.msra.mxu0 %v4131
    %4642 = vmatpush.bf16.msra.mxu0 %v4127
    %4643 = vmatpush.bf16.msra.mxu0 %v4123
    %4644 = vmatpush.bf16.msra.mxu0 %v4119
    %4645 = vmatpush.bf16.msra.mxu0 %v4115
    %4646 = vmatmul.bf16.gmra.mxu0 %v2526
    %v4647 = vpop.f32.mrf.mxu0
    %v4648 = vadd.f32 %v4629, %v4647
    %v4649 = vpop.f32.mrf.mxu0
    %v4650 = vadd.f32 %v4631, %v4649
    %4651 = vmatmul.bf16.gmra.mxu0 %v2536
    %v4652 = vpop.f32.mrf.mxu0
    %v4653 = vadd.f32 %v4634, %v4652
    %v4654 = vpop.f32.mrf.mxu0
    %v4655 = vadd.f32 %v4636, %v4654
    %4656 = vdwg.mxu0
    %4657 = vmatpush.bf16.msra.mxu0 %v3856
    %4658 = vmatpush.bf16.msra.mxu0 %v3852
    %4659 = vmatpush.bf16.msra.mxu0 %v3848
    %4660 = vmatpush.bf16.msra.mxu0 %v3844
    %4661 = vmatpush.bf16.msra.mxu0 %v3840
    %4662 = vmatpush.bf16.msra.mxu0 %v3836
    %4663 = vmatpush.bf16.msra.mxu0 %v3832
    %4664 = vmatpush.bf16.msra.mxu0 %v3828
    %4665 = vmatmul.bf16.gmra.mxu0 %v2517
    %v4666 = vpop.f32.mrf.mxu0
    %v4667 = vadd.f32 %v2860, %v4666
    %v4668 = vpop.f32.mrf.mxu0
    %v4669 = vadd.f32 %v2860, %v4668
    %4670 = vmatmul.bf16.gmra.mxu0 %v2527
    %v4671 = vpop.f32.mrf.mxu0
    %v4672 = vadd.f32 %v2860, %v4671
    %v4673 = vpop.f32.mrf.mxu0
    %v4674 = vadd.f32 %v2860, %v4673
    %4675 = vdwg.mxu0
    %4676 = vmatpush.bf16.msra.mxu0 %v3888
    %4677 = vmatpush.bf16.msra.mxu0 %v3884
    %4678 = vmatpush.bf16.msra.mxu0 %v3880
    %4679 = vmatpush.bf16.msra.mxu0 %v3876
    %4680 = vmatpush.bf16.msra.mxu0 %v3872
    %4681 = vmatpush.bf16.msra.mxu0 %v3868
    %4682 = vmatpush.bf16.msra.mxu0 %v3864
    %4683 = vmatpush.bf16.msra.mxu0 %v3860
    %4684 = vmatmul.bf16.gmra.mxu0 %v2518
    %v4685 = vpop.f32.mrf.mxu0
    %v4686 = vadd.f32 %v4667, %v4685
    %v4687 = vpop.f32.mrf.mxu0
    %v4688 = vadd.f32 %v4669, %v4687
    %4689 = vmatmul.bf16.gmra.mxu0 %v2528
    %v4690 = vpop.f32.mrf.mxu0
    %v4691 = vadd.f32 %v4672, %v4690
    %v4692 = vpop.f32.mrf.mxu0
    %v4693 = vadd.f32 %v4674, %v4692
    %4694 = vdwg.mxu0
    %4695 = vmatpush.bf16.msra.mxu0 %v3920
    %4696 = vmatpush.bf16.msra.mxu0 %v3916
    %4697 = vmatpush.bf16.msra.mxu0 %v3912
    %4698 = vmatpush.bf16.msra.mxu0 %v3908
    %4699 = vmatpush.bf16.msra.mxu0 %v3904
    %4700 = vmatpush.bf16.msra.mxu0 %v3900
    %4701 = vmatpush.bf16.msra.mxu0 %v3896
    %4702 = vmatpush.bf16.msra.mxu0 %v3892
    %4703 = vmatmul.bf16.gmra.mxu0 %v2519
    %v4704 = vpop.f32.mrf.mxu0
    %v4705 = vadd.f32 %v4686, %v4704
    %v4706 = vpop.f32.mrf.mxu0
    %v4707 = vadd.f32 %v4688, %v4706
    %4708 = vmatmul.bf16.gmra.mxu0 %v2529
    %v4709 = vpop.f32.mrf.mxu0
    %v4710 = vadd.f32 %v4691, %v4709
    %v4711 = vpop.f32.mrf.mxu0
    %v4712 = vadd.f32 %v4693, %v4711
    %4713 = vdwg.mxu0
    %4714 = vmatpush.bf16.msra.mxu0 %v3952
    %4715 = vmatpush.bf16.msra.mxu0 %v3948
    %4716 = vmatpush.bf16.msra.mxu0 %v3944
    %4717 = vmatpush.bf16.msra.mxu0 %v3940
    %4718 = vmatpush.bf16.msra.mxu0 %v3936
    %4719 = vmatpush.bf16.msra.mxu0 %v3932
    %4720 = vmatpush.bf16.msra.mxu0 %v3928
    %4721 = vmatpush.bf16.msra.mxu0 %v3924
    %4722 = vmatmul.bf16.gmra.mxu0 %v2520
    %v4723 = vpop.f32.mrf.mxu0
    %v4724 = vadd.f32 %v4705, %v4723
    %v4725 = vpop.f32.mrf.mxu0
    %v4726 = vadd.f32 %v4707, %v4725
    %4727 = vmatmul.bf16.gmra.mxu0 %v2530
    %v4728 = vpop.f32.mrf.mxu0
    %v4729 = vadd.f32 %v4710, %v4728
    %v4730 = vpop.f32.mrf.mxu0
    %v4731 = vadd.f32 %v4712, %v4730
    %4732 = vdwg.mxu0
    %4733 = vmatpush.bf16.msra.mxu0 %v3984
    %4734 = vmatpush.bf16.msra.mxu0 %v3980
    %4735 = vmatpush.bf16.msra.mxu0 %v3976
    %4736 = vmatpush.bf16.msra.mxu0 %v3972
    %4737 = vmatpush.bf16.msra.mxu0 %v3968
    %4738 = vmatpush.bf16.msra.mxu0 %v3964
    %4739 = vmatpush.bf16.msra.mxu0 %v3960
    %4740 = vmatpush.bf16.msra.mxu0 %v3956
    %4741 = vmatmul.bf16.gmra.mxu0 %v2521
    %v4742 = vpop.f32.mrf.mxu0
    %v4743 = vadd.f32 %v4724, %v4742
    %v4744 = vpop.f32.mrf.mxu0
    %v4745 = vadd.f32 %v4726, %v4744
    %4746 = vmatmul.bf16.gmra.mxu0 %v2531
    %v4747 = vpop.f32.mrf.mxu0
    %v4748 = vadd.f32 %v4729, %v4747
    %v4749 = vpop.f32.mrf.mxu0
    %v4750 = vadd.f32 %v4731, %v4749
    %4751 = vdwg.mxu0
    %4752 = vmatpush.bf16.msra.mxu0 %v4016
    %4753 = vmatpush.bf16.msra.mxu0 %v4012
    %4754 = vmatpush.bf16.msra.mxu0 %v4008
    %4755 = vmatpush.bf16.msra.mxu0 %v4004
    %4756 = vmatpush.bf16.msra.mxu0 %v4000
    %4757 = vmatpush.bf16.msra.mxu0 %v3996
    %4758 = vmatpush.bf16.msra.mxu0 %v3992
    %4759 = vmatpush.bf16.msra.mxu0 %v3988
    %4760 = vmatmul.bf16.gmra.mxu0 %v2522
    %v4761 = vpop.f32.mrf.mxu0
    %v4762 = vadd.f32 %v4743, %v4761
    %v4763 = vpop.f32.mrf.mxu0
    %v4764 = vadd.f32 %v4745, %v4763
    %4765 = vmatmul.bf16.gmra.mxu0 %v2532
    %v4766 = vpop.f32.mrf.mxu0
    %v4767 = vadd.f32 %v4748, %v4766
    %v4768 = vpop.f32.mrf.mxu0
    %v4769 = vadd.f32 %v4750, %v4768
    %4770 = vdwg.mxu0
    %4771 = vmatpush.bf16.msra.mxu0 %v4048
    %4772 = vmatpush.bf16.msra.mxu0 %v4044
    %4773 = vmatpush.bf16.msra.mxu0 %v4040
    %4774 = vmatpush.bf16.msra.mxu0 %v4036
    %4775 = vmatpush.bf16.msra.mxu0 %v4032
    %4776 = vmatpush.bf16.msra.mxu0 %v4028
    %4777 = vmatpush.bf16.msra.mxu0 %v4024
    %4778 = vmatpush.bf16.msra.mxu0 %v4020
    %4779 = vmatmul.bf16.gmra.mxu0 %v2523
    %v4780 = vpop.f32.mrf.mxu0
    %v4781 = vadd.f32 %v4762, %v4780
    %v4782 = vpop.f32.mrf.mxu0
    %v4783 = vadd.f32 %v4764, %v4782
    %4784 = vmatmul.bf16.gmra.mxu0 %v2533
    %v4785 = vpop.f32.mrf.mxu0
    %v4786 = vadd.f32 %v4767, %v4785
    %v4787 = vpop.f32.mrf.mxu0
    %v4788 = vadd.f32 %v4769, %v4787
    %4789 = vdwg.mxu0
    %4790 = vmatpush.bf16.msra.mxu0 %v4080
    %4791 = vmatpush.bf16.msra.mxu0 %v4076
    %4792 = vmatpush.bf16.msra.mxu0 %v4072
    %4793 = vmatpush.bf16.msra.mxu0 %v4068
    %4794 = vmatpush.bf16.msra.mxu0 %v4064
    %4795 = vmatpush.bf16.msra.mxu0 %v4060
    %4796 = vmatpush.bf16.msra.mxu0 %v4056
    %4797 = vmatpush.bf16.msra.mxu0 %v4052
    %4798 = vmatmul.bf16.gmra.mxu0 %v2524
    %v4799 = vpop.f32.mrf.mxu0
    %v4800 = vadd.f32 %v4781, %v4799
    %v4801 = vpop.f32.mrf.mxu0
    %v4802 = vadd.f32 %v4783, %v4801
    %4803 = vmatmul.bf16.gmra.mxu0 %v2534
    %v4804 = vpop.f32.mrf.mxu0
    %v4805 = vadd.f32 %v4786, %v4804
    %v4806 = vpop.f32.mrf.mxu0
    %v4807 = vadd.f32 %v4788, %v4806
    %4808 = vdwg.mxu0
    %4809 = vmatpush.bf16.msra.mxu0 %v4112
    %4810 = vmatpush.bf16.msra.mxu0 %v4108
    %4811 = vmatpush.bf16.msra.mxu0 %v4104
    %4812 = vmatpush.bf16.msra.mxu0 %v4100
    %4813 = vmatpush.bf16.msra.mxu0 %v4096
    %4814 = vmatpush.bf16.msra.mxu0 %v4092
    %4815 = vmatpush.bf16.msra.mxu0 %v4088
    %4816 = vmatpush.bf16.msra.mxu0 %v4084
    %4817 = vmatmul.bf16.gmra.mxu0 %v2525
    %v4818 = vpop.f32.mrf.mxu0
    %v4819 = vadd.f32 %v4800, %v4818
    %v4820 = vpop.f32.mrf.mxu0
    %v4821 = vadd.f32 %v4802, %v4820
    %4822 = vmatmul.bf16.gmra.mxu0 %v2535
    %v4823 = vpop.f32.mrf.mxu0
    %v4824 = vadd.f32 %v4805, %v4823
    %v4825 = vpop.f32.mrf.mxu0
    %v4826 = vadd.f32 %v4807, %v4825
    %4827 = vdwg.mxu0
    %4828 = vmatpush.bf16.msra.mxu0 %v4144
    %4829 = vmatpush.bf16.msra.mxu0 %v4140
    %4830 = vmatpush.bf16.msra.mxu0 %v4136
    %4831 = vmatpush.bf16.msra.mxu0 %v4132
    %4832 = vmatpush.bf16.msra.mxu0 %v4128
    %4833 = vmatpush.bf16.msra.mxu0 %v4124
    %4834 = vmatpush.bf16.msra.mxu0 %v4120
    %4835 = vmatpush.bf16.msra.mxu0 %v4116
    %4836 = vmatmul.bf16.gmra.mxu0 %v2526
    %v4837 = vpop.f32.mrf.mxu0
    %v4838 = vadd.f32 %v4819, %v4837
    %v4839 = vpop.f32.mrf.mxu0
    %v4840 = vadd.f32 %v4821, %v4839
    %4841 = vmatmul.bf16.gmra.mxu0 %v2536
    %v4842 = vpop.f32.mrf.mxu0
    %v4843 = vadd.f32 %v4824, %v4842
    %v4844 = vpop.f32.mrf.mxu0
    %v4845 = vadd.f32 %v4826, %v4844
    %4846 = vdwg.mxu0
    %4847 = vmatpush.bf16.msra.mxu0 %v3857
    %4848 = vmatpush.bf16.msra.mxu0 %v3853
    %4849 = vmatpush.bf16.msra.mxu0 %v3849
    %4850 = vmatpush.bf16.msra.mxu0 %v3845
    %4851 = vmatpush.bf16.msra.mxu0 %v3841
    %4852 = vmatpush.bf16.msra.mxu0 %v3837
    %4853 = vmatpush.bf16.msra.mxu0 %v3833
    %4854 = vmatpush.bf16.msra.mxu0 %v3829
    %4855 = vmatmul.bf16.gmra.mxu0 %v2517
    %v4856 = vpop.f32.mrf.mxu0
    %v4857 = vadd.f32 %v2861, %v4856
    %v4858 = vpop.f32.mrf.mxu0
    %v4859 = vadd.f32 %v2861, %v4858
    %4860 = vmatmul.bf16.gmra.mxu0 %v2527
    %v4861 = vpop.f32.mrf.mxu0
    %v4862 = vadd.f32 %v2861, %v4861
    %v4863 = vpop.f32.mrf.mxu0
    %v4864 = vadd.f32 %v2861, %v4863
    %4865 = vdwg.mxu0
    %4866 = vmatpush.bf16.msra.mxu0 %v3889
    %4867 = vmatpush.bf16.msra.mxu0 %v3885
    %4868 = vmatpush.bf16.msra.mxu0 %v3881
    %4869 = vmatpush.bf16.msra.mxu0 %v3877
    %4870 = vmatpush.bf16.msra.mxu0 %v3873
    %4871 = vmatpush.bf16.msra.mxu0 %v3869
    %4872 = vmatpush.bf16.msra.mxu0 %v3865
    %4873 = vmatpush.bf16.msra.mxu0 %v3861
    %4874 = vmatmul.bf16.gmra.mxu0 %v2518
    %v4875 = vpop.f32.mrf.mxu0
    %v4876 = vadd.f32 %v4857, %v4875
    %v4877 = vpop.f32.mrf.mxu0
    %v4878 = vadd.f32 %v4859, %v4877
    %4879 = vmatmul.bf16.gmra.mxu0 %v2528
    %v4880 = vpop.f32.mrf.mxu0
    %v4881 = vadd.f32 %v4862, %v4880
    %v4882 = vpop.f32.mrf.mxu0
    %v4883 = vadd.f32 %v4864, %v4882
    %4884 = vdwg.mxu0
    %4885 = vmatpush.bf16.msra.mxu0 %v3921
    %4886 = vmatpush.bf16.msra.mxu0 %v3917
    %4887 = vmatpush.bf16.msra.mxu0 %v3913
    %4888 = vmatpush.bf16.msra.mxu0 %v3909
    %4889 = vmatpush.bf16.msra.mxu0 %v3905
    %4890 = vmatpush.bf16.msra.mxu0 %v3901
    %4891 = vmatpush.bf16.msra.mxu0 %v3897
    %4892 = vmatpush.bf16.msra.mxu0 %v3893
    %4893 = vmatmul.bf16.gmra.mxu0 %v2519
    %v4894 = vpop.f32.mrf.mxu0
    %v4895 = vadd.f32 %v4876, %v4894
    %v4896 = vpop.f32.mrf.mxu0
    %v4897 = vadd.f32 %v4878, %v4896
    %4898 = vmatmul.bf16.gmra.mxu0 %v2529
    %v4899 = vpop.f32.mrf.mxu0
    %v4900 = vadd.f32 %v4881, %v4899
    %v4901 = vpop.f32.mrf.mxu0
    %v4902 = vadd.f32 %v4883, %v4901
    %4903 = vdwg.mxu0
    %4904 = vmatpush.bf16.msra.mxu0 %v3953
    %4905 = vmatpush.bf16.msra.mxu0 %v3949
    %4906 = vmatpush.bf16.msra.mxu0 %v3945
    %4907 = vmatpush.bf16.msra.mxu0 %v3941
    %4908 = vmatpush.bf16.msra.mxu0 %v3937
    %4909 = vmatpush.bf16.msra.mxu0 %v3933
    %4910 = vmatpush.bf16.msra.mxu0 %v3929
    %4911 = vmatpush.bf16.msra.mxu0 %v3925
    %4912 = vmatmul.bf16.gmra.mxu0 %v2520
    %v4913 = vpop.f32.mrf.mxu0
    %v4914 = vadd.f32 %v4895, %v4913
    %v4915 = vpop.f32.mrf.mxu0
    %v4916 = vadd.f32 %v4897, %v4915
    %4917 = vmatmul.bf16.gmra.mxu0 %v2530
    %v4918 = vpop.f32.mrf.mxu0
    %v4919 = vadd.f32 %v4900, %v4918
    %v4920 = vpop.f32.mrf.mxu0
    %v4921 = vadd.f32 %v4902, %v4920
    %4922 = vdwg.mxu0
    %4923 = vmatpush.bf16.msra.mxu0 %v3985
    %4924 = vmatpush.bf16.msra.mxu0 %v3981
    %4925 = vmatpush.bf16.msra.mxu0 %v3977
    %4926 = vmatpush.bf16.msra.mxu0 %v3973
    %4927 = vmatpush.bf16.msra.mxu0 %v3969
    %4928 = vmatpush.bf16.msra.mxu0 %v3965
    %4929 = vmatpush.bf16.msra.mxu0 %v3961
    %4930 = vmatpush.bf16.msra.mxu0 %v3957
    %4931 = vmatmul.bf16.gmra.mxu0 %v2521
    %v4932 = vpop.f32.mrf.mxu0
    %v4933 = vadd.f32 %v4914, %v4932
    %v4934 = vpop.f32.mrf.mxu0
    %v4935 = vadd.f32 %v4916, %v4934
    %4936 = vmatmul.bf16.gmra.mxu0 %v2531
    %v4937 = vpop.f32.mrf.mxu0
    %v4938 = vadd.f32 %v4919, %v4937
    %v4939 = vpop.f32.mrf.mxu0
    %v4940 = vadd.f32 %v4921, %v4939
    %4941 = vdwg.mxu0
    %4942 = vmatpush.bf16.msra.mxu0 %v4017
    %4943 = vmatpush.bf16.msra.mxu0 %v4013
    %4944 = vmatpush.bf16.msra.mxu0 %v4009
    %4945 = vmatpush.bf16.msra.mxu0 %v4005
    %4946 = vmatpush.bf16.msra.mxu0 %v4001
    %4947 = vmatpush.bf16.msra.mxu0 %v3997
    %4948 = vmatpush.bf16.msra.mxu0 %v3993
    %4949 = vmatpush.bf16.msra.mxu0 %v3989
    %4950 = vmatmul.bf16.gmra.mxu0 %v2522
    %v4951 = vpop.f32.mrf.mxu0
    %v4952 = vadd.f32 %v4933, %v4951
    %v4953 = vpop.f32.mrf.mxu0
    %v4954 = vadd.f32 %v4935, %v4953
    %4955 = vmatmul.bf16.gmra.mxu0 %v2532
    %v4956 = vpop.f32.mrf.mxu0
    %v4957 = vadd.f32 %v4938, %v4956
    %v4958 = vpop.f32.mrf.mxu0
    %v4959 = vadd.f32 %v4940, %v4958
    %4960 = vdwg.mxu0
    %4961 = vmatpush.bf16.msra.mxu0 %v4049
    %4962 = vmatpush.bf16.msra.mxu0 %v4045
    %4963 = vmatpush.bf16.msra.mxu0 %v4041
    %4964 = vmatpush.bf16.msra.mxu0 %v4037
    %4965 = vmatpush.bf16.msra.mxu0 %v4033
    %4966 = vmatpush.bf16.msra.mxu0 %v4029
    %4967 = vmatpush.bf16.msra.mxu0 %v4025
    %4968 = vmatpush.bf16.msra.mxu0 %v4021
    %4969 = vmatmul.bf16.gmra.mxu0 %v2523
    %v4970 = vpop.f32.mrf.mxu0
    %v4971 = vadd.f32 %v4952, %v4970
    %v4972 = vpop.f32.mrf.mxu0
    %v4973 = vadd.f32 %v4954, %v4972
    %4974 = vmatmul.bf16.gmra.mxu0 %v2533
    %v4975 = vpop.f32.mrf.mxu0
    %v4976 = vadd.f32 %v4957, %v4975
    %v4977 = vpop.f32.mrf.mxu0
    %v4978 = vadd.f32 %v4959, %v4977
    %4979 = vdwg.mxu0
    %4980 = vmatpush.bf16.msra.mxu0 %v4081
    %4981 = vmatpush.bf16.msra.mxu0 %v4077
    %4982 = vmatpush.bf16.msra.mxu0 %v4073
    %4983 = vmatpush.bf16.msra.mxu0 %v4069
    %4984 = vmatpush.bf16.msra.mxu0 %v4065
    %4985 = vmatpush.bf16.msra.mxu0 %v4061
    %4986 = vmatpush.bf16.msra.mxu0 %v4057
    %4987 = vmatpush.bf16.msra.mxu0 %v4053
    %4988 = vmatmul.bf16.gmra.mxu0 %v2524
    %v4989 = vpop.f32.mrf.mxu0
    %v4990 = vadd.f32 %v4971, %v4989
    %v4991 = vpop.f32.mrf.mxu0
    %v4992 = vadd.f32 %v4973, %v4991
    %4993 = vmatmul.bf16.gmra.mxu0 %v2534
    %v4994 = vpop.f32.mrf.mxu0
    %v4995 = vadd.f32 %v4976, %v4994
    %v4996 = vpop.f32.mrf.mxu0
    %v4997 = vadd.f32 %v4978, %v4996
    %4998 = vdwg.mxu0
    %4999 = vmatpush.bf16.msra.mxu0 %v4113
    %5000 = vmatpush.bf16.msra.mxu0 %v4109
    %5001 = vmatpush.bf16.msra.mxu0 %v4105
    %5002 = vmatpush.bf16.msra.mxu0 %v4101
    %5003 = vmatpush.bf16.msra.mxu0 %v4097
    %5004 = vmatpush.bf16.msra.mxu0 %v4093
    %5005 = vmatpush.bf16.msra.mxu0 %v4089
    %5006 = vmatpush.bf16.msra.mxu0 %v4085
    %5007 = vmatmul.bf16.gmra.mxu0 %v2525
    %v5008 = vpop.f32.mrf.mxu0
    %v5009 = vadd.f32 %v4990, %v5008
    %v5010 = vpop.f32.mrf.mxu0
    %v5011 = vadd.f32 %v4992, %v5010
    %5012 = vmatmul.bf16.gmra.mxu0 %v2535
    %v5013 = vpop.f32.mrf.mxu0
    %v5014 = vadd.f32 %v4995, %v5013
    %v5015 = vpop.f32.mrf.mxu0
    %v5016 = vadd.f32 %v4997, %v5015
    %5017 = vdwg.mxu0
    %5018 = vmatpush.bf16.msra.mxu0 %v4145
    %5019 = vmatpush.bf16.msra.mxu0 %v4141
    %5020 = vmatpush.bf16.msra.mxu0 %v4137
    %5021 = vmatpush.bf16.msra.mxu0 %v4133
    %5022 = vmatpush.bf16.msra.mxu0 %v4129
    %5023 = vmatpush.bf16.msra.mxu0 %v4125
    %5024 = vmatpush.bf16.msra.mxu0 %v4121
    %5025 = vmatpush.bf16.msra.mxu0 %v4117
    %5026 = vmatmul.bf16.gmra.mxu0 %v2526
    %v5027 = vpop.f32.mrf.mxu0
    %v5028 = vadd.f32 %v5009, %v5027
    %v5029 = vpop.f32.mrf.mxu0
    %v5030 = vadd.f32 %v5011, %v5029
    %5031 = vmatmul.bf16.gmra.mxu0 %v2536
    %v5032 = vpop.f32.mrf.mxu0
    %v5033 = vadd.f32 %v5014, %v5032
    %v5034 = vpop.f32.mrf.mxu0
    %v5035 = vadd.f32 %v5016, %v5034
    %5036 = vdwg.mxu0
    %5037 = vmatpush.bf16.msra.mxu0 %v3858
    %5038 = vmatpush.bf16.msra.mxu0 %v3854
    %5039 = vmatpush.bf16.msra.mxu0 %v3850
    %5040 = vmatpush.bf16.msra.mxu0 %v3846
    %5041 = vmatpush.bf16.msra.mxu0 %v3842
    %5042 = vmatpush.bf16.msra.mxu0 %v3838
    %5043 = vmatpush.bf16.msra.mxu0 %v3834
    %5044 = vmatpush.bf16.msra.mxu0 %v3830
    %5045 = vmatmul.bf16.gmra.mxu0 %v2517
    %v5046 = vpop.f32.mrf.mxu0
    %v5047 = vadd.f32 %v2862, %v5046
    %v5048 = vpop.f32.mrf.mxu0
    %v5049 = vadd.f32 %v2862, %v5048
    %5050 = vmatmul.bf16.gmra.mxu0 %v2527
    %v5051 = vpop.f32.mrf.mxu0
    %v5052 = vadd.f32 %v2862, %v5051
    %v5053 = vpop.f32.mrf.mxu0
    %v5054 = vadd.f32 %v2862, %v5053
    %5055 = vdwg.mxu0
    %5056 = vmatpush.bf16.msra.mxu0 %v3890
    %5057 = vmatpush.bf16.msra.mxu0 %v3886
    %5058 = vmatpush.bf16.msra.mxu0 %v3882
    %5059 = vmatpush.bf16.msra.mxu0 %v3878
    %5060 = vmatpush.bf16.msra.mxu0 %v3874
    %5061 = vmatpush.bf16.msra.mxu0 %v3870
    %5062 = vmatpush.bf16.msra.mxu0 %v3866
    %5063 = vmatpush.bf16.msra.mxu0 %v3862
    %5064 = vmatmul.bf16.gmra.mxu0 %v2518
    %v5065 = vpop.f32.mrf.mxu0
    %v5066 = vadd.f32 %v5047, %v5065
    %v5067 = vpop.f32.mrf.mxu0
    %v5068 = vadd.f32 %v5049, %v5067
    %5069 = vmatmul.bf16.gmra.mxu0 %v2528
    %v5070 = vpop.f32.mrf.mxu0
    %v5071 = vadd.f32 %v5052, %v5070
    %v5072 = vpop.f32.mrf.mxu0
    %v5073 = vadd.f32 %v5054, %v5072
    %5074 = vdwg.mxu0
    %5075 = vmatpush.bf16.msra.mxu0 %v3922
    %5076 = vmatpush.bf16.msra.mxu0 %v3918
    %5077 = vmatpush.bf16.msra.mxu0 %v3914
    %5078 = vmatpush.bf16.msra.mxu0 %v3910
    %5079 = vmatpush.bf16.msra.mxu0 %v3906
    %5080 = vmatpush.bf16.msra.mxu0 %v3902
    %5081 = vmatpush.bf16.msra.mxu0 %v3898
    %5082 = vmatpush.bf16.msra.mxu0 %v3894
    %5083 = vmatmul.bf16.gmra.mxu0 %v2519
    %v5084 = vpop.f32.mrf.mxu0
    %v5085 = vadd.f32 %v5066, %v5084
    %v5086 = vpop.f32.mrf.mxu0
    %v5087 = vadd.f32 %v5068, %v5086
    %5088 = vmatmul.bf16.gmra.mxu0 %v2529
    %v5089 = vpop.f32.mrf.mxu0
    %v5090 = vadd.f32 %v5071, %v5089
    %v5091 = vpop.f32.mrf.mxu0
    %v5092 = vadd.f32 %v5073, %v5091
    %5093 = vdwg.mxu0
    %5094 = vmatpush.bf16.msra.mxu0 %v3954
    %5095 = vmatpush.bf16.msra.mxu0 %v3950
    %5096 = vmatpush.bf16.msra.mxu0 %v3946
    %5097 = vmatpush.bf16.msra.mxu0 %v3942
    %5098 = vmatpush.bf16.msra.mxu0 %v3938
    %5099 = vmatpush.bf16.msra.mxu0 %v3934
    %5100 = vmatpush.bf16.msra.mxu0 %v3930
    %5101 = vmatpush.bf16.msra.mxu0 %v3926
    %5102 = vmatmul.bf16.gmra.mxu0 %v2520
    %v5103 = vpop.f32.mrf.mxu0
    %v5104 = vadd.f32 %v5085, %v5103
    %v5105 = vpop.f32.mrf.mxu0
    %v5106 = vadd.f32 %v5087, %v5105
    %5107 = vmatmul.bf16.gmra.mxu0 %v2530
    %v5108 = vpop.f32.mrf.mxu0
    %v5109 = vadd.f32 %v5090, %v5108
    %v5110 = vpop.f32.mrf.mxu0
    %v5111 = vadd.f32 %v5092, %v5110
    %5112 = vdwg.mxu0
    %5113 = vmatpush.bf16.msra.mxu0 %v3986
    %5114 = vmatpush.bf16.msra.mxu0 %v3982
    %5115 = vmatpush.bf16.msra.mxu0 %v3978
    %5116 = vmatpush.bf16.msra.mxu0 %v3974
    %5117 = vmatpush.bf16.msra.mxu0 %v3970
    %5118 = vmatpush.bf16.msra.mxu0 %v3966
    %5119 = vmatpush.bf16.msra.mxu0 %v3962
    %5120 = vmatpush.bf16.msra.mxu0 %v3958
    %5121 = vmatmul.bf16.gmra.mxu0 %v2521
    %v5122 = vpop.f32.mrf.mxu0
    %v5123 = vadd.f32 %v5104, %v5122
    %v5124 = vpop.f32.mrf.mxu0
    %v5125 = vadd.f32 %v5106, %v5124
    %5126 = vmatmul.bf16.gmra.mxu0 %v2531
    %v5127 = vpop.f32.mrf.mxu0
    %v5128 = vadd.f32 %v5109, %v5127
    %v5129 = vpop.f32.mrf.mxu0
    %v5130 = vadd.f32 %v5111, %v5129
    %5131 = vdwg.mxu0
    %5132 = vmatpush.bf16.msra.mxu0 %v4018
    %5133 = vmatpush.bf16.msra.mxu0 %v4014
    %5134 = vmatpush.bf16.msra.mxu0 %v4010
    %5135 = vmatpush.bf16.msra.mxu0 %v4006
    %5136 = vmatpush.bf16.msra.mxu0 %v4002
    %5137 = vmatpush.bf16.msra.mxu0 %v3998
    %5138 = vmatpush.bf16.msra.mxu0 %v3994
    %5139 = vmatpush.bf16.msra.mxu0 %v3990
    %5140 = vmatmul.bf16.gmra.mxu0 %v2522
    %v5141 = vpop.f32.mrf.mxu0
    %v5142 = vadd.f32 %v5123, %v5141
    %v5143 = vpop.f32.mrf.mxu0
    %v5144 = vadd.f32 %v5125, %v5143
    %5145 = vmatmul.bf16.gmra.mxu0 %v2532
    %v5146 = vpop.f32.mrf.mxu0
    %v5147 = vadd.f32 %v5128, %v5146
    %v5148 = vpop.f32.mrf.mxu0
    %v5149 = vadd.f32 %v5130, %v5148
    %5150 = vdwg.mxu0
    %5151 = vmatpush.bf16.msra.mxu0 %v4050
    %5152 = vmatpush.bf16.msra.mxu0 %v4046
    %5153 = vmatpush.bf16.msra.mxu0 %v4042
    %5154 = vmatpush.bf16.msra.mxu0 %v4038
    %5155 = vmatpush.bf16.msra.mxu0 %v4034
    %5156 = vmatpush.bf16.msra.mxu0 %v4030
    %5157 = vmatpush.bf16.msra.mxu0 %v4026
    %5158 = vmatpush.bf16.msra.mxu0 %v4022
    %5159 = vmatmul.bf16.gmra.mxu0 %v2523
    %v5160 = vpop.f32.mrf.mxu0
    %v5161 = vadd.f32 %v5142, %v5160
    %v5162 = vpop.f32.mrf.mxu0
    %v5163 = vadd.f32 %v5144, %v5162
    %5164 = vmatmul.bf16.gmra.mxu0 %v2533
    %v5165 = vpop.f32.mrf.mxu0
    %v5166 = vadd.f32 %v5147, %v5165
    %v5167 = vpop.f32.mrf.mxu0
    %v5168 = vadd.f32 %v5149, %v5167
    %5169 = vdwg.mxu0
    %5170 = vmatpush.bf16.msra.mxu0 %v4082
    %5171 = vmatpush.bf16.msra.mxu0 %v4078
    %5172 = vmatpush.bf16.msra.mxu0 %v4074
    %5173 = vmatpush.bf16.msra.mxu0 %v4070
    %5174 = vmatpush.bf16.msra.mxu0 %v4066
    %5175 = vmatpush.bf16.msra.mxu0 %v4062
    %5176 = vmatpush.bf16.msra.mxu0 %v4058
    %5177 = vmatpush.bf16.msra.mxu0 %v4054
    %5178 = vmatmul.bf16.gmra.mxu0 %v2524
    %v5179 = vpop.f32.mrf.mxu0
    %v5180 = vadd.f32 %v5161, %v5179
    %v5181 = vpop.f32.mrf.mxu0
    %v5182 = vadd.f32 %v5163, %v5181
    %5183 = vmatmul.bf16.gmra.mxu0 %v2534
    %v5184 = vpop.f32.mrf.mxu0
    %v5185 = vadd.f32 %v5166, %v5184
    %v5186 = vpop.f32.mrf.mxu0
    %v5187 = vadd.f32 %v5168, %v5186
    %5188 = vdwg.mxu0
    %5189 = vmatpush.bf16.msra.mxu0 %v4114
    %5190 = vmatpush.bf16.msra.mxu0 %v4110
    %5191 = vmatpush.bf16.msra.mxu0 %v4106
    %5192 = vmatpush.bf16.msra.mxu0 %v4102
    %5193 = vmatpush.bf16.msra.mxu0 %v4098
    %5194 = vmatpush.bf16.msra.mxu0 %v4094
    %5195 = vmatpush.bf16.msra.mxu0 %v4090
    %5196 = vmatpush.bf16.msra.mxu0 %v4086
    %5197 = vmatmul.bf16.gmra.mxu0 %v2525
    %v5198 = vpop.f32.mrf.mxu0
    %v5199 = vadd.f32 %v5180, %v5198
    %v5200 = vpop.f32.mrf.mxu0
    %v5201 = vadd.f32 %v5182, %v5200
    %5202 = vmatmul.bf16.gmra.mxu0 %v2535
    %v5203 = vpop.f32.mrf.mxu0
    %v5204 = vadd.f32 %v5185, %v5203
    %v5205 = vpop.f32.mrf.mxu0
    %v5206 = vadd.f32 %v5187, %v5205
    %5207 = vdwg.mxu0
    %5208 = vmatpush.bf16.msra.mxu0 %v4146
    %5209 = vmatpush.bf16.msra.mxu0 %v4142
    %5210 = vmatpush.bf16.msra.mxu0 %v4138
    %5211 = vmatpush.bf16.msra.mxu0 %v4134
    %5212 = vmatpush.bf16.msra.mxu0 %v4130
    %5213 = vmatpush.bf16.msra.mxu0 %v4126
    %5214 = vmatpush.bf16.msra.mxu0 %v4122
    %5215 = vmatpush.bf16.msra.mxu0 %v4118
    %5216 = vmatmul.bf16.gmra.mxu0 %v2526
    %v5217 = vpop.f32.mrf.mxu0
    %v5218 = vadd.f32 %v5199, %v5217
    %v5219 = vpop.f32.mrf.mxu0
    %v5220 = vadd.f32 %v5201, %v5219
    %5221 = vmatmul.bf16.gmra.mxu0 %v2536
    %v5222 = vpop.f32.mrf.mxu0
    %v5223 = vadd.f32 %v5204, %v5222
    %v5224 = vpop.f32.mrf.mxu0
    %v5225 = vadd.f32 %v5206, %v5224
    %5226 = vdwg.mxu0
    %v5227 = vmax.f32 %v4648, 0.0
    %v5228 = vmax.f32 %v4838, 0.0
    %v5229 = vmax.f32 %v5028, 0.0
    %v5230 = vmax.f32 %v5218, 0.0
    %v5231 = vmax.f32 %v4650, 0.0
    %v5232 = vmax.f32 %v4840, 0.0
    %v5233 = vmax.f32 %v5030, 0.0
    %v5234 = vmax.f32 %v5220, 0.0
    %v5235 = vmax.f32 %v4653, 0.0
    %v5236 = vmax.f32 %v4843, 0.0
    %v5237 = vmax.f32 %v5033, 0.0
    %v5238 = vmax.f32 %v5223, 0.0
    %v5239 = vmax.f32 %v4655, 0.0
    %v5240 = vmax.f32 %v4845, 0.0
    %v5241 = vmax.f32 %v5035, 0.0
    %v5242 = vmax.f32 %v5225, 0.0
    %v5243 = vmax.f32 %v5227, %v5229
    %v5244 = vmax.f32 %v5228, %v5230
    %v5245 = vmax.f32 %v5231, %v5233
    %v5246 = vmax.f32 %v5232, %v5234
    %v5247 = vmax.f32 %v5235, %v5237
    %v5248 = vmax.f32 %v5236, %v5238
    %v5249 = vmax.f32 %v5239, %v5241
    %v5250 = vmax.f32 %v5240, %v5242
    %5251 = vst [vmem:[#allocation9] sm:$0xff] %v5243
    %5252 = vst [vmem:[#allocation9 + $0x8] sm:$0xff] %v5244
    %5253 = vst [vmem:[#allocation9 + $0x10] sm:$0xff] %v5245
    %5254 = vst [vmem:[#allocation9 + $0x18] sm:$0xff] %v5246
    %5255 = vst [vmem:[#allocation9 + $0x20] sm:$0xff] %v5247
    %5256 = vst [vmem:[#allocation9 + $0x28] sm:$0xff] %v5248
    %5257 = vst [vmem:[#allocation9 + $0x30] sm:$0xff] %v5249
    %5258 = vst [vmem:[#allocation9 + $0x38] sm:$0xff] %v5250
    %v5259 = vld [vmem:[#allocation9] ss:$8 sm:$0x3]
    %s5260 = scalar_lea.vmem [#allocation9], 32
    %v5261 = vld [vmem:[%s5260] ss:$8 sm:$0x3]
    %s5262 = scalar_lea.vmem [#allocation9], 1
    %v5263 = vld [vmem:[%s5262] ss:$8 sm:$0x3]
    %s5264 = scalar_lea.vmem [#allocation9], 33
    %v5265 = vld [vmem:[%s5264] ss:$8 sm:$0x3]
    %v5266 = vmax.f32 %v5259, %v5263
    %v5267 = vmax.f32 %v5261, %v5265
    %5270 = vst [vmem:[#allocation1] ss:$2 sm:$0xff] %v5266
    %s5271 = scalar_lea.vmem [#allocation1], 1
    %5272 = vst [vmem:[%s5271] ss:$2 sm:$0xff] %v5267
    %v5273 = vld [vmem:[#allocation1] sm:$0xff]
    %5275 = vst [vmem:[#allocation10] sm:$0xf] %v5273
    %s5276 = scalar_lea.vmem [#allocation9], 2
    %v5277 = vld [vmem:[%s5276] ss:$8 sm:$0x3]
    %s5278 = scalar_lea.vmem [#allocation9], 34
    %v5279 = vld [vmem:[%s5278] ss:$8 sm:$0x3]
    %s5280 = scalar_lea.vmem [#allocation9], 3
    %v5281 = vld [vmem:[%s5280] ss:$8 sm:$0x3]
    %s5282 = scalar_lea.vmem [#allocation9], 35
    %v5283 = vld [vmem:[%s5282] ss:$8 sm:$0x3]
    %v5284 = vmax.f32 %v5277, %v5281
    %v5285 = vmax.f32 %v5279, %v5283
    %5288 = vst [vmem:[#allocation1] ss:$2 sm:$0xff] %v5284
    %s5289 = scalar_lea.vmem [#allocation1], 1
    %5290 = vst [vmem:[%s5289] ss:$2 sm:$0xff] %v5285
    %v5291 = vld [vmem:[#allocation1] sm:$0xff]
    %5293 = vst [vmem:[#allocation10 + $0x4] sm:$0xf] %v5291
    %s5294 = scalar_lea.vmem [#allocation9], 4
    %v5295 = vld [vmem:[%s5294] ss:$8 sm:$0x3]
    %s5296 = scalar_lea.vmem [#allocation9], 36
    %v5297 = vld [vmem:[%s5296] ss:$8 sm:$0x3]
    %s5298 = scalar_lea.vmem [#allocation9], 5
    %v5299 = vld [vmem:[%s5298] ss:$8 sm:$0x3]
    %s5300 = scalar_lea.vmem [#allocation9], 37
    %v5301 = vld [vmem:[%s5300] ss:$8 sm:$0x3]
    %v5302 = vmax.f32 %v5295, %v5299
    %v5303 = vmax.f32 %v5297, %v5301
    %5306 = vst [vmem:[#allocation1] ss:$2 sm:$0xff] %v5302
    %s5307 = scalar_lea.vmem [#allocation1], 1
    %5308 = vst [vmem:[%s5307] ss:$2 sm:$0xff] %v5303
    %v5309 = vld [vmem:[#allocation1] sm:$0xff]
    %5311 = vst [vmem:[#allocation10 + $0x8] sm:$0xf] %v5309
    %s5312 = scalar_lea.vmem [#allocation9], 6
    %v5313 = vld [vmem:[%s5312] ss:$8 sm:$0x3]
    %s5314 = scalar_lea.vmem [#allocation9], 38
    %v5315 = vld [vmem:[%s5314] ss:$8 sm:$0x3]
    %s5316 = scalar_lea.vmem [#allocation9], 7
    %v5317 = vld [vmem:[%s5316] ss:$8 sm:$0x3]
    %s5318 = scalar_lea.vmem [#allocation9], 39
    %v5319 = vld [vmem:[%s5318] ss:$8 sm:$0x3]
    %v5320 = vmax.f32 %v5313, %v5317
    %v5321 = vmax.f32 %v5315, %v5319
    %5324 = vst [vmem:[#allocation1] ss:$2 sm:$0xff] %v5320
    %s5325 = scalar_lea.vmem [#allocation1], 1
    %5326 = vst [vmem:[%s5325] ss:$2 sm:$0xff] %v5321
    %v5327 = vld [vmem:[#allocation1] sm:$0xff]
    %5329 = vst [vmem:[#allocation10 + $0xc] sm:$0xf] %v5327
    %s5330 = scalar_lea.vmem [#allocation9], 16
    %v5331 = vld [vmem:[%s5330] ss:$8 sm:$0x3]
    %s5332 = scalar_lea.vmem [#allocation9], 48
    %v5333 = vld [vmem:[%s5332] ss:$8 sm:$0x3]
    %s5334 = scalar_lea.vmem [#allocation9], 17
    %v5335 = vld [vmem:[%s5334] ss:$8 sm:$0x3]
    %s5336 = scalar_lea.vmem [#allocation9], 49
    %v5337 = vld [vmem:[%s5336] ss:$8 sm:$0x3]
    %v5338 = vmax.f32 %v5331, %v5335
    %v5339 = vmax.f32 %v5333, %v5337
    %5342 = vst [vmem:[#allocation1] ss:$2 sm:$0xff] %v5338
    %s5343 = scalar_lea.vmem [#allocation1], 1
    %5344 = vst [vmem:[%s5343] ss:$2 sm:$0xff] %v5339
    %v5345 = vld [vmem:[#allocation1] sm:$0xff]
    %5347 = vst [vmem:[#allocation10 + $0x10] sm:$0xf] %v5345
    %s5348 = scalar_lea.vmem [#allocation9], 18
    %v5349 = vld [vmem:[%s5348] ss:$8 sm:$0x3]
    %s5350 = scalar_lea.vmem [#allocation9], 50
    %v5351 = vld [vmem:[%s5350] ss:$8 sm:$0x3]
    %s5352 = scalar_lea.vmem [#allocation9], 19
    %v5353 = vld [vmem:[%s5352] ss:$8 sm:$0x3]
    %s5354 = scalar_lea.vmem [#allocation9], 51
    %v5355 = vld [vmem:[%s5354] ss:$8 sm:$0x3]
    %v5356 = vmax.f32 %v5349, %v5353
    %v5357 = vmax.f32 %v5351, %v5355
    %5360 = vst [vmem:[#allocation1] ss:$2 sm:$0xff] %v5356
    %s5361 = scalar_lea.vmem [#allocation1], 1
    %5362 = vst [vmem:[%s5361] ss:$2 sm:$0xff] %v5357
    %v5363 = vld [vmem:[#allocation1] sm:$0xff]
    %5365 = vst [vmem:[#allocation10 + $0x14] sm:$0xf] %v5363
    %s5366 = scalar_lea.vmem [#allocation9], 20
    %v5367 = vld [vmem:[%s5366] ss:$8 sm:$0x3]
    %s5368 = scalar_lea.vmem [#allocation9], 52
    %v5369 = vld [vmem:[%s5368] ss:$8 sm:$0x3]
    %s5370 = scalar_lea.vmem [#allocation9], 21
    %v5371 = vld [vmem:[%s5370] ss:$8 sm:$0x3]
    %s5372 = scalar_lea.vmem [#allocation9], 53
    %v5373 = vld [vmem:[%s5372] ss:$8 sm:$0x3]
    %v5374 = vmax.f32 %v5367, %v5371
    %v5375 = vmax.f32 %v5369, %v5373
    %5378 = vst [vmem:[#allocation1] ss:$2 sm:$0xff] %v5374
    %s5379 = scalar_lea.vmem [#allocation1], 1
    %5380 = vst [vmem:[%s5379] ss:$2 sm:$0xff] %v5375
    %v5381 = vld [vmem:[#allocation1] sm:$0xff]
    %5383 = vst [vmem:[#allocation10 + $0x18] sm:$0xf] %v5381
    %s5384 = scalar_lea.vmem [#allocation9], 22
    %v5385 = vld [vmem:[%s5384] ss:$8 sm:$0x3]
    %s5386 = scalar_lea.vmem [#allocation9], 54
    %v5387 = vld [vmem:[%s5386] ss:$8 sm:$0x3]
    %s5388 = scalar_lea.vmem [#allocation9], 23
    %v5389 = vld [vmem:[%s5388] ss:$8 sm:$0x3]
    %s5390 = scalar_lea.vmem [#allocation9], 55
    %v5391 = vld [vmem:[%s5390] ss:$8 sm:$0x3]
    %v5392 = vmax.f32 %v5385, %v5389
    %v5393 = vmax.f32 %v5387, %v5391
    %5396 = vst [vmem:[#allocation1] ss:$2 sm:$0xff] %v5392
    %s5397 = scalar_lea.vmem [#allocation1], 1
    %5398 = vst [vmem:[%s5397] ss:$2 sm:$0xff] %v5393
    %v5399 = vld [vmem:[#allocation1] sm:$0xff]
    %5401 = vst [vmem:[#allocation10 + $0x1c] sm:$0xf] %v5399
    %s5402 = smul.u32 4, 256
    %s5403 = smul.u32 %s5402, 8
    %s5404 = sshll.u32 %s5403, 4
    %5405 = dma.done %s110, %s5404
    %v5406 = vld [vmem:[#allocation10] sm:$0xff]
    %v5407 = vld [vmem:[#allocation10 + $0x8] sm:$0xff]
    %v5408 = vld [vmem:[#allocation10 + $0x10] sm:$0xff]
    %v5409 = vld [vmem:[#allocation10 + $0x18] sm:$0xff]
    %5414 = vst [vmem:[#allocation1] ss:$4 sm:$0xff] %v5406
    %s5415 = scalar_lea.vmem [#allocation1], 32
    %5416 = vst [vmem:[%s5415] ss:$4 sm:$0xff] %v5407
    %v5417 = vld.sshfl [vmem:[#allocation1] sm:$0xff pattern:$0x73625140]
    %v5418 = vld.sshfl [vmem:[#allocation1 + $0x8] sm:$0xff pattern:$0x73625140]
    %v5419 = vld.sshfl [vmem:[#allocation1 + $0x10] sm:$0xff pattern:$0x73625140]
    %v5420 = vld.sshfl [vmem:[#allocation1 + $0x18] sm:$0xff pattern:$0x73625140]
    %v5421 = vld.sshfl [vmem:[#allocation1 + $0x20] sm:$0xff pattern:$0x73625140]
    %v5422 = vld.sshfl [vmem:[#allocation1 + $0x28] sm:$0xff pattern:$0x73625140]
    %v5423 = vld.sshfl [vmem:[#allocation1 + $0x30] sm:$0xff pattern:$0x73625140]
    %v5424 = vld.sshfl [vmem:[#allocation1 + $0x38] sm:$0xff pattern:$0x73625140]
    %5425 = vst [vmem:[#allocation1] ss:$4 sm:$0xff] %v5408
    %5426 = vst [vmem:[%s5415] ss:$4 sm:$0xff] %v5409
    %v5427 = vld.sshfl [vmem:[#allocation1] sm:$0xff pattern:$0x73625140]
    %v5428 = vld.sshfl [vmem:[#allocation1 + $0x8] sm:$0xff pattern:$0x73625140]
    %v5429 = vld.sshfl [vmem:[#allocation1 + $0x10] sm:$0xff pattern:$0x73625140]
    %v5430 = vld.sshfl [vmem:[#allocation1 + $0x18] sm:$0xff pattern:$0x73625140]
    %v5431 = vld.sshfl [vmem:[#allocation1 + $0x20] sm:$0xff pattern:$0x73625140]
    %v5432 = vld.sshfl [vmem:[#allocation1 + $0x28] sm:$0xff pattern:$0x73625140]
    %v5433 = vld.sshfl [vmem:[#allocation1 + $0x30] sm:$0xff pattern:$0x73625140]
    %v5434 = vld.sshfl [vmem:[#allocation1 + $0x38] sm:$0xff pattern:$0x73625140]
    %v5451 = vpack.c.bf16 %v5417, %v5417
    %v5452 = vpack.c.bf16 %v5418, %v5418
    %v5453 = vpack.c.bf16 %v5419, %v5419
    %v5454 = vpack.c.bf16 %v5420, %v5420
    %v5455 = vpack.c.bf16 %v5421, %v5421
    %v5456 = vpack.c.bf16 %v5422, %v5422
    %v5457 = vpack.c.bf16 %v5423, %v5423
    %v5458 = vpack.c.bf16 %v5424, %v5424
    %v5459 = vpack.c.bf16 %v5427, %v5427
    %v5460 = vpack.c.bf16 %v5428, %v5428
    %v5461 = vpack.c.bf16 %v5429, %v5429
    %v5462 = vpack.c.bf16 %v5430, %v5430
    %v5463 = vpack.c.bf16 %v5431, %v5431
    %v5464 = vpack.c.bf16 %v5432, %v5432
    %v5465 = vpack.c.bf16 %v5433, %v5433
    %v5466 = vpack.c.bf16 %v5434, %v5434
    %v5467 = vld [vmem:[#allocation3] sm:$0xff]
    %v5468 = vld [vmem:[#allocation3 + $0x8] sm:$0xff]
    %v5469 = vld [vmem:[#allocation3 + $0x10] sm:$0xff]
    %v5470 = vld [vmem:[#allocation3 + $0x18] sm:$0xff]
    %v5471 = vld [vmem:[#allocation3 + $0x20] sm:$0xff]
    %v5472 = vld [vmem:[#allocation3 + $0x28] sm:$0xff]
    %v5473 = vld [vmem:[#allocation3 + $0x30] sm:$0xff]
    %v5474 = vld [vmem:[#allocation3 + $0x38] sm:$0xff]
    %v5475 = vld [vmem:[#allocation3 + $0x40] sm:$0xff]
    %v5476 = vld [vmem:[#allocation3 + $0x48] sm:$0xff]
    %v5477 = vld [vmem:[#allocation3 + $0x50] sm:$0xff]
    %v5478 = vld [vmem:[#allocation3 + $0x58] sm:$0xff]
    %v5479 = vld [vmem:[#allocation3 + $0x60] sm:$0xff]
    %v5480 = vld [vmem:[#allocation3 + $0x68] sm:$0xff]
    %v5481 = vld [vmem:[#allocation3 + $0x70] sm:$0xff]
    %v5482 = vld [vmem:[#allocation3 + $0x78] sm:$0xff]
    %v5483 = vld [vmem:[#allocation3 + $0x80] sm:$0xff]
    %v5484 = vld [vmem:[#allocation3 + $0x88] sm:$0xff]
    %v5485 = vld [vmem:[#allocation3 + $0x90] sm:$0xff]
    %v5486 = vld [vmem:[#allocation3 + $0x98] sm:$0xff]
    %v5487 = vld [vmem:[#allocation3 + $0xa0] sm:$0xff]
    %v5488 = vld [vmem:[#allocation3 + $0xa8] sm:$0xff]
    %v5489 = vld [vmem:[#allocation3 + $0xb0] sm:$0xff]
    %v5490 = vld [vmem:[#allocation3 + $0xb8] sm:$0xff]
    %v5491 = vld [vmem:[#allocation3 + $0xc0] sm:$0xff]
    %v5492 = vld [vmem:[#allocation3 + $0xc8] sm:$0xff]
    %v5493 = vld [vmem:[#allocation3 + $0xd0] sm:$0xff]
    %v5494 = vld [vmem:[#allocation3 + $0xd8] sm:$0xff]
    %v5495 = vld [vmem:[#allocation3 + $0xe0] sm:$0xff]
    %v5496 = vld [vmem:[#allocation3 + $0xe8] sm:$0xff]
    %v5497 = vld [vmem:[#allocation3 + $0xf0] sm:$0xff]
    %v5498 = vld [vmem:[#allocation3 + $0xf8] sm:$0xff]
    %v5499 = vld [vmem:[#allocation3 + $0x100] sm:$0xff]
    %v5500 = vld [vmem:[#allocation3 + $0x108] sm:$0xff]
    %v5501 = vld [vmem:[#allocation3 + $0x110] sm:$0xff]
    %v5502 = vld [vmem:[#allocation3 + $0x118] sm:$0xff]
    %v5503 = vld [vmem:[#allocation3 + $0x120] sm:$0xff]
    %v5504 = vld [vmem:[#allocation3 + $0x128] sm:$0xff]
    %v5505 = vld [vmem:[#allocation3 + $0x130] sm:$0xff]
    %v5506 = vld [vmem:[#allocation3 + $0x138] sm:$0xff]
    %v5507 = vld [vmem:[#allocation3 + $0x140] sm:$0xff]
    %v5508 = vld [vmem:[#allocation3 + $0x148] sm:$0xff]
    %v5509 = vld [vmem:[#allocation3 + $0x150] sm:$0xff]
    %v5510 = vld [vmem:[#allocation3 + $0x158] sm:$0xff]
    %v5511 = vld [vmem:[#allocation3 + $0x160] sm:$0xff]
    %v5512 = vld [vmem:[#allocation3 + $0x168] sm:$0xff]
    %v5513 = vld [vmem:[#allocation3 + $0x170] sm:$0xff]
    %v5514 = vld [vmem:[#allocation3 + $0x178] sm:$0xff]
    %v5515 = vld [vmem:[#allocation3 + $0x180] sm:$0xff]
    %v5516 = vld [vmem:[#allocation3 + $0x188] sm:$0xff]
    %v5517 = vld [vmem:[#allocation3 + $0x190] sm:$0xff]
    %v5518 = vld [vmem:[#allocation3 + $0x198] sm:$0xff]
    %v5519 = vld [vmem:[#allocation3 + $0x1a0] sm:$0xff]
    %v5520 = vld [vmem:[#allocation3 + $0x1a8] sm:$0xff]
    %v5521 = vld [vmem:[#allocation3 + $0x1b0] sm:$0xff]
    %v5522 = vld [vmem:[#allocation3 + $0x1b8] sm:$0xff]
    %v5523 = vld [vmem:[#allocation3 + $0x1c0] sm:$0xff]
    %v5524 = vld [vmem:[#allocation3 + $0x1c8] sm:$0xff]
    %v5525 = vld [vmem:[#allocation3 + $0x1d0] sm:$0xff]
    %v5526 = vld [vmem:[#allocation3 + $0x1d8] sm:$0xff]
    %v5527 = vld [vmem:[#allocation3 + $0x1e0] sm:$0xff]
    %v5528 = vld [vmem:[#allocation3 + $0x1e8] sm:$0xff]
    %v5529 = vld [vmem:[#allocation3 + $0x1f0] sm:$0xff]
    %v5530 = vld [vmem:[#allocation3 + $0x1f8] sm:$0xff]
    %v5531 = vld [vmem:[#allocation3 + $0x200] sm:$0xff]
    %v5532 = vld [vmem:[#allocation3 + $0x208] sm:$0xff]
    %v5533 = vld [vmem:[#allocation3 + $0x210] sm:$0xff]
    %v5534 = vld [vmem:[#allocation3 + $0x218] sm:$0xff]
    %v5535 = vld [vmem:[#allocation3 + $0x220] sm:$0xff]
    %v5536 = vld [vmem:[#allocation3 + $0x228] sm:$0xff]
    %v5537 = vld [vmem:[#allocation3 + $0x230] sm:$0xff]
    %v5538 = vld [vmem:[#allocation3 + $0x238] sm:$0xff]
    %v5539 = vld [vmem:[#allocation3 + $0x240] sm:$0xff]
    %v5540 = vld [vmem:[#allocation3 + $0x248] sm:$0xff]
    %v5541 = vld [vmem:[#allocation3 + $0x250] sm:$0xff]
    %v5542 = vld [vmem:[#allocation3 + $0x258] sm:$0xff]
    %v5543 = vld [vmem:[#allocation3 + $0x260] sm:$0xff]
    %v5544 = vld [vmem:[#allocation3 + $0x268] sm:$0xff]
    %v5545 = vld [vmem:[#allocation3 + $0x270] sm:$0xff]
    %v5546 = vld [vmem:[#allocation3 + $0x278] sm:$0xff]
    %v5547 = vld [vmem:[#allocation3 + $0x280] sm:$0xff]
    %v5548 = vld [vmem:[#allocation3 + $0x288] sm:$0xff]
    %v5549 = vld [vmem:[#allocation3 + $0x290] sm:$0xff]
    %v5550 = vld [vmem:[#allocation3 + $0x298] sm:$0xff]
    %v5551 = vld [vmem:[#allocation3 + $0x2a0] sm:$0xff]
    %v5552 = vld [vmem:[#allocation3 + $0x2a8] sm:$0xff]
    %v5553 = vld [vmem:[#allocation3 + $0x2b0] sm:$0xff]
    %v5554 = vld [vmem:[#allocation3 + $0x2b8] sm:$0xff]
    %v5555 = vld [vmem:[#allocation3 + $0x2c0] sm:$0xff]
    %v5556 = vld [vmem:[#allocation3 + $0x2c8] sm:$0xff]
    %v5557 = vld [vmem:[#allocation3 + $0x2d0] sm:$0xff]
    %v5558 = vld [vmem:[#allocation3 + $0x2d8] sm:$0xff]
    %v5559 = vld [vmem:[#allocation3 + $0x2e0] sm:$0xff]
    %v5560 = vld [vmem:[#allocation3 + $0x2e8] sm:$0xff]
    %v5561 = vld [vmem:[#allocation3 + $0x2f0] sm:$0xff]
    %v5562 = vld [vmem:[#allocation3 + $0x2f8] sm:$0xff]
    %v5563 = vld [vmem:[#allocation3 + $0x300] sm:$0xff]
    %v5564 = vld [vmem:[#allocation3 + $0x308] sm:$0xff]
    %v5565 = vld [vmem:[#allocation3 + $0x310] sm:$0xff]
    %v5566 = vld [vmem:[#allocation3 + $0x318] sm:$0xff]
    %v5567 = vld [vmem:[#allocation3 + $0x320] sm:$0xff]
    %v5568 = vld [vmem:[#allocation3 + $0x328] sm:$0xff]
    %v5569 = vld [vmem:[#allocation3 + $0x330] sm:$0xff]
    %v5570 = vld [vmem:[#allocation3 + $0x338] sm:$0xff]
    %v5571 = vld [vmem:[#allocation3 + $0x340] sm:$0xff]
    %v5572 = vld [vmem:[#allocation3 + $0x348] sm:$0xff]
    %v5573 = vld [vmem:[#allocation3 + $0x350] sm:$0xff]
    %v5574 = vld [vmem:[#allocation3 + $0x358] sm:$0xff]
    %v5575 = vld [vmem:[#allocation3 + $0x360] sm:$0xff]
    %v5576 = vld [vmem:[#allocation3 + $0x368] sm:$0xff]
    %v5577 = vld [vmem:[#allocation3 + $0x370] sm:$0xff]
    %v5578 = vld [vmem:[#allocation3 + $0x378] sm:$0xff]
    %v5579 = vld [vmem:[#allocation3 + $0x380] sm:$0xff]
    %v5580 = vld [vmem:[#allocation3 + $0x388] sm:$0xff]
    %v5581 = vld [vmem:[#allocation3 + $0x390] sm:$0xff]
    %v5582 = vld [vmem:[#allocation3 + $0x398] sm:$0xff]
    %v5583 = vld [vmem:[#allocation3 + $0x3a0] sm:$0xff]
    %v5584 = vld [vmem:[#allocation3 + $0x3a8] sm:$0xff]
    %v5585 = vld [vmem:[#allocation3 + $0x3b0] sm:$0xff]
    %v5586 = vld [vmem:[#allocation3 + $0x3b8] sm:$0xff]
    %v5587 = vld [vmem:[#allocation3 + $0x3c0] sm:$0xff]
    %v5588 = vld [vmem:[#allocation3 + $0x3c8] sm:$0xff]
    %v5589 = vld [vmem:[#allocation3 + $0x3d0] sm:$0xff]
    %v5590 = vld [vmem:[#allocation3 + $0x3d8] sm:$0xff]
    %v5591 = vld [vmem:[#allocation3 + $0x3e0] sm:$0xff]
    %v5592 = vld [vmem:[#allocation3 + $0x3e8] sm:$0xff]
    %v5593 = vld [vmem:[#allocation3 + $0x3f0] sm:$0xff]
    %v5594 = vld [vmem:[#allocation3 + $0x3f8] sm:$0xff]
    %v5595 = vld [vmem:[#allocation3 + $0x400] sm:$0xff]
    %v5596 = vld [vmem:[#allocation3 + $0x408] sm:$0xff]
    %v5597 = vld [vmem:[#allocation3 + $0x410] sm:$0xff]
    %v5598 = vld [vmem:[#allocation3 + $0x418] sm:$0xff]
    %v5599 = vld [vmem:[#allocation3 + $0x420] sm:$0xff]
    %v5600 = vld [vmem:[#allocation3 + $0x428] sm:$0xff]
    %v5601 = vld [vmem:[#allocation3 + $0x430] sm:$0xff]
    %v5602 = vld [vmem:[#allocation3 + $0x438] sm:$0xff]
    %v5603 = vld [vmem:[#allocation3 + $0x440] sm:$0xff]
    %v5604 = vld [vmem:[#allocation3 + $0x448] sm:$0xff]
    %v5605 = vld [vmem:[#allocation3 + $0x450] sm:$0xff]
    %v5606 = vld [vmem:[#allocation3 + $0x458] sm:$0xff]
    %v5607 = vld [vmem:[#allocation3 + $0x460] sm:$0xff]
    %v5608 = vld [vmem:[#allocation3 + $0x468] sm:$0xff]
    %v5609 = vld [vmem:[#allocation3 + $0x470] sm:$0xff]
    %v5610 = vld [vmem:[#allocation3 + $0x478] sm:$0xff]
    %v5611 = vld [vmem:[#allocation3 + $0x480] sm:$0xff]
    %v5612 = vld [vmem:[#allocation3 + $0x488] sm:$0xff]
    %v5613 = vld [vmem:[#allocation3 + $0x490] sm:$0xff]
    %v5614 = vld [vmem:[#allocation3 + $0x498] sm:$0xff]
    %v5615 = vld [vmem:[#allocation3 + $0x4a0] sm:$0xff]
    %v5616 = vld [vmem:[#allocation3 + $0x4a8] sm:$0xff]
    %v5617 = vld [vmem:[#allocation3 + $0x4b0] sm:$0xff]
    %v5618 = vld [vmem:[#allocation3 + $0x4b8] sm:$0xff]
    %v5619 = vld [vmem:[#allocation3 + $0x4c0] sm:$0xff]
    %v5620 = vld [vmem:[#allocation3 + $0x4c8] sm:$0xff]
    %v5621 = vld [vmem:[#allocation3 + $0x4d0] sm:$0xff]
    %v5622 = vld [vmem:[#allocation3 + $0x4d8] sm:$0xff]
    %v5623 = vld [vmem:[#allocation3 + $0x4e0] sm:$0xff]
    %v5624 = vld [vmem:[#allocation3 + $0x4e8] sm:$0xff]
    %v5625 = vld [vmem:[#allocation3 + $0x4f0] sm:$0xff]
    %v5626 = vld [vmem:[#allocation3 + $0x4f8] sm:$0xff]
    %v5627 = vld [vmem:[#allocation3 + $0x500] sm:$0xff]
    %v5628 = vld [vmem:[#allocation3 + $0x508] sm:$0xff]
    %v5629 = vld [vmem:[#allocation3 + $0x510] sm:$0xff]
    %v5630 = vld [vmem:[#allocation3 + $0x518] sm:$0xff]
    %v5631 = vld [vmem:[#allocation3 + $0x520] sm:$0xff]
    %v5632 = vld [vmem:[#allocation3 + $0x528] sm:$0xff]
    %v5633 = vld [vmem:[#allocation3 + $0x530] sm:$0xff]
    %v5634 = vld [vmem:[#allocation3 + $0x538] sm:$0xff]
    %v5635 = vld [vmem:[#allocation3 + $0x540] sm:$0xff]
    %v5636 = vld [vmem:[#allocation3 + $0x548] sm:$0xff]
    %v5637 = vld [vmem:[#allocation3 + $0x550] sm:$0xff]
    %v5638 = vld [vmem:[#allocation3 + $0x558] sm:$0xff]
    %v5639 = vld [vmem:[#allocation3 + $0x560] sm:$0xff]
    %v5640 = vld [vmem:[#allocation3 + $0x568] sm:$0xff]
    %v5641 = vld [vmem:[#allocation3 + $0x570] sm:$0xff]
    %v5642 = vld [vmem:[#allocation3 + $0x578] sm:$0xff]
    %v5643 = vld [vmem:[#allocation3 + $0x580] sm:$0xff]
    %v5644 = vld [vmem:[#allocation3 + $0x588] sm:$0xff]
    %v5645 = vld [vmem:[#allocation3 + $0x590] sm:$0xff]
    %v5646 = vld [vmem:[#allocation3 + $0x598] sm:$0xff]
    %v5647 = vld [vmem:[#allocation3 + $0x5a0] sm:$0xff]
    %v5648 = vld [vmem:[#allocation3 + $0x5a8] sm:$0xff]
    %v5649 = vld [vmem:[#allocation3 + $0x5b0] sm:$0xff]
    %v5650 = vld [vmem:[#allocation3 + $0x5b8] sm:$0xff]
    %v5651 = vld [vmem:[#allocation3 + $0x5c0] sm:$0xff]
    %v5652 = vld [vmem:[#allocation3 + $0x5c8] sm:$0xff]
    %v5653 = vld [vmem:[#allocation3 + $0x5d0] sm:$0xff]
    %v5654 = vld [vmem:[#allocation3 + $0x5d8] sm:$0xff]
    %v5655 = vld [vmem:[#allocation3 + $0x5e0] sm:$0xff]
    %v5656 = vld [vmem:[#allocation3 + $0x5e8] sm:$0xff]
    %v5657 = vld [vmem:[#allocation3 + $0x5f0] sm:$0xff]
    %v5658 = vld [vmem:[#allocation3 + $0x5f8] sm:$0xff]
    %v5659 = vld [vmem:[#allocation3 + $0x600] sm:$0xff]
    %v5660 = vld [vmem:[#allocation3 + $0x608] sm:$0xff]
    %v5661 = vld [vmem:[#allocation3 + $0x610] sm:$0xff]
    %v5662 = vld [vmem:[#allocation3 + $0x618] sm:$0xff]
    %v5663 = vld [vmem:[#allocation3 + $0x620] sm:$0xff]
    %v5664 = vld [vmem:[#allocation3 + $0x628] sm:$0xff]
    %v5665 = vld [vmem:[#allocation3 + $0x630] sm:$0xff]
    %v5666 = vld [vmem:[#allocation3 + $0x638] sm:$0xff]
    %v5667 = vld [vmem:[#allocation3 + $0x640] sm:$0xff]
    %v5668 = vld [vmem:[#allocation3 + $0x648] sm:$0xff]
    %v5669 = vld [vmem:[#allocation3 + $0x650] sm:$0xff]
    %v5670 = vld [vmem:[#allocation3 + $0x658] sm:$0xff]
    %v5671 = vld [vmem:[#allocation3 + $0x660] sm:$0xff]
    %v5672 = vld [vmem:[#allocation3 + $0x668] sm:$0xff]
    %v5673 = vld [vmem:[#allocation3 + $0x670] sm:$0xff]
    %v5674 = vld [vmem:[#allocation3 + $0x678] sm:$0xff]
    %v5675 = vld [vmem:[#allocation3 + $0x680] sm:$0xff]
    %v5676 = vld [vmem:[#allocation3 + $0x688] sm:$0xff]
    %v5677 = vld [vmem:[#allocation3 + $0x690] sm:$0xff]
    %v5678 = vld [vmem:[#allocation3 + $0x698] sm:$0xff]
    %v5679 = vld [vmem:[#allocation3 + $0x6a0] sm:$0xff]
    %v5680 = vld [vmem:[#allocation3 + $0x6a8] sm:$0xff]
    %v5681 = vld [vmem:[#allocation3 + $0x6b0] sm:$0xff]
    %v5682 = vld [vmem:[#allocation3 + $0x6b8] sm:$0xff]
    %v5683 = vld [vmem:[#allocation3 + $0x6c0] sm:$0xff]
    %v5684 = vld [vmem:[#allocation3 + $0x6c8] sm:$0xff]
    %v5685 = vld [vmem:[#allocation3 + $0x6d0] sm:$0xff]
    %v5686 = vld [vmem:[#allocation3 + $0x6d8] sm:$0xff]
    %v5687 = vld [vmem:[#allocation3 + $0x6e0] sm:$0xff]
    %v5688 = vld [vmem:[#allocation3 + $0x6e8] sm:$0xff]
    %v5689 = vld [vmem:[#allocation3 + $0x6f0] sm:$0xff]
    %v5690 = vld [vmem:[#allocation3 + $0x6f8] sm:$0xff]
    %v5691 = vld [vmem:[#allocation3 + $0x700] sm:$0xff]
    %v5692 = vld [vmem:[#allocation3 + $0x708] sm:$0xff]
    %v5693 = vld [vmem:[#allocation3 + $0x710] sm:$0xff]
    %v5694 = vld [vmem:[#allocation3 + $0x718] sm:$0xff]
    %v5695 = vld [vmem:[#allocation3 + $0x720] sm:$0xff]
    %v5696 = vld [vmem:[#allocation3 + $0x728] sm:$0xff]
    %v5697 = vld [vmem:[#allocation3 + $0x730] sm:$0xff]
    %v5698 = vld [vmem:[#allocation3 + $0x738] sm:$0xff]
    %v5699 = vld [vmem:[#allocation3 + $0x740] sm:$0xff]
    %v5700 = vld [vmem:[#allocation3 + $0x748] sm:$0xff]
    %v5701 = vld [vmem:[#allocation3 + $0x750] sm:$0xff]
    %v5702 = vld [vmem:[#allocation3 + $0x758] sm:$0xff]
    %v5703 = vld [vmem:[#allocation3 + $0x760] sm:$0xff]
    %v5704 = vld [vmem:[#allocation3 + $0x768] sm:$0xff]
    %v5705 = vld [vmem:[#allocation3 + $0x770] sm:$0xff]
    %v5706 = vld [vmem:[#allocation3 + $0x778] sm:$0xff]
    %v5707 = vld [vmem:[#allocation3 + $0x780] sm:$0xff]
    %v5708 = vld [vmem:[#allocation3 + $0x788] sm:$0xff]
    %v5709 = vld [vmem:[#allocation3 + $0x790] sm:$0xff]
    %v5710 = vld [vmem:[#allocation3 + $0x798] sm:$0xff]
    %v5711 = vld [vmem:[#allocation3 + $0x7a0] sm:$0xff]
    %v5712 = vld [vmem:[#allocation3 + $0x7a8] sm:$0xff]
    %v5713 = vld [vmem:[#allocation3 + $0x7b0] sm:$0xff]
    %v5714 = vld [vmem:[#allocation3 + $0x7b8] sm:$0xff]
    %v5715 = vld [vmem:[#allocation3 + $0x7c0] sm:$0xff]
    %v5716 = vld [vmem:[#allocation3 + $0x7c8] sm:$0xff]
    %v5717 = vld [vmem:[#allocation3 + $0x7d0] sm:$0xff]
    %v5718 = vld [vmem:[#allocation3 + $0x7d8] sm:$0xff]
    %v5719 = vld [vmem:[#allocation3 + $0x7e0] sm:$0xff]
    %v5720 = vld [vmem:[#allocation3 + $0x7e8] sm:$0xff]
    %v5721 = vld [vmem:[#allocation3 + $0x7f0] sm:$0xff]
    %v5722 = vld [vmem:[#allocation3 + $0x7f8] sm:$0xff]
    %v5723 = vld [vmem:[#allocation3 + $0x800] sm:$0xff]
    %v5724 = vld [vmem:[#allocation3 + $0x808] sm:$0xff]
    %v5725 = vld [vmem:[#allocation3 + $0x810] sm:$0xff]
    %v5726 = vld [vmem:[#allocation3 + $0x818] sm:$0xff]
    %v5727 = vld [vmem:[#allocation3 + $0x820] sm:$0xff]
    %v5728 = vld [vmem:[#allocation3 + $0x828] sm:$0xff]
    %v5729 = vld [vmem:[#allocation3 + $0x830] sm:$0xff]
    %v5730 = vld [vmem:[#allocation3 + $0x838] sm:$0xff]
    %v5731 = vld [vmem:[#allocation3 + $0x840] sm:$0xff]
    %v5732 = vld [vmem:[#allocation3 + $0x848] sm:$0xff]
    %v5733 = vld [vmem:[#allocation3 + $0x850] sm:$0xff]
    %v5734 = vld [vmem:[#allocation3 + $0x858] sm:$0xff]
    %v5735 = vld [vmem:[#allocation3 + $0x860] sm:$0xff]
    %v5736 = vld [vmem:[#allocation3 + $0x868] sm:$0xff]
    %v5737 = vld [vmem:[#allocation3 + $0x870] sm:$0xff]
    %v5738 = vld [vmem:[#allocation3 + $0x878] sm:$0xff]
    %v5739 = vld [vmem:[#allocation3 + $0x880] sm:$0xff]
    %v5740 = vld [vmem:[#allocation3 + $0x888] sm:$0xff]
    %v5741 = vld [vmem:[#allocation3 + $0x890] sm:$0xff]
    %v5742 = vld [vmem:[#allocation3 + $0x898] sm:$0xff]
    %v5743 = vld [vmem:[#allocation3 + $0x8a0] sm:$0xff]
    %v5744 = vld [vmem:[#allocation3 + $0x8a8] sm:$0xff]
    %v5745 = vld [vmem:[#allocation3 + $0x8b0] sm:$0xff]
    %v5746 = vld [vmem:[#allocation3 + $0x8b8] sm:$0xff]
    %v5747 = vld [vmem:[#allocation3 + $0x8c0] sm:$0xff]
    %v5748 = vld [vmem:[#allocation3 + $0x8c8] sm:$0xff]
    %v5749 = vld [vmem:[#allocation3 + $0x8d0] sm:$0xff]
    %v5750 = vld [vmem:[#allocation3 + $0x8d8] sm:$0xff]
    %v5751 = vld [vmem:[#allocation3 + $0x8e0] sm:$0xff]
    %v5752 = vld [vmem:[#allocation3 + $0x8e8] sm:$0xff]
    %v5753 = vld [vmem:[#allocation3 + $0x8f0] sm:$0xff]
    %v5754 = vld [vmem:[#allocation3 + $0x8f8] sm:$0xff]
    %v5755 = vld [vmem:[#allocation3 + $0x900] sm:$0xff]
    %v5756 = vld [vmem:[#allocation3 + $0x908] sm:$0xff]
    %v5757 = vld [vmem:[#allocation3 + $0x910] sm:$0xff]
    %v5758 = vld [vmem:[#allocation3 + $0x918] sm:$0xff]
    %v5759 = vld [vmem:[#allocation3 + $0x920] sm:$0xff]
    %v5760 = vld [vmem:[#allocation3 + $0x928] sm:$0xff]
    %v5761 = vld [vmem:[#allocation3 + $0x930] sm:$0xff]
    %v5762 = vld [vmem:[#allocation3 + $0x938] sm:$0xff]
    %v5763 = vld [vmem:[#allocation3 + $0x940] sm:$0xff]
    %v5764 = vld [vmem:[#allocation3 + $0x948] sm:$0xff]
    %v5765 = vld [vmem:[#allocation3 + $0x950] sm:$0xff]
    %v5766 = vld [vmem:[#allocation3 + $0x958] sm:$0xff]
    %v5767 = vld [vmem:[#allocation3 + $0x960] sm:$0xff]
    %v5768 = vld [vmem:[#allocation3 + $0x968] sm:$0xff]
    %v5769 = vld [vmem:[#allocation3 + $0x970] sm:$0xff]
    %v5770 = vld [vmem:[#allocation3 + $0x978] sm:$0xff]
    %v5771 = vld [vmem:[#allocation3 + $0x980] sm:$0xff]
    %v5772 = vld [vmem:[#allocation3 + $0x988] sm:$0xff]
    %v5773 = vld [vmem:[#allocation3 + $0x990] sm:$0xff]
    %v5774 = vld [vmem:[#allocation3 + $0x998] sm:$0xff]
    %v5775 = vld [vmem:[#allocation3 + $0x9a0] sm:$0xff]
    %v5776 = vld [vmem:[#allocation3 + $0x9a8] sm:$0xff]
    %v5777 = vld [vmem:[#allocation3 + $0x9b0] sm:$0xff]
    %v5778 = vld [vmem:[#allocation3 + $0x9b8] sm:$0xff]
    %v5779 = vld [vmem:[#allocation3 + $0x9c0] sm:$0xff]
    %v5780 = vld [vmem:[#allocation3 + $0x9c8] sm:$0xff]
    %v5781 = vld [vmem:[#allocation3 + $0x9d0] sm:$0xff]
    %v5782 = vld [vmem:[#allocation3 + $0x9d8] sm:$0xff]
    %v5783 = vld [vmem:[#allocation3 + $0x9e0] sm:$0xff]
    %v5784 = vld [vmem:[#allocation3 + $0x9e8] sm:$0xff]
    %v5785 = vld [vmem:[#allocation3 + $0x9f0] sm:$0xff]
    %v5786 = vld [vmem:[#allocation3 + $0x9f8] sm:$0xff]
    %v5787 = vld [vmem:[#allocation3 + $0xa00] sm:$0xff]
    %v5788 = vld [vmem:[#allocation3 + $0xa08] sm:$0xff]
    %v5789 = vld [vmem:[#allocation3 + $0xa10] sm:$0xff]
    %v5790 = vld [vmem:[#allocation3 + $0xa18] sm:$0xff]
    %v5791 = vld [vmem:[#allocation3 + $0xa20] sm:$0xff]
    %v5792 = vld [vmem:[#allocation3 + $0xa28] sm:$0xff]
    %v5793 = vld [vmem:[#allocation3 + $0xa30] sm:$0xff]
    %v5794 = vld [vmem:[#allocation3 + $0xa38] sm:$0xff]
    %v5795 = vld [vmem:[#allocation3 + $0xa40] sm:$0xff]
    %v5796 = vld [vmem:[#allocation3 + $0xa48] sm:$0xff]
    %v5797 = vld [vmem:[#allocation3 + $0xa50] sm:$0xff]
    %v5798 = vld [vmem:[#allocation3 + $0xa58] sm:$0xff]
    %v5799 = vld [vmem:[#allocation3 + $0xa60] sm:$0xff]
    %v5800 = vld [vmem:[#allocation3 + $0xa68] sm:$0xff]
    %v5801 = vld [vmem:[#allocation3 + $0xa70] sm:$0xff]
    %v5802 = vld [vmem:[#allocation3 + $0xa78] sm:$0xff]
    %v5803 = vld [vmem:[#allocation3 + $0xa80] sm:$0xff]
    %v5804 = vld [vmem:[#allocation3 + $0xa88] sm:$0xff]
    %v5805 = vld [vmem:[#allocation3 + $0xa90] sm:$0xff]
    %v5806 = vld [vmem:[#allocation3 + $0xa98] sm:$0xff]
    %v5807 = vld [vmem:[#allocation3 + $0xaa0] sm:$0xff]
    %v5808 = vld [vmem:[#allocation3 + $0xaa8] sm:$0xff]
    %v5809 = vld [vmem:[#allocation3 + $0xab0] sm:$0xff]
    %v5810 = vld [vmem:[#allocation3 + $0xab8] sm:$0xff]
    %v5811 = vld [vmem:[#allocation3 + $0xac0] sm:$0xff]
    %v5812 = vld [vmem:[#allocation3 + $0xac8] sm:$0xff]
    %v5813 = vld [vmem:[#allocation3 + $0xad0] sm:$0xff]
    %v5814 = vld [vmem:[#allocation3 + $0xad8] sm:$0xff]
    %v5815 = vld [vmem:[#allocation3 + $0xae0] sm:$0xff]
    %v5816 = vld [vmem:[#allocation3 + $0xae8] sm:$0xff]
    %v5817 = vld [vmem:[#allocation3 + $0xaf0] sm:$0xff]
    %v5818 = vld [vmem:[#allocation3 + $0xaf8] sm:$0xff]
    %v5819 = vld [vmem:[#allocation3 + $0xb00] sm:$0xff]
    %v5820 = vld [vmem:[#allocation3 + $0xb08] sm:$0xff]
    %v5821 = vld [vmem:[#allocation3 + $0xb10] sm:$0xff]
    %v5822 = vld [vmem:[#allocation3 + $0xb18] sm:$0xff]
    %v5823 = vld [vmem:[#allocation3 + $0xb20] sm:$0xff]
    %v5824 = vld [vmem:[#allocation3 + $0xb28] sm:$0xff]
    %v5825 = vld [vmem:[#allocation3 + $0xb30] sm:$0xff]
    %v5826 = vld [vmem:[#allocation3 + $0xb38] sm:$0xff]
    %v5827 = vld [vmem:[#allocation3 + $0xb40] sm:$0xff]
    %v5828 = vld [vmem:[#allocation3 + $0xb48] sm:$0xff]
    %v5829 = vld [vmem:[#allocation3 + $0xb50] sm:$0xff]
    %v5830 = vld [vmem:[#allocation3 + $0xb58] sm:$0xff]
    %v5831 = vld [vmem:[#allocation3 + $0xb60] sm:$0xff]
    %v5832 = vld [vmem:[#allocation3 + $0xb68] sm:$0xff]
    %v5833 = vld [vmem:[#allocation3 + $0xb70] sm:$0xff]
    %v5834 = vld [vmem:[#allocation3 + $0xb78] sm:$0xff]
    %v5835 = vld [vmem:[#allocation3 + $0xb80] sm:$0xff]
    %v5836 = vld [vmem:[#allocation3 + $0xb88] sm:$0xff]
    %v5837 = vld [vmem:[#allocation3 + $0xb90] sm:$0xff]
    %v5838 = vld [vmem:[#allocation3 + $0xb98] sm:$0xff]
    %v5839 = vld [vmem:[#allocation3 + $0xba0] sm:$0xff]
    %v5840 = vld [vmem:[#allocation3 + $0xba8] sm:$0xff]
    %v5841 = vld [vmem:[#allocation3 + $0xbb0] sm:$0xff]
    %v5842 = vld [vmem:[#allocation3 + $0xbb8] sm:$0xff]
    %v5843 = vld [vmem:[#allocation3 + $0xbc0] sm:$0xff]
    %v5844 = vld [vmem:[#allocation3 + $0xbc8] sm:$0xff]
    %v5845 = vld [vmem:[#allocation3 + $0xbd0] sm:$0xff]
    %v5846 = vld [vmem:[#allocation3 + $0xbd8] sm:$0xff]
    %v5847 = vld [vmem:[#allocation3 + $0xbe0] sm:$0xff]
    %v5848 = vld [vmem:[#allocation3 + $0xbe8] sm:$0xff]
    %v5849 = vld [vmem:[#allocation3 + $0xbf0] sm:$0xff]
    %v5850 = vld [vmem:[#allocation3 + $0xbf8] sm:$0xff]
    %v5851 = vld [vmem:[#allocation3 + $0xc00] sm:$0xff]
    %v5852 = vld [vmem:[#allocation3 + $0xc08] sm:$0xff]
    %v5853 = vld [vmem:[#allocation3 + $0xc10] sm:$0xff]
    %v5854 = vld [vmem:[#allocation3 + $0xc18] sm:$0xff]
    %v5855 = vld [vmem:[#allocation3 + $0xc20] sm:$0xff]
    %v5856 = vld [vmem:[#allocation3 + $0xc28] sm:$0xff]
    %v5857 = vld [vmem:[#allocation3 + $0xc30] sm:$0xff]
    %v5858 = vld [vmem:[#allocation3 + $0xc38] sm:$0xff]
    %v5859 = vld [vmem:[#allocation3 + $0xc40] sm:$0xff]
    %v5860 = vld [vmem:[#allocation3 + $0xc48] sm:$0xff]
    %v5861 = vld [vmem:[#allocation3 + $0xc50] sm:$0xff]
    %v5862 = vld [vmem:[#allocation3 + $0xc58] sm:$0xff]
    %v5863 = vld [vmem:[#allocation3 + $0xc60] sm:$0xff]
    %v5864 = vld [vmem:[#allocation3 + $0xc68] sm:$0xff]
    %v5865 = vld [vmem:[#allocation3 + $0xc70] sm:$0xff]
    %v5866 = vld [vmem:[#allocation3 + $0xc78] sm:$0xff]
    %v5867 = vld [vmem:[#allocation3 + $0xc80] sm:$0xff]
    %v5868 = vld [vmem:[#allocation3 + $0xc88] sm:$0xff]
    %v5869 = vld [vmem:[#allocation3 + $0xc90] sm:$0xff]
    %v5870 = vld [vmem:[#allocation3 + $0xc98] sm:$0xff]
    %v5871 = vld [vmem:[#allocation3 + $0xca0] sm:$0xff]
    %v5872 = vld [vmem:[#allocation3 + $0xca8] sm:$0xff]
    %v5873 = vld [vmem:[#allocation3 + $0xcb0] sm:$0xff]
    %v5874 = vld [vmem:[#allocation3 + $0xcb8] sm:$0xff]
    %v5875 = vld [vmem:[#allocation3 + $0xcc0] sm:$0xff]
    %v5876 = vld [vmem:[#allocation3 + $0xcc8] sm:$0xff]
    %v5877 = vld [vmem:[#allocation3 + $0xcd0] sm:$0xff]
    %v5878 = vld [vmem:[#allocation3 + $0xcd8] sm:$0xff]
    %v5879 = vld [vmem:[#allocation3 + $0xce0] sm:$0xff]
    %v5880 = vld [vmem:[#allocation3 + $0xce8] sm:$0xff]
    %v5881 = vld [vmem:[#allocation3 + $0xcf0] sm:$0xff]
    %v5882 = vld [vmem:[#allocation3 + $0xcf8] sm:$0xff]
    %v5883 = vld [vmem:[#allocation3 + $0xd00] sm:$0xff]
    %v5884 = vld [vmem:[#allocation3 + $0xd08] sm:$0xff]
    %v5885 = vld [vmem:[#allocation3 + $0xd10] sm:$0xff]
    %v5886 = vld [vmem:[#allocation3 + $0xd18] sm:$0xff]
    %v5887 = vld [vmem:[#allocation3 + $0xd20] sm:$0xff]
    %v5888 = vld [vmem:[#allocation3 + $0xd28] sm:$0xff]
    %v5889 = vld [vmem:[#allocation3 + $0xd30] sm:$0xff]
    %v5890 = vld [vmem:[#allocation3 + $0xd38] sm:$0xff]
    %v5891 = vld [vmem:[#allocation3 + $0xd40] sm:$0xff]
    %v5892 = vld [vmem:[#allocation3 + $0xd48] sm:$0xff]
    %v5893 = vld [vmem:[#allocation3 + $0xd50] sm:$0xff]
    %v5894 = vld [vmem:[#allocation3 + $0xd58] sm:$0xff]
    %v5895 = vld [vmem:[#allocation3 + $0xd60] sm:$0xff]
    %v5896 = vld [vmem:[#allocation3 + $0xd68] sm:$0xff]
    %v5897 = vld [vmem:[#allocation3 + $0xd70] sm:$0xff]
    %v5898 = vld [vmem:[#allocation3 + $0xd78] sm:$0xff]
    %v5899 = vld [vmem:[#allocation3 + $0xd80] sm:$0xff]
    %v5900 = vld [vmem:[#allocation3 + $0xd88] sm:$0xff]
    %v5901 = vld [vmem:[#allocation3 + $0xd90] sm:$0xff]
    %v5902 = vld [vmem:[#allocation3 + $0xd98] sm:$0xff]
    %v5903 = vld [vmem:[#allocation3 + $0xda0] sm:$0xff]
    %v5904 = vld [vmem:[#allocation3 + $0xda8] sm:$0xff]
    %v5905 = vld [vmem:[#allocation3 + $0xdb0] sm:$0xff]
    %v5906 = vld [vmem:[#allocation3 + $0xdb8] sm:$0xff]
    %v5907 = vld [vmem:[#allocation3 + $0xdc0] sm:$0xff]
    %v5908 = vld [vmem:[#allocation3 + $0xdc8] sm:$0xff]
    %v5909 = vld [vmem:[#allocation3 + $0xdd0] sm:$0xff]
    %v5910 = vld [vmem:[#allocation3 + $0xdd8] sm:$0xff]
    %v5911 = vld [vmem:[#allocation3 + $0xde0] sm:$0xff]
    %v5912 = vld [vmem:[#allocation3 + $0xde8] sm:$0xff]
    %v5913 = vld [vmem:[#allocation3 + $0xdf0] sm:$0xff]
    %v5914 = vld [vmem:[#allocation3 + $0xdf8] sm:$0xff]
    %v5915 = vld [vmem:[#allocation3 + $0xe00] sm:$0xff]
    %v5916 = vld [vmem:[#allocation3 + $0xe08] sm:$0xff]
    %v5917 = vld [vmem:[#allocation3 + $0xe10] sm:$0xff]
    %v5918 = vld [vmem:[#allocation3 + $0xe18] sm:$0xff]
    %v5919 = vld [vmem:[#allocation3 + $0xe20] sm:$0xff]
    %v5920 = vld [vmem:[#allocation3 + $0xe28] sm:$0xff]
    %v5921 = vld [vmem:[#allocation3 + $0xe30] sm:$0xff]
    %v5922 = vld [vmem:[#allocation3 + $0xe38] sm:$0xff]
    %v5923 = vld [vmem:[#allocation3 + $0xe40] sm:$0xff]
    %v5924 = vld [vmem:[#allocation3 + $0xe48] sm:$0xff]
    %v5925 = vld [vmem:[#allocation3 + $0xe50] sm:$0xff]
    %v5926 = vld [vmem:[#allocation3 + $0xe58] sm:$0xff]
    %v5927 = vld [vmem:[#allocation3 + $0xe60] sm:$0xff]
    %v5928 = vld [vmem:[#allocation3 + $0xe68] sm:$0xff]
    %v5929 = vld [vmem:[#allocation3 + $0xe70] sm:$0xff]
    %v5930 = vld [vmem:[#allocation3 + $0xe78] sm:$0xff]
    %v5931 = vld [vmem:[#allocation3 + $0xe80] sm:$0xff]
    %v5932 = vld [vmem:[#allocation3 + $0xe88] sm:$0xff]
    %v5933 = vld [vmem:[#allocation3 + $0xe90] sm:$0xff]
    %v5934 = vld [vmem:[#allocation3 + $0xe98] sm:$0xff]
    %v5935 = vld [vmem:[#allocation3 + $0xea0] sm:$0xff]
    %v5936 = vld [vmem:[#allocation3 + $0xea8] sm:$0xff]
    %v5937 = vld [vmem:[#allocation3 + $0xeb0] sm:$0xff]
    %v5938 = vld [vmem:[#allocation3 + $0xeb8] sm:$0xff]
    %v5939 = vld [vmem:[#allocation3 + $0xec0] sm:$0xff]
    %v5940 = vld [vmem:[#allocation3 + $0xec8] sm:$0xff]
    %v5941 = vld [vmem:[#allocation3 + $0xed0] sm:$0xff]
    %v5942 = vld [vmem:[#allocation3 + $0xed8] sm:$0xff]
    %v5943 = vld [vmem:[#allocation3 + $0xee0] sm:$0xff]
    %v5944 = vld [vmem:[#allocation3 + $0xee8] sm:$0xff]
    %v5945 = vld [vmem:[#allocation3 + $0xef0] sm:$0xff]
    %v5946 = vld [vmem:[#allocation3 + $0xef8] sm:$0xff]
    %v5947 = vld [vmem:[#allocation3 + $0xf00] sm:$0xff]
    %v5948 = vld [vmem:[#allocation3 + $0xf08] sm:$0xff]
    %v5949 = vld [vmem:[#allocation3 + $0xf10] sm:$0xff]
    %v5950 = vld [vmem:[#allocation3 + $0xf18] sm:$0xff]
    %v5951 = vld [vmem:[#allocation3 + $0xf20] sm:$0xff]
    %v5952 = vld [vmem:[#allocation3 + $0xf28] sm:$0xff]
    %v5953 = vld [vmem:[#allocation3 + $0xf30] sm:$0xff]
    %v5954 = vld [vmem:[#allocation3 + $0xf38] sm:$0xff]
    %v5955 = vld [vmem:[#allocation3 + $0xf40] sm:$0xff]
    %v5956 = vld [vmem:[#allocation3 + $0xf48] sm:$0xff]
    %v5957 = vld [vmem:[#allocation3 + $0xf50] sm:$0xff]
    %v5958 = vld [vmem:[#allocation3 + $0xf58] sm:$0xff]
    %v5959 = vld [vmem:[#allocation3 + $0xf60] sm:$0xff]
    %v5960 = vld [vmem:[#allocation3 + $0xf68] sm:$0xff]
    %v5961 = vld [vmem:[#allocation3 + $0xf70] sm:$0xff]
    %v5962 = vld [vmem:[#allocation3 + $0xf78] sm:$0xff]
    %v5963 = vld [vmem:[#allocation3 + $0xf80] sm:$0xff]
    %v5964 = vld [vmem:[#allocation3 + $0xf88] sm:$0xff]
    %v5965 = vld [vmem:[#allocation3 + $0xf90] sm:$0xff]
    %v5966 = vld [vmem:[#allocation3 + $0xf98] sm:$0xff]
    %v5967 = vld [vmem:[#allocation3 + $0xfa0] sm:$0xff]
    %v5968 = vld [vmem:[#allocation3 + $0xfa8] sm:$0xff]
    %v5969 = vld [vmem:[#allocation3 + $0xfb0] sm:$0xff]
    %v5970 = vld [vmem:[#allocation3 + $0xfb8] sm:$0xff]
    %v5971 = vld [vmem:[#allocation3 + $0xfc0] sm:$0xff]
    %v5972 = vld [vmem:[#allocation3 + $0xfc8] sm:$0xff]
    %v5973 = vld [vmem:[#allocation3 + $0xfd0] sm:$0xff]
    %v5974 = vld [vmem:[#allocation3 + $0xfd8] sm:$0xff]
    %v5975 = vld [vmem:[#allocation3 + $0xfe0] sm:$0xff]
    %v5976 = vld [vmem:[#allocation3 + $0xfe8] sm:$0xff]
    %v5977 = vld [vmem:[#allocation3 + $0xff0] sm:$0xff]
    %v5978 = vld [vmem:[#allocation3 + $0xff8] sm:$0xff]
    %v5979 = vld [vmem:[#allocation3 + $0x1000] sm:$0xff]
    %v5980 = vld [vmem:[#allocation3 + $0x1008] sm:$0xff]
    %v5981 = vld [vmem:[#allocation3 + $0x1010] sm:$0xff]
    %v5982 = vld [vmem:[#allocation3 + $0x1018] sm:$0xff]
    %v5983 = vld [vmem:[#allocation3 + $0x1020] sm:$0xff]
    %v5984 = vld [vmem:[#allocation3 + $0x1028] sm:$0xff]
    %v5985 = vld [vmem:[#allocation3 + $0x1030] sm:$0xff]
    %v5986 = vld [vmem:[#allocation3 + $0x1038] sm:$0xff]
    %v5987 = vld [vmem:[#allocation3 + $0x1040] sm:$0xff]
    %v5988 = vld [vmem:[#allocation3 + $0x1048] sm:$0xff]
    %v5989 = vld [vmem:[#allocation3 + $0x1050] sm:$0xff]
    %v5990 = vld [vmem:[#allocation3 + $0x1058] sm:$0xff]
    %v5991 = vld [vmem:[#allocation3 + $0x1060] sm:$0xff]
    %v5992 = vld [vmem:[#allocation3 + $0x1068] sm:$0xff]
    %v5993 = vld [vmem:[#allocation3 + $0x1070] sm:$0xff]
    %v5994 = vld [vmem:[#allocation3 + $0x1078] sm:$0xff]
    %v5995 = vld [vmem:[#allocation3 + $0x1080] sm:$0xff]
    %v5996 = vld [vmem:[#allocation3 + $0x1088] sm:$0xff]
    %v5997 = vld [vmem:[#allocation3 + $0x1090] sm:$0xff]
    %v5998 = vld [vmem:[#allocation3 + $0x1098] sm:$0xff]
    %v5999 = vld [vmem:[#allocation3 + $0x10a0] sm:$0xff]
    %v6000 = vld [vmem:[#allocation3 + $0x10a8] sm:$0xff]
    %v6001 = vld [vmem:[#allocation3 + $0x10b0] sm:$0xff]
    %v6002 = vld [vmem:[#allocation3 + $0x10b8] sm:$0xff]
    %v6003 = vld [vmem:[#allocation3 + $0x10c0] sm:$0xff]
    %v6004 = vld [vmem:[#allocation3 + $0x10c8] sm:$0xff]
    %v6005 = vld [vmem:[#allocation3 + $0x10d0] sm:$0xff]
    %v6006 = vld [vmem:[#allocation3 + $0x10d8] sm:$0xff]
    %v6007 = vld [vmem:[#allocation3 + $0x10e0] sm:$0xff]
    %v6008 = vld [vmem:[#allocation3 + $0x10e8] sm:$0xff]
    %v6009 = vld [vmem:[#allocation3 + $0x10f0] sm:$0xff]
    %v6010 = vld [vmem:[#allocation3 + $0x10f8] sm:$0xff]
    %v6011 = vld [vmem:[#allocation3 + $0x1100] sm:$0xff]
    %v6012 = vld [vmem:[#allocation3 + $0x1108] sm:$0xff]
    %v6013 = vld [vmem:[#allocation3 + $0x1110] sm:$0xff]
    %v6014 = vld [vmem:[#allocation3 + $0x1118] sm:$0xff]
    %v6015 = vld [vmem:[#allocation3 + $0x1120] sm:$0xff]
    %v6016 = vld [vmem:[#allocation3 + $0x1128] sm:$0xff]
    %v6017 = vld [vmem:[#allocation3 + $0x1130] sm:$0xff]
    %v6018 = vld [vmem:[#allocation3 + $0x1138] sm:$0xff]
    %v6019 = vld [vmem:[#allocation3 + $0x1140] sm:$0xff]
    %v6020 = vld [vmem:[#allocation3 + $0x1148] sm:$0xff]
    %v6021 = vld [vmem:[#allocation3 + $0x1150] sm:$0xff]
    %v6022 = vld [vmem:[#allocation3 + $0x1158] sm:$0xff]
    %v6023 = vld [vmem:[#allocation3 + $0x1160] sm:$0xff]
    %v6024 = vld [vmem:[#allocation3 + $0x1168] sm:$0xff]
    %v6025 = vld [vmem:[#allocation3 + $0x1170] sm:$0xff]
    %v6026 = vld [vmem:[#allocation3 + $0x1178] sm:$0xff]
    %v6027 = vld [vmem:[#allocation3 + $0x1180] sm:$0xff]
    %v6028 = vld [vmem:[#allocation3 + $0x1188] sm:$0xff]
    %v6029 = vld [vmem:[#allocation3 + $0x1190] sm:$0xff]
    %v6030 = vld [vmem:[#allocation3 + $0x1198] sm:$0xff]
    %v6031 = vld [vmem:[#allocation3 + $0x11a0] sm:$0xff]
    %v6032 = vld [vmem:[#allocation3 + $0x11a8] sm:$0xff]
    %v6033 = vld [vmem:[#allocation3 + $0x11b0] sm:$0xff]
    %v6034 = vld [vmem:[#allocation3 + $0x11b8] sm:$0xff]
    %v6035 = vld [vmem:[#allocation3 + $0x11c0] sm:$0xff]
    %v6036 = vld [vmem:[#allocation3 + $0x11c8] sm:$0xff]
    %v6037 = vld [vmem:[#allocation3 + $0x11d0] sm:$0xff]
    %v6038 = vld [vmem:[#allocation3 + $0x11d8] sm:$0xff]
    %v6039 = vld [vmem:[#allocation3 + $0x11e0] sm:$0xff]
    %v6040 = vld [vmem:[#allocation3 + $0x11e8] sm:$0xff]
    %v6041 = vld [vmem:[#allocation3 + $0x11f0] sm:$0xff]
    %v6042 = vld [vmem:[#allocation3 + $0x11f8] sm:$0xff]
    %v6043 = vld [vmem:[#allocation3 + $0x1200] sm:$0xff]
    %v6044 = vld [vmem:[#allocation3 + $0x1208] sm:$0xff]
    %v6045 = vld [vmem:[#allocation3 + $0x1210] sm:$0xff]
    %v6046 = vld [vmem:[#allocation3 + $0x1218] sm:$0xff]
    %v6047 = vld [vmem:[#allocation3 + $0x1220] sm:$0xff]
    %v6048 = vld [vmem:[#allocation3 + $0x1228] sm:$0xff]
    %v6049 = vld [vmem:[#allocation3 + $0x1230] sm:$0xff]
    %v6050 = vld [vmem:[#allocation3 + $0x1238] sm:$0xff]
    %v6051 = vld [vmem:[#allocation3 + $0x1240] sm:$0xff]
    %v6052 = vld [vmem:[#allocation3 + $0x1248] sm:$0xff]
    %v6053 = vld [vmem:[#allocation3 + $0x1250] sm:$0xff]
    %v6054 = vld [vmem:[#allocation3 + $0x1258] sm:$0xff]
    %v6055 = vld [vmem:[#allocation3 + $0x1260] sm:$0xff]
    %v6056 = vld [vmem:[#allocation3 + $0x1268] sm:$0xff]
    %v6057 = vld [vmem:[#allocation3 + $0x1270] sm:$0xff]
    %v6058 = vld [vmem:[#allocation3 + $0x1278] sm:$0xff]
    %v6059 = vld [vmem:[#allocation3 + $0x1280] sm:$0xff]
    %v6060 = vld [vmem:[#allocation3 + $0x1288] sm:$0xff]
    %v6061 = vld [vmem:[#allocation3 + $0x1290] sm:$0xff]
    %v6062 = vld [vmem:[#allocation3 + $0x1298] sm:$0xff]
    %v6063 = vld [vmem:[#allocation3 + $0x12a0] sm:$0xff]
    %v6064 = vld [vmem:[#allocation3 + $0x12a8] sm:$0xff]
    %v6065 = vld [vmem:[#allocation3 + $0x12b0] sm:$0xff]
    %v6066 = vld [vmem:[#allocation3 + $0x12b8] sm:$0xff]
    %v6067 = vld [vmem:[#allocation3 + $0x12c0] sm:$0xff]
    %v6068 = vld [vmem:[#allocation3 + $0x12c8] sm:$0xff]
    %v6069 = vld [vmem:[#allocation3 + $0x12d0] sm:$0xff]
    %v6070 = vld [vmem:[#allocation3 + $0x12d8] sm:$0xff]
    %v6071 = vld [vmem:[#allocation3 + $0x12e0] sm:$0xff]
    %v6072 = vld [vmem:[#allocation3 + $0x12e8] sm:$0xff]
    %v6073 = vld [vmem:[#allocation3 + $0x12f0] sm:$0xff]
    %v6074 = vld [vmem:[#allocation3 + $0x12f8] sm:$0xff]
    %v6075 = vld [vmem:[#allocation3 + $0x1300] sm:$0xff]
    %v6076 = vld [vmem:[#allocation3 + $0x1308] sm:$0xff]
    %v6077 = vld [vmem:[#allocation3 + $0x1310] sm:$0xff]
    %v6078 = vld [vmem:[#allocation3 + $0x1318] sm:$0xff]
    %v6079 = vld [vmem:[#allocation3 + $0x1320] sm:$0xff]
    %v6080 = vld [vmem:[#allocation3 + $0x1328] sm:$0xff]
    %v6081 = vld [vmem:[#allocation3 + $0x1330] sm:$0xff]
    %v6082 = vld [vmem:[#allocation3 + $0x1338] sm:$0xff]
    %v6083 = vld [vmem:[#allocation3 + $0x1340] sm:$0xff]
    %v6084 = vld [vmem:[#allocation3 + $0x1348] sm:$0xff]
    %v6085 = vld [vmem:[#allocation3 + $0x1350] sm:$0xff]
    %v6086 = vld [vmem:[#allocation3 + $0x1358] sm:$0xff]
    %v6087 = vld [vmem:[#allocation3 + $0x1360] sm:$0xff]
    %v6088 = vld [vmem:[#allocation3 + $0x1368] sm:$0xff]
    %v6089 = vld [vmem:[#allocation3 + $0x1370] sm:$0xff]
    %v6090 = vld [vmem:[#allocation3 + $0x1378] sm:$0xff]
    %v6091 = vld [vmem:[#allocation3 + $0x1380] sm:$0xff]
    %v6092 = vld [vmem:[#allocation3 + $0x1388] sm:$0xff]
    %v6093 = vld [vmem:[#allocation3 + $0x1390] sm:$0xff]
    %v6094 = vld [vmem:[#allocation3 + $0x1398] sm:$0xff]
    %v6095 = vld [vmem:[#allocation3 + $0x13a0] sm:$0xff]
    %v6096 = vld [vmem:[#allocation3 + $0x13a8] sm:$0xff]
    %v6097 = vld [vmem:[#allocation3 + $0x13b0] sm:$0xff]
    %v6098 = vld [vmem:[#allocation3 + $0x13b8] sm:$0xff]
    %v6099 = vld [vmem:[#allocation3 + $0x13c0] sm:$0xff]
    %v6100 = vld [vmem:[#allocation3 + $0x13c8] sm:$0xff]
    %v6101 = vld [vmem:[#allocation3 + $0x13d0] sm:$0xff]
    %v6102 = vld [vmem:[#allocation3 + $0x13d8] sm:$0xff]
    %v6103 = vld [vmem:[#allocation3 + $0x13e0] sm:$0xff]
    %v6104 = vld [vmem:[#allocation3 + $0x13e8] sm:$0xff]
    %v6105 = vld [vmem:[#allocation3 + $0x13f0] sm:$0xff]
    %v6106 = vld [vmem:[#allocation3 + $0x13f8] sm:$0xff]
    %v6107 = vld [vmem:[#allocation3 + $0x1400] sm:$0xff]
    %v6108 = vld [vmem:[#allocation3 + $0x1408] sm:$0xff]
    %v6109 = vld [vmem:[#allocation3 + $0x1410] sm:$0xff]
    %v6110 = vld [vmem:[#allocation3 + $0x1418] sm:$0xff]
    %v6111 = vld [vmem:[#allocation3 + $0x1420] sm:$0xff]
    %v6112 = vld [vmem:[#allocation3 + $0x1428] sm:$0xff]
    %v6113 = vld [vmem:[#allocation3 + $0x1430] sm:$0xff]
    %v6114 = vld [vmem:[#allocation3 + $0x1438] sm:$0xff]
    %v6115 = vld [vmem:[#allocation3 + $0x1440] sm:$0xff]
    %v6116 = vld [vmem:[#allocation3 + $0x1448] sm:$0xff]
    %v6117 = vld [vmem:[#allocation3 + $0x1450] sm:$0xff]
    %v6118 = vld [vmem:[#allocation3 + $0x1458] sm:$0xff]
    %v6119 = vld [vmem:[#allocation3 + $0x1460] sm:$0xff]
    %v6120 = vld [vmem:[#allocation3 + $0x1468] sm:$0xff]
    %v6121 = vld [vmem:[#allocation3 + $0x1470] sm:$0xff]
    %v6122 = vld [vmem:[#allocation3 + $0x1478] sm:$0xff]
    %v6123 = vld [vmem:[#allocation3 + $0x1480] sm:$0xff]
    %v6124 = vld [vmem:[#allocation3 + $0x1488] sm:$0xff]
    %v6125 = vld [vmem:[#allocation3 + $0x1490] sm:$0xff]
    %v6126 = vld [vmem:[#allocation3 + $0x1498] sm:$0xff]
    %v6127 = vld [vmem:[#allocation3 + $0x14a0] sm:$0xff]
    %v6128 = vld [vmem:[#allocation3 + $0x14a8] sm:$0xff]
    %v6129 = vld [vmem:[#allocation3 + $0x14b0] sm:$0xff]
    %v6130 = vld [vmem:[#allocation3 + $0x14b8] sm:$0xff]
    %v6131 = vld [vmem:[#allocation3 + $0x14c0] sm:$0xff]
    %v6132 = vld [vmem:[#allocation3 + $0x14c8] sm:$0xff]
    %v6133 = vld [vmem:[#allocation3 + $0x14d0] sm:$0xff]
    %v6134 = vld [vmem:[#allocation3 + $0x14d8] sm:$0xff]
    %v6135 = vld [vmem:[#allocation3 + $0x14e0] sm:$0xff]
    %v6136 = vld [vmem:[#allocation3 + $0x14e8] sm:$0xff]
    %v6137 = vld [vmem:[#allocation3 + $0x14f0] sm:$0xff]
    %v6138 = vld [vmem:[#allocation3 + $0x14f8] sm:$0xff]
    %v6139 = vld [vmem:[#allocation3 + $0x1500] sm:$0xff]
    %v6140 = vld [vmem:[#allocation3 + $0x1508] sm:$0xff]
    %v6141 = vld [vmem:[#allocation3 + $0x1510] sm:$0xff]
    %v6142 = vld [vmem:[#allocation3 + $0x1518] sm:$0xff]
    %v6143 = vld [vmem:[#allocation3 + $0x1520] sm:$0xff]
    %v6144 = vld [vmem:[#allocation3 + $0x1528] sm:$0xff]
    %v6145 = vld [vmem:[#allocation3 + $0x1530] sm:$0xff]
    %v6146 = vld [vmem:[#allocation3 + $0x1538] sm:$0xff]
    %v6147 = vld [vmem:[#allocation3 + $0x1540] sm:$0xff]
    %v6148 = vld [vmem:[#allocation3 + $0x1548] sm:$0xff]
    %v6149 = vld [vmem:[#allocation3 + $0x1550] sm:$0xff]
    %v6150 = vld [vmem:[#allocation3 + $0x1558] sm:$0xff]
    %v6151 = vld [vmem:[#allocation3 + $0x1560] sm:$0xff]
    %v6152 = vld [vmem:[#allocation3 + $0x1568] sm:$0xff]
    %v6153 = vld [vmem:[#allocation3 + $0x1570] sm:$0xff]
    %v6154 = vld [vmem:[#allocation3 + $0x1578] sm:$0xff]
    %v6155 = vld [vmem:[#allocation3 + $0x1580] sm:$0xff]
    %v6156 = vld [vmem:[#allocation3 + $0x1588] sm:$0xff]
    %v6157 = vld [vmem:[#allocation3 + $0x1590] sm:$0xff]
    %v6158 = vld [vmem:[#allocation3 + $0x1598] sm:$0xff]
    %v6159 = vld [vmem:[#allocation3 + $0x15a0] sm:$0xff]
    %v6160 = vld [vmem:[#allocation3 + $0x15a8] sm:$0xff]
    %v6161 = vld [vmem:[#allocation3 + $0x15b0] sm:$0xff]
    %v6162 = vld [vmem:[#allocation3 + $0x15b8] sm:$0xff]
    %v6163 = vld [vmem:[#allocation3 + $0x15c0] sm:$0xff]
    %v6164 = vld [vmem:[#allocation3 + $0x15c8] sm:$0xff]
    %v6165 = vld [vmem:[#allocation3 + $0x15d0] sm:$0xff]
    %v6166 = vld [vmem:[#allocation3 + $0x15d8] sm:$0xff]
    %v6167 = vld [vmem:[#allocation3 + $0x15e0] sm:$0xff]
    %v6168 = vld [vmem:[#allocation3 + $0x15e8] sm:$0xff]
    %v6169 = vld [vmem:[#allocation3 + $0x15f0] sm:$0xff]
    %v6170 = vld [vmem:[#allocation3 + $0x15f8] sm:$0xff]
    %v6171 = vld [vmem:[#allocation3 + $0x1600] sm:$0xff]
    %v6172 = vld [vmem:[#allocation3 + $0x1608] sm:$0xff]
    %v6173 = vld [vmem:[#allocation3 + $0x1610] sm:$0xff]
    %v6174 = vld [vmem:[#allocation3 + $0x1618] sm:$0xff]
    %v6175 = vld [vmem:[#allocation3 + $0x1620] sm:$0xff]
    %v6176 = vld [vmem:[#allocation3 + $0x1628] sm:$0xff]
    %v6177 = vld [vmem:[#allocation3 + $0x1630] sm:$0xff]
    %v6178 = vld [vmem:[#allocation3 + $0x1638] sm:$0xff]
    %v6179 = vld [vmem:[#allocation3 + $0x1640] sm:$0xff]
    %v6180 = vld [vmem:[#allocation3 + $0x1648] sm:$0xff]
    %v6181 = vld [vmem:[#allocation3 + $0x1650] sm:$0xff]
    %v6182 = vld [vmem:[#allocation3 + $0x1658] sm:$0xff]
    %v6183 = vld [vmem:[#allocation3 + $0x1660] sm:$0xff]
    %v6184 = vld [vmem:[#allocation3 + $0x1668] sm:$0xff]
    %v6185 = vld [vmem:[#allocation3 + $0x1670] sm:$0xff]
    %v6186 = vld [vmem:[#allocation3 + $0x1678] sm:$0xff]
    %v6187 = vld [vmem:[#allocation3 + $0x1680] sm:$0xff]
    %v6188 = vld [vmem:[#allocation3 + $0x1688] sm:$0xff]
    %v6189 = vld [vmem:[#allocation3 + $0x1690] sm:$0xff]
    %v6190 = vld [vmem:[#allocation3 + $0x1698] sm:$0xff]
    %v6191 = vld [vmem:[#allocation3 + $0x16a0] sm:$0xff]
    %v6192 = vld [vmem:[#allocation3 + $0x16a8] sm:$0xff]
    %v6193 = vld [vmem:[#allocation3 + $0x16b0] sm:$0xff]
    %v6194 = vld [vmem:[#allocation3 + $0x16b8] sm:$0xff]
    %v6195 = vld [vmem:[#allocation3 + $0x16c0] sm:$0xff]
    %v6196 = vld [vmem:[#allocation3 + $0x16c8] sm:$0xff]
    %v6197 = vld [vmem:[#allocation3 + $0x16d0] sm:$0xff]
    %v6198 = vld [vmem:[#allocation3 + $0x16d8] sm:$0xff]
    %v6199 = vld [vmem:[#allocation3 + $0x16e0] sm:$0xff]
    %v6200 = vld [vmem:[#allocation3 + $0x16e8] sm:$0xff]
    %v6201 = vld [vmem:[#allocation3 + $0x16f0] sm:$0xff]
    %v6202 = vld [vmem:[#allocation3 + $0x16f8] sm:$0xff]
    %v6203 = vld [vmem:[#allocation3 + $0x1700] sm:$0xff]
    %v6204 = vld [vmem:[#allocation3 + $0x1708] sm:$0xff]
    %v6205 = vld [vmem:[#allocation3 + $0x1710] sm:$0xff]
    %v6206 = vld [vmem:[#allocation3 + $0x1718] sm:$0xff]
    %v6207 = vld [vmem:[#allocation3 + $0x1720] sm:$0xff]
    %v6208 = vld [vmem:[#allocation3 + $0x1728] sm:$0xff]
    %v6209 = vld [vmem:[#allocation3 + $0x1730] sm:$0xff]
    %v6210 = vld [vmem:[#allocation3 + $0x1738] sm:$0xff]
    %v6211 = vld [vmem:[#allocation3 + $0x1740] sm:$0xff]
    %v6212 = vld [vmem:[#allocation3 + $0x1748] sm:$0xff]
    %v6213 = vld [vmem:[#allocation3 + $0x1750] sm:$0xff]
    %v6214 = vld [vmem:[#allocation3 + $0x1758] sm:$0xff]
    %v6215 = vld [vmem:[#allocation3 + $0x1760] sm:$0xff]
    %v6216 = vld [vmem:[#allocation3 + $0x1768] sm:$0xff]
    %v6217 = vld [vmem:[#allocation3 + $0x1770] sm:$0xff]
    %v6218 = vld [vmem:[#allocation3 + $0x1778] sm:$0xff]
    %v6219 = vld [vmem:[#allocation3 + $0x1780] sm:$0xff]
    %v6220 = vld [vmem:[#allocation3 + $0x1788] sm:$0xff]
    %v6221 = vld [vmem:[#allocation3 + $0x1790] sm:$0xff]
    %v6222 = vld [vmem:[#allocation3 + $0x1798] sm:$0xff]
    %v6223 = vld [vmem:[#allocation3 + $0x17a0] sm:$0xff]
    %v6224 = vld [vmem:[#allocation3 + $0x17a8] sm:$0xff]
    %v6225 = vld [vmem:[#allocation3 + $0x17b0] sm:$0xff]
    %v6226 = vld [vmem:[#allocation3 + $0x17b8] sm:$0xff]
    %v6227 = vld [vmem:[#allocation3 + $0x17c0] sm:$0xff]
    %v6228 = vld [vmem:[#allocation3 + $0x17c8] sm:$0xff]
    %v6229 = vld [vmem:[#allocation3 + $0x17d0] sm:$0xff]
    %v6230 = vld [vmem:[#allocation3 + $0x17d8] sm:$0xff]
    %v6231 = vld [vmem:[#allocation3 + $0x17e0] sm:$0xff]
    %v6232 = vld [vmem:[#allocation3 + $0x17e8] sm:$0xff]
    %v6233 = vld [vmem:[#allocation3 + $0x17f0] sm:$0xff]
    %v6234 = vld [vmem:[#allocation3 + $0x17f8] sm:$0xff]
    %v6235 = vld [vmem:[#allocation3 + $0x1800] sm:$0xff]
    %v6236 = vld [vmem:[#allocation3 + $0x1808] sm:$0xff]
    %v6237 = vld [vmem:[#allocation3 + $0x1810] sm:$0xff]
    %v6238 = vld [vmem:[#allocation3 + $0x1818] sm:$0xff]
    %v6239 = vld [vmem:[#allocation3 + $0x1820] sm:$0xff]
    %v6240 = vld [vmem:[#allocation3 + $0x1828] sm:$0xff]
    %v6241 = vld [vmem:[#allocation3 + $0x1830] sm:$0xff]
    %v6242 = vld [vmem:[#allocation3 + $0x1838] sm:$0xff]
    %v6243 = vld [vmem:[#allocation3 + $0x1840] sm:$0xff]
    %v6244 = vld [vmem:[#allocation3 + $0x1848] sm:$0xff]
    %v6245 = vld [vmem:[#allocation3 + $0x1850] sm:$0xff]
    %v6246 = vld [vmem:[#allocation3 + $0x1858] sm:$0xff]
    %v6247 = vld [vmem:[#allocation3 + $0x1860] sm:$0xff]
    %v6248 = vld [vmem:[#allocation3 + $0x1868] sm:$0xff]
    %v6249 = vld [vmem:[#allocation3 + $0x1870] sm:$0xff]
    %v6250 = vld [vmem:[#allocation3 + $0x1878] sm:$0xff]
    %v6251 = vld [vmem:[#allocation3 + $0x1880] sm:$0xff]
    %v6252 = vld [vmem:[#allocation3 + $0x1888] sm:$0xff]
    %v6253 = vld [vmem:[#allocation3 + $0x1890] sm:$0xff]
    %v6254 = vld [vmem:[#allocation3 + $0x1898] sm:$0xff]
    %v6255 = vld [vmem:[#allocation3 + $0x18a0] sm:$0xff]
    %v6256 = vld [vmem:[#allocation3 + $0x18a8] sm:$0xff]
    %v6257 = vld [vmem:[#allocation3 + $0x18b0] sm:$0xff]
    %v6258 = vld [vmem:[#allocation3 + $0x18b8] sm:$0xff]
    %v6259 = vld [vmem:[#allocation3 + $0x18c0] sm:$0xff]
    %v6260 = vld [vmem:[#allocation3 + $0x18c8] sm:$0xff]
    %v6261 = vld [vmem:[#allocation3 + $0x18d0] sm:$0xff]
    %v6262 = vld [vmem:[#allocation3 + $0x18d8] sm:$0xff]
    %v6263 = vld [vmem:[#allocation3 + $0x18e0] sm:$0xff]
    %v6264 = vld [vmem:[#allocation3 + $0x18e8] sm:$0xff]
    %v6265 = vld [vmem:[#allocation3 + $0x18f0] sm:$0xff]
    %v6266 = vld [vmem:[#allocation3 + $0x18f8] sm:$0xff]
    %v6267 = vld [vmem:[#allocation3 + $0x1900] sm:$0xff]
    %v6268 = vld [vmem:[#allocation3 + $0x1908] sm:$0xff]
    %v6269 = vld [vmem:[#allocation3 + $0x1910] sm:$0xff]
    %v6270 = vld [vmem:[#allocation3 + $0x1918] sm:$0xff]
    %v6271 = vld [vmem:[#allocation3 + $0x1920] sm:$0xff]
    %v6272 = vld [vmem:[#allocation3 + $0x1928] sm:$0xff]
    %v6273 = vld [vmem:[#allocation3 + $0x1930] sm:$0xff]
    %v6274 = vld [vmem:[#allocation3 + $0x1938] sm:$0xff]
    %v6275 = vld [vmem:[#allocation3 + $0x1940] sm:$0xff]
    %v6276 = vld [vmem:[#allocation3 + $0x1948] sm:$0xff]
    %v6277 = vld [vmem:[#allocation3 + $0x1950] sm:$0xff]
    %v6278 = vld [vmem:[#allocation3 + $0x1958] sm:$0xff]
    %v6279 = vld [vmem:[#allocation3 + $0x1960] sm:$0xff]
    %v6280 = vld [vmem:[#allocation3 + $0x1968] sm:$0xff]
    %v6281 = vld [vmem:[#allocation3 + $0x1970] sm:$0xff]
    %v6282 = vld [vmem:[#allocation3 + $0x1978] sm:$0xff]
    %v6283 = vld [vmem:[#allocation3 + $0x1980] sm:$0xff]
    %v6284 = vld [vmem:[#allocation3 + $0x1988] sm:$0xff]
    %v6285 = vld [vmem:[#allocation3 + $0x1990] sm:$0xff]
    %v6286 = vld [vmem:[#allocation3 + $0x1998] sm:$0xff]
    %v6287 = vld [vmem:[#allocation3 + $0x19a0] sm:$0xff]
    %v6288 = vld [vmem:[#allocation3 + $0x19a8] sm:$0xff]
    %v6289 = vld [vmem:[#allocation3 + $0x19b0] sm:$0xff]
    %v6290 = vld [vmem:[#allocation3 + $0x19b8] sm:$0xff]
    %v6291 = vld [vmem:[#allocation3 + $0x19c0] sm:$0xff]
    %v6292 = vld [vmem:[#allocation3 + $0x19c8] sm:$0xff]
    %v6293 = vld [vmem:[#allocation3 + $0x19d0] sm:$0xff]
    %v6294 = vld [vmem:[#allocation3 + $0x19d8] sm:$0xff]
    %v6295 = vld [vmem:[#allocation3 + $0x19e0] sm:$0xff]
    %v6296 = vld [vmem:[#allocation3 + $0x19e8] sm:$0xff]
    %v6297 = vld [vmem:[#allocation3 + $0x19f0] sm:$0xff]
    %v6298 = vld [vmem:[#allocation3 + $0x19f8] sm:$0xff]
    %v6299 = vld [vmem:[#allocation3 + $0x1a00] sm:$0xff]
    %v6300 = vld [vmem:[#allocation3 + $0x1a08] sm:$0xff]
    %v6301 = vld [vmem:[#allocation3 + $0x1a10] sm:$0xff]
    %v6302 = vld [vmem:[#allocation3 + $0x1a18] sm:$0xff]
    %v6303 = vld [vmem:[#allocation3 + $0x1a20] sm:$0xff]
    %v6304 = vld [vmem:[#allocation3 + $0x1a28] sm:$0xff]
    %v6305 = vld [vmem:[#allocation3 + $0x1a30] sm:$0xff]
    %v6306 = vld [vmem:[#allocation3 + $0x1a38] sm:$0xff]
    %v6307 = vld [vmem:[#allocation3 + $0x1a40] sm:$0xff]
    %v6308 = vld [vmem:[#allocation3 + $0x1a48] sm:$0xff]
    %v6309 = vld [vmem:[#allocation3 + $0x1a50] sm:$0xff]
    %v6310 = vld [vmem:[#allocation3 + $0x1a58] sm:$0xff]
    %v6311 = vld [vmem:[#allocation3 + $0x1a60] sm:$0xff]
    %v6312 = vld [vmem:[#allocation3 + $0x1a68] sm:$0xff]
    %v6313 = vld [vmem:[#allocation3 + $0x1a70] sm:$0xff]
    %v6314 = vld [vmem:[#allocation3 + $0x1a78] sm:$0xff]
    %v6315 = vld [vmem:[#allocation3 + $0x1a80] sm:$0xff]
    %v6316 = vld [vmem:[#allocation3 + $0x1a88] sm:$0xff]
    %v6317 = vld [vmem:[#allocation3 + $0x1a90] sm:$0xff]
    %v6318 = vld [vmem:[#allocation3 + $0x1a98] sm:$0xff]
    %v6319 = vld [vmem:[#allocation3 + $0x1aa0] sm:$0xff]
    %v6320 = vld [vmem:[#allocation3 + $0x1aa8] sm:$0xff]
    %v6321 = vld [vmem:[#allocation3 + $0x1ab0] sm:$0xff]
    %v6322 = vld [vmem:[#allocation3 + $0x1ab8] sm:$0xff]
    %v6323 = vld [vmem:[#allocation3 + $0x1ac0] sm:$0xff]
    %v6324 = vld [vmem:[#allocation3 + $0x1ac8] sm:$0xff]
    %v6325 = vld [vmem:[#allocation3 + $0x1ad0] sm:$0xff]
    %v6326 = vld [vmem:[#allocation3 + $0x1ad8] sm:$0xff]
    %v6327 = vld [vmem:[#allocation3 + $0x1ae0] sm:$0xff]
    %v6328 = vld [vmem:[#allocation3 + $0x1ae8] sm:$0xff]
    %v6329 = vld [vmem:[#allocation3 + $0x1af0] sm:$0xff]
    %v6330 = vld [vmem:[#allocation3 + $0x1af8] sm:$0xff]
    %v6331 = vld [vmem:[#allocation3 + $0x1b00] sm:$0xff]
    %v6332 = vld [vmem:[#allocation3 + $0x1b08] sm:$0xff]
    %v6333 = vld [vmem:[#allocation3 + $0x1b10] sm:$0xff]
    %v6334 = vld [vmem:[#allocation3 + $0x1b18] sm:$0xff]
    %v6335 = vld [vmem:[#allocation3 + $0x1b20] sm:$0xff]
    %v6336 = vld [vmem:[#allocation3 + $0x1b28] sm:$0xff]
    %v6337 = vld [vmem:[#allocation3 + $0x1b30] sm:$0xff]
    %v6338 = vld [vmem:[#allocation3 + $0x1b38] sm:$0xff]
    %v6339 = vld [vmem:[#allocation3 + $0x1b40] sm:$0xff]
    %v6340 = vld [vmem:[#allocation3 + $0x1b48] sm:$0xff]
    %v6341 = vld [vmem:[#allocation3 + $0x1b50] sm:$0xff]
    %v6342 = vld [vmem:[#allocation3 + $0x1b58] sm:$0xff]
    %v6343 = vld [vmem:[#allocation3 + $0x1b60] sm:$0xff]
    %v6344 = vld [vmem:[#allocation3 + $0x1b68] sm:$0xff]
    %v6345 = vld [vmem:[#allocation3 + $0x1b70] sm:$0xff]
    %v6346 = vld [vmem:[#allocation3 + $0x1b78] sm:$0xff]
    %v6347 = vld [vmem:[#allocation3 + $0x1b80] sm:$0xff]
    %v6348 = vld [vmem:[#allocation3 + $0x1b88] sm:$0xff]
    %v6349 = vld [vmem:[#allocation3 + $0x1b90] sm:$0xff]
    %v6350 = vld [vmem:[#allocation3 + $0x1b98] sm:$0xff]
    %v6351 = vld [vmem:[#allocation3 + $0x1ba0] sm:$0xff]
    %v6352 = vld [vmem:[#allocation3 + $0x1ba8] sm:$0xff]
    %v6353 = vld [vmem:[#allocation3 + $0x1bb0] sm:$0xff]
    %v6354 = vld [vmem:[#allocation3 + $0x1bb8] sm:$0xff]
    %v6355 = vld [vmem:[#allocation3 + $0x1bc0] sm:$0xff]
    %v6356 = vld [vmem:[#allocation3 + $0x1bc8] sm:$0xff]
    %v6357 = vld [vmem:[#allocation3 + $0x1bd0] sm:$0xff]
    %v6358 = vld [vmem:[#allocation3 + $0x1bd8] sm:$0xff]
    %v6359 = vld [vmem:[#allocation3 + $0x1be0] sm:$0xff]
    %v6360 = vld [vmem:[#allocation3 + $0x1be8] sm:$0xff]
    %v6361 = vld [vmem:[#allocation3 + $0x1bf0] sm:$0xff]
    %v6362 = vld [vmem:[#allocation3 + $0x1bf8] sm:$0xff]
    %v6363 = vld [vmem:[#allocation3 + $0x1c00] sm:$0xff]
    %v6364 = vld [vmem:[#allocation3 + $0x1c08] sm:$0xff]
    %v6365 = vld [vmem:[#allocation3 + $0x1c10] sm:$0xff]
    %v6366 = vld [vmem:[#allocation3 + $0x1c18] sm:$0xff]
    %v6367 = vld [vmem:[#allocation3 + $0x1c20] sm:$0xff]
    %v6368 = vld [vmem:[#allocation3 + $0x1c28] sm:$0xff]
    %v6369 = vld [vmem:[#allocation3 + $0x1c30] sm:$0xff]
    %v6370 = vld [vmem:[#allocation3 + $0x1c38] sm:$0xff]
    %v6371 = vld [vmem:[#allocation3 + $0x1c40] sm:$0xff]
    %v6372 = vld [vmem:[#allocation3 + $0x1c48] sm:$0xff]
    %v6373 = vld [vmem:[#allocation3 + $0x1c50] sm:$0xff]
    %v6374 = vld [vmem:[#allocation3 + $0x1c58] sm:$0xff]
    %v6375 = vld [vmem:[#allocation3 + $0x1c60] sm:$0xff]
    %v6376 = vld [vmem:[#allocation3 + $0x1c68] sm:$0xff]
    %v6377 = vld [vmem:[#allocation3 + $0x1c70] sm:$0xff]
    %v6378 = vld [vmem:[#allocation3 + $0x1c78] sm:$0xff]
    %v6379 = vld [vmem:[#allocation3 + $0x1c80] sm:$0xff]
    %v6380 = vld [vmem:[#allocation3 + $0x1c88] sm:$0xff]
    %v6381 = vld [vmem:[#allocation3 + $0x1c90] sm:$0xff]
    %v6382 = vld [vmem:[#allocation3 + $0x1c98] sm:$0xff]
    %v6383 = vld [vmem:[#allocation3 + $0x1ca0] sm:$0xff]
    %v6384 = vld [vmem:[#allocation3 + $0x1ca8] sm:$0xff]
    %v6385 = vld [vmem:[#allocation3 + $0x1cb0] sm:$0xff]
    %v6386 = vld [vmem:[#allocation3 + $0x1cb8] sm:$0xff]
    %v6387 = vld [vmem:[#allocation3 + $0x1cc0] sm:$0xff]
    %v6388 = vld [vmem:[#allocation3 + $0x1cc8] sm:$0xff]
    %v6389 = vld [vmem:[#allocation3 + $0x1cd0] sm:$0xff]
    %v6390 = vld [vmem:[#allocation3 + $0x1cd8] sm:$0xff]
    %v6391 = vld [vmem:[#allocation3 + $0x1ce0] sm:$0xff]
    %v6392 = vld [vmem:[#allocation3 + $0x1ce8] sm:$0xff]
    %v6393 = vld [vmem:[#allocation3 + $0x1cf0] sm:$0xff]
    %v6394 = vld [vmem:[#allocation3 + $0x1cf8] sm:$0xff]
    %v6395 = vld [vmem:[#allocation3 + $0x1d00] sm:$0xff]
    %v6396 = vld [vmem:[#allocation3 + $0x1d08] sm:$0xff]
    %v6397 = vld [vmem:[#allocation3 + $0x1d10] sm:$0xff]
    %v6398 = vld [vmem:[#allocation3 + $0x1d18] sm:$0xff]
    %v6399 = vld [vmem:[#allocation3 + $0x1d20] sm:$0xff]
    %v6400 = vld [vmem:[#allocation3 + $0x1d28] sm:$0xff]
    %v6401 = vld [vmem:[#allocation3 + $0x1d30] sm:$0xff]
    %v6402 = vld [vmem:[#allocation3 + $0x1d38] sm:$0xff]
    %v6403 = vld [vmem:[#allocation3 + $0x1d40] sm:$0xff]
    %v6404 = vld [vmem:[#allocation3 + $0x1d48] sm:$0xff]
    %v6405 = vld [vmem:[#allocation3 + $0x1d50] sm:$0xff]
    %v6406 = vld [vmem:[#allocation3 + $0x1d58] sm:$0xff]
    %v6407 = vld [vmem:[#allocation3 + $0x1d60] sm:$0xff]
    %v6408 = vld [vmem:[#allocation3 + $0x1d68] sm:$0xff]
    %v6409 = vld [vmem:[#allocation3 + $0x1d70] sm:$0xff]
    %v6410 = vld [vmem:[#allocation3 + $0x1d78] sm:$0xff]
    %v6411 = vld [vmem:[#allocation3 + $0x1d80] sm:$0xff]
    %v6412 = vld [vmem:[#allocation3 + $0x1d88] sm:$0xff]
    %v6413 = vld [vmem:[#allocation3 + $0x1d90] sm:$0xff]
    %v6414 = vld [vmem:[#allocation3 + $0x1d98] sm:$0xff]
    %v6415 = vld [vmem:[#allocation3 + $0x1da0] sm:$0xff]
    %v6416 = vld [vmem:[#allocation3 + $0x1da8] sm:$0xff]
    %v6417 = vld [vmem:[#allocation3 + $0x1db0] sm:$0xff]
    %v6418 = vld [vmem:[#allocation3 + $0x1db8] sm:$0xff]
    %v6419 = vld [vmem:[#allocation3 + $0x1dc0] sm:$0xff]
    %v6420 = vld [vmem:[#allocation3 + $0x1dc8] sm:$0xff]
    %v6421 = vld [vmem:[#allocation3 + $0x1dd0] sm:$0xff]
    %v6422 = vld [vmem:[#allocation3 + $0x1dd8] sm:$0xff]
    %v6423 = vld [vmem:[#allocation3 + $0x1de0] sm:$0xff]
    %v6424 = vld [vmem:[#allocation3 + $0x1de8] sm:$0xff]
    %v6425 = vld [vmem:[#allocation3 + $0x1df0] sm:$0xff]
    %v6426 = vld [vmem:[#allocation3 + $0x1df8] sm:$0xff]
    %v6427 = vld [vmem:[#allocation3 + $0x1e00] sm:$0xff]
    %v6428 = vld [vmem:[#allocation3 + $0x1e08] sm:$0xff]
    %v6429 = vld [vmem:[#allocation3 + $0x1e10] sm:$0xff]
    %v6430 = vld [vmem:[#allocation3 + $0x1e18] sm:$0xff]
    %v6431 = vld [vmem:[#allocation3 + $0x1e20] sm:$0xff]
    %v6432 = vld [vmem:[#allocation3 + $0x1e28] sm:$0xff]
    %v6433 = vld [vmem:[#allocation3 + $0x1e30] sm:$0xff]
    %v6434 = vld [vmem:[#allocation3 + $0x1e38] sm:$0xff]
    %v6435 = vld [vmem:[#allocation3 + $0x1e40] sm:$0xff]
    %v6436 = vld [vmem:[#allocation3 + $0x1e48] sm:$0xff]
    %v6437 = vld [vmem:[#allocation3 + $0x1e50] sm:$0xff]
    %v6438 = vld [vmem:[#allocation3 + $0x1e58] sm:$0xff]
    %v6439 = vld [vmem:[#allocation3 + $0x1e60] sm:$0xff]
    %v6440 = vld [vmem:[#allocation3 + $0x1e68] sm:$0xff]
    %v6441 = vld [vmem:[#allocation3 + $0x1e70] sm:$0xff]
    %v6442 = vld [vmem:[#allocation3 + $0x1e78] sm:$0xff]
    %v6443 = vld [vmem:[#allocation3 + $0x1e80] sm:$0xff]
    %v6444 = vld [vmem:[#allocation3 + $0x1e88] sm:$0xff]
    %v6445 = vld [vmem:[#allocation3 + $0x1e90] sm:$0xff]
    %v6446 = vld [vmem:[#allocation3 + $0x1e98] sm:$0xff]
    %v6447 = vld [vmem:[#allocation3 + $0x1ea0] sm:$0xff]
    %v6448 = vld [vmem:[#allocation3 + $0x1ea8] sm:$0xff]
    %v6449 = vld [vmem:[#allocation3 + $0x1eb0] sm:$0xff]
    %v6450 = vld [vmem:[#allocation3 + $0x1eb8] sm:$0xff]
    %v6451 = vld [vmem:[#allocation3 + $0x1ec0] sm:$0xff]
    %v6452 = vld [vmem:[#allocation3 + $0x1ec8] sm:$0xff]
    %v6453 = vld [vmem:[#allocation3 + $0x1ed0] sm:$0xff]
    %v6454 = vld [vmem:[#allocation3 + $0x1ed8] sm:$0xff]
    %v6455 = vld [vmem:[#allocation3 + $0x1ee0] sm:$0xff]
    %v6456 = vld [vmem:[#allocation3 + $0x1ee8] sm:$0xff]
    %v6457 = vld [vmem:[#allocation3 + $0x1ef0] sm:$0xff]
    %v6458 = vld [vmem:[#allocation3 + $0x1ef8] sm:$0xff]
    %v6459 = vld [vmem:[#allocation3 + $0x1f00] sm:$0xff]
    %v6460 = vld [vmem:[#allocation3 + $0x1f08] sm:$0xff]
    %v6461 = vld [vmem:[#allocation3 + $0x1f10] sm:$0xff]
    %v6462 = vld [vmem:[#allocation3 + $0x1f18] sm:$0xff]
    %v6463 = vld [vmem:[#allocation3 + $0x1f20] sm:$0xff]
    %v6464 = vld [vmem:[#allocation3 + $0x1f28] sm:$0xff]
    %v6465 = vld [vmem:[#allocation3 + $0x1f30] sm:$0xff]
    %v6466 = vld [vmem:[#allocation3 + $0x1f38] sm:$0xff]
    %v6467 = vld [vmem:[#allocation3 + $0x1f40] sm:$0xff]
    %v6468 = vld [vmem:[#allocation3 + $0x1f48] sm:$0xff]
    %v6469 = vld [vmem:[#allocation3 + $0x1f50] sm:$0xff]
    %v6470 = vld [vmem:[#allocation3 + $0x1f58] sm:$0xff]
    %v6471 = vld [vmem:[#allocation3 + $0x1f60] sm:$0xff]
    %v6472 = vld [vmem:[#allocation3 + $0x1f68] sm:$0xff]
    %v6473 = vld [vmem:[#allocation3 + $0x1f70] sm:$0xff]
    %v6474 = vld [vmem:[#allocation3 + $0x1f78] sm:$0xff]
    %v6475 = vld [vmem:[#allocation3 + $0x1f80] sm:$0xff]
    %v6476 = vld [vmem:[#allocation3 + $0x1f88] sm:$0xff]
    %v6477 = vld [vmem:[#allocation3 + $0x1f90] sm:$0xff]
    %v6478 = vld [vmem:[#allocation3 + $0x1f98] sm:$0xff]
    %v6479 = vld [vmem:[#allocation3 + $0x1fa0] sm:$0xff]
    %v6480 = vld [vmem:[#allocation3 + $0x1fa8] sm:$0xff]
    %v6481 = vld [vmem:[#allocation3 + $0x1fb0] sm:$0xff]
    %v6482 = vld [vmem:[#allocation3 + $0x1fb8] sm:$0xff]
    %v6483 = vld [vmem:[#allocation3 + $0x1fc0] sm:$0xff]
    %v6484 = vld [vmem:[#allocation3 + $0x1fc8] sm:$0xff]
    %v6485 = vld [vmem:[#allocation3 + $0x1fd0] sm:$0xff]
    %v6486 = vld [vmem:[#allocation3 + $0x1fd8] sm:$0xff]
    %v6487 = vld [vmem:[#allocation3 + $0x1fe0] sm:$0xff]
    %v6488 = vld [vmem:[#allocation3 + $0x1fe8] sm:$0xff]
    %v6489 = vld [vmem:[#allocation3 + $0x1ff0] sm:$0xff]
    %v6490 = vld [vmem:[#allocation3 + $0x1ff8] sm:$0xff]
    %v6491 = vld [vmem:[#allocation17] sm:$0xff]
    %v6493 = vperm.slane %v6491, 0
    %v6494 = vperm.slane %v6491, 1
    %v6495 = vperm.slane %v6491, 2
    %v6496 = vperm.slane %v6491, 3
    %v6497 = vperm.slane %v6491, 4
    %v6498 = vperm.slane %v6491, 5
    %v6499 = vperm.slane %v6491, 6
    %v6500 = vperm.slane %v6491, 7
    %v7533 = vunpack.c.l.b16 %v5467
    %v7534 = vunpack.c.h.b16 %v5467
    %v7535 = vunpack.c.l.b16 %v5468
    %v7536 = vunpack.c.h.b16 %v5468
    %v7537 = vunpack.c.l.b16 %v5469
    %v7538 = vunpack.c.h.b16 %v5469
    %v7539 = vunpack.c.l.b16 %v5470
    %v7540 = vunpack.c.h.b16 %v5470
    %v7541 = vunpack.c.l.b16 %v5471
    %v7542 = vunpack.c.h.b16 %v5471
    %v7543 = vunpack.c.l.b16 %v5472
    %v7544 = vunpack.c.h.b16 %v5472
    %v7545 = vunpack.c.l.b16 %v5473
    %v7546 = vunpack.c.h.b16 %v5473
    %v7547 = vunpack.c.l.b16 %v5474
    %v7548 = vunpack.c.h.b16 %v5474
    %v7549 = vunpack.c.l.b16 %v5475
    %v7550 = vunpack.c.h.b16 %v5475
    %v7551 = vunpack.c.l.b16 %v5476
    %v7552 = vunpack.c.h.b16 %v5476
    %v7553 = vunpack.c.l.b16 %v5477
    %v7554 = vunpack.c.h.b16 %v5477
    %v7555 = vunpack.c.l.b16 %v5478
    %v7556 = vunpack.c.h.b16 %v5478
    %v7557 = vunpack.c.l.b16 %v5479
    %v7558 = vunpack.c.h.b16 %v5479
    %v7559 = vunpack.c.l.b16 %v5480
    %v7560 = vunpack.c.h.b16 %v5480
    %v7561 = vunpack.c.l.b16 %v5481
    %v7562 = vunpack.c.h.b16 %v5481
    %v7563 = vunpack.c.l.b16 %v5482
    %v7564 = vunpack.c.h.b16 %v5482
    %v7565 = vunpack.c.l.b16 %v5483
    %v7566 = vunpack.c.h.b16 %v5483
    %v7567 = vunpack.c.l.b16 %v5484
    %v7568 = vunpack.c.h.b16 %v5484
    %v7569 = vunpack.c.l.b16 %v5485
    %v7570 = vunpack.c.h.b16 %v5485
    %v7571 = vunpack.c.l.b16 %v5486
    %v7572 = vunpack.c.h.b16 %v5486
    %v7573 = vunpack.c.l.b16 %v5487
    %v7574 = vunpack.c.h.b16 %v5487
    %v7575 = vunpack.c.l.b16 %v5488
    %v7576 = vunpack.c.h.b16 %v5488
    %v7577 = vunpack.c.l.b16 %v5489
    %v7578 = vunpack.c.h.b16 %v5489
    %v7579 = vunpack.c.l.b16 %v5490
    %v7580 = vunpack.c.h.b16 %v5490
    %v7581 = vunpack.c.l.b16 %v5491
    %v7582 = vunpack.c.h.b16 %v5491
    %v7583 = vunpack.c.l.b16 %v5492
    %v7584 = vunpack.c.h.b16 %v5492
    %v7585 = vunpack.c.l.b16 %v5493
    %v7586 = vunpack.c.h.b16 %v5493
    %v7587 = vunpack.c.l.b16 %v5494
    %v7588 = vunpack.c.h.b16 %v5494
    %v7589 = vunpack.c.l.b16 %v5495
    %v7590 = vunpack.c.h.b16 %v5495
    %v7591 = vunpack.c.l.b16 %v5496
    %v7592 = vunpack.c.h.b16 %v5496
    %v7593 = vunpack.c.l.b16 %v5497
    %v7594 = vunpack.c.h.b16 %v5497
    %v7595 = vunpack.c.l.b16 %v5498
    %v7596 = vunpack.c.h.b16 %v5498
    %v7597 = vunpack.c.l.b16 %v5499
    %v7598 = vunpack.c.h.b16 %v5499
    %v7599 = vunpack.c.l.b16 %v5500
    %v7600 = vunpack.c.h.b16 %v5500
    %v7601 = vunpack.c.l.b16 %v5501
    %v7602 = vunpack.c.h.b16 %v5501
    %v7603 = vunpack.c.l.b16 %v5502
    %v7604 = vunpack.c.h.b16 %v5502
    %v7605 = vunpack.c.l.b16 %v5503
    %v7606 = vunpack.c.h.b16 %v5503
    %v7607 = vunpack.c.l.b16 %v5504
    %v7608 = vunpack.c.h.b16 %v5504
    %v7609 = vunpack.c.l.b16 %v5505
    %v7610 = vunpack.c.h.b16 %v5505
    %v7611 = vunpack.c.l.b16 %v5506
    %v7612 = vunpack.c.h.b16 %v5506
    %v7613 = vunpack.c.l.b16 %v5507
    %v7614 = vunpack.c.h.b16 %v5507
    %v7615 = vunpack.c.l.b16 %v5508
    %v7616 = vunpack.c.h.b16 %v5508
    %v7617 = vunpack.c.l.b16 %v5509
    %v7618 = vunpack.c.h.b16 %v5509
    %v7619 = vunpack.c.l.b16 %v5510
    %v7620 = vunpack.c.h.b16 %v5510
    %v7621 = vunpack.c.l.b16 %v5511
    %v7622 = vunpack.c.h.b16 %v5511
    %v7623 = vunpack.c.l.b16 %v5512
    %v7624 = vunpack.c.h.b16 %v5512
    %v7625 = vunpack.c.l.b16 %v5513
    %v7626 = vunpack.c.h.b16 %v5513
    %v7627 = vunpack.c.l.b16 %v5514
    %v7628 = vunpack.c.h.b16 %v5514
    %v7629 = vunpack.c.l.b16 %v5515
    %v7630 = vunpack.c.h.b16 %v5515
    %v7631 = vunpack.c.l.b16 %v5516
    %v7632 = vunpack.c.h.b16 %v5516
    %v7633 = vunpack.c.l.b16 %v5517
    %v7634 = vunpack.c.h.b16 %v5517
    %v7635 = vunpack.c.l.b16 %v5518
    %v7636 = vunpack.c.h.b16 %v5518
    %v7637 = vunpack.c.l.b16 %v5519
    %v7638 = vunpack.c.h.b16 %v5519
    %v7639 = vunpack.c.l.b16 %v5520
    %v7640 = vunpack.c.h.b16 %v5520
    %v7641 = vunpack.c.l.b16 %v5521
    %v7642 = vunpack.c.h.b16 %v5521
    %v7643 = vunpack.c.l.b16 %v5522
    %v7644 = vunpack.c.h.b16 %v5522
    %v7645 = vunpack.c.l.b16 %v5523
    %v7646 = vunpack.c.h.b16 %v5523
    %v7647 = vunpack.c.l.b16 %v5524
    %v7648 = vunpack.c.h.b16 %v5524
    %v7649 = vunpack.c.l.b16 %v5525
    %v7650 = vunpack.c.h.b16 %v5525
    %v7651 = vunpack.c.l.b16 %v5526
    %v7652 = vunpack.c.h.b16 %v5526
    %v7653 = vunpack.c.l.b16 %v5527
    %v7654 = vunpack.c.h.b16 %v5527
    %v7655 = vunpack.c.l.b16 %v5528
    %v7656 = vunpack.c.h.b16 %v5528
    %v7657 = vunpack.c.l.b16 %v5529
    %v7658 = vunpack.c.h.b16 %v5529
    %v7659 = vunpack.c.l.b16 %v5530
    %v7660 = vunpack.c.h.b16 %v5530
    %v7661 = vunpack.c.l.b16 %v5531
    %v7662 = vunpack.c.h.b16 %v5531
    %v7663 = vunpack.c.l.b16 %v5532
    %v7664 = vunpack.c.h.b16 %v5532
    %v7665 = vunpack.c.l.b16 %v5533
    %v7666 = vunpack.c.h.b16 %v5533
    %v7667 = vunpack.c.l.b16 %v5534
    %v7668 = vunpack.c.h.b16 %v5534
    %v7669 = vunpack.c.l.b16 %v5535
    %v7670 = vunpack.c.h.b16 %v5535
    %v7671 = vunpack.c.l.b16 %v5536
    %v7672 = vunpack.c.h.b16 %v5536
    %v7673 = vunpack.c.l.b16 %v5537
    %v7674 = vunpack.c.h.b16 %v5537
    %v7675 = vunpack.c.l.b16 %v5538
    %v7676 = vunpack.c.h.b16 %v5538
    %v7677 = vunpack.c.l.b16 %v5539
    %v7678 = vunpack.c.h.b16 %v5539
    %v7679 = vunpack.c.l.b16 %v5540
    %v7680 = vunpack.c.h.b16 %v5540
    %v7681 = vunpack.c.l.b16 %v5541
    %v7682 = vunpack.c.h.b16 %v5541
    %v7683 = vunpack.c.l.b16 %v5542
    %v7684 = vunpack.c.h.b16 %v5542
    %v7685 = vunpack.c.l.b16 %v5543
    %v7686 = vunpack.c.h.b16 %v5543
    %v7687 = vunpack.c.l.b16 %v5544
    %v7688 = vunpack.c.h.b16 %v5544
    %v7689 = vunpack.c.l.b16 %v5545
    %v7690 = vunpack.c.h.b16 %v5545
    %v7691 = vunpack.c.l.b16 %v5546
    %v7692 = vunpack.c.h.b16 %v5546
    %v7693 = vunpack.c.l.b16 %v5547
    %v7694 = vunpack.c.h.b16 %v5547
    %v7695 = vunpack.c.l.b16 %v5548
    %v7696 = vunpack.c.h.b16 %v5548
    %v7697 = vunpack.c.l.b16 %v5549
    %v7698 = vunpack.c.h.b16 %v5549
    %v7699 = vunpack.c.l.b16 %v5550
    %v7700 = vunpack.c.h.b16 %v5550
    %v7701 = vunpack.c.l.b16 %v5551
    %v7702 = vunpack.c.h.b16 %v5551
    %v7703 = vunpack.c.l.b16 %v5552
    %v7704 = vunpack.c.h.b16 %v5552
    %v7705 = vunpack.c.l.b16 %v5553
    %v7706 = vunpack.c.h.b16 %v5553
    %v7707 = vunpack.c.l.b16 %v5554
    %v7708 = vunpack.c.h.b16 %v5554
    %v7709 = vunpack.c.l.b16 %v5555
    %v7710 = vunpack.c.h.b16 %v5555
    %v7711 = vunpack.c.l.b16 %v5556
    %v7712 = vunpack.c.h.b16 %v5556
    %v7713 = vunpack.c.l.b16 %v5557
    %v7714 = vunpack.c.h.b16 %v5557
    %v7715 = vunpack.c.l.b16 %v5558
    %v7716 = vunpack.c.h.b16 %v5558
    %v7717 = vunpack.c.l.b16 %v5559
    %v7718 = vunpack.c.h.b16 %v5559
    %v7719 = vunpack.c.l.b16 %v5560
    %v7720 = vunpack.c.h.b16 %v5560
    %v7721 = vunpack.c.l.b16 %v5561
    %v7722 = vunpack.c.h.b16 %v5561
    %v7723 = vunpack.c.l.b16 %v5562
    %v7724 = vunpack.c.h.b16 %v5562
    %v7725 = vunpack.c.l.b16 %v5563
    %v7726 = vunpack.c.h.b16 %v5563
    %v7727 = vunpack.c.l.b16 %v5564
    %v7728 = vunpack.c.h.b16 %v5564
    %v7729 = vunpack.c.l.b16 %v5565
    %v7730 = vunpack.c.h.b16 %v5565
    %v7731 = vunpack.c.l.b16 %v5566
    %v7732 = vunpack.c.h.b16 %v5566
    %v7733 = vunpack.c.l.b16 %v5567
    %v7734 = vunpack.c.h.b16 %v5567
    %v7735 = vunpack.c.l.b16 %v5568
    %v7736 = vunpack.c.h.b16 %v5568
    %v7737 = vunpack.c.l.b16 %v5569
    %v7738 = vunpack.c.h.b16 %v5569
    %v7739 = vunpack.c.l.b16 %v5570
    %v7740 = vunpack.c.h.b16 %v5570
    %v7741 = vunpack.c.l.b16 %v5571
    %v7742 = vunpack.c.h.b16 %v5571
    %v7743 = vunpack.c.l.b16 %v5572
    %v7744 = vunpack.c.h.b16 %v5572
    %v7745 = vunpack.c.l.b16 %v5573
    %v7746 = vunpack.c.h.b16 %v5573
    %v7747 = vunpack.c.l.b16 %v5574
    %v7748 = vunpack.c.h.b16 %v5574
    %v7749 = vunpack.c.l.b16 %v5575
    %v7750 = vunpack.c.h.b16 %v5575
    %v7751 = vunpack.c.l.b16 %v5576
    %v7752 = vunpack.c.h.b16 %v5576
    %v7753 = vunpack.c.l.b16 %v5577
    %v7754 = vunpack.c.h.b16 %v5577
    %v7755 = vunpack.c.l.b16 %v5578
    %v7756 = vunpack.c.h.b16 %v5578
    %v7757 = vunpack.c.l.b16 %v5579
    %v7758 = vunpack.c.h.b16 %v5579
    %v7759 = vunpack.c.l.b16 %v5580
    %v7760 = vunpack.c.h.b16 %v5580
    %v7761 = vunpack.c.l.b16 %v5581
    %v7762 = vunpack.c.h.b16 %v5581
    %v7763 = vunpack.c.l.b16 %v5582
    %v7764 = vunpack.c.h.b16 %v5582
    %v7765 = vunpack.c.l.b16 %v5583
    %v7766 = vunpack.c.h.b16 %v5583
    %v7767 = vunpack.c.l.b16 %v5584
    %v7768 = vunpack.c.h.b16 %v5584
    %v7769 = vunpack.c.l.b16 %v5585
    %v7770 = vunpack.c.h.b16 %v5585
    %v7771 = vunpack.c.l.b16 %v5586
    %v7772 = vunpack.c.h.b16 %v5586
    %v7773 = vunpack.c.l.b16 %v5587
    %v7774 = vunpack.c.h.b16 %v5587
    %v7775 = vunpack.c.l.b16 %v5588
    %v7776 = vunpack.c.h.b16 %v5588
    %v7777 = vunpack.c.l.b16 %v5589
    %v7778 = vunpack.c.h.b16 %v5589
    %v7779 = vunpack.c.l.b16 %v5590
    %v7780 = vunpack.c.h.b16 %v5590
    %v7781 = vunpack.c.l.b16 %v5591
    %v7782 = vunpack.c.h.b16 %v5591
    %v7783 = vunpack.c.l.b16 %v5592
    %v7784 = vunpack.c.h.b16 %v5592
    %v7785 = vunpack.c.l.b16 %v5593
    %v7786 = vunpack.c.h.b16 %v5593
    %v7787 = vunpack.c.l.b16 %v5594
    %v7788 = vunpack.c.h.b16 %v5594
    %v7789 = vunpack.c.l.b16 %v5595
    %v7790 = vunpack.c.h.b16 %v5595
    %v7791 = vunpack.c.l.b16 %v5596
    %v7792 = vunpack.c.h.b16 %v5596
    %v7793 = vunpack.c.l.b16 %v5597
    %v7794 = vunpack.c.h.b16 %v5597
    %v7795 = vunpack.c.l.b16 %v5598
    %v7796 = vunpack.c.h.b16 %v5598
    %v7797 = vunpack.c.l.b16 %v5599
    %v7798 = vunpack.c.h.b16 %v5599
    %v7799 = vunpack.c.l.b16 %v5600
    %v7800 = vunpack.c.h.b16 %v5600
    %v7801 = vunpack.c.l.b16 %v5601
    %v7802 = vunpack.c.h.b16 %v5601
    %v7803 = vunpack.c.l.b16 %v5602
    %v7804 = vunpack.c.h.b16 %v5602
    %v7805 = vunpack.c.l.b16 %v5603
    %v7806 = vunpack.c.h.b16 %v5603
    %v7807 = vunpack.c.l.b16 %v5604
    %v7808 = vunpack.c.h.b16 %v5604
    %v7809 = vunpack.c.l.b16 %v5605
    %v7810 = vunpack.c.h.b16 %v5605
    %v7811 = vunpack.c.l.b16 %v5606
    %v7812 = vunpack.c.h.b16 %v5606
    %v7813 = vunpack.c.l.b16 %v5607
    %v7814 = vunpack.c.h.b16 %v5607
    %v7815 = vunpack.c.l.b16 %v5608
    %v7816 = vunpack.c.h.b16 %v5608
    %v7817 = vunpack.c.l.b16 %v5609
    %v7818 = vunpack.c.h.b16 %v5609
    %v7819 = vunpack.c.l.b16 %v5610
    %v7820 = vunpack.c.h.b16 %v5610
    %v7821 = vunpack.c.l.b16 %v5611
    %v7822 = vunpack.c.h.b16 %v5611
    %v7823 = vunpack.c.l.b16 %v5612
    %v7824 = vunpack.c.h.b16 %v5612
    %v7825 = vunpack.c.l.b16 %v5613
    %v7826 = vunpack.c.h.b16 %v5613
    %v7827 = vunpack.c.l.b16 %v5614
    %v7828 = vunpack.c.h.b16 %v5614
    %v7829 = vunpack.c.l.b16 %v5615
    %v7830 = vunpack.c.h.b16 %v5615
    %v7831 = vunpack.c.l.b16 %v5616
    %v7832 = vunpack.c.h.b16 %v5616
    %v7833 = vunpack.c.l.b16 %v5617
    %v7834 = vunpack.c.h.b16 %v5617
    %v7835 = vunpack.c.l.b16 %v5618
    %v7836 = vunpack.c.h.b16 %v5618
    %v7837 = vunpack.c.l.b16 %v5619
    %v7838 = vunpack.c.h.b16 %v5619
    %v7839 = vunpack.c.l.b16 %v5620
    %v7840 = vunpack.c.h.b16 %v5620
    %v7841 = vunpack.c.l.b16 %v5621
    %v7842 = vunpack.c.h.b16 %v5621
    %v7843 = vunpack.c.l.b16 %v5622
    %v7844 = vunpack.c.h.b16 %v5622
    %v7845 = vunpack.c.l.b16 %v5623
    %v7846 = vunpack.c.h.b16 %v5623
    %v7847 = vunpack.c.l.b16 %v5624
    %v7848 = vunpack.c.h.b16 %v5624
    %v7849 = vunpack.c.l.b16 %v5625
    %v7850 = vunpack.c.h.b16 %v5625
    %v7851 = vunpack.c.l.b16 %v5626
    %v7852 = vunpack.c.h.b16 %v5626
    %v7853 = vunpack.c.l.b16 %v5627
    %v7854 = vunpack.c.h.b16 %v5627
    %v7855 = vunpack.c.l.b16 %v5628
    %v7856 = vunpack.c.h.b16 %v5628
    %v7857 = vunpack.c.l.b16 %v5629
    %v7858 = vunpack.c.h.b16 %v5629
    %v7859 = vunpack.c.l.b16 %v5630
    %v7860 = vunpack.c.h.b16 %v5630
    %v7861 = vunpack.c.l.b16 %v5631
    %v7862 = vunpack.c.h.b16 %v5631
    %v7863 = vunpack.c.l.b16 %v5632
    %v7864 = vunpack.c.h.b16 %v5632
    %v7865 = vunpack.c.l.b16 %v5633
    %v7866 = vunpack.c.h.b16 %v5633
    %v7867 = vunpack.c.l.b16 %v5634
    %v7868 = vunpack.c.h.b16 %v5634
    %v7869 = vunpack.c.l.b16 %v5635
    %v7870 = vunpack.c.h.b16 %v5635
    %v7871 = vunpack.c.l.b16 %v5636
    %v7872 = vunpack.c.h.b16 %v5636
    %v7873 = vunpack.c.l.b16 %v5637
    %v7874 = vunpack.c.h.b16 %v5637
    %v7875 = vunpack.c.l.b16 %v5638
    %v7876 = vunpack.c.h.b16 %v5638
    %v7877 = vunpack.c.l.b16 %v5639
    %v7878 = vunpack.c.h.b16 %v5639
    %v7879 = vunpack.c.l.b16 %v5640
    %v7880 = vunpack.c.h.b16 %v5640
    %v7881 = vunpack.c.l.b16 %v5641
    %v7882 = vunpack.c.h.b16 %v5641
    %v7883 = vunpack.c.l.b16 %v5642
    %v7884 = vunpack.c.h.b16 %v5642
    %v7885 = vunpack.c.l.b16 %v5643
    %v7886 = vunpack.c.h.b16 %v5643
    %v7887 = vunpack.c.l.b16 %v5644
    %v7888 = vunpack.c.h.b16 %v5644
    %v7889 = vunpack.c.l.b16 %v5645
    %v7890 = vunpack.c.h.b16 %v5645
    %v7891 = vunpack.c.l.b16 %v5646
    %v7892 = vunpack.c.h.b16 %v5646
    %v7893 = vunpack.c.l.b16 %v5647
    %v7894 = vunpack.c.h.b16 %v5647
    %v7895 = vunpack.c.l.b16 %v5648
    %v7896 = vunpack.c.h.b16 %v5648
    %v7897 = vunpack.c.l.b16 %v5649
    %v7898 = vunpack.c.h.b16 %v5649
    %v7899 = vunpack.c.l.b16 %v5650
    %v7900 = vunpack.c.h.b16 %v5650
    %v7901 = vunpack.c.l.b16 %v5651
    %v7902 = vunpack.c.h.b16 %v5651
    %v7903 = vunpack.c.l.b16 %v5652
    %v7904 = vunpack.c.h.b16 %v5652
    %v7905 = vunpack.c.l.b16 %v5653
    %v7906 = vunpack.c.h.b16 %v5653
    %v7907 = vunpack.c.l.b16 %v5654
    %v7908 = vunpack.c.h.b16 %v5654
    %v7909 = vunpack.c.l.b16 %v5655
    %v7910 = vunpack.c.h.b16 %v5655
    %v7911 = vunpack.c.l.b16 %v5656
    %v7912 = vunpack.c.h.b16 %v5656
    %v7913 = vunpack.c.l.b16 %v5657
    %v7914 = vunpack.c.h.b16 %v5657
    %v7915 = vunpack.c.l.b16 %v5658
    %v7916 = vunpack.c.h.b16 %v5658
    %v7917 = vunpack.c.l.b16 %v5659
    %v7918 = vunpack.c.h.b16 %v5659
    %v7919 = vunpack.c.l.b16 %v5660
    %v7920 = vunpack.c.h.b16 %v5660
    %v7921 = vunpack.c.l.b16 %v5661
    %v7922 = vunpack.c.h.b16 %v5661
    %v7923 = vunpack.c.l.b16 %v5662
    %v7924 = vunpack.c.h.b16 %v5662
    %v7925 = vunpack.c.l.b16 %v5663
    %v7926 = vunpack.c.h.b16 %v5663
    %v7927 = vunpack.c.l.b16 %v5664
    %v7928 = vunpack.c.h.b16 %v5664
    %v7929 = vunpack.c.l.b16 %v5665
    %v7930 = vunpack.c.h.b16 %v5665
    %v7931 = vunpack.c.l.b16 %v5666
    %v7932 = vunpack.c.h.b16 %v5666
    %v7933 = vunpack.c.l.b16 %v5667
    %v7934 = vunpack.c.h.b16 %v5667
    %v7935 = vunpack.c.l.b16 %v5668
    %v7936 = vunpack.c.h.b16 %v5668
    %v7937 = vunpack.c.l.b16 %v5669
    %v7938 = vunpack.c.h.b16 %v5669
    %v7939 = vunpack.c.l.b16 %v5670
    %v7940 = vunpack.c.h.b16 %v5670
    %v7941 = vunpack.c.l.b16 %v5671
    %v7942 = vunpack.c.h.b16 %v5671
    %v7943 = vunpack.c.l.b16 %v5672
    %v7944 = vunpack.c.h.b16 %v5672
    %v7945 = vunpack.c.l.b16 %v5673
    %v7946 = vunpack.c.h.b16 %v5673
    %v7947 = vunpack.c.l.b16 %v5674
    %v7948 = vunpack.c.h.b16 %v5674
    %v7949 = vunpack.c.l.b16 %v5675
    %v7950 = vunpack.c.h.b16 %v5675
    %v7951 = vunpack.c.l.b16 %v5676
    %v7952 = vunpack.c.h.b16 %v5676
    %v7953 = vunpack.c.l.b16 %v5677
    %v7954 = vunpack.c.h.b16 %v5677
    %v7955 = vunpack.c.l.b16 %v5678
    %v7956 = vunpack.c.h.b16 %v5678
    %v7957 = vunpack.c.l.b16 %v5679
    %v7958 = vunpack.c.h.b16 %v5679
    %v7959 = vunpack.c.l.b16 %v5680
    %v7960 = vunpack.c.h.b16 %v5680
    %v7961 = vunpack.c.l.b16 %v5681
    %v7962 = vunpack.c.h.b16 %v5681
    %v7963 = vunpack.c.l.b16 %v5682
    %v7964 = vunpack.c.h.b16 %v5682
    %v7965 = vunpack.c.l.b16 %v5683
    %v7966 = vunpack.c.h.b16 %v5683
    %v7967 = vunpack.c.l.b16 %v5684
    %v7968 = vunpack.c.h.b16 %v5684
    %v7969 = vunpack.c.l.b16 %v5685
    %v7970 = vunpack.c.h.b16 %v5685
    %v7971 = vunpack.c.l.b16 %v5686
    %v7972 = vunpack.c.h.b16 %v5686
    %v7973 = vunpack.c.l.b16 %v5687
    %v7974 = vunpack.c.h.b16 %v5687
    %v7975 = vunpack.c.l.b16 %v5688
    %v7976 = vunpack.c.h.b16 %v5688
    %v7977 = vunpack.c.l.b16 %v5689
    %v7978 = vunpack.c.h.b16 %v5689
    %v7979 = vunpack.c.l.b16 %v5690
    %v7980 = vunpack.c.h.b16 %v5690
    %v7981 = vunpack.c.l.b16 %v5691
    %v7982 = vunpack.c.h.b16 %v5691
    %v7983 = vunpack.c.l.b16 %v5692
    %v7984 = vunpack.c.h.b16 %v5692
    %v7985 = vunpack.c.l.b16 %v5693
    %v7986 = vunpack.c.h.b16 %v5693
    %v7987 = vunpack.c.l.b16 %v5694
    %v7988 = vunpack.c.h.b16 %v5694
    %v7989 = vunpack.c.l.b16 %v5695
    %v7990 = vunpack.c.h.b16 %v5695
    %v7991 = vunpack.c.l.b16 %v5696
    %v7992 = vunpack.c.h.b16 %v5696
    %v7993 = vunpack.c.l.b16 %v5697
    %v7994 = vunpack.c.h.b16 %v5697
    %v7995 = vunpack.c.l.b16 %v5698
    %v7996 = vunpack.c.h.b16 %v5698
    %v7997 = vunpack.c.l.b16 %v5699
    %v7998 = vunpack.c.h.b16 %v5699
    %v7999 = vunpack.c.l.b16 %v5700
    %v8000 = vunpack.c.h.b16 %v5700
    %v8001 = vunpack.c.l.b16 %v5701
    %v8002 = vunpack.c.h.b16 %v5701
    %v8003 = vunpack.c.l.b16 %v5702
    %v8004 = vunpack.c.h.b16 %v5702
    %v8005 = vunpack.c.l.b16 %v5703
    %v8006 = vunpack.c.h.b16 %v5703
    %v8007 = vunpack.c.l.b16 %v5704
    %v8008 = vunpack.c.h.b16 %v5704
    %v8009 = vunpack.c.l.b16 %v5705
    %v8010 = vunpack.c.h.b16 %v5705
    %v8011 = vunpack.c.l.b16 %v5706
    %v8012 = vunpack.c.h.b16 %v5706
    %v8013 = vunpack.c.l.b16 %v5707
    %v8014 = vunpack.c.h.b16 %v5707
    %v8015 = vunpack.c.l.b16 %v5708
    %v8016 = vunpack.c.h.b16 %v5708
    %v8017 = vunpack.c.l.b16 %v5709
    %v8018 = vunpack.c.h.b16 %v5709
    %v8019 = vunpack.c.l.b16 %v5710
    %v8020 = vunpack.c.h.b16 %v5710
    %v8021 = vunpack.c.l.b16 %v5711
    %v8022 = vunpack.c.h.b16 %v5711
    %v8023 = vunpack.c.l.b16 %v5712
    %v8024 = vunpack.c.h.b16 %v5712
    %v8025 = vunpack.c.l.b16 %v5713
    %v8026 = vunpack.c.h.b16 %v5713
    %v8027 = vunpack.c.l.b16 %v5714
    %v8028 = vunpack.c.h.b16 %v5714
    %v8029 = vunpack.c.l.b16 %v5715
    %v8030 = vunpack.c.h.b16 %v5715
    %v8031 = vunpack.c.l.b16 %v5716
    %v8032 = vunpack.c.h.b16 %v5716
    %v8033 = vunpack.c.l.b16 %v5717
    %v8034 = vunpack.c.h.b16 %v5717
    %v8035 = vunpack.c.l.b16 %v5718
    %v8036 = vunpack.c.h.b16 %v5718
    %v8037 = vunpack.c.l.b16 %v5719
    %v8038 = vunpack.c.h.b16 %v5719
    %v8039 = vunpack.c.l.b16 %v5720
    %v8040 = vunpack.c.h.b16 %v5720
    %v8041 = vunpack.c.l.b16 %v5721
    %v8042 = vunpack.c.h.b16 %v5721
    %v8043 = vunpack.c.l.b16 %v5722
    %v8044 = vunpack.c.h.b16 %v5722
    %v8045 = vunpack.c.l.b16 %v5723
    %v8046 = vunpack.c.h.b16 %v5723
    %v8047 = vunpack.c.l.b16 %v5724
    %v8048 = vunpack.c.h.b16 %v5724
    %v8049 = vunpack.c.l.b16 %v5725
    %v8050 = vunpack.c.h.b16 %v5725
    %v8051 = vunpack.c.l.b16 %v5726
    %v8052 = vunpack.c.h.b16 %v5726
    %v8053 = vunpack.c.l.b16 %v5727
    %v8054 = vunpack.c.h.b16 %v5727
    %v8055 = vunpack.c.l.b16 %v5728
    %v8056 = vunpack.c.h.b16 %v5728
    %v8057 = vunpack.c.l.b16 %v5729
    %v8058 = vunpack.c.h.b16 %v5729
    %v8059 = vunpack.c.l.b16 %v5730
    %v8060 = vunpack.c.h.b16 %v5730
    %v8061 = vunpack.c.l.b16 %v5731
    %v8062 = vunpack.c.h.b16 %v5731
    %v8063 = vunpack.c.l.b16 %v5732
    %v8064 = vunpack.c.h.b16 %v5732
    %v8065 = vunpack.c.l.b16 %v5733
    %v8066 = vunpack.c.h.b16 %v5733
    %v8067 = vunpack.c.l.b16 %v5734
    %v8068 = vunpack.c.h.b16 %v5734
    %v8069 = vunpack.c.l.b16 %v5735
    %v8070 = vunpack.c.h.b16 %v5735
    %v8071 = vunpack.c.l.b16 %v5736
    %v8072 = vunpack.c.h.b16 %v5736
    %v8073 = vunpack.c.l.b16 %v5737
    %v8074 = vunpack.c.h.b16 %v5737
    %v8075 = vunpack.c.l.b16 %v5738
    %v8076 = vunpack.c.h.b16 %v5738
    %v8077 = vunpack.c.l.b16 %v5739
    %v8078 = vunpack.c.h.b16 %v5739
    %v8079 = vunpack.c.l.b16 %v5740
    %v8080 = vunpack.c.h.b16 %v5740
    %v8081 = vunpack.c.l.b16 %v5741
    %v8082 = vunpack.c.h.b16 %v5741
    %v8083 = vunpack.c.l.b16 %v5742
    %v8084 = vunpack.c.h.b16 %v5742
    %v8085 = vunpack.c.l.b16 %v5743
    %v8086 = vunpack.c.h.b16 %v5743
    %v8087 = vunpack.c.l.b16 %v5744
    %v8088 = vunpack.c.h.b16 %v5744
    %v8089 = vunpack.c.l.b16 %v5745
    %v8090 = vunpack.c.h.b16 %v5745
    %v8091 = vunpack.c.l.b16 %v5746
    %v8092 = vunpack.c.h.b16 %v5746
    %v8093 = vunpack.c.l.b16 %v5747
    %v8094 = vunpack.c.h.b16 %v5747
    %v8095 = vunpack.c.l.b16 %v5748
    %v8096 = vunpack.c.h.b16 %v5748
    %v8097 = vunpack.c.l.b16 %v5749
    %v8098 = vunpack.c.h.b16 %v5749
    %v8099 = vunpack.c.l.b16 %v5750
    %v8100 = vunpack.c.h.b16 %v5750
    %v8101 = vunpack.c.l.b16 %v5751
    %v8102 = vunpack.c.h.b16 %v5751
    %v8103 = vunpack.c.l.b16 %v5752
    %v8104 = vunpack.c.h.b16 %v5752
    %v8105 = vunpack.c.l.b16 %v5753
    %v8106 = vunpack.c.h.b16 %v5753
    %v8107 = vunpack.c.l.b16 %v5754
    %v8108 = vunpack.c.h.b16 %v5754
    %v8109 = vunpack.c.l.b16 %v5755
    %v8110 = vunpack.c.h.b16 %v5755
    %v8111 = vunpack.c.l.b16 %v5756
    %v8112 = vunpack.c.h.b16 %v5756
    %v8113 = vunpack.c.l.b16 %v5757
    %v8114 = vunpack.c.h.b16 %v5757
    %v8115 = vunpack.c.l.b16 %v5758
    %v8116 = vunpack.c.h.b16 %v5758
    %v8117 = vunpack.c.l.b16 %v5759
    %v8118 = vunpack.c.h.b16 %v5759
    %v8119 = vunpack.c.l.b16 %v5760
    %v8120 = vunpack.c.h.b16 %v5760
    %v8121 = vunpack.c.l.b16 %v5761
    %v8122 = vunpack.c.h.b16 %v5761
    %v8123 = vunpack.c.l.b16 %v5762
    %v8124 = vunpack.c.h.b16 %v5762
    %v8125 = vunpack.c.l.b16 %v5763
    %v8126 = vunpack.c.h.b16 %v5763
    %v8127 = vunpack.c.l.b16 %v5764
    %v8128 = vunpack.c.h.b16 %v5764
    %v8129 = vunpack.c.l.b16 %v5765
    %v8130 = vunpack.c.h.b16 %v5765
    %v8131 = vunpack.c.l.b16 %v5766
    %v8132 = vunpack.c.h.b16 %v5766
    %v8133 = vunpack.c.l.b16 %v5767
    %v8134 = vunpack.c.h.b16 %v5767
    %v8135 = vunpack.c.l.b16 %v5768
    %v8136 = vunpack.c.h.b16 %v5768
    %v8137 = vunpack.c.l.b16 %v5769
    %v8138 = vunpack.c.h.b16 %v5769
    %v8139 = vunpack.c.l.b16 %v5770
    %v8140 = vunpack.c.h.b16 %v5770
    %v8141 = vunpack.c.l.b16 %v5771
    %v8142 = vunpack.c.h.b16 %v5771
    %v8143 = vunpack.c.l.b16 %v5772
    %v8144 = vunpack.c.h.b16 %v5772
    %v8145 = vunpack.c.l.b16 %v5773
    %v8146 = vunpack.c.h.b16 %v5773
    %v8147 = vunpack.c.l.b16 %v5774
    %v8148 = vunpack.c.h.b16 %v5774
    %v8149 = vunpack.c.l.b16 %v5775
    %v8150 = vunpack.c.h.b16 %v5775
    %v8151 = vunpack.c.l.b16 %v5776
    %v8152 = vunpack.c.h.b16 %v5776
    %v8153 = vunpack.c.l.b16 %v5777
    %v8154 = vunpack.c.h.b16 %v5777
    %v8155 = vunpack.c.l.b16 %v5778
    %v8156 = vunpack.c.h.b16 %v5778
    %v8157 = vunpack.c.l.b16 %v5779
    %v8158 = vunpack.c.h.b16 %v5779
    %v8159 = vunpack.c.l.b16 %v5780
    %v8160 = vunpack.c.h.b16 %v5780
    %v8161 = vunpack.c.l.b16 %v5781
    %v8162 = vunpack.c.h.b16 %v5781
    %v8163 = vunpack.c.l.b16 %v5782
    %v8164 = vunpack.c.h.b16 %v5782
    %v8165 = vunpack.c.l.b16 %v5783
    %v8166 = vunpack.c.h.b16 %v5783
    %v8167 = vunpack.c.l.b16 %v5784
    %v8168 = vunpack.c.h.b16 %v5784
    %v8169 = vunpack.c.l.b16 %v5785
    %v8170 = vunpack.c.h.b16 %v5785
    %v8171 = vunpack.c.l.b16 %v5786
    %v8172 = vunpack.c.h.b16 %v5786
    %v8173 = vunpack.c.l.b16 %v5787
    %v8174 = vunpack.c.h.b16 %v5787
    %v8175 = vunpack.c.l.b16 %v5788
    %v8176 = vunpack.c.h.b16 %v5788
    %v8177 = vunpack.c.l.b16 %v5789
    %v8178 = vunpack.c.h.b16 %v5789
    %v8179 = vunpack.c.l.b16 %v5790
    %v8180 = vunpack.c.h.b16 %v5790
    %v8181 = vunpack.c.l.b16 %v5791
    %v8182 = vunpack.c.h.b16 %v5791
    %v8183 = vunpack.c.l.b16 %v5792
    %v8184 = vunpack.c.h.b16 %v5792
    %v8185 = vunpack.c.l.b16 %v5793
    %v8186 = vunpack.c.h.b16 %v5793
    %v8187 = vunpack.c.l.b16 %v5794
    %v8188 = vunpack.c.h.b16 %v5794
    %v8189 = vunpack.c.l.b16 %v5795
    %v8190 = vunpack.c.h.b16 %v5795
    %v8191 = vunpack.c.l.b16 %v5796
    %v8192 = vunpack.c.h.b16 %v5796
    %v8193 = vunpack.c.l.b16 %v5797
    %v8194 = vunpack.c.h.b16 %v5797
    %v8195 = vunpack.c.l.b16 %v5798
    %v8196 = vunpack.c.h.b16 %v5798
    %v8197 = vunpack.c.l.b16 %v5799
    %v8198 = vunpack.c.h.b16 %v5799
    %v8199 = vunpack.c.l.b16 %v5800
    %v8200 = vunpack.c.h.b16 %v5800
    %v8201 = vunpack.c.l.b16 %v5801
    %v8202 = vunpack.c.h.b16 %v5801
    %v8203 = vunpack.c.l.b16 %v5802
    %v8204 = vunpack.c.h.b16 %v5802
    %v8205 = vunpack.c.l.b16 %v5803
    %v8206 = vunpack.c.h.b16 %v5803
    %v8207 = vunpack.c.l.b16 %v5804
    %v8208 = vunpack.c.h.b16 %v5804
    %v8209 = vunpack.c.l.b16 %v5805
    %v8210 = vunpack.c.h.b16 %v5805
    %v8211 = vunpack.c.l.b16 %v5806
    %v8212 = vunpack.c.h.b16 %v5806
    %v8213 = vunpack.c.l.b16 %v5807
    %v8214 = vunpack.c.h.b16 %v5807
    %v8215 = vunpack.c.l.b16 %v5808
    %v8216 = vunpack.c.h.b16 %v5808
    %v8217 = vunpack.c.l.b16 %v5809
    %v8218 = vunpack.c.h.b16 %v5809
    %v8219 = vunpack.c.l.b16 %v5810
    %v8220 = vunpack.c.h.b16 %v5810
    %v8221 = vunpack.c.l.b16 %v5811
    %v8222 = vunpack.c.h.b16 %v5811
    %v8223 = vunpack.c.l.b16 %v5812
    %v8224 = vunpack.c.h.b16 %v5812
    %v8225 = vunpack.c.l.b16 %v5813
    %v8226 = vunpack.c.h.b16 %v5813
    %v8227 = vunpack.c.l.b16 %v5814
    %v8228 = vunpack.c.h.b16 %v5814
    %v8229 = vunpack.c.l.b16 %v5815
    %v8230 = vunpack.c.h.b16 %v5815
    %v8231 = vunpack.c.l.b16 %v5816
    %v8232 = vunpack.c.h.b16 %v5816
    %v8233 = vunpack.c.l.b16 %v5817
    %v8234 = vunpack.c.h.b16 %v5817
    %v8235 = vunpack.c.l.b16 %v5818
    %v8236 = vunpack.c.h.b16 %v5818
    %v8237 = vunpack.c.l.b16 %v5819
    %v8238 = vunpack.c.h.b16 %v5819
    %v8239 = vunpack.c.l.b16 %v5820
    %v8240 = vunpack.c.h.b16 %v5820
    %v8241 = vunpack.c.l.b16 %v5821
    %v8242 = vunpack.c.h.b16 %v5821
    %v8243 = vunpack.c.l.b16 %v5822
    %v8244 = vunpack.c.h.b16 %v5822
    %v8245 = vunpack.c.l.b16 %v5823
    %v8246 = vunpack.c.h.b16 %v5823
    %v8247 = vunpack.c.l.b16 %v5824
    %v8248 = vunpack.c.h.b16 %v5824
    %v8249 = vunpack.c.l.b16 %v5825
    %v8250 = vunpack.c.h.b16 %v5825
    %v8251 = vunpack.c.l.b16 %v5826
    %v8252 = vunpack.c.h.b16 %v5826
    %v8253 = vunpack.c.l.b16 %v5827
    %v8254 = vunpack.c.h.b16 %v5827
    %v8255 = vunpack.c.l.b16 %v5828
    %v8256 = vunpack.c.h.b16 %v5828
    %v8257 = vunpack.c.l.b16 %v5829
    %v8258 = vunpack.c.h.b16 %v5829
    %v8259 = vunpack.c.l.b16 %v5830
    %v8260 = vunpack.c.h.b16 %v5830
    %v8261 = vunpack.c.l.b16 %v5831
    %v8262 = vunpack.c.h.b16 %v5831
    %v8263 = vunpack.c.l.b16 %v5832
    %v8264 = vunpack.c.h.b16 %v5832
    %v8265 = vunpack.c.l.b16 %v5833
    %v8266 = vunpack.c.h.b16 %v5833
    %v8267 = vunpack.c.l.b16 %v5834
    %v8268 = vunpack.c.h.b16 %v5834
    %v8269 = vunpack.c.l.b16 %v5835
    %v8270 = vunpack.c.h.b16 %v5835
    %v8271 = vunpack.c.l.b16 %v5836
    %v8272 = vunpack.c.h.b16 %v5836
    %v8273 = vunpack.c.l.b16 %v5837
    %v8274 = vunpack.c.h.b16 %v5837
    %v8275 = vunpack.c.l.b16 %v5838
    %v8276 = vunpack.c.h.b16 %v5838
    %v8277 = vunpack.c.l.b16 %v5839
    %v8278 = vunpack.c.h.b16 %v5839
    %v8279 = vunpack.c.l.b16 %v5840
    %v8280 = vunpack.c.h.b16 %v5840
    %v8281 = vunpack.c.l.b16 %v5841
    %v8282 = vunpack.c.h.b16 %v5841
    %v8283 = vunpack.c.l.b16 %v5842
    %v8284 = vunpack.c.h.b16 %v5842
    %v8285 = vunpack.c.l.b16 %v5843
    %v8286 = vunpack.c.h.b16 %v5843
    %v8287 = vunpack.c.l.b16 %v5844
    %v8288 = vunpack.c.h.b16 %v5844
    %v8289 = vunpack.c.l.b16 %v5845
    %v8290 = vunpack.c.h.b16 %v5845
    %v8291 = vunpack.c.l.b16 %v5846
    %v8292 = vunpack.c.h.b16 %v5846
    %v8293 = vunpack.c.l.b16 %v5847
    %v8294 = vunpack.c.h.b16 %v5847
    %v8295 = vunpack.c.l.b16 %v5848
    %v8296 = vunpack.c.h.b16 %v5848
    %v8297 = vunpack.c.l.b16 %v5849
    %v8298 = vunpack.c.h.b16 %v5849
    %v8299 = vunpack.c.l.b16 %v5850
    %v8300 = vunpack.c.h.b16 %v5850
    %v8301 = vunpack.c.l.b16 %v5851
    %v8302 = vunpack.c.h.b16 %v5851
    %v8303 = vunpack.c.l.b16 %v5852
    %v8304 = vunpack.c.h.b16 %v5852
    %v8305 = vunpack.c.l.b16 %v5853
    %v8306 = vunpack.c.h.b16 %v5853
    %v8307 = vunpack.c.l.b16 %v5854
    %v8308 = vunpack.c.h.b16 %v5854
    %v8309 = vunpack.c.l.b16 %v5855
    %v8310 = vunpack.c.h.b16 %v5855
    %v8311 = vunpack.c.l.b16 %v5856
    %v8312 = vunpack.c.h.b16 %v5856
    %v8313 = vunpack.c.l.b16 %v5857
    %v8314 = vunpack.c.h.b16 %v5857
    %v8315 = vunpack.c.l.b16 %v5858
    %v8316 = vunpack.c.h.b16 %v5858
    %v8317 = vunpack.c.l.b16 %v5859
    %v8318 = vunpack.c.h.b16 %v5859
    %v8319 = vunpack.c.l.b16 %v5860
    %v8320 = vunpack.c.h.b16 %v5860
    %v8321 = vunpack.c.l.b16 %v5861
    %v8322 = vunpack.c.h.b16 %v5861
    %v8323 = vunpack.c.l.b16 %v5862
    %v8324 = vunpack.c.h.b16 %v5862
    %v8325 = vunpack.c.l.b16 %v5863
    %v8326 = vunpack.c.h.b16 %v5863
    %v8327 = vunpack.c.l.b16 %v5864
    %v8328 = vunpack.c.h.b16 %v5864
    %v8329 = vunpack.c.l.b16 %v5865
    %v8330 = vunpack.c.h.b16 %v5865
    %v8331 = vunpack.c.l.b16 %v5866
    %v8332 = vunpack.c.h.b16 %v5866
    %v8333 = vunpack.c.l.b16 %v5867
    %v8334 = vunpack.c.h.b16 %v5867
    %v8335 = vunpack.c.l.b16 %v5868
    %v8336 = vunpack.c.h.b16 %v5868
    %v8337 = vunpack.c.l.b16 %v5869
    %v8338 = vunpack.c.h.b16 %v5869
    %v8339 = vunpack.c.l.b16 %v5870
    %v8340 = vunpack.c.h.b16 %v5870
    %v8341 = vunpack.c.l.b16 %v5871
    %v8342 = vunpack.c.h.b16 %v5871
    %v8343 = vunpack.c.l.b16 %v5872
    %v8344 = vunpack.c.h.b16 %v5872
    %v8345 = vunpack.c.l.b16 %v5873
    %v8346 = vunpack.c.h.b16 %v5873
    %v8347 = vunpack.c.l.b16 %v5874
    %v8348 = vunpack.c.h.b16 %v5874
    %v8349 = vunpack.c.l.b16 %v5875
    %v8350 = vunpack.c.h.b16 %v5875
    %v8351 = vunpack.c.l.b16 %v5876
    %v8352 = vunpack.c.h.b16 %v5876
    %v8353 = vunpack.c.l.b16 %v5877
    %v8354 = vunpack.c.h.b16 %v5877
    %v8355 = vunpack.c.l.b16 %v5878
    %v8356 = vunpack.c.h.b16 %v5878
    %v8357 = vunpack.c.l.b16 %v5879
    %v8358 = vunpack.c.h.b16 %v5879
    %v8359 = vunpack.c.l.b16 %v5880
    %v8360 = vunpack.c.h.b16 %v5880
    %v8361 = vunpack.c.l.b16 %v5881
    %v8362 = vunpack.c.h.b16 %v5881
    %v8363 = vunpack.c.l.b16 %v5882
    %v8364 = vunpack.c.h.b16 %v5882
    %v8365 = vunpack.c.l.b16 %v5883
    %v8366 = vunpack.c.h.b16 %v5883
    %v8367 = vunpack.c.l.b16 %v5884
    %v8368 = vunpack.c.h.b16 %v5884
    %v8369 = vunpack.c.l.b16 %v5885
    %v8370 = vunpack.c.h.b16 %v5885
    %v8371 = vunpack.c.l.b16 %v5886
    %v8372 = vunpack.c.h.b16 %v5886
    %v8373 = vunpack.c.l.b16 %v5887
    %v8374 = vunpack.c.h.b16 %v5887
    %v8375 = vunpack.c.l.b16 %v5888
    %v8376 = vunpack.c.h.b16 %v5888
    %v8377 = vunpack.c.l.b16 %v5889
    %v8378 = vunpack.c.h.b16 %v5889
    %v8379 = vunpack.c.l.b16 %v5890
    %v8380 = vunpack.c.h.b16 %v5890
    %v8381 = vunpack.c.l.b16 %v5891
    %v8382 = vunpack.c.h.b16 %v5891
    %v8383 = vunpack.c.l.b16 %v5892
    %v8384 = vunpack.c.h.b16 %v5892
    %v8385 = vunpack.c.l.b16 %v5893
    %v8386 = vunpack.c.h.b16 %v5893
    %v8387 = vunpack.c.l.b16 %v5894
    %v8388 = vunpack.c.h.b16 %v5894
    %v8389 = vunpack.c.l.b16 %v5895
    %v8390 = vunpack.c.h.b16 %v5895
    %v8391 = vunpack.c.l.b16 %v5896
    %v8392 = vunpack.c.h.b16 %v5896
    %v8393 = vunpack.c.l.b16 %v5897
    %v8394 = vunpack.c.h.b16 %v5897
    %v8395 = vunpack.c.l.b16 %v5898
    %v8396 = vunpack.c.h.b16 %v5898
    %v8397 = vunpack.c.l.b16 %v5899
    %v8398 = vunpack.c.h.b16 %v5899
    %v8399 = vunpack.c.l.b16 %v5900
    %v8400 = vunpack.c.h.b16 %v5900
    %v8401 = vunpack.c.l.b16 %v5901
    %v8402 = vunpack.c.h.b16 %v5901
    %v8403 = vunpack.c.l.b16 %v5902
    %v8404 = vunpack.c.h.b16 %v5902
    %v8405 = vunpack.c.l.b16 %v5903
    %v8406 = vunpack.c.h.b16 %v5903
    %v8407 = vunpack.c.l.b16 %v5904
    %v8408 = vunpack.c.h.b16 %v5904
    %v8409 = vunpack.c.l.b16 %v5905
    %v8410 = vunpack.c.h.b16 %v5905
    %v8411 = vunpack.c.l.b16 %v5906
    %v8412 = vunpack.c.h.b16 %v5906
    %v8413 = vunpack.c.l.b16 %v5907
    %v8414 = vunpack.c.h.b16 %v5907
    %v8415 = vunpack.c.l.b16 %v5908
    %v8416 = vunpack.c.h.b16 %v5908
    %v8417 = vunpack.c.l.b16 %v5909
    %v8418 = vunpack.c.h.b16 %v5909
    %v8419 = vunpack.c.l.b16 %v5910
    %v8420 = vunpack.c.h.b16 %v5910
    %v8421 = vunpack.c.l.b16 %v5911
    %v8422 = vunpack.c.h.b16 %v5911
    %v8423 = vunpack.c.l.b16 %v5912
    %v8424 = vunpack.c.h.b16 %v5912
    %v8425 = vunpack.c.l.b16 %v5913
    %v8426 = vunpack.c.h.b16 %v5913
    %v8427 = vunpack.c.l.b16 %v5914
    %v8428 = vunpack.c.h.b16 %v5914
    %v8429 = vunpack.c.l.b16 %v5915
    %v8430 = vunpack.c.h.b16 %v5915
    %v8431 = vunpack.c.l.b16 %v5916
    %v8432 = vunpack.c.h.b16 %v5916
    %v8433 = vunpack.c.l.b16 %v5917
    %v8434 = vunpack.c.h.b16 %v5917
    %v8435 = vunpack.c.l.b16 %v5918
    %v8436 = vunpack.c.h.b16 %v5918
    %v8437 = vunpack.c.l.b16 %v5919
    %v8438 = vunpack.c.h.b16 %v5919
    %v8439 = vunpack.c.l.b16 %v5920
    %v8440 = vunpack.c.h.b16 %v5920
    %v8441 = vunpack.c.l.b16 %v5921
    %v8442 = vunpack.c.h.b16 %v5921
    %v8443 = vunpack.c.l.b16 %v5922
    %v8444 = vunpack.c.h.b16 %v5922
    %v8445 = vunpack.c.l.b16 %v5923
    %v8446 = vunpack.c.h.b16 %v5923
    %v8447 = vunpack.c.l.b16 %v5924
    %v8448 = vunpack.c.h.b16 %v5924
    %v8449 = vunpack.c.l.b16 %v5925
    %v8450 = vunpack.c.h.b16 %v5925
    %v8451 = vunpack.c.l.b16 %v5926
    %v8452 = vunpack.c.h.b16 %v5926
    %v8453 = vunpack.c.l.b16 %v5927
    %v8454 = vunpack.c.h.b16 %v5927
    %v8455 = vunpack.c.l.b16 %v5928
    %v8456 = vunpack.c.h.b16 %v5928
    %v8457 = vunpack.c.l.b16 %v5929
    %v8458 = vunpack.c.h.b16 %v5929
    %v8459 = vunpack.c.l.b16 %v5930
    %v8460 = vunpack.c.h.b16 %v5930
    %v8461 = vunpack.c.l.b16 %v5931
    %v8462 = vunpack.c.h.b16 %v5931
    %v8463 = vunpack.c.l.b16 %v5932
    %v8464 = vunpack.c.h.b16 %v5932
    %v8465 = vunpack.c.l.b16 %v5933
    %v8466 = vunpack.c.h.b16 %v5933
    %v8467 = vunpack.c.l.b16 %v5934
    %v8468 = vunpack.c.h.b16 %v5934
    %v8469 = vunpack.c.l.b16 %v5935
    %v8470 = vunpack.c.h.b16 %v5935
    %v8471 = vunpack.c.l.b16 %v5936
    %v8472 = vunpack.c.h.b16 %v5936
    %v8473 = vunpack.c.l.b16 %v5937
    %v8474 = vunpack.c.h.b16 %v5937
    %v8475 = vunpack.c.l.b16 %v5938
    %v8476 = vunpack.c.h.b16 %v5938
    %v8477 = vunpack.c.l.b16 %v5939
    %v8478 = vunpack.c.h.b16 %v5939
    %v8479 = vunpack.c.l.b16 %v5940
    %v8480 = vunpack.c.h.b16 %v5940
    %v8481 = vunpack.c.l.b16 %v5941
    %v8482 = vunpack.c.h.b16 %v5941
    %v8483 = vunpack.c.l.b16 %v5942
    %v8484 = vunpack.c.h.b16 %v5942
    %v8485 = vunpack.c.l.b16 %v5943
    %v8486 = vunpack.c.h.b16 %v5943
    %v8487 = vunpack.c.l.b16 %v5944
    %v8488 = vunpack.c.h.b16 %v5944
    %v8489 = vunpack.c.l.b16 %v5945
    %v8490 = vunpack.c.h.b16 %v5945
    %v8491 = vunpack.c.l.b16 %v5946
    %v8492 = vunpack.c.h.b16 %v5946
    %v8493 = vunpack.c.l.b16 %v5947
    %v8494 = vunpack.c.h.b16 %v5947
    %v8495 = vunpack.c.l.b16 %v5948
    %v8496 = vunpack.c.h.b16 %v5948
    %v8497 = vunpack.c.l.b16 %v5949
    %v8498 = vunpack.c.h.b16 %v5949
    %v8499 = vunpack.c.l.b16 %v5950
    %v8500 = vunpack.c.h.b16 %v5950
    %v8501 = vunpack.c.l.b16 %v5951
    %v8502 = vunpack.c.h.b16 %v5951
    %v8503 = vunpack.c.l.b16 %v5952
    %v8504 = vunpack.c.h.b16 %v5952
    %v8505 = vunpack.c.l.b16 %v5953
    %v8506 = vunpack.c.h.b16 %v5953
    %v8507 = vunpack.c.l.b16 %v5954
    %v8508 = vunpack.c.h.b16 %v5954
    %v8509 = vunpack.c.l.b16 %v5955
    %v8510 = vunpack.c.h.b16 %v5955
    %v8511 = vunpack.c.l.b16 %v5956
    %v8512 = vunpack.c.h.b16 %v5956
    %v8513 = vunpack.c.l.b16 %v5957
    %v8514 = vunpack.c.h.b16 %v5957
    %v8515 = vunpack.c.l.b16 %v5958
    %v8516 = vunpack.c.h.b16 %v5958
    %v8517 = vunpack.c.l.b16 %v5959
    %v8518 = vunpack.c.h.b16 %v5959
    %v8519 = vunpack.c.l.b16 %v5960
    %v8520 = vunpack.c.h.b16 %v5960
    %v8521 = vunpack.c.l.b16 %v5961
    %v8522 = vunpack.c.h.b16 %v5961
    %v8523 = vunpack.c.l.b16 %v5962
    %v8524 = vunpack.c.h.b16 %v5962
    %v8525 = vunpack.c.l.b16 %v5963
    %v8526 = vunpack.c.h.b16 %v5963
    %v8527 = vunpack.c.l.b16 %v5964
    %v8528 = vunpack.c.h.b16 %v5964
    %v8529 = vunpack.c.l.b16 %v5965
    %v8530 = vunpack.c.h.b16 %v5965
    %v8531 = vunpack.c.l.b16 %v5966
    %v8532 = vunpack.c.h.b16 %v5966
    %v8533 = vunpack.c.l.b16 %v5967
    %v8534 = vunpack.c.h.b16 %v5967
    %v8535 = vunpack.c.l.b16 %v5968
    %v8536 = vunpack.c.h.b16 %v5968
    %v8537 = vunpack.c.l.b16 %v5969
    %v8538 = vunpack.c.h.b16 %v5969
    %v8539 = vunpack.c.l.b16 %v5970
    %v8540 = vunpack.c.h.b16 %v5970
    %v8541 = vunpack.c.l.b16 %v5971
    %v8542 = vunpack.c.h.b16 %v5971
    %v8543 = vunpack.c.l.b16 %v5972
    %v8544 = vunpack.c.h.b16 %v5972
    %v8545 = vunpack.c.l.b16 %v5973
    %v8546 = vunpack.c.h.b16 %v5973
    %v8547 = vunpack.c.l.b16 %v5974
    %v8548 = vunpack.c.h.b16 %v5974
    %v8549 = vunpack.c.l.b16 %v5975
    %v8550 = vunpack.c.h.b16 %v5975
    %v8551 = vunpack.c.l.b16 %v5976
    %v8552 = vunpack.c.h.b16 %v5976
    %v8553 = vunpack.c.l.b16 %v5977
    %v8554 = vunpack.c.h.b16 %v5977
    %v8555 = vunpack.c.l.b16 %v5978
    %v8556 = vunpack.c.h.b16 %v5978
    %v8557 = vunpack.c.l.b16 %v5979
    %v8558 = vunpack.c.h.b16 %v5979
    %v8559 = vunpack.c.l.b16 %v5980
    %v8560 = vunpack.c.h.b16 %v5980
    %v8561 = vunpack.c.l.b16 %v5981
    %v8562 = vunpack.c.h.b16 %v5981
    %v8563 = vunpack.c.l.b16 %v5982
    %v8564 = vunpack.c.h.b16 %v5982
    %v8565 = vunpack.c.l.b16 %v5983
    %v8566 = vunpack.c.h.b16 %v5983
    %v8567 = vunpack.c.l.b16 %v5984
    %v8568 = vunpack.c.h.b16 %v5984
    %v8569 = vunpack.c.l.b16 %v5985
    %v8570 = vunpack.c.h.b16 %v5985
    %v8571 = vunpack.c.l.b16 %v5986
    %v8572 = vunpack.c.h.b16 %v5986
    %v8573 = vunpack.c.l.b16 %v5987
    %v8574 = vunpack.c.h.b16 %v5987
    %v8575 = vunpack.c.l.b16 %v5988
    %v8576 = vunpack.c.h.b16 %v5988
    %v8577 = vunpack.c.l.b16 %v5989
    %v8578 = vunpack.c.h.b16 %v5989
    %v8579 = vunpack.c.l.b16 %v5990
    %v8580 = vunpack.c.h.b16 %v5990
    %v8581 = vunpack.c.l.b16 %v5991
    %v8582 = vunpack.c.h.b16 %v5991
    %v8583 = vunpack.c.l.b16 %v5992
    %v8584 = vunpack.c.h.b16 %v5992
    %v8585 = vunpack.c.l.b16 %v5993
    %v8586 = vunpack.c.h.b16 %v5993
    %v8587 = vunpack.c.l.b16 %v5994
    %v8588 = vunpack.c.h.b16 %v5994
    %v8589 = vunpack.c.l.b16 %v5995
    %v8590 = vunpack.c.h.b16 %v5995
    %v8591 = vunpack.c.l.b16 %v5996
    %v8592 = vunpack.c.h.b16 %v5996
    %v8593 = vunpack.c.l.b16 %v5997
    %v8594 = vunpack.c.h.b16 %v5997
    %v8595 = vunpack.c.l.b16 %v5998
    %v8596 = vunpack.c.h.b16 %v5998
    %v8597 = vunpack.c.l.b16 %v5999
    %v8598 = vunpack.c.h.b16 %v5999
    %v8599 = vunpack.c.l.b16 %v6000
    %v8600 = vunpack.c.h.b16 %v6000
    %v8601 = vunpack.c.l.b16 %v6001
    %v8602 = vunpack.c.h.b16 %v6001
    %v8603 = vunpack.c.l.b16 %v6002
    %v8604 = vunpack.c.h.b16 %v6002
    %v8605 = vunpack.c.l.b16 %v6003
    %v8606 = vunpack.c.h.b16 %v6003
    %v8607 = vunpack.c.l.b16 %v6004
    %v8608 = vunpack.c.h.b16 %v6004
    %v8609 = vunpack.c.l.b16 %v6005
    %v8610 = vunpack.c.h.b16 %v6005
    %v8611 = vunpack.c.l.b16 %v6006
    %v8612 = vunpack.c.h.b16 %v6006
    %v8613 = vunpack.c.l.b16 %v6007
    %v8614 = vunpack.c.h.b16 %v6007
    %v8615 = vunpack.c.l.b16 %v6008
    %v8616 = vunpack.c.h.b16 %v6008
    %v8617 = vunpack.c.l.b16 %v6009
    %v8618 = vunpack.c.h.b16 %v6009
    %v8619 = vunpack.c.l.b16 %v6010
    %v8620 = vunpack.c.h.b16 %v6010
    %v8621 = vunpack.c.l.b16 %v6011
    %v8622 = vunpack.c.h.b16 %v6011
    %v8623 = vunpack.c.l.b16 %v6012
    %v8624 = vunpack.c.h.b16 %v6012
    %v8625 = vunpack.c.l.b16 %v6013
    %v8626 = vunpack.c.h.b16 %v6013
    %v8627 = vunpack.c.l.b16 %v6014
    %v8628 = vunpack.c.h.b16 %v6014
    %v8629 = vunpack.c.l.b16 %v6015
    %v8630 = vunpack.c.h.b16 %v6015
    %v8631 = vunpack.c.l.b16 %v6016
    %v8632 = vunpack.c.h.b16 %v6016
    %v8633 = vunpack.c.l.b16 %v6017
    %v8634 = vunpack.c.h.b16 %v6017
    %v8635 = vunpack.c.l.b16 %v6018
    %v8636 = vunpack.c.h.b16 %v6018
    %v8637 = vunpack.c.l.b16 %v6019
    %v8638 = vunpack.c.h.b16 %v6019
    %v8639 = vunpack.c.l.b16 %v6020
    %v8640 = vunpack.c.h.b16 %v6020
    %v8641 = vunpack.c.l.b16 %v6021
    %v8642 = vunpack.c.h.b16 %v6021
    %v8643 = vunpack.c.l.b16 %v6022
    %v8644 = vunpack.c.h.b16 %v6022
    %v8645 = vunpack.c.l.b16 %v6023
    %v8646 = vunpack.c.h.b16 %v6023
    %v8647 = vunpack.c.l.b16 %v6024
    %v8648 = vunpack.c.h.b16 %v6024
    %v8649 = vunpack.c.l.b16 %v6025
    %v8650 = vunpack.c.h.b16 %v6025
    %v8651 = vunpack.c.l.b16 %v6026
    %v8652 = vunpack.c.h.b16 %v6026
    %v8653 = vunpack.c.l.b16 %v6027
    %v8654 = vunpack.c.h.b16 %v6027
    %v8655 = vunpack.c.l.b16 %v6028
    %v8656 = vunpack.c.h.b16 %v6028
    %v8657 = vunpack.c.l.b16 %v6029
    %v8658 = vunpack.c.h.b16 %v6029
    %v8659 = vunpack.c.l.b16 %v6030
    %v8660 = vunpack.c.h.b16 %v6030
    %v8661 = vunpack.c.l.b16 %v6031
    %v8662 = vunpack.c.h.b16 %v6031
    %v8663 = vunpack.c.l.b16 %v6032
    %v8664 = vunpack.c.h.b16 %v6032
    %v8665 = vunpack.c.l.b16 %v6033
    %v8666 = vunpack.c.h.b16 %v6033
    %v8667 = vunpack.c.l.b16 %v6034
    %v8668 = vunpack.c.h.b16 %v6034
    %v8669 = vunpack.c.l.b16 %v6035
    %v8670 = vunpack.c.h.b16 %v6035
    %v8671 = vunpack.c.l.b16 %v6036
    %v8672 = vunpack.c.h.b16 %v6036
    %v8673 = vunpack.c.l.b16 %v6037
    %v8674 = vunpack.c.h.b16 %v6037
    %v8675 = vunpack.c.l.b16 %v6038
    %v8676 = vunpack.c.h.b16 %v6038
    %v8677 = vunpack.c.l.b16 %v6039
    %v8678 = vunpack.c.h.b16 %v6039
    %v8679 = vunpack.c.l.b16 %v6040
    %v8680 = vunpack.c.h.b16 %v6040
    %v8681 = vunpack.c.l.b16 %v6041
    %v8682 = vunpack.c.h.b16 %v6041
    %v8683 = vunpack.c.l.b16 %v6042
    %v8684 = vunpack.c.h.b16 %v6042
    %v8685 = vunpack.c.l.b16 %v6043
    %v8686 = vunpack.c.h.b16 %v6043
    %v8687 = vunpack.c.l.b16 %v6044
    %v8688 = vunpack.c.h.b16 %v6044
    %v8689 = vunpack.c.l.b16 %v6045
    %v8690 = vunpack.c.h.b16 %v6045
    %v8691 = vunpack.c.l.b16 %v6046
    %v8692 = vunpack.c.h.b16 %v6046
    %v8693 = vunpack.c.l.b16 %v6047
    %v8694 = vunpack.c.h.b16 %v6047
    %v8695 = vunpack.c.l.b16 %v6048
    %v8696 = vunpack.c.h.b16 %v6048
    %v8697 = vunpack.c.l.b16 %v6049
    %v8698 = vunpack.c.h.b16 %v6049
    %v8699 = vunpack.c.l.b16 %v6050
    %v8700 = vunpack.c.h.b16 %v6050
    %v8701 = vunpack.c.l.b16 %v6051
    %v8702 = vunpack.c.h.b16 %v6051
    %v8703 = vunpack.c.l.b16 %v6052
    %v8704 = vunpack.c.h.b16 %v6052
    %v8705 = vunpack.c.l.b16 %v6053
    %v8706 = vunpack.c.h.b16 %v6053
    %v8707 = vunpack.c.l.b16 %v6054
    %v8708 = vunpack.c.h.b16 %v6054
    %v8709 = vunpack.c.l.b16 %v6055
    %v8710 = vunpack.c.h.b16 %v6055
    %v8711 = vunpack.c.l.b16 %v6056
    %v8712 = vunpack.c.h.b16 %v6056
    %v8713 = vunpack.c.l.b16 %v6057
    %v8714 = vunpack.c.h.b16 %v6057
    %v8715 = vunpack.c.l.b16 %v6058
    %v8716 = vunpack.c.h.b16 %v6058
    %v8717 = vunpack.c.l.b16 %v6059
    %v8718 = vunpack.c.h.b16 %v6059
    %v8719 = vunpack.c.l.b16 %v6060
    %v8720 = vunpack.c.h.b16 %v6060
    %v8721 = vunpack.c.l.b16 %v6061
    %v8722 = vunpack.c.h.b16 %v6061
    %v8723 = vunpack.c.l.b16 %v6062
    %v8724 = vunpack.c.h.b16 %v6062
    %v8725 = vunpack.c.l.b16 %v6063
    %v8726 = vunpack.c.h.b16 %v6063
    %v8727 = vunpack.c.l.b16 %v6064
    %v8728 = vunpack.c.h.b16 %v6064
    %v8729 = vunpack.c.l.b16 %v6065
    %v8730 = vunpack.c.h.b16 %v6065
    %v8731 = vunpack.c.l.b16 %v6066
    %v8732 = vunpack.c.h.b16 %v6066
    %v8733 = vunpack.c.l.b16 %v6067
    %v8734 = vunpack.c.h.b16 %v6067
    %v8735 = vunpack.c.l.b16 %v6068
    %v8736 = vunpack.c.h.b16 %v6068
    %v8737 = vunpack.c.l.b16 %v6069
    %v8738 = vunpack.c.h.b16 %v6069
    %v8739 = vunpack.c.l.b16 %v6070
    %v8740 = vunpack.c.h.b16 %v6070
    %v8741 = vunpack.c.l.b16 %v6071
    %v8742 = vunpack.c.h.b16 %v6071
    %v8743 = vunpack.c.l.b16 %v6072
    %v8744 = vunpack.c.h.b16 %v6072
    %v8745 = vunpack.c.l.b16 %v6073
    %v8746 = vunpack.c.h.b16 %v6073
    %v8747 = vunpack.c.l.b16 %v6074
    %v8748 = vunpack.c.h.b16 %v6074
    %v8749 = vunpack.c.l.b16 %v6075
    %v8750 = vunpack.c.h.b16 %v6075
    %v8751 = vunpack.c.l.b16 %v6076
    %v8752 = vunpack.c.h.b16 %v6076
    %v8753 = vunpack.c.l.b16 %v6077
    %v8754 = vunpack.c.h.b16 %v6077
    %v8755 = vunpack.c.l.b16 %v6078
    %v8756 = vunpack.c.h.b16 %v6078
    %v8757 = vunpack.c.l.b16 %v6079
    %v8758 = vunpack.c.h.b16 %v6079
    %v8759 = vunpack.c.l.b16 %v6080
    %v8760 = vunpack.c.h.b16 %v6080
    %v8761 = vunpack.c.l.b16 %v6081
    %v8762 = vunpack.c.h.b16 %v6081
    %v8763 = vunpack.c.l.b16 %v6082
    %v8764 = vunpack.c.h.b16 %v6082
    %v8765 = vunpack.c.l.b16 %v6083
    %v8766 = vunpack.c.h.b16 %v6083
    %v8767 = vunpack.c.l.b16 %v6084
    %v8768 = vunpack.c.h.b16 %v6084
    %v8769 = vunpack.c.l.b16 %v6085
    %v8770 = vunpack.c.h.b16 %v6085
    %v8771 = vunpack.c.l.b16 %v6086
    %v8772 = vunpack.c.h.b16 %v6086
    %v8773 = vunpack.c.l.b16 %v6087
    %v8774 = vunpack.c.h.b16 %v6087
    %v8775 = vunpack.c.l.b16 %v6088
    %v8776 = vunpack.c.h.b16 %v6088
    %v8777 = vunpack.c.l.b16 %v6089
    %v8778 = vunpack.c.h.b16 %v6089
    %v8779 = vunpack.c.l.b16 %v6090
    %v8780 = vunpack.c.h.b16 %v6090
    %v8781 = vunpack.c.l.b16 %v6091
    %v8782 = vunpack.c.h.b16 %v6091
    %v8783 = vunpack.c.l.b16 %v6092
    %v8784 = vunpack.c.h.b16 %v6092
    %v8785 = vunpack.c.l.b16 %v6093
    %v8786 = vunpack.c.h.b16 %v6093
    %v8787 = vunpack.c.l.b16 %v6094
    %v8788 = vunpack.c.h.b16 %v6094
    %v8789 = vunpack.c.l.b16 %v6095
    %v8790 = vunpack.c.h.b16 %v6095
    %v8791 = vunpack.c.l.b16 %v6096
    %v8792 = vunpack.c.h.b16 %v6096
    %v8793 = vunpack.c.l.b16 %v6097
    %v8794 = vunpack.c.h.b16 %v6097
    %v8795 = vunpack.c.l.b16 %v6098
    %v8796 = vunpack.c.h.b16 %v6098
    %v8797 = vunpack.c.l.b16 %v6099
    %v8798 = vunpack.c.h.b16 %v6099
    %v8799 = vunpack.c.l.b16 %v6100
    %v8800 = vunpack.c.h.b16 %v6100
    %v8801 = vunpack.c.l.b16 %v6101
    %v8802 = vunpack.c.h.b16 %v6101
    %v8803 = vunpack.c.l.b16 %v6102
    %v8804 = vunpack.c.h.b16 %v6102
    %v8805 = vunpack.c.l.b16 %v6103
    %v8806 = vunpack.c.h.b16 %v6103
    %v8807 = vunpack.c.l.b16 %v6104
    %v8808 = vunpack.c.h.b16 %v6104
    %v8809 = vunpack.c.l.b16 %v6105
    %v8810 = vunpack.c.h.b16 %v6105
    %v8811 = vunpack.c.l.b16 %v6106
    %v8812 = vunpack.c.h.b16 %v6106
    %v8813 = vunpack.c.l.b16 %v6107
    %v8814 = vunpack.c.h.b16 %v6107
    %v8815 = vunpack.c.l.b16 %v6108
    %v8816 = vunpack.c.h.b16 %v6108
    %v8817 = vunpack.c.l.b16 %v6109
    %v8818 = vunpack.c.h.b16 %v6109
    %v8819 = vunpack.c.l.b16 %v6110
    %v8820 = vunpack.c.h.b16 %v6110
    %v8821 = vunpack.c.l.b16 %v6111
    %v8822 = vunpack.c.h.b16 %v6111
    %v8823 = vunpack.c.l.b16 %v6112
    %v8824 = vunpack.c.h.b16 %v6112
    %v8825 = vunpack.c.l.b16 %v6113
    %v8826 = vunpack.c.h.b16 %v6113
    %v8827 = vunpack.c.l.b16 %v6114
    %v8828 = vunpack.c.h.b16 %v6114
    %v8829 = vunpack.c.l.b16 %v6115
    %v8830 = vunpack.c.h.b16 %v6115
    %v8831 = vunpack.c.l.b16 %v6116
    %v8832 = vunpack.c.h.b16 %v6116
    %v8833 = vunpack.c.l.b16 %v6117
    %v8834 = vunpack.c.h.b16 %v6117
    %v8835 = vunpack.c.l.b16 %v6118
    %v8836 = vunpack.c.h.b16 %v6118
    %v8837 = vunpack.c.l.b16 %v6119
    %v8838 = vunpack.c.h.b16 %v6119
    %v8839 = vunpack.c.l.b16 %v6120
    %v8840 = vunpack.c.h.b16 %v6120
    %v8841 = vunpack.c.l.b16 %v6121
    %v8842 = vunpack.c.h.b16 %v6121
    %v8843 = vunpack.c.l.b16 %v6122
    %v8844 = vunpack.c.h.b16 %v6122
    %v8845 = vunpack.c.l.b16 %v6123
    %v8846 = vunpack.c.h.b16 %v6123
    %v8847 = vunpack.c.l.b16 %v6124
    %v8848 = vunpack.c.h.b16 %v6124
    %v8849 = vunpack.c.l.b16 %v6125
    %v8850 = vunpack.c.h.b16 %v6125
    %v8851 = vunpack.c.l.b16 %v6126
    %v8852 = vunpack.c.h.b16 %v6126
    %v8853 = vunpack.c.l.b16 %v6127
    %v8854 = vunpack.c.h.b16 %v6127
    %v8855 = vunpack.c.l.b16 %v6128
    %v8856 = vunpack.c.h.b16 %v6128
    %v8857 = vunpack.c.l.b16 %v6129
    %v8858 = vunpack.c.h.b16 %v6129
    %v8859 = vunpack.c.l.b16 %v6130
    %v8860 = vunpack.c.h.b16 %v6130
    %v8861 = vunpack.c.l.b16 %v6131
    %v8862 = vunpack.c.h.b16 %v6131
    %v8863 = vunpack.c.l.b16 %v6132
    %v8864 = vunpack.c.h.b16 %v6132
    %v8865 = vunpack.c.l.b16 %v6133
    %v8866 = vunpack.c.h.b16 %v6133
    %v8867 = vunpack.c.l.b16 %v6134
    %v8868 = vunpack.c.h.b16 %v6134
    %v8869 = vunpack.c.l.b16 %v6135
    %v8870 = vunpack.c.h.b16 %v6135
    %v8871 = vunpack.c.l.b16 %v6136
    %v8872 = vunpack.c.h.b16 %v6136
    %v8873 = vunpack.c.l.b16 %v6137
    %v8874 = vunpack.c.h.b16 %v6137
    %v8875 = vunpack.c.l.b16 %v6138
    %v8876 = vunpack.c.h.b16 %v6138
    %v8877 = vunpack.c.l.b16 %v6139
    %v8878 = vunpack.c.h.b16 %v6139
    %v8879 = vunpack.c.l.b16 %v6140
    %v8880 = vunpack.c.h.b16 %v6140
    %v8881 = vunpack.c.l.b16 %v6141
    %v8882 = vunpack.c.h.b16 %v6141
    %v8883 = vunpack.c.l.b16 %v6142
    %v8884 = vunpack.c.h.b16 %v6142
    %v8885 = vunpack.c.l.b16 %v6143
    %v8886 = vunpack.c.h.b16 %v6143
    %v8887 = vunpack.c.l.b16 %v6144
    %v8888 = vunpack.c.h.b16 %v6144
    %v8889 = vunpack.c.l.b16 %v6145
    %v8890 = vunpack.c.h.b16 %v6145
    %v8891 = vunpack.c.l.b16 %v6146
    %v8892 = vunpack.c.h.b16 %v6146
    %v8893 = vunpack.c.l.b16 %v6147
    %v8894 = vunpack.c.h.b16 %v6147
    %v8895 = vunpack.c.l.b16 %v6148
    %v8896 = vunpack.c.h.b16 %v6148
    %v8897 = vunpack.c.l.b16 %v6149
    %v8898 = vunpack.c.h.b16 %v6149
    %v8899 = vunpack.c.l.b16 %v6150
    %v8900 = vunpack.c.h.b16 %v6150
    %v8901 = vunpack.c.l.b16 %v6151
    %v8902 = vunpack.c.h.b16 %v6151
    %v8903 = vunpack.c.l.b16 %v6152
    %v8904 = vunpack.c.h.b16 %v6152
    %v8905 = vunpack.c.l.b16 %v6153
    %v8906 = vunpack.c.h.b16 %v6153
    %v8907 = vunpack.c.l.b16 %v6154
    %v8908 = vunpack.c.h.b16 %v6154
    %v8909 = vunpack.c.l.b16 %v6155
    %v8910 = vunpack.c.h.b16 %v6155
    %v8911 = vunpack.c.l.b16 %v6156
    %v8912 = vunpack.c.h.b16 %v6156
    %v8913 = vunpack.c.l.b16 %v6157
    %v8914 = vunpack.c.h.b16 %v6157
    %v8915 = vunpack.c.l.b16 %v6158
    %v8916 = vunpack.c.h.b16 %v6158
    %v8917 = vunpack.c.l.b16 %v6159
    %v8918 = vunpack.c.h.b16 %v6159
    %v8919 = vunpack.c.l.b16 %v6160
    %v8920 = vunpack.c.h.b16 %v6160
    %v8921 = vunpack.c.l.b16 %v6161
    %v8922 = vunpack.c.h.b16 %v6161
    %v8923 = vunpack.c.l.b16 %v6162
    %v8924 = vunpack.c.h.b16 %v6162
    %v8925 = vunpack.c.l.b16 %v6163
    %v8926 = vunpack.c.h.b16 %v6163
    %v8927 = vunpack.c.l.b16 %v6164
    %v8928 = vunpack.c.h.b16 %v6164
    %v8929 = vunpack.c.l.b16 %v6165
    %v8930 = vunpack.c.h.b16 %v6165
    %v8931 = vunpack.c.l.b16 %v6166
    %v8932 = vunpack.c.h.b16 %v6166
    %v8933 = vunpack.c.l.b16 %v6167
    %v8934 = vunpack.c.h.b16 %v6167
    %v8935 = vunpack.c.l.b16 %v6168
    %v8936 = vunpack.c.h.b16 %v6168
    %v8937 = vunpack.c.l.b16 %v6169
    %v8938 = vunpack.c.h.b16 %v6169
    %v8939 = vunpack.c.l.b16 %v6170
    %v8940 = vunpack.c.h.b16 %v6170
    %v8941 = vunpack.c.l.b16 %v6171
    %v8942 = vunpack.c.h.b16 %v6171
    %v8943 = vunpack.c.l.b16 %v6172
    %v8944 = vunpack.c.h.b16 %v6172
    %v8945 = vunpack.c.l.b16 %v6173
    %v8946 = vunpack.c.h.b16 %v6173
    %v8947 = vunpack.c.l.b16 %v6174
    %v8948 = vunpack.c.h.b16 %v6174
    %v8949 = vunpack.c.l.b16 %v6175
    %v8950 = vunpack.c.h.b16 %v6175
    %v8951 = vunpack.c.l.b16 %v6176
    %v8952 = vunpack.c.h.b16 %v6176
    %v8953 = vunpack.c.l.b16 %v6177
    %v8954 = vunpack.c.h.b16 %v6177
    %v8955 = vunpack.c.l.b16 %v6178
    %v8956 = vunpack.c.h.b16 %v6178
    %v8957 = vunpack.c.l.b16 %v6179
    %v8958 = vunpack.c.h.b16 %v6179
    %v8959 = vunpack.c.l.b16 %v6180
    %v8960 = vunpack.c.h.b16 %v6180
    %v8961 = vunpack.c.l.b16 %v6181
    %v8962 = vunpack.c.h.b16 %v6181
    %v8963 = vunpack.c.l.b16 %v6182
    %v8964 = vunpack.c.h.b16 %v6182
    %v8965 = vunpack.c.l.b16 %v6183
    %v8966 = vunpack.c.h.b16 %v6183
    %v8967 = vunpack.c.l.b16 %v6184
    %v8968 = vunpack.c.h.b16 %v6184
    %v8969 = vunpack.c.l.b16 %v6185
    %v8970 = vunpack.c.h.b16 %v6185
    %v8971 = vunpack.c.l.b16 %v6186
    %v8972 = vunpack.c.h.b16 %v6186
    %v8973 = vunpack.c.l.b16 %v6187
    %v8974 = vunpack.c.h.b16 %v6187
    %v8975 = vunpack.c.l.b16 %v6188
    %v8976 = vunpack.c.h.b16 %v6188
    %v8977 = vunpack.c.l.b16 %v6189
    %v8978 = vunpack.c.h.b16 %v6189
    %v8979 = vunpack.c.l.b16 %v6190
    %v8980 = vunpack.c.h.b16 %v6190
    %v8981 = vunpack.c.l.b16 %v6191
    %v8982 = vunpack.c.h.b16 %v6191
    %v8983 = vunpack.c.l.b16 %v6192
    %v8984 = vunpack.c.h.b16 %v6192
    %v8985 = vunpack.c.l.b16 %v6193
    %v8986 = vunpack.c.h.b16 %v6193
    %v8987 = vunpack.c.l.b16 %v6194
    %v8988 = vunpack.c.h.b16 %v6194
    %v8989 = vunpack.c.l.b16 %v6195
    %v8990 = vunpack.c.h.b16 %v6195
    %v8991 = vunpack.c.l.b16 %v6196
    %v8992 = vunpack.c.h.b16 %v6196
    %v8993 = vunpack.c.l.b16 %v6197
    %v8994 = vunpack.c.h.b16 %v6197
    %v8995 = vunpack.c.l.b16 %v6198
    %v8996 = vunpack.c.h.b16 %v6198
    %v8997 = vunpack.c.l.b16 %v6199
    %v8998 = vunpack.c.h.b16 %v6199
    %v8999 = vunpack.c.l.b16 %v6200
    %v9000 = vunpack.c.h.b16 %v6200
    %v9001 = vunpack.c.l.b16 %v6201
    %v9002 = vunpack.c.h.b16 %v6201
    %v9003 = vunpack.c.l.b16 %v6202
    %v9004 = vunpack.c.h.b16 %v6202
    %v9005 = vunpack.c.l.b16 %v6203
    %v9006 = vunpack.c.h.b16 %v6203
    %v9007 = vunpack.c.l.b16 %v6204
    %v9008 = vunpack.c.h.b16 %v6204
    %v9009 = vunpack.c.l.b16 %v6205
    %v9010 = vunpack.c.h.b16 %v6205
    %v9011 = vunpack.c.l.b16 %v6206
    %v9012 = vunpack.c.h.b16 %v6206
    %v9013 = vunpack.c.l.b16 %v6207
    %v9014 = vunpack.c.h.b16 %v6207
    %v9015 = vunpack.c.l.b16 %v6208
    %v9016 = vunpack.c.h.b16 %v6208
    %v9017 = vunpack.c.l.b16 %v6209
    %v9018 = vunpack.c.h.b16 %v6209
    %v9019 = vunpack.c.l.b16 %v6210
    %v9020 = vunpack.c.h.b16 %v6210
    %v9021 = vunpack.c.l.b16 %v6211
    %v9022 = vunpack.c.h.b16 %v6211
    %v9023 = vunpack.c.l.b16 %v6212
    %v9024 = vunpack.c.h.b16 %v6212
    %v9025 = vunpack.c.l.b16 %v6213
    %v9026 = vunpack.c.h.b16 %v6213
    %v9027 = vunpack.c.l.b16 %v6214
    %v9028 = vunpack.c.h.b16 %v6214
    %v9029 = vunpack.c.l.b16 %v6215
    %v9030 = vunpack.c.h.b16 %v6215
    %v9031 = vunpack.c.l.b16 %v6216
    %v9032 = vunpack.c.h.b16 %v6216
    %v9033 = vunpack.c.l.b16 %v6217
    %v9034 = vunpack.c.h.b16 %v6217
    %v9035 = vunpack.c.l.b16 %v6218
    %v9036 = vunpack.c.h.b16 %v6218
    %v9037 = vunpack.c.l.b16 %v6219
    %v9038 = vunpack.c.h.b16 %v6219
    %v9039 = vunpack.c.l.b16 %v6220
    %v9040 = vunpack.c.h.b16 %v6220
    %v9041 = vunpack.c.l.b16 %v6221
    %v9042 = vunpack.c.h.b16 %v6221
    %v9043 = vunpack.c.l.b16 %v6222
    %v9044 = vunpack.c.h.b16 %v6222
    %v9045 = vunpack.c.l.b16 %v6223
    %v9046 = vunpack.c.h.b16 %v6223
    %v9047 = vunpack.c.l.b16 %v6224
    %v9048 = vunpack.c.h.b16 %v6224
    %v9049 = vunpack.c.l.b16 %v6225
    %v9050 = vunpack.c.h.b16 %v6225
    %v9051 = vunpack.c.l.b16 %v6226
    %v9052 = vunpack.c.h.b16 %v6226
    %v9053 = vunpack.c.l.b16 %v6227
    %v9054 = vunpack.c.h.b16 %v6227
    %v9055 = vunpack.c.l.b16 %v6228
    %v9056 = vunpack.c.h.b16 %v6228
    %v9057 = vunpack.c.l.b16 %v6229
    %v9058 = vunpack.c.h.b16 %v6229
    %v9059 = vunpack.c.l.b16 %v6230
    %v9060 = vunpack.c.h.b16 %v6230
    %v9061 = vunpack.c.l.b16 %v6231
    %v9062 = vunpack.c.h.b16 %v6231
    %v9063 = vunpack.c.l.b16 %v6232
    %v9064 = vunpack.c.h.b16 %v6232
    %v9065 = vunpack.c.l.b16 %v6233
    %v9066 = vunpack.c.h.b16 %v6233
    %v9067 = vunpack.c.l.b16 %v6234
    %v9068 = vunpack.c.h.b16 %v6234
    %v9069 = vunpack.c.l.b16 %v6235
    %v9070 = vunpack.c.h.b16 %v6235
    %v9071 = vunpack.c.l.b16 %v6236
    %v9072 = vunpack.c.h.b16 %v6236
    %v9073 = vunpack.c.l.b16 %v6237
    %v9074 = vunpack.c.h.b16 %v6237
    %v9075 = vunpack.c.l.b16 %v6238
    %v9076 = vunpack.c.h.b16 %v6238
    %v9077 = vunpack.c.l.b16 %v6239
    %v9078 = vunpack.c.h.b16 %v6239
    %v9079 = vunpack.c.l.b16 %v6240
    %v9080 = vunpack.c.h.b16 %v6240
    %v9081 = vunpack.c.l.b16 %v6241
    %v9082 = vunpack.c.h.b16 %v6241
    %v9083 = vunpack.c.l.b16 %v6242
    %v9084 = vunpack.c.h.b16 %v6242
    %v9085 = vunpack.c.l.b16 %v6243
    %v9086 = vunpack.c.h.b16 %v6243
    %v9087 = vunpack.c.l.b16 %v6244
    %v9088 = vunpack.c.h.b16 %v6244
    %v9089 = vunpack.c.l.b16 %v6245
    %v9090 = vunpack.c.h.b16 %v6245
    %v9091 = vunpack.c.l.b16 %v6246
    %v9092 = vunpack.c.h.b16 %v6246
    %v9093 = vunpack.c.l.b16 %v6247
    %v9094 = vunpack.c.h.b16 %v6247
    %v9095 = vunpack.c.l.b16 %v6248
    %v9096 = vunpack.c.h.b16 %v6248
    %v9097 = vunpack.c.l.b16 %v6249
    %v9098 = vunpack.c.h.b16 %v6249
    %v9099 = vunpack.c.l.b16 %v6250
    %v9100 = vunpack.c.h.b16 %v6250
    %v9101 = vunpack.c.l.b16 %v6251
    %v9102 = vunpack.c.h.b16 %v6251
    %v9103 = vunpack.c.l.b16 %v6252
    %v9104 = vunpack.c.h.b16 %v6252
    %v9105 = vunpack.c.l.b16 %v6253
    %v9106 = vunpack.c.h.b16 %v6253
    %v9107 = vunpack.c.l.b16 %v6254
    %v9108 = vunpack.c.h.b16 %v6254
    %v9109 = vunpack.c.l.b16 %v6255
    %v9110 = vunpack.c.h.b16 %v6255
    %v9111 = vunpack.c.l.b16 %v6256
    %v9112 = vunpack.c.h.b16 %v6256
    %v9113 = vunpack.c.l.b16 %v6257
    %v9114 = vunpack.c.h.b16 %v6257
    %v9115 = vunpack.c.l.b16 %v6258
    %v9116 = vunpack.c.h.b16 %v6258
    %v9117 = vunpack.c.l.b16 %v6259
    %v9118 = vunpack.c.h.b16 %v6259
    %v9119 = vunpack.c.l.b16 %v6260
    %v9120 = vunpack.c.h.b16 %v6260
    %v9121 = vunpack.c.l.b16 %v6261
    %v9122 = vunpack.c.h.b16 %v6261
    %v9123 = vunpack.c.l.b16 %v6262
    %v9124 = vunpack.c.h.b16 %v6262
    %v9125 = vunpack.c.l.b16 %v6263
    %v9126 = vunpack.c.h.b16 %v6263
    %v9127 = vunpack.c.l.b16 %v6264
    %v9128 = vunpack.c.h.b16 %v6264
    %v9129 = vunpack.c.l.b16 %v6265
    %v9130 = vunpack.c.h.b16 %v6265
    %v9131 = vunpack.c.l.b16 %v6266
    %v9132 = vunpack.c.h.b16 %v6266
    %v9133 = vunpack.c.l.b16 %v6267
    %v9134 = vunpack.c.h.b16 %v6267
    %v9135 = vunpack.c.l.b16 %v6268
    %v9136 = vunpack.c.h.b16 %v6268
    %v9137 = vunpack.c.l.b16 %v6269
    %v9138 = vunpack.c.h.b16 %v6269
    %v9139 = vunpack.c.l.b16 %v6270
    %v9140 = vunpack.c.h.b16 %v6270
    %v9141 = vunpack.c.l.b16 %v6271
    %v9142 = vunpack.c.h.b16 %v6271
    %v9143 = vunpack.c.l.b16 %v6272
    %v9144 = vunpack.c.h.b16 %v6272
    %v9145 = vunpack.c.l.b16 %v6273
    %v9146 = vunpack.c.h.b16 %v6273
    %v9147 = vunpack.c.l.b16 %v6274
    %v9148 = vunpack.c.h.b16 %v6274
    %v9149 = vunpack.c.l.b16 %v6275
    %v9150 = vunpack.c.h.b16 %v6275
    %v9151 = vunpack.c.l.b16 %v6276
    %v9152 = vunpack.c.h.b16 %v6276
    %v9153 = vunpack.c.l.b16 %v6277
    %v9154 = vunpack.c.h.b16 %v6277
    %v9155 = vunpack.c.l.b16 %v6278
    %v9156 = vunpack.c.h.b16 %v6278
    %v9157 = vunpack.c.l.b16 %v6279
    %v9158 = vunpack.c.h.b16 %v6279
    %v9159 = vunpack.c.l.b16 %v6280
    %v9160 = vunpack.c.h.b16 %v6280
    %v9161 = vunpack.c.l.b16 %v6281
    %v9162 = vunpack.c.h.b16 %v6281
    %v9163 = vunpack.c.l.b16 %v6282
    %v9164 = vunpack.c.h.b16 %v6282
    %v9165 = vunpack.c.l.b16 %v6283
    %v9166 = vunpack.c.h.b16 %v6283
    %v9167 = vunpack.c.l.b16 %v6284
    %v9168 = vunpack.c.h.b16 %v6284
    %v9169 = vunpack.c.l.b16 %v6285
    %v9170 = vunpack.c.h.b16 %v6285
    %v9171 = vunpack.c.l.b16 %v6286
    %v9172 = vunpack.c.h.b16 %v6286
    %v9173 = vunpack.c.l.b16 %v6287
    %v9174 = vunpack.c.h.b16 %v6287
    %v9175 = vunpack.c.l.b16 %v6288
    %v9176 = vunpack.c.h.b16 %v6288
    %v9177 = vunpack.c.l.b16 %v6289
    %v9178 = vunpack.c.h.b16 %v6289
    %v9179 = vunpack.c.l.b16 %v6290
    %v9180 = vunpack.c.h.b16 %v6290
    %v9181 = vunpack.c.l.b16 %v6291
    %v9182 = vunpack.c.h.b16 %v6291
    %v9183 = vunpack.c.l.b16 %v6292
    %v9184 = vunpack.c.h.b16 %v6292
    %v9185 = vunpack.c.l.b16 %v6293
    %v9186 = vunpack.c.h.b16 %v6293
    %v9187 = vunpack.c.l.b16 %v6294
    %v9188 = vunpack.c.h.b16 %v6294
    %v9189 = vunpack.c.l.b16 %v6295
    %v9190 = vunpack.c.h.b16 %v6295
    %v9191 = vunpack.c.l.b16 %v6296
    %v9192 = vunpack.c.h.b16 %v6296
    %v9193 = vunpack.c.l.b16 %v6297
    %v9194 = vunpack.c.h.b16 %v6297
    %v9195 = vunpack.c.l.b16 %v6298
    %v9196 = vunpack.c.h.b16 %v6298
    %v9197 = vunpack.c.l.b16 %v6299
    %v9198 = vunpack.c.h.b16 %v6299
    %v9199 = vunpack.c.l.b16 %v6300
    %v9200 = vunpack.c.h.b16 %v6300
    %v9201 = vunpack.c.l.b16 %v6301
    %v9202 = vunpack.c.h.b16 %v6301
    %v9203 = vunpack.c.l.b16 %v6302
    %v9204 = vunpack.c.h.b16 %v6302
    %v9205 = vunpack.c.l.b16 %v6303
    %v9206 = vunpack.c.h.b16 %v6303
    %v9207 = vunpack.c.l.b16 %v6304
    %v9208 = vunpack.c.h.b16 %v6304
    %v9209 = vunpack.c.l.b16 %v6305
    %v9210 = vunpack.c.h.b16 %v6305
    %v9211 = vunpack.c.l.b16 %v6306
    %v9212 = vunpack.c.h.b16 %v6306
    %v9213 = vunpack.c.l.b16 %v6307
    %v9214 = vunpack.c.h.b16 %v6307
    %v9215 = vunpack.c.l.b16 %v6308
    %v9216 = vunpack.c.h.b16 %v6308
    %v9217 = vunpack.c.l.b16 %v6309
    %v9218 = vunpack.c.h.b16 %v6309
    %v9219 = vunpack.c.l.b16 %v6310
    %v9220 = vunpack.c.h.b16 %v6310
    %v9221 = vunpack.c.l.b16 %v6311
    %v9222 = vunpack.c.h.b16 %v6311
    %v9223 = vunpack.c.l.b16 %v6312
    %v9224 = vunpack.c.h.b16 %v6312
    %v9225 = vunpack.c.l.b16 %v6313
    %v9226 = vunpack.c.h.b16 %v6313
    %v9227 = vunpack.c.l.b16 %v6314
    %v9228 = vunpack.c.h.b16 %v6314
    %v9229 = vunpack.c.l.b16 %v6315
    %v9230 = vunpack.c.h.b16 %v6315
    %v9231 = vunpack.c.l.b16 %v6316
    %v9232 = vunpack.c.h.b16 %v6316
    %v9233 = vunpack.c.l.b16 %v6317
    %v9234 = vunpack.c.h.b16 %v6317
    %v9235 = vunpack.c.l.b16 %v6318
    %v9236 = vunpack.c.h.b16 %v6318
    %v9237 = vunpack.c.l.b16 %v6319
    %v9238 = vunpack.c.h.b16 %v6319
    %v9239 = vunpack.c.l.b16 %v6320
    %v9240 = vunpack.c.h.b16 %v6320
    %v9241 = vunpack.c.l.b16 %v6321
    %v9242 = vunpack.c.h.b16 %v6321
    %v9243 = vunpack.c.l.b16 %v6322
    %v9244 = vunpack.c.h.b16 %v6322
    %v9245 = vunpack.c.l.b16 %v6323
    %v9246 = vunpack.c.h.b16 %v6323
    %v9247 = vunpack.c.l.b16 %v6324
    %v9248 = vunpack.c.h.b16 %v6324
    %v9249 = vunpack.c.l.b16 %v6325
    %v9250 = vunpack.c.h.b16 %v6325
    %v9251 = vunpack.c.l.b16 %v6326
    %v9252 = vunpack.c.h.b16 %v6326
    %v9253 = vunpack.c.l.b16 %v6327
    %v9254 = vunpack.c.h.b16 %v6327
    %v9255 = vunpack.c.l.b16 %v6328
    %v9256 = vunpack.c.h.b16 %v6328
    %v9257 = vunpack.c.l.b16 %v6329
    %v9258 = vunpack.c.h.b16 %v6329
    %v9259 = vunpack.c.l.b16 %v6330
    %v9260 = vunpack.c.h.b16 %v6330
    %v9261 = vunpack.c.l.b16 %v6331
    %v9262 = vunpack.c.h.b16 %v6331
    %v9263 = vunpack.c.l.b16 %v6332
    %v9264 = vunpack.c.h.b16 %v6332
    %v9265 = vunpack.c.l.b16 %v6333
    %v9266 = vunpack.c.h.b16 %v6333
    %v9267 = vunpack.c.l.b16 %v6334
    %v9268 = vunpack.c.h.b16 %v6334
    %v9269 = vunpack.c.l.b16 %v6335
    %v9270 = vunpack.c.h.b16 %v6335
    %v9271 = vunpack.c.l.b16 %v6336
    %v9272 = vunpack.c.h.b16 %v6336
    %v9273 = vunpack.c.l.b16 %v6337
    %v9274 = vunpack.c.h.b16 %v6337
    %v9275 = vunpack.c.l.b16 %v6338
    %v9276 = vunpack.c.h.b16 %v6338
    %v9277 = vunpack.c.l.b16 %v6339
    %v9278 = vunpack.c.h.b16 %v6339
    %v9279 = vunpack.c.l.b16 %v6340
    %v9280 = vunpack.c.h.b16 %v6340
    %v9281 = vunpack.c.l.b16 %v6341
    %v9282 = vunpack.c.h.b16 %v6341
    %v9283 = vunpack.c.l.b16 %v6342
    %v9284 = vunpack.c.h.b16 %v6342
    %v9285 = vunpack.c.l.b16 %v6343
    %v9286 = vunpack.c.h.b16 %v6343
    %v9287 = vunpack.c.l.b16 %v6344
    %v9288 = vunpack.c.h.b16 %v6344
    %v9289 = vunpack.c.l.b16 %v6345
    %v9290 = vunpack.c.h.b16 %v6345
    %v9291 = vunpack.c.l.b16 %v6346
    %v9292 = vunpack.c.h.b16 %v6346
    %v9293 = vunpack.c.l.b16 %v6347
    %v9294 = vunpack.c.h.b16 %v6347
    %v9295 = vunpack.c.l.b16 %v6348
    %v9296 = vunpack.c.h.b16 %v6348
    %v9297 = vunpack.c.l.b16 %v6349
    %v9298 = vunpack.c.h.b16 %v6349
    %v9299 = vunpack.c.l.b16 %v6350
    %v9300 = vunpack.c.h.b16 %v6350
    %v9301 = vunpack.c.l.b16 %v6351
    %v9302 = vunpack.c.h.b16 %v6351
    %v9303 = vunpack.c.l.b16 %v6352
    %v9304 = vunpack.c.h.b16 %v6352
    %v9305 = vunpack.c.l.b16 %v6353
    %v9306 = vunpack.c.h.b16 %v6353
    %v9307 = vunpack.c.l.b16 %v6354
    %v9308 = vunpack.c.h.b16 %v6354
    %v9309 = vunpack.c.l.b16 %v6355
    %v9310 = vunpack.c.h.b16 %v6355
    %v9311 = vunpack.c.l.b16 %v6356
    %v9312 = vunpack.c.h.b16 %v6356
    %v9313 = vunpack.c.l.b16 %v6357
    %v9314 = vunpack.c.h.b16 %v6357
    %v9315 = vunpack.c.l.b16 %v6358
    %v9316 = vunpack.c.h.b16 %v6358
    %v9317 = vunpack.c.l.b16 %v6359
    %v9318 = vunpack.c.h.b16 %v6359
    %v9319 = vunpack.c.l.b16 %v6360
    %v9320 = vunpack.c.h.b16 %v6360
    %v9321 = vunpack.c.l.b16 %v6361
    %v9322 = vunpack.c.h.b16 %v6361
    %v9323 = vunpack.c.l.b16 %v6362
    %v9324 = vunpack.c.h.b16 %v6362
    %v9325 = vunpack.c.l.b16 %v6363
    %v9326 = vunpack.c.h.b16 %v6363
    %v9327 = vunpack.c.l.b16 %v6364
    %v9328 = vunpack.c.h.b16 %v6364
    %v9329 = vunpack.c.l.b16 %v6365
    %v9330 = vunpack.c.h.b16 %v6365
    %v9331 = vunpack.c.l.b16 %v6366
    %v9332 = vunpack.c.h.b16 %v6366
    %v9333 = vunpack.c.l.b16 %v6367
    %v9334 = vunpack.c.h.b16 %v6367
    %v9335 = vunpack.c.l.b16 %v6368
    %v9336 = vunpack.c.h.b16 %v6368
    %v9337 = vunpack.c.l.b16 %v6369
    %v9338 = vunpack.c.h.b16 %v6369
    %v9339 = vunpack.c.l.b16 %v6370
    %v9340 = vunpack.c.h.b16 %v6370
    %v9341 = vunpack.c.l.b16 %v6371
    %v9342 = vunpack.c.h.b16 %v6371
    %v9343 = vunpack.c.l.b16 %v6372
    %v9344 = vunpack.c.h.b16 %v6372
    %v9345 = vunpack.c.l.b16 %v6373
    %v9346 = vunpack.c.h.b16 %v6373
    %v9347 = vunpack.c.l.b16 %v6374
    %v9348 = vunpack.c.h.b16 %v6374
    %v9349 = vunpack.c.l.b16 %v6375
    %v9350 = vunpack.c.h.b16 %v6375
    %v9351 = vunpack.c.l.b16 %v6376
    %v9352 = vunpack.c.h.b16 %v6376
    %v9353 = vunpack.c.l.b16 %v6377
    %v9354 = vunpack.c.h.b16 %v6377
    %v9355 = vunpack.c.l.b16 %v6378
    %v9356 = vunpack.c.h.b16 %v6378
    %v9357 = vunpack.c.l.b16 %v6379
    %v9358 = vunpack.c.h.b16 %v6379
    %v9359 = vunpack.c.l.b16 %v6380
    %v9360 = vunpack.c.h.b16 %v6380
    %v9361 = vunpack.c.l.b16 %v6381
    %v9362 = vunpack.c.h.b16 %v6381
    %v9363 = vunpack.c.l.b16 %v6382
    %v9364 = vunpack.c.h.b16 %v6382
    %v9365 = vunpack.c.l.b16 %v6383
    %v9366 = vunpack.c.h.b16 %v6383
    %v9367 = vunpack.c.l.b16 %v6384
    %v9368 = vunpack.c.h.b16 %v6384
    %v9369 = vunpack.c.l.b16 %v6385
    %v9370 = vunpack.c.h.b16 %v6385
    %v9371 = vunpack.c.l.b16 %v6386
    %v9372 = vunpack.c.h.b16 %v6386
    %v9373 = vunpack.c.l.b16 %v6387
    %v9374 = vunpack.c.h.b16 %v6387
    %v9375 = vunpack.c.l.b16 %v6388
    %v9376 = vunpack.c.h.b16 %v6388
    %v9377 = vunpack.c.l.b16 %v6389
    %v9378 = vunpack.c.h.b16 %v6389
    %v9379 = vunpack.c.l.b16 %v6390
    %v9380 = vunpack.c.h.b16 %v6390
    %v9381 = vunpack.c.l.b16 %v6391
    %v9382 = vunpack.c.h.b16 %v6391
    %v9383 = vunpack.c.l.b16 %v6392
    %v9384 = vunpack.c.h.b16 %v6392
    %v9385 = vunpack.c.l.b16 %v6393
    %v9386 = vunpack.c.h.b16 %v6393
    %v9387 = vunpack.c.l.b16 %v6394
    %v9388 = vunpack.c.h.b16 %v6394
    %v9389 = vunpack.c.l.b16 %v6395
    %v9390 = vunpack.c.h.b16 %v6395
    %v9391 = vunpack.c.l.b16 %v6396
    %v9392 = vunpack.c.h.b16 %v6396
    %v9393 = vunpack.c.l.b16 %v6397
    %v9394 = vunpack.c.h.b16 %v6397
    %v9395 = vunpack.c.l.b16 %v6398
    %v9396 = vunpack.c.h.b16 %v6398
    %v9397 = vunpack.c.l.b16 %v6399
    %v9398 = vunpack.c.h.b16 %v6399
    %v9399 = vunpack.c.l.b16 %v6400
    %v9400 = vunpack.c.h.b16 %v6400
    %v9401 = vunpack.c.l.b16 %v6401
    %v9402 = vunpack.c.h.b16 %v6401
    %v9403 = vunpack.c.l.b16 %v6402
    %v9404 = vunpack.c.h.b16 %v6402
    %v9405 = vunpack.c.l.b16 %v6403
    %v9406 = vunpack.c.h.b16 %v6403
    %v9407 = vunpack.c.l.b16 %v6404
    %v9408 = vunpack.c.h.b16 %v6404
    %v9409 = vunpack.c.l.b16 %v6405
    %v9410 = vunpack.c.h.b16 %v6405
    %v9411 = vunpack.c.l.b16 %v6406
    %v9412 = vunpack.c.h.b16 %v6406
    %v9413 = vunpack.c.l.b16 %v6407
    %v9414 = vunpack.c.h.b16 %v6407
    %v9415 = vunpack.c.l.b16 %v6408
    %v9416 = vunpack.c.h.b16 %v6408
    %v9417 = vunpack.c.l.b16 %v6409
    %v9418 = vunpack.c.h.b16 %v6409
    %v9419 = vunpack.c.l.b16 %v6410
    %v9420 = vunpack.c.h.b16 %v6410
    %v9421 = vunpack.c.l.b16 %v6411
    %v9422 = vunpack.c.h.b16 %v6411
    %v9423 = vunpack.c.l.b16 %v6412
    %v9424 = vunpack.c.h.b16 %v6412
    %v9425 = vunpack.c.l.b16 %v6413
    %v9426 = vunpack.c.h.b16 %v6413
    %v9427 = vunpack.c.l.b16 %v6414
    %v9428 = vunpack.c.h.b16 %v6414
    %v9429 = vunpack.c.l.b16 %v6415
    %v9430 = vunpack.c.h.b16 %v6415
    %v9431 = vunpack.c.l.b16 %v6416
    %v9432 = vunpack.c.h.b16 %v6416
    %v9433 = vunpack.c.l.b16 %v6417
    %v9434 = vunpack.c.h.b16 %v6417
    %v9435 = vunpack.c.l.b16 %v6418
    %v9436 = vunpack.c.h.b16 %v6418
    %v9437 = vunpack.c.l.b16 %v6419
    %v9438 = vunpack.c.h.b16 %v6419
    %v9439 = vunpack.c.l.b16 %v6420
    %v9440 = vunpack.c.h.b16 %v6420
    %v9441 = vunpack.c.l.b16 %v6421
    %v9442 = vunpack.c.h.b16 %v6421
    %v9443 = vunpack.c.l.b16 %v6422
    %v9444 = vunpack.c.h.b16 %v6422
    %v9445 = vunpack.c.l.b16 %v6423
    %v9446 = vunpack.c.h.b16 %v6423
    %v9447 = vunpack.c.l.b16 %v6424
    %v9448 = vunpack.c.h.b16 %v6424
    %v9449 = vunpack.c.l.b16 %v6425
    %v9450 = vunpack.c.h.b16 %v6425
    %v9451 = vunpack.c.l.b16 %v6426
    %v9452 = vunpack.c.h.b16 %v6426
    %v9453 = vunpack.c.l.b16 %v6427
    %v9454 = vunpack.c.h.b16 %v6427
    %v9455 = vunpack.c.l.b16 %v6428
    %v9456 = vunpack.c.h.b16 %v6428
    %v9457 = vunpack.c.l.b16 %v6429
    %v9458 = vunpack.c.h.b16 %v6429
    %v9459 = vunpack.c.l.b16 %v6430
    %v9460 = vunpack.c.h.b16 %v6430
    %v9461 = vunpack.c.l.b16 %v6431
    %v9462 = vunpack.c.h.b16 %v6431
    %v9463 = vunpack.c.l.b16 %v6432
    %v9464 = vunpack.c.h.b16 %v6432
    %v9465 = vunpack.c.l.b16 %v6433
    %v9466 = vunpack.c.h.b16 %v6433
    %v9467 = vunpack.c.l.b16 %v6434
    %v9468 = vunpack.c.h.b16 %v6434
    %v9469 = vunpack.c.l.b16 %v6435
    %v9470 = vunpack.c.h.b16 %v6435
    %v9471 = vunpack.c.l.b16 %v6436
    %v9472 = vunpack.c.h.b16 %v6436
    %v9473 = vunpack.c.l.b16 %v6437
    %v9474 = vunpack.c.h.b16 %v6437
    %v9475 = vunpack.c.l.b16 %v6438
    %v9476 = vunpack.c.h.b16 %v6438
    %v9477 = vunpack.c.l.b16 %v6439
    %v9478 = vunpack.c.h.b16 %v6439
    %v9479 = vunpack.c.l.b16 %v6440
    %v9480 = vunpack.c.h.b16 %v6440
    %v9481 = vunpack.c.l.b16 %v6441
    %v9482 = vunpack.c.h.b16 %v6441
    %v9483 = vunpack.c.l.b16 %v6442
    %v9484 = vunpack.c.h.b16 %v6442
    %v9485 = vunpack.c.l.b16 %v6443
    %v9486 = vunpack.c.h.b16 %v6443
    %v9487 = vunpack.c.l.b16 %v6444
    %v9488 = vunpack.c.h.b16 %v6444
    %v9489 = vunpack.c.l.b16 %v6445
    %v9490 = vunpack.c.h.b16 %v6445
    %v9491 = vunpack.c.l.b16 %v6446
    %v9492 = vunpack.c.h.b16 %v6446
    %v9493 = vunpack.c.l.b16 %v6447
    %v9494 = vunpack.c.h.b16 %v6447
    %v9495 = vunpack.c.l.b16 %v6448
    %v9496 = vunpack.c.h.b16 %v6448
    %v9497 = vunpack.c.l.b16 %v6449
    %v9498 = vunpack.c.h.b16 %v6449
    %v9499 = vunpack.c.l.b16 %v6450
    %v9500 = vunpack.c.h.b16 %v6450
    %v9501 = vunpack.c.l.b16 %v6451
    %v9502 = vunpack.c.h.b16 %v6451
    %v9503 = vunpack.c.l.b16 %v6452
    %v9504 = vunpack.c.h.b16 %v6452
    %v9505 = vunpack.c.l.b16 %v6453
    %v9506 = vunpack.c.h.b16 %v6453
    %v9507 = vunpack.c.l.b16 %v6454
    %v9508 = vunpack.c.h.b16 %v6454
    %v9509 = vunpack.c.l.b16 %v6455
    %v9510 = vunpack.c.h.b16 %v6455
    %v9511 = vunpack.c.l.b16 %v6456
    %v9512 = vunpack.c.h.b16 %v6456
    %v9513 = vunpack.c.l.b16 %v6457
    %v9514 = vunpack.c.h.b16 %v6457
    %v9515 = vunpack.c.l.b16 %v6458
    %v9516 = vunpack.c.h.b16 %v6458
    %v9517 = vunpack.c.l.b16 %v6459
    %v9518 = vunpack.c.h.b16 %v6459
    %v9519 = vunpack.c.l.b16 %v6460
    %v9520 = vunpack.c.h.b16 %v6460
    %v9521 = vunpack.c.l.b16 %v6461
    %v9522 = vunpack.c.h.b16 %v6461
    %v9523 = vunpack.c.l.b16 %v6462
    %v9524 = vunpack.c.h.b16 %v6462
    %v9525 = vunpack.c.l.b16 %v6463
    %v9526 = vunpack.c.h.b16 %v6463
    %v9527 = vunpack.c.l.b16 %v6464
    %v9528 = vunpack.c.h.b16 %v6464
    %v9529 = vunpack.c.l.b16 %v6465
    %v9530 = vunpack.c.h.b16 %v6465
    %v9531 = vunpack.c.l.b16 %v6466
    %v9532 = vunpack.c.h.b16 %v6466
    %v9533 = vunpack.c.l.b16 %v6467
    %v9534 = vunpack.c.h.b16 %v6467
    %v9535 = vunpack.c.l.b16 %v6468
    %v9536 = vunpack.c.h.b16 %v6468
    %v9537 = vunpack.c.l.b16 %v6469
    %v9538 = vunpack.c.h.b16 %v6469
    %v9539 = vunpack.c.l.b16 %v6470
    %v9540 = vunpack.c.h.b16 %v6470
    %v9541 = vunpack.c.l.b16 %v6471
    %v9542 = vunpack.c.h.b16 %v6471
    %v9543 = vunpack.c.l.b16 %v6472
    %v9544 = vunpack.c.h.b16 %v6472
    %v9545 = vunpack.c.l.b16 %v6473
    %v9546 = vunpack.c.h.b16 %v6473
    %v9547 = vunpack.c.l.b16 %v6474
    %v9548 = vunpack.c.h.b16 %v6474
    %v9549 = vunpack.c.l.b16 %v6475
    %v9550 = vunpack.c.h.b16 %v6475
    %v9551 = vunpack.c.l.b16 %v6476
    %v9552 = vunpack.c.h.b16 %v6476
    %v9553 = vunpack.c.l.b16 %v6477
    %v9554 = vunpack.c.h.b16 %v6477
    %v9555 = vunpack.c.l.b16 %v6478
    %v9556 = vunpack.c.h.b16 %v6478
    %v9557 = vunpack.c.l.b16 %v6479
    %v9558 = vunpack.c.h.b16 %v6479
    %v9559 = vunpack.c.l.b16 %v6480
    %v9560 = vunpack.c.h.b16 %v6480
    %v9561 = vunpack.c.l.b16 %v6481
    %v9562 = vunpack.c.h.b16 %v6481
    %v9563 = vunpack.c.l.b16 %v6482
    %v9564 = vunpack.c.h.b16 %v6482
    %v9565 = vunpack.c.l.b16 %v6483
    %v9566 = vunpack.c.h.b16 %v6483
    %v9567 = vunpack.c.l.b16 %v6484
    %v9568 = vunpack.c.h.b16 %v6484
    %v9569 = vunpack.c.l.b16 %v6485
    %v9570 = vunpack.c.h.b16 %v6485
    %v9571 = vunpack.c.l.b16 %v6486
    %v9572 = vunpack.c.h.b16 %v6486
    %v9573 = vunpack.c.l.b16 %v6487
    %v9574 = vunpack.c.h.b16 %v6487
    %v9575 = vunpack.c.l.b16 %v6488
    %v9576 = vunpack.c.h.b16 %v6488
    %v9577 = vunpack.c.l.b16 %v6489
    %v9578 = vunpack.c.h.b16 %v6489
    %v9579 = vunpack.c.l.b16 %v6490
    %v9580 = vunpack.c.h.b16 %v6490
    %v9581 = vpack.c.b16 %v7541, %v7533
    %v9582 = vpack.c.b16 %v7542, %v7534
    %v9583 = vpack.c.b16 %v7543, %v7535
    %v9584 = vpack.c.b16 %v7544, %v7536
    %v9585 = vpack.c.b16 %v7545, %v7537
    %v9586 = vpack.c.b16 %v7546, %v7538
    %v9587 = vpack.c.b16 %v7547, %v7539
    %v9588 = vpack.c.b16 %v7548, %v7540
    %v9589 = vpack.c.b16 %v7557, %v7549
    %v9590 = vpack.c.b16 %v7558, %v7550
    %v9591 = vpack.c.b16 %v7559, %v7551
    %v9592 = vpack.c.b16 %v7560, %v7552
    %v9593 = vpack.c.b16 %v7561, %v7553
    %v9594 = vpack.c.b16 %v7562, %v7554
    %v9595 = vpack.c.b16 %v7563, %v7555
    %v9596 = vpack.c.b16 %v7564, %v7556
    %v9597 = vpack.c.b16 %v7573, %v7565
    %v9598 = vpack.c.b16 %v7574, %v7566
    %v9599 = vpack.c.b16 %v7575, %v7567
    %v9600 = vpack.c.b16 %v7576, %v7568
    %v9601 = vpack.c.b16 %v7577, %v7569
    %v9602 = vpack.c.b16 %v7578, %v7570
    %v9603 = vpack.c.b16 %v7579, %v7571
    %v9604 = vpack.c.b16 %v7580, %v7572
    %v9605 = vpack.c.b16 %v7589, %v7581
    %v9606 = vpack.c.b16 %v7590, %v7582
    %v9607 = vpack.c.b16 %v7591, %v7583
    %v9608 = vpack.c.b16 %v7592, %v7584
    %v9609 = vpack.c.b16 %v7593, %v7585
    %v9610 = vpack.c.b16 %v7594, %v7586
    %v9611 = vpack.c.b16 %v7595, %v7587
    %v9612 = vpack.c.b16 %v7596, %v7588
    %v9613 = vpack.c.b16 %v7605, %v7597
    %v9614 = vpack.c.b16 %v7606, %v7598
    %v9615 = vpack.c.b16 %v7607, %v7599
    %v9616 = vpack.c.b16 %v7608, %v7600
    %v9617 = vpack.c.b16 %v7609, %v7601
    %v9618 = vpack.c.b16 %v7610, %v7602
    %v9619 = vpack.c.b16 %v7611, %v7603
    %v9620 = vpack.c.b16 %v7612, %v7604
    %v9621 = vpack.c.b16 %v7621, %v7613
    %v9622 = vpack.c.b16 %v7622, %v7614
    %v9623 = vpack.c.b16 %v7623, %v7615
    %v9624 = vpack.c.b16 %v7624, %v7616
    %v9625 = vpack.c.b16 %v7625, %v7617
    %v9626 = vpack.c.b16 %v7626, %v7618
    %v9627 = vpack.c.b16 %v7627, %v7619
    %v9628 = vpack.c.b16 %v7628, %v7620
    %v9629 = vpack.c.b16 %v7637, %v7629
    %v9630 = vpack.c.b16 %v7638, %v7630
    %v9631 = vpack.c.b16 %v7639, %v7631
    %v9632 = vpack.c.b16 %v7640, %v7632
    %v9633 = vpack.c.b16 %v7641, %v7633
    %v9634 = vpack.c.b16 %v7642, %v7634
    %v9635 = vpack.c.b16 %v7643, %v7635
    %v9636 = vpack.c.b16 %v7644, %v7636
    %v9637 = vpack.c.b16 %v7653, %v7645
    %v9638 = vpack.c.b16 %v7654, %v7646
    %v9639 = vpack.c.b16 %v7655, %v7647
    %v9640 = vpack.c.b16 %v7656, %v7648
    %v9641 = vpack.c.b16 %v7657, %v7649
    %v9642 = vpack.c.b16 %v7658, %v7650
    %v9643 = vpack.c.b16 %v7659, %v7651
    %v9644 = vpack.c.b16 %v7660, %v7652
    %v9645 = vpack.c.b16 %v7669, %v7661
    %v9646 = vpack.c.b16 %v7670, %v7662
    %v9647 = vpack.c.b16 %v7671, %v7663
    %v9648 = vpack.c.b16 %v7672, %v7664
    %v9649 = vpack.c.b16 %v7673, %v7665
    %v9650 = vpack.c.b16 %v7674, %v7666
    %v9651 = vpack.c.b16 %v7675, %v7667
    %v9652 = vpack.c.b16 %v7676, %v7668
    %v9653 = vpack.c.b16 %v7685, %v7677
    %v9654 = vpack.c.b16 %v7686, %v7678
    %v9655 = vpack.c.b16 %v7687, %v7679
    %v9656 = vpack.c.b16 %v7688, %v7680
    %v9657 = vpack.c.b16 %v7689, %v7681
    %v9658 = vpack.c.b16 %v7690, %v7682
    %v9659 = vpack.c.b16 %v7691, %v7683
    %v9660 = vpack.c.b16 %v7692, %v7684
    %v9661 = vpack.c.b16 %v7701, %v7693
    %v9662 = vpack.c.b16 %v7702, %v7694
    %v9663 = vpack.c.b16 %v7703, %v7695
    %v9664 = vpack.c.b16 %v7704, %v7696
    %v9665 = vpack.c.b16 %v7705, %v7697
    %v9666 = vpack.c.b16 %v7706, %v7698
    %v9667 = vpack.c.b16 %v7707, %v7699
    %v9668 = vpack.c.b16 %v7708, %v7700
    %v9669 = vpack.c.b16 %v7717, %v7709
    %v9670 = vpack.c.b16 %v7718, %v7710
    %v9671 = vpack.c.b16 %v7719, %v7711
    %v9672 = vpack.c.b16 %v7720, %v7712
    %v9673 = vpack.c.b16 %v7721, %v7713
    %v9674 = vpack.c.b16 %v7722, %v7714
    %v9675 = vpack.c.b16 %v7723, %v7715
    %v9676 = vpack.c.b16 %v7724, %v7716
    %v9677 = vpack.c.b16 %v7733, %v7725
    %v9678 = vpack.c.b16 %v7734, %v7726
    %v9679 = vpack.c.b16 %v7735, %v7727
    %v9680 = vpack.c.b16 %v7736, %v7728
    %v9681 = vpack.c.b16 %v7737, %v7729
    %v9682 = vpack.c.b16 %v7738, %v7730
    %v9683 = vpack.c.b16 %v7739, %v7731
    %v9684 = vpack.c.b16 %v7740, %v7732
    %v9685 = vpack.c.b16 %v7749, %v7741
    %v9686 = vpack.c.b16 %v7750, %v7742
    %v9687 = vpack.c.b16 %v7751, %v7743
    %v9688 = vpack.c.b16 %v7752, %v7744
    %v9689 = vpack.c.b16 %v7753, %v7745
    %v9690 = vpack.c.b16 %v7754, %v7746
    %v9691 = vpack.c.b16 %v7755, %v7747
    %v9692 = vpack.c.b16 %v7756, %v7748
    %v9693 = vpack.c.b16 %v7765, %v7757
    %v9694 = vpack.c.b16 %v7766, %v7758
    %v9695 = vpack.c.b16 %v7767, %v7759
    %v9696 = vpack.c.b16 %v7768, %v7760
    %v9697 = vpack.c.b16 %v7769, %v7761
    %v9698 = vpack.c.b16 %v7770, %v7762
    %v9699 = vpack.c.b16 %v7771, %v7763
    %v9700 = vpack.c.b16 %v7772, %v7764
    %v9701 = vpack.c.b16 %v7781, %v7773
    %v9702 = vpack.c.b16 %v7782, %v7774
    %v9703 = vpack.c.b16 %v7783, %v7775
    %v9704 = vpack.c.b16 %v7784, %v7776
    %v9705 = vpack.c.b16 %v7785, %v7777
    %v9706 = vpack.c.b16 %v7786, %v7778
    %v9707 = vpack.c.b16 %v7787, %v7779
    %v9708 = vpack.c.b16 %v7788, %v7780
    %v9709 = vpack.c.b16 %v7797, %v7789
    %v9710 = vpack.c.b16 %v7798, %v7790
    %v9711 = vpack.c.b16 %v7799, %v7791
    %v9712 = vpack.c.b16 %v7800, %v7792
    %v9713 = vpack.c.b16 %v7801, %v7793
    %v9714 = vpack.c.b16 %v7802, %v7794
    %v9715 = vpack.c.b16 %v7803, %v7795
    %v9716 = vpack.c.b16 %v7804, %v7796
    %v9717 = vpack.c.b16 %v7813, %v7805
    %v9718 = vpack.c.b16 %v7814, %v7806
    %v9719 = vpack.c.b16 %v7815, %v7807
    %v9720 = vpack.c.b16 %v7816, %v7808
    %v9721 = vpack.c.b16 %v7817, %v7809
    %v9722 = vpack.c.b16 %v7818, %v7810
    %v9723 = vpack.c.b16 %v7819, %v7811
    %v9724 = vpack.c.b16 %v7820, %v7812
    %v9725 = vpack.c.b16 %v7829, %v7821
    %v9726 = vpack.c.b16 %v7830, %v7822
    %v9727 = vpack.c.b16 %v7831, %v7823
    %v9728 = vpack.c.b16 %v7832, %v7824
    %v9729 = vpack.c.b16 %v7833, %v7825
    %v9730 = vpack.c.b16 %v7834, %v7826
    %v9731 = vpack.c.b16 %v7835, %v7827
    %v9732 = vpack.c.b16 %v7836, %v7828
    %v9733 = vpack.c.b16 %v7845, %v7837
    %v9734 = vpack.c.b16 %v7846, %v7838
    %v9735 = vpack.c.b16 %v7847, %v7839
    %v9736 = vpack.c.b16 %v7848, %v7840
    %v9737 = vpack.c.b16 %v7849, %v7841
    %v9738 = vpack.c.b16 %v7850, %v7842
    %v9739 = vpack.c.b16 %v7851, %v7843
    %v9740 = vpack.c.b16 %v7852, %v7844
    %v9741 = vpack.c.b16 %v7861, %v7853
    %v9742 = vpack.c.b16 %v7862, %v7854
    %v9743 = vpack.c.b16 %v7863, %v7855
    %v9744 = vpack.c.b16 %v7864, %v7856
    %v9745 = vpack.c.b16 %v7865, %v7857
    %v9746 = vpack.c.b16 %v7866, %v7858
    %v9747 = vpack.c.b16 %v7867, %v7859
    %v9748 = vpack.c.b16 %v7868, %v7860
    %v9749 = vpack.c.b16 %v7877, %v7869
    %v9750 = vpack.c.b16 %v7878, %v7870
    %v9751 = vpack.c.b16 %v7879, %v7871
    %v9752 = vpack.c.b16 %v7880, %v7872
    %v9753 = vpack.c.b16 %v7881, %v7873
    %v9754 = vpack.c.b16 %v7882, %v7874
    %v9755 = vpack.c.b16 %v7883, %v7875
    %v9756 = vpack.c.b16 %v7884, %v7876
    %v9757 = vpack.c.b16 %v7893, %v7885
    %v9758 = vpack.c.b16 %v7894, %v7886
    %v9759 = vpack.c.b16 %v7895, %v7887
    %v9760 = vpack.c.b16 %v7896, %v7888
    %v9761 = vpack.c.b16 %v7897, %v7889
    %v9762 = vpack.c.b16 %v7898, %v7890
    %v9763 = vpack.c.b16 %v7899, %v7891
    %v9764 = vpack.c.b16 %v7900, %v7892
    %v9765 = vpack.c.b16 %v7909, %v7901
    %v9766 = vpack.c.b16 %v7910, %v7902
    %v9767 = vpack.c.b16 %v7911, %v7903
    %v9768 = vpack.c.b16 %v7912, %v7904
    %v9769 = vpack.c.b16 %v7913, %v7905
    %v9770 = vpack.c.b16 %v7914, %v7906
    %v9771 = vpack.c.b16 %v7915, %v7907
    %v9772 = vpack.c.b16 %v7916, %v7908
    %v9773 = vpack.c.b16 %v7925, %v7917
    %v9774 = vpack.c.b16 %v7926, %v7918
    %v9775 = vpack.c.b16 %v7927, %v7919
    %v9776 = vpack.c.b16 %v7928, %v7920
    %v9777 = vpack.c.b16 %v7929, %v7921
    %v9778 = vpack.c.b16 %v7930, %v7922
    %v9779 = vpack.c.b16 %v7931, %v7923
    %v9780 = vpack.c.b16 %v7932, %v7924
    %v9781 = vpack.c.b16 %v7941, %v7933
    %v9782 = vpack.c.b16 %v7942, %v7934
    %v9783 = vpack.c.b16 %v7943, %v7935
    %v9784 = vpack.c.b16 %v7944, %v7936
    %v9785 = vpack.c.b16 %v7945, %v7937
    %v9786 = vpack.c.b16 %v7946, %v7938
    %v9787 = vpack.c.b16 %v7947, %v7939
    %v9788 = vpack.c.b16 %v7948, %v7940
    %v9789 = vpack.c.b16 %v7957, %v7949
    %v9790 = vpack.c.b16 %v7958, %v7950
    %v9791 = vpack.c.b16 %v7959, %v7951
    %v9792 = vpack.c.b16 %v7960, %v7952
    %v9793 = vpack.c.b16 %v7961, %v7953
    %v9794 = vpack.c.b16 %v7962, %v7954
    %v9795 = vpack.c.b16 %v7963, %v7955
    %v9796 = vpack.c.b16 %v7964, %v7956
    %v9797 = vpack.c.b16 %v7973, %v7965
    %v9798 = vpack.c.b16 %v7974, %v7966
    %v9799 = vpack.c.b16 %v7975, %v7967
    %v9800 = vpack.c.b16 %v7976, %v7968
    %v9801 = vpack.c.b16 %v7977, %v7969
    %v9802 = vpack.c.b16 %v7978, %v7970
    %v9803 = vpack.c.b16 %v7979, %v7971
    %v9804 = vpack.c.b16 %v7980, %v7972
    %v9805 = vpack.c.b16 %v7989, %v7981
    %v9806 = vpack.c.b16 %v7990, %v7982
    %v9807 = vpack.c.b16 %v7991, %v7983
    %v9808 = vpack.c.b16 %v7992, %v7984
    %v9809 = vpack.c.b16 %v7993, %v7985
    %v9810 = vpack.c.b16 %v7994, %v7986
    %v9811 = vpack.c.b16 %v7995, %v7987
    %v9812 = vpack.c.b16 %v7996, %v7988
    %v9813 = vpack.c.b16 %v8005, %v7997
    %v9814 = vpack.c.b16 %v8006, %v7998
    %v9815 = vpack.c.b16 %v8007, %v7999
    %v9816 = vpack.c.b16 %v8008, %v8000
    %v9817 = vpack.c.b16 %v8009, %v8001
    %v9818 = vpack.c.b16 %v8010, %v8002
    %v9819 = vpack.c.b16 %v8011, %v8003
    %v9820 = vpack.c.b16 %v8012, %v8004
    %v9821 = vpack.c.b16 %v8021, %v8013
    %v9822 = vpack.c.b16 %v8022, %v8014
    %v9823 = vpack.c.b16 %v8023, %v8015
    %v9824 = vpack.c.b16 %v8024, %v8016
    %v9825 = vpack.c.b16 %v8025, %v8017
    %v9826 = vpack.c.b16 %v8026, %v8018
    %v9827 = vpack.c.b16 %v8027, %v8019
    %v9828 = vpack.c.b16 %v8028, %v8020
    %v9829 = vpack.c.b16 %v8037, %v8029
    %v9830 = vpack.c.b16 %v8038, %v8030
    %v9831 = vpack.c.b16 %v8039, %v8031
    %v9832 = vpack.c.b16 %v8040, %v8032
    %v9833 = vpack.c.b16 %v8041, %v8033
    %v9834 = vpack.c.b16 %v8042, %v8034
    %v9835 = vpack.c.b16 %v8043, %v8035
    %v9836 = vpack.c.b16 %v8044, %v8036
    %v9837 = vpack.c.b16 %v8053, %v8045
    %v9838 = vpack.c.b16 %v8054, %v8046
    %v9839 = vpack.c.b16 %v8055, %v8047
    %v9840 = vpack.c.b16 %v8056, %v8048
    %v9841 = vpack.c.b16 %v8057, %v8049
    %v9842 = vpack.c.b16 %v8058, %v8050
    %v9843 = vpack.c.b16 %v8059, %v8051
    %v9844 = vpack.c.b16 %v8060, %v8052
    %v9845 = vpack.c.b16 %v8069, %v8061
    %v9846 = vpack.c.b16 %v8070, %v8062
    %v9847 = vpack.c.b16 %v8071, %v8063
    %v9848 = vpack.c.b16 %v8072, %v8064
    %v9849 = vpack.c.b16 %v8073, %v8065
    %v9850 = vpack.c.b16 %v8074, %v8066
    %v9851 = vpack.c.b16 %v8075, %v8067
    %v9852 = vpack.c.b16 %v8076, %v8068
    %v9853 = vpack.c.b16 %v8085, %v8077
    %v9854 = vpack.c.b16 %v8086, %v8078
    %v9855 = vpack.c.b16 %v8087, %v8079
    %v9856 = vpack.c.b16 %v8088, %v8080
    %v9857 = vpack.c.b16 %v8089, %v8081
    %v9858 = vpack.c.b16 %v8090, %v8082
    %v9859 = vpack.c.b16 %v8091, %v8083
    %v9860 = vpack.c.b16 %v8092, %v8084
    %v9861 = vpack.c.b16 %v8101, %v8093
    %v9862 = vpack.c.b16 %v8102, %v8094
    %v9863 = vpack.c.b16 %v8103, %v8095
    %v9864 = vpack.c.b16 %v8104, %v8096
    %v9865 = vpack.c.b16 %v8105, %v8097
    %v9866 = vpack.c.b16 %v8106, %v8098
    %v9867 = vpack.c.b16 %v8107, %v8099
    %v9868 = vpack.c.b16 %v8108, %v8100
    %v9869 = vpack.c.b16 %v8117, %v8109
    %v9870 = vpack.c.b16 %v8118, %v8110
    %v9871 = vpack.c.b16 %v8119, %v8111
    %v9872 = vpack.c.b16 %v8120, %v8112
    %v9873 = vpack.c.b16 %v8121, %v8113
    %v9874 = vpack.c.b16 %v8122, %v8114
    %v9875 = vpack.c.b16 %v8123, %v8115
    %v9876 = vpack.c.b16 %v8124, %v8116
    %v9877 = vpack.c.b16 %v8133, %v8125
    %v9878 = vpack.c.b16 %v8134, %v8126
    %v9879 = vpack.c.b16 %v8135, %v8127
    %v9880 = vpack.c.b16 %v8136, %v8128
    %v9881 = vpack.c.b16 %v8137, %v8129
    %v9882 = vpack.c.b16 %v8138, %v8130
    %v9883 = vpack.c.b16 %v8139, %v8131
    %v9884 = vpack.c.b16 %v8140, %v8132
    %v9885 = vpack.c.b16 %v8149, %v8141
    %v9886 = vpack.c.b16 %v8150, %v8142
    %v9887 = vpack.c.b16 %v8151, %v8143
    %v9888 = vpack.c.b16 %v8152, %v8144
    %v9889 = vpack.c.b16 %v8153, %v8145
    %v9890 = vpack.c.b16 %v8154, %v8146
    %v9891 = vpack.c.b16 %v8155, %v8147
    %v9892 = vpack.c.b16 %v8156, %v8148
    %v9893 = vpack.c.b16 %v8165, %v8157
    %v9894 = vpack.c.b16 %v8166, %v8158
    %v9895 = vpack.c.b16 %v8167, %v8159
    %v9896 = vpack.c.b16 %v8168, %v8160
    %v9897 = vpack.c.b16 %v8169, %v8161
    %v9898 = vpack.c.b16 %v8170, %v8162
    %v9899 = vpack.c.b16 %v8171, %v8163
    %v9900 = vpack.c.b16 %v8172, %v8164
    %v9901 = vpack.c.b16 %v8181, %v8173
    %v9902 = vpack.c.b16 %v8182, %v8174
    %v9903 = vpack.c.b16 %v8183, %v8175
    %v9904 = vpack.c.b16 %v8184, %v8176
    %v9905 = vpack.c.b16 %v8185, %v8177
    %v9906 = vpack.c.b16 %v8186, %v8178
    %v9907 = vpack.c.b16 %v8187, %v8179
    %v9908 = vpack.c.b16 %v8188, %v8180
    %v9909 = vpack.c.b16 %v8197, %v8189
    %v9910 = vpack.c.b16 %v8198, %v8190
    %v9911 = vpack.c.b16 %v8199, %v8191
    %v9912 = vpack.c.b16 %v8200, %v8192
    %v9913 = vpack.c.b16 %v8201, %v8193
    %v9914 = vpack.c.b16 %v8202, %v8194
    %v9915 = vpack.c.b16 %v8203, %v8195
    %v9916 = vpack.c.b16 %v8204, %v8196
    %v9917 = vpack.c.b16 %v8213, %v8205
    %v9918 = vpack.c.b16 %v8214, %v8206
    %v9919 = vpack.c.b16 %v8215, %v8207
    %v9920 = vpack.c.b16 %v8216, %v8208
    %v9921 = vpack.c.b16 %v8217, %v8209
    %v9922 = vpack.c.b16 %v8218, %v8210
    %v9923 = vpack.c.b16 %v8219, %v8211
    %v9924 = vpack.c.b16 %v8220, %v8212
    %v9925 = vpack.c.b16 %v8229, %v8221
    %v9926 = vpack.c.b16 %v8230, %v8222
    %v9927 = vpack.c.b16 %v8231, %v8223
    %v9928 = vpack.c.b16 %v8232, %v8224
    %v9929 = vpack.c.b16 %v8233, %v8225
    %v9930 = vpack.c.b16 %v8234, %v8226
    %v9931 = vpack.c.b16 %v8235, %v8227
    %v9932 = vpack.c.b16 %v8236, %v8228
    %v9933 = vpack.c.b16 %v8245, %v8237
    %v9934 = vpack.c.b16 %v8246, %v8238
    %v9935 = vpack.c.b16 %v8247, %v8239
    %v9936 = vpack.c.b16 %v8248, %v8240
    %v9937 = vpack.c.b16 %v8249, %v8241
    %v9938 = vpack.c.b16 %v8250, %v8242
    %v9939 = vpack.c.b16 %v8251, %v8243
    %v9940 = vpack.c.b16 %v8252, %v8244
    %v9941 = vpack.c.b16 %v8261, %v8253
    %v9942 = vpack.c.b16 %v8262, %v8254
    %v9943 = vpack.c.b16 %v8263, %v8255
    %v9944 = vpack.c.b16 %v8264, %v8256
    %v9945 = vpack.c.b16 %v8265, %v8257
    %v9946 = vpack.c.b16 %v8266, %v8258
    %v9947 = vpack.c.b16 %v8267, %v8259
    %v9948 = vpack.c.b16 %v8268, %v8260
    %v9949 = vpack.c.b16 %v8277, %v8269
    %v9950 = vpack.c.b16 %v8278, %v8270
    %v9951 = vpack.c.b16 %v8279, %v8271
    %v9952 = vpack.c.b16 %v8280, %v8272
    %v9953 = vpack.c.b16 %v8281, %v8273
    %v9954 = vpack.c.b16 %v8282, %v8274
    %v9955 = vpack.c.b16 %v8283, %v8275
    %v9956 = vpack.c.b16 %v8284, %v8276
    %v9957 = vpack.c.b16 %v8293, %v8285
    %v9958 = vpack.c.b16 %v8294, %v8286
    %v9959 = vpack.c.b16 %v8295, %v8287
    %v9960 = vpack.c.b16 %v8296, %v8288
    %v9961 = vpack.c.b16 %v8297, %v8289
    %v9962 = vpack.c.b16 %v8298, %v8290
    %v9963 = vpack.c.b16 %v8299, %v8291
    %v9964 = vpack.c.b16 %v8300, %v8292
    %v9965 = vpack.c.b16 %v8309, %v8301
    %v9966 = vpack.c.b16 %v8310, %v8302
    %v9967 = vpack.c.b16 %v8311, %v8303
    %v9968 = vpack.c.b16 %v8312, %v8304
    %v9969 = vpack.c.b16 %v8313, %v8305
    %v9970 = vpack.c.b16 %v8314, %v8306
    %v9971 = vpack.c.b16 %v8315, %v8307
    %v9972 = vpack.c.b16 %v8316, %v8308
    %v9973 = vpack.c.b16 %v8325, %v8317
    %v9974 = vpack.c.b16 %v8326, %v8318
    %v9975 = vpack.c.b16 %v8327, %v8319
    %v9976 = vpack.c.b16 %v8328, %v8320
    %v9977 = vpack.c.b16 %v8329, %v8321
    %v9978 = vpack.c.b16 %v8330, %v8322
    %v9979 = vpack.c.b16 %v8331, %v8323
    %v9980 = vpack.c.b16 %v8332, %v8324
    %v9981 = vpack.c.b16 %v8341, %v8333
    %v9982 = vpack.c.b16 %v8342, %v8334
    %v9983 = vpack.c.b16 %v8343, %v8335
    %v9984 = vpack.c.b16 %v8344, %v8336
    %v9985 = vpack.c.b16 %v8345, %v8337
    %v9986 = vpack.c.b16 %v8346, %v8338
    %v9987 = vpack.c.b16 %v8347, %v8339
    %v9988 = vpack.c.b16 %v8348, %v8340
    %v9989 = vpack.c.b16 %v8357, %v8349
    %v9990 = vpack.c.b16 %v8358, %v8350
    %v9991 = vpack.c.b16 %v8359, %v8351
    %v9992 = vpack.c.b16 %v8360, %v8352
    %v9993 = vpack.c.b16 %v8361, %v8353
    %v9994 = vpack.c.b16 %v8362, %v8354
    %v9995 = vpack.c.b16 %v8363, %v8355
    %v9996 = vpack.c.b16 %v8364, %v8356
    %v9997 = vpack.c.b16 %v8373, %v8365
    %v9998 = vpack.c.b16 %v8374, %v8366
    %v9999 = vpack.c.b16 %v8375, %v8367
    %v10000 = vpack.c.b16 %v8376, %v8368
    %v10001 = vpack.c.b16 %v8377, %v8369
    %v10002 = vpack.c.b16 %v8378, %v8370
    %v10003 = vpack.c.b16 %v8379, %v8371
    %v10004 = vpack.c.b16 %v8380, %v8372
    %v10005 = vpack.c.b16 %v8389, %v8381
    %v10006 = vpack.c.b16 %v8390, %v8382
    %v10007 = vpack.c.b16 %v8391, %v8383
    %v10008 = vpack.c.b16 %v8392, %v8384
    %v10009 = vpack.c.b16 %v8393, %v8385
    %v10010 = vpack.c.b16 %v8394, %v8386
    %v10011 = vpack.c.b16 %v8395, %v8387
    %v10012 = vpack.c.b16 %v8396, %v8388
    %v10013 = vpack.c.b16 %v8405, %v8397
    %v10014 = vpack.c.b16 %v8406, %v8398
    %v10015 = vpack.c.b16 %v8407, %v8399
    %v10016 = vpack.c.b16 %v8408, %v8400
    %v10017 = vpack.c.b16 %v8409, %v8401
    %v10018 = vpack.c.b16 %v8410, %v8402
    %v10019 = vpack.c.b16 %v8411, %v8403
    %v10020 = vpack.c.b16 %v8412, %v8404
    %v10021 = vpack.c.b16 %v8421, %v8413
    %v10022 = vpack.c.b16 %v8422, %v8414
    %v10023 = vpack.c.b16 %v8423, %v8415
    %v10024 = vpack.c.b16 %v8424, %v8416
    %v10025 = vpack.c.b16 %v8425, %v8417
    %v10026 = vpack.c.b16 %v8426, %v8418
    %v10027 = vpack.c.b16 %v8427, %v8419
    %v10028 = vpack.c.b16 %v8428, %v8420
    %v10029 = vpack.c.b16 %v8437, %v8429
    %v10030 = vpack.c.b16 %v8438, %v8430
    %v10031 = vpack.c.b16 %v8439, %v8431
    %v10032 = vpack.c.b16 %v8440, %v8432
    %v10033 = vpack.c.b16 %v8441, %v8433
    %v10034 = vpack.c.b16 %v8442, %v8434
    %v10035 = vpack.c.b16 %v8443, %v8435
    %v10036 = vpack.c.b16 %v8444, %v8436
    %v10037 = vpack.c.b16 %v8453, %v8445
    %v10038 = vpack.c.b16 %v8454, %v8446
    %v10039 = vpack.c.b16 %v8455, %v8447
    %v10040 = vpack.c.b16 %v8456, %v8448
    %v10041 = vpack.c.b16 %v8457, %v8449
    %v10042 = vpack.c.b16 %v8458, %v8450
    %v10043 = vpack.c.b16 %v8459, %v8451
    %v10044 = vpack.c.b16 %v8460, %v8452
    %v10045 = vpack.c.b16 %v8469, %v8461
    %v10046 = vpack.c.b16 %v8470, %v8462
    %v10047 = vpack.c.b16 %v8471, %v8463
    %v10048 = vpack.c.b16 %v8472, %v8464
    %v10049 = vpack.c.b16 %v8473, %v8465
    %v10050 = vpack.c.b16 %v8474, %v8466
    %v10051 = vpack.c.b16 %v8475, %v8467
    %v10052 = vpack.c.b16 %v8476, %v8468
    %v10053 = vpack.c.b16 %v8485, %v8477
    %v10054 = vpack.c.b16 %v8486, %v8478
    %v10055 = vpack.c.b16 %v8487, %v8479
    %v10056 = vpack.c.b16 %v8488, %v8480
    %v10057 = vpack.c.b16 %v8489, %v8481
    %v10058 = vpack.c.b16 %v8490, %v8482
    %v10059 = vpack.c.b16 %v8491, %v8483
    %v10060 = vpack.c.b16 %v8492, %v8484
    %v10061 = vpack.c.b16 %v8501, %v8493
    %v10062 = vpack.c.b16 %v8502, %v8494
    %v10063 = vpack.c.b16 %v8503, %v8495
    %v10064 = vpack.c.b16 %v8504, %v8496
    %v10065 = vpack.c.b16 %v8505, %v8497
    %v10066 = vpack.c.b16 %v8506, %v8498
    %v10067 = vpack.c.b16 %v8507, %v8499
    %v10068 = vpack.c.b16 %v8508, %v8500
    %v10069 = vpack.c.b16 %v8517, %v8509
    %v10070 = vpack.c.b16 %v8518, %v8510
    %v10071 = vpack.c.b16 %v8519, %v8511
    %v10072 = vpack.c.b16 %v8520, %v8512
    %v10073 = vpack.c.b16 %v8521, %v8513
    %v10074 = vpack.c.b16 %v8522, %v8514
    %v10075 = vpack.c.b16 %v8523, %v8515
    %v10076 = vpack.c.b16 %v8524, %v8516
    %v10077 = vpack.c.b16 %v8533, %v8525
    %v10078 = vpack.c.b16 %v8534, %v8526
    %v10079 = vpack.c.b16 %v8535, %v8527
    %v10080 = vpack.c.b16 %v8536, %v8528
    %v10081 = vpack.c.b16 %v8537, %v8529
    %v10082 = vpack.c.b16 %v8538, %v8530
    %v10083 = vpack.c.b16 %v8539, %v8531
    %v10084 = vpack.c.b16 %v8540, %v8532
    %v10085 = vpack.c.b16 %v8549, %v8541
    %v10086 = vpack.c.b16 %v8550, %v8542
    %v10087 = vpack.c.b16 %v8551, %v8543
    %v10088 = vpack.c.b16 %v8552, %v8544
    %v10089 = vpack.c.b16 %v8553, %v8545
    %v10090 = vpack.c.b16 %v8554, %v8546
    %v10091 = vpack.c.b16 %v8555, %v8547
    %v10092 = vpack.c.b16 %v8556, %v8548
    %v10093 = vpack.c.b16 %v8565, %v8557
    %v10094 = vpack.c.b16 %v8566, %v8558
    %v10095 = vpack.c.b16 %v8567, %v8559
    %v10096 = vpack.c.b16 %v8568, %v8560
    %v10097 = vpack.c.b16 %v8569, %v8561
    %v10098 = vpack.c.b16 %v8570, %v8562
    %v10099 = vpack.c.b16 %v8571, %v8563
    %v10100 = vpack.c.b16 %v8572, %v8564
    %v10101 = vpack.c.b16 %v8581, %v8573
    %v10102 = vpack.c.b16 %v8582, %v8574
    %v10103 = vpack.c.b16 %v8583, %v8575
    %v10104 = vpack.c.b16 %v8584, %v8576
    %v10105 = vpack.c.b16 %v8585, %v8577
    %v10106 = vpack.c.b16 %v8586, %v8578
    %v10107 = vpack.c.b16 %v8587, %v8579
    %v10108 = vpack.c.b16 %v8588, %v8580
    %v10109 = vpack.c.b16 %v8597, %v8589
    %v10110 = vpack.c.b16 %v8598, %v8590
    %v10111 = vpack.c.b16 %v8599, %v8591
    %v10112 = vpack.c.b16 %v8600, %v8592
    %v10113 = vpack.c.b16 %v8601, %v8593
    %v10114 = vpack.c.b16 %v8602, %v8594
    %v10115 = vpack.c.b16 %v8603, %v8595
    %v10116 = vpack.c.b16 %v8604, %v8596
    %v10117 = vpack.c.b16 %v8613, %v8605
    %v10118 = vpack.c.b16 %v8614, %v8606
    %v10119 = vpack.c.b16 %v8615, %v8607
    %v10120 = vpack.c.b16 %v8616, %v8608
    %v10121 = vpack.c.b16 %v8617, %v8609
    %v10122 = vpack.c.b16 %v8618, %v8610
    %v10123 = vpack.c.b16 %v8619, %v8611
    %v10124 = vpack.c.b16 %v8620, %v8612
    %v10125 = vpack.c.b16 %v8629, %v8621
    %v10126 = vpack.c.b16 %v8630, %v8622
    %v10127 = vpack.c.b16 %v8631, %v8623
    %v10128 = vpack.c.b16 %v8632, %v8624
    %v10129 = vpack.c.b16 %v8633, %v8625
    %v10130 = vpack.c.b16 %v8634, %v8626
    %v10131 = vpack.c.b16 %v8635, %v8627
    %v10132 = vpack.c.b16 %v8636, %v8628
    %v10133 = vpack.c.b16 %v8645, %v8637
    %v10134 = vpack.c.b16 %v8646, %v8638
    %v10135 = vpack.c.b16 %v8647, %v8639
    %v10136 = vpack.c.b16 %v8648, %v8640
    %v10137 = vpack.c.b16 %v8649, %v8641
    %v10138 = vpack.c.b16 %v8650, %v8642
    %v10139 = vpack.c.b16 %v8651, %v8643
    %v10140 = vpack.c.b16 %v8652, %v8644
    %v10141 = vpack.c.b16 %v8661, %v8653
    %v10142 = vpack.c.b16 %v8662, %v8654
    %v10143 = vpack.c.b16 %v8663, %v8655
    %v10144 = vpack.c.b16 %v8664, %v8656
    %v10145 = vpack.c.b16 %v8665, %v8657
    %v10146 = vpack.c.b16 %v8666, %v8658
    %v10147 = vpack.c.b16 %v8667, %v8659
    %v10148 = vpack.c.b16 %v8668, %v8660
    %v10149 = vpack.c.b16 %v8677, %v8669
    %v10150 = vpack.c.b16 %v8678, %v8670
    %v10151 = vpack.c.b16 %v8679, %v8671
    %v10152 = vpack.c.b16 %v8680, %v8672
    %v10153 = vpack.c.b16 %v8681, %v8673
    %v10154 = vpack.c.b16 %v8682, %v8674
    %v10155 = vpack.c.b16 %v8683, %v8675
    %v10156 = vpack.c.b16 %v8684, %v8676
    %v10157 = vpack.c.b16 %v8693, %v8685
    %v10158 = vpack.c.b16 %v8694, %v8686
    %v10159 = vpack.c.b16 %v8695, %v8687
    %v10160 = vpack.c.b16 %v8696, %v8688
    %v10161 = vpack.c.b16 %v8697, %v8689
    %v10162 = vpack.c.b16 %v8698, %v8690
    %v10163 = vpack.c.b16 %v8699, %v8691
    %v10164 = vpack.c.b16 %v8700, %v8692
    %v10165 = vpack.c.b16 %v8709, %v8701
    %v10166 = vpack.c.b16 %v8710, %v8702
    %v10167 = vpack.c.b16 %v8711, %v8703
    %v10168 = vpack.c.b16 %v8712, %v8704
    %v10169 = vpack.c.b16 %v8713, %v8705
    %v10170 = vpack.c.b16 %v8714, %v8706
    %v10171 = vpack.c.b16 %v8715, %v8707
    %v10172 = vpack.c.b16 %v8716, %v8708
    %v10173 = vpack.c.b16 %v8725, %v8717
    %v10174 = vpack.c.b16 %v8726, %v8718
    %v10175 = vpack.c.b16 %v8727, %v8719
    %v10176 = vpack.c.b16 %v8728, %v8720
    %v10177 = vpack.c.b16 %v8729, %v8721
    %v10178 = vpack.c.b16 %v8730, %v8722
    %v10179 = vpack.c.b16 %v8731, %v8723
    %v10180 = vpack.c.b16 %v8732, %v8724
    %v10181 = vpack.c.b16 %v8741, %v8733
    %v10182 = vpack.c.b16 %v8742, %v8734
    %v10183 = vpack.c.b16 %v8743, %v8735
    %v10184 = vpack.c.b16 %v8744, %v8736
    %v10185 = vpack.c.b16 %v8745, %v8737
    %v10186 = vpack.c.b16 %v8746, %v8738
    %v10187 = vpack.c.b16 %v8747, %v8739
    %v10188 = vpack.c.b16 %v8748, %v8740
    %v10189 = vpack.c.b16 %v8757, %v8749
    %v10190 = vpack.c.b16 %v8758, %v8750
    %v10191 = vpack.c.b16 %v8759, %v8751
    %v10192 = vpack.c.b16 %v8760, %v8752
    %v10193 = vpack.c.b16 %v8761, %v8753
    %v10194 = vpack.c.b16 %v8762, %v8754
    %v10195 = vpack.c.b16 %v8763, %v8755
    %v10196 = vpack.c.b16 %v8764, %v8756
    %v10197 = vpack.c.b16 %v8773, %v8765
    %v10198 = vpack.c.b16 %v8774, %v8766
    %v10199 = vpack.c.b16 %v8775, %v8767
    %v10200 = vpack.c.b16 %v8776, %v8768
    %v10201 = vpack.c.b16 %v8777, %v8769
    %v10202 = vpack.c.b16 %v8778, %v8770
    %v10203 = vpack.c.b16 %v8779, %v8771
    %v10204 = vpack.c.b16 %v8780, %v8772
    %v10205 = vpack.c.b16 %v8789, %v8781
    %v10206 = vpack.c.b16 %v8790, %v8782
    %v10207 = vpack.c.b16 %v8791, %v8783
    %v10208 = vpack.c.b16 %v8792, %v8784
    %v10209 = vpack.c.b16 %v8793, %v8785
    %v10210 = vpack.c.b16 %v8794, %v8786
    %v10211 = vpack.c.b16 %v8795, %v8787
    %v10212 = vpack.c.b16 %v8796, %v8788
    %v10213 = vpack.c.b16 %v8805, %v8797
    %v10214 = vpack.c.b16 %v8806, %v8798
    %v10215 = vpack.c.b16 %v8807, %v8799
    %v10216 = vpack.c.b16 %v8808, %v8800
    %v10217 = vpack.c.b16 %v8809, %v8801
    %v10218 = vpack.c.b16 %v8810, %v8802
    %v10219 = vpack.c.b16 %v8811, %v8803
    %v10220 = vpack.c.b16 %v8812, %v8804
    %v10221 = vpack.c.b16 %v8821, %v8813
    %v10222 = vpack.c.b16 %v8822, %v8814
    %v10223 = vpack.c.b16 %v8823, %v8815
    %v10224 = vpack.c.b16 %v8824, %v8816
    %v10225 = vpack.c.b16 %v8825, %v8817
    %v10226 = vpack.c.b16 %v8826, %v8818
    %v10227 = vpack.c.b16 %v8827, %v8819
    %v10228 = vpack.c.b16 %v8828, %v8820
    %v10229 = vpack.c.b16 %v8837, %v8829
    %v10230 = vpack.c.b16 %v8838, %v8830
    %v10231 = vpack.c.b16 %v8839, %v8831
    %v10232 = vpack.c.b16 %v8840, %v8832
    %v10233 = vpack.c.b16 %v8841, %v8833
    %v10234 = vpack.c.b16 %v8842, %v8834
    %v10235 = vpack.c.b16 %v8843, %v8835
    %v10236 = vpack.c.b16 %v8844, %v8836
    %v10237 = vpack.c.b16 %v8853, %v8845
    %v10238 = vpack.c.b16 %v8854, %v8846
    %v10239 = vpack.c.b16 %v8855, %v8847
    %v10240 = vpack.c.b16 %v8856, %v8848
    %v10241 = vpack.c.b16 %v8857, %v8849
    %v10242 = vpack.c.b16 %v8858, %v8850
    %v10243 = vpack.c.b16 %v8859, %v8851
    %v10244 = vpack.c.b16 %v8860, %v8852
    %v10245 = vpack.c.b16 %v8869, %v8861
    %v10246 = vpack.c.b16 %v8870, %v8862
    %v10247 = vpack.c.b16 %v8871, %v8863
    %v10248 = vpack.c.b16 %v8872, %v8864
    %v10249 = vpack.c.b16 %v8873, %v8865
    %v10250 = vpack.c.b16 %v8874, %v8866
    %v10251 = vpack.c.b16 %v8875, %v8867
    %v10252 = vpack.c.b16 %v8876, %v8868
    %v10253 = vpack.c.b16 %v8885, %v8877
    %v10254 = vpack.c.b16 %v8886, %v8878
    %v10255 = vpack.c.b16 %v8887, %v8879
    %v10256 = vpack.c.b16 %v8888, %v8880
    %v10257 = vpack.c.b16 %v8889, %v8881
    %v10258 = vpack.c.b16 %v8890, %v8882
    %v10259 = vpack.c.b16 %v8891, %v8883
    %v10260 = vpack.c.b16 %v8892, %v8884
    %v10261 = vpack.c.b16 %v8901, %v8893
    %v10262 = vpack.c.b16 %v8902, %v8894
    %v10263 = vpack.c.b16 %v8903, %v8895
    %v10264 = vpack.c.b16 %v8904, %v8896
    %v10265 = vpack.c.b16 %v8905, %v8897
    %v10266 = vpack.c.b16 %v8906, %v8898
    %v10267 = vpack.c.b16 %v8907, %v8899
    %v10268 = vpack.c.b16 %v8908, %v8900
    %v10269 = vpack.c.b16 %v8917, %v8909
    %v10270 = vpack.c.b16 %v8918, %v8910
    %v10271 = vpack.c.b16 %v8919, %v8911
    %v10272 = vpack.c.b16 %v8920, %v8912
    %v10273 = vpack.c.b16 %v8921, %v8913
    %v10274 = vpack.c.b16 %v8922, %v8914
    %v10275 = vpack.c.b16 %v8923, %v8915
    %v10276 = vpack.c.b16 %v8924, %v8916
    %v10277 = vpack.c.b16 %v8933, %v8925
    %v10278 = vpack.c.b16 %v8934, %v8926
    %v10279 = vpack.c.b16 %v8935, %v8927
    %v10280 = vpack.c.b16 %v8936, %v8928
    %v10281 = vpack.c.b16 %v8937, %v8929
    %v10282 = vpack.c.b16 %v8938, %v8930
    %v10283 = vpack.c.b16 %v8939, %v8931
    %v10284 = vpack.c.b16 %v8940, %v8932
    %v10285 = vpack.c.b16 %v8949, %v8941
    %v10286 = vpack.c.b16 %v8950, %v8942
    %v10287 = vpack.c.b16 %v8951, %v8943
    %v10288 = vpack.c.b16 %v8952, %v8944
    %v10289 = vpack.c.b16 %v8953, %v8945
    %v10290 = vpack.c.b16 %v8954, %v8946
    %v10291 = vpack.c.b16 %v8955, %v8947
    %v10292 = vpack.c.b16 %v8956, %v8948
    %v10293 = vpack.c.b16 %v8965, %v8957
    %v10294 = vpack.c.b16 %v8966, %v8958
    %v10295 = vpack.c.b16 %v8967, %v8959
    %v10296 = vpack.c.b16 %v8968, %v8960
    %v10297 = vpack.c.b16 %v8969, %v8961
    %v10298 = vpack.c.b16 %v8970, %v8962
    %v10299 = vpack.c.b16 %v8971, %v8963
    %v10300 = vpack.c.b16 %v8972, %v8964
    %v10301 = vpack.c.b16 %v8981, %v8973
    %v10302 = vpack.c.b16 %v8982, %v8974
    %v10303 = vpack.c.b16 %v8983, %v8975
    %v10304 = vpack.c.b16 %v8984, %v8976
    %v10305 = vpack.c.b16 %v8985, %v8977
    %v10306 = vpack.c.b16 %v8986, %v8978
    %v10307 = vpack.c.b16 %v8987, %v8979
    %v10308 = vpack.c.b16 %v8988, %v8980
    %v10309 = vpack.c.b16 %v8997, %v8989
    %v10310 = vpack.c.b16 %v8998, %v8990
    %v10311 = vpack.c.b16 %v8999, %v8991
    %v10312 = vpack.c.b16 %v9000, %v8992
    %v10313 = vpack.c.b16 %v9001, %v8993
    %v10314 = vpack.c.b16 %v9002, %v8994
    %v10315 = vpack.c.b16 %v9003, %v8995
    %v10316 = vpack.c.b16 %v9004, %v8996
    %v10317 = vpack.c.b16 %v9013, %v9005
    %v10318 = vpack.c.b16 %v9014, %v9006
    %v10319 = vpack.c.b16 %v9015, %v9007
    %v10320 = vpack.c.b16 %v9016, %v9008
    %v10321 = vpack.c.b16 %v9017, %v9009
    %v10322 = vpack.c.b16 %v9018, %v9010
    %v10323 = vpack.c.b16 %v9019, %v9011
    %v10324 = vpack.c.b16 %v9020, %v9012
    %v10325 = vpack.c.b16 %v9029, %v9021
    %v10326 = vpack.c.b16 %v9030, %v9022
    %v10327 = vpack.c.b16 %v9031, %v9023
    %v10328 = vpack.c.b16 %v9032, %v9024
    %v10329 = vpack.c.b16 %v9033, %v9025
    %v10330 = vpack.c.b16 %v9034, %v9026
    %v10331 = vpack.c.b16 %v9035, %v9027
    %v10332 = vpack.c.b16 %v9036, %v9028
    %v10333 = vpack.c.b16 %v9045, %v9037
    %v10334 = vpack.c.b16 %v9046, %v9038
    %v10335 = vpack.c.b16 %v9047, %v9039
    %v10336 = vpack.c.b16 %v9048, %v9040
    %v10337 = vpack.c.b16 %v9049, %v9041
    %v10338 = vpack.c.b16 %v9050, %v9042
    %v10339 = vpack.c.b16 %v9051, %v9043
    %v10340 = vpack.c.b16 %v9052, %v9044
    %v10341 = vpack.c.b16 %v9061, %v9053
    %v10342 = vpack.c.b16 %v9062, %v9054
    %v10343 = vpack.c.b16 %v9063, %v9055
    %v10344 = vpack.c.b16 %v9064, %v9056
    %v10345 = vpack.c.b16 %v9065, %v9057
    %v10346 = vpack.c.b16 %v9066, %v9058
    %v10347 = vpack.c.b16 %v9067, %v9059
    %v10348 = vpack.c.b16 %v9068, %v9060
    %v10349 = vpack.c.b16 %v9077, %v9069
    %v10350 = vpack.c.b16 %v9078, %v9070
    %v10351 = vpack.c.b16 %v9079, %v9071
    %v10352 = vpack.c.b16 %v9080, %v9072
    %v10353 = vpack.c.b16 %v9081, %v9073
    %v10354 = vpack.c.b16 %v9082, %v9074
    %v10355 = vpack.c.b16 %v9083, %v9075
    %v10356 = vpack.c.b16 %v9084, %v9076
    %v10357 = vpack.c.b16 %v9093, %v9085
    %v10358 = vpack.c.b16 %v9094, %v9086
    %v10359 = vpack.c.b16 %v9095, %v9087
    %v10360 = vpack.c.b16 %v9096, %v9088
    %v10361 = vpack.c.b16 %v9097, %v9089
    %v10362 = vpack.c.b16 %v9098, %v9090
    %v10363 = vpack.c.b16 %v9099, %v9091
    %v10364 = vpack.c.b16 %v9100, %v9092
    %v10365 = vpack.c.b16 %v9109, %v9101
    %v10366 = vpack.c.b16 %v9110, %v9102
    %v10367 = vpack.c.b16 %v9111, %v9103
    %v10368 = vpack.c.b16 %v9112, %v9104
    %v10369 = vpack.c.b16 %v9113, %v9105
    %v10370 = vpack.c.b16 %v9114, %v9106
    %v10371 = vpack.c.b16 %v9115, %v9107
    %v10372 = vpack.c.b16 %v9116, %v9108
    %v10373 = vpack.c.b16 %v9125, %v9117
    %v10374 = vpack.c.b16 %v9126, %v9118
    %v10375 = vpack.c.b16 %v9127, %v9119
    %v10376 = vpack.c.b16 %v9128, %v9120
    %v10377 = vpack.c.b16 %v9129, %v9121
    %v10378 = vpack.c.b16 %v9130, %v9122
    %v10379 = vpack.c.b16 %v9131, %v9123
    %v10380 = vpack.c.b16 %v9132, %v9124
    %v10381 = vpack.c.b16 %v9141, %v9133
    %v10382 = vpack.c.b16 %v9142, %v9134
    %v10383 = vpack.c.b16 %v9143, %v9135
    %v10384 = vpack.c.b16 %v9144, %v9136
    %v10385 = vpack.c.b16 %v9145, %v9137
    %v10386 = vpack.c.b16 %v9146, %v9138
    %v10387 = vpack.c.b16 %v9147, %v9139
    %v10388 = vpack.c.b16 %v9148, %v9140
    %v10389 = vpack.c.b16 %v9157, %v9149
    %v10390 = vpack.c.b16 %v9158, %v9150
    %v10391 = vpack.c.b16 %v9159, %v9151
    %v10392 = vpack.c.b16 %v9160, %v9152
    %v10393 = vpack.c.b16 %v9161, %v9153
    %v10394 = vpack.c.b16 %v9162, %v9154
    %v10395 = vpack.c.b16 %v9163, %v9155
    %v10396 = vpack.c.b16 %v9164, %v9156
    %v10397 = vpack.c.b16 %v9173, %v9165
    %v10398 = vpack.c.b16 %v9174, %v9166
    %v10399 = vpack.c.b16 %v9175, %v9167
    %v10400 = vpack.c.b16 %v9176, %v9168
    %v10401 = vpack.c.b16 %v9177, %v9169
    %v10402 = vpack.c.b16 %v9178, %v9170
    %v10403 = vpack.c.b16 %v9179, %v9171
    %v10404 = vpack.c.b16 %v9180, %v9172
    %v10405 = vpack.c.b16 %v9189, %v9181
    %v10406 = vpack.c.b16 %v9190, %v9182
    %v10407 = vpack.c.b16 %v9191, %v9183
    %v10408 = vpack.c.b16 %v9192, %v9184
    %v10409 = vpack.c.b16 %v9193, %v9185
    %v10410 = vpack.c.b16 %v9194, %v9186
    %v10411 = vpack.c.b16 %v9195, %v9187
    %v10412 = vpack.c.b16 %v9196, %v9188
    %v10413 = vpack.c.b16 %v9205, %v9197
    %v10414 = vpack.c.b16 %v9206, %v9198
    %v10415 = vpack.c.b16 %v9207, %v9199
    %v10416 = vpack.c.b16 %v9208, %v9200
    %v10417 = vpack.c.b16 %v9209, %v9201
    %v10418 = vpack.c.b16 %v9210, %v9202
    %v10419 = vpack.c.b16 %v9211, %v9203
    %v10420 = vpack.c.b16 %v9212, %v9204
    %v10421 = vpack.c.b16 %v9221, %v9213
    %v10422 = vpack.c.b16 %v9222, %v9214
    %v10423 = vpack.c.b16 %v9223, %v9215
    %v10424 = vpack.c.b16 %v9224, %v9216
    %v10425 = vpack.c.b16 %v9225, %v9217
    %v10426 = vpack.c.b16 %v9226, %v9218
    %v10427 = vpack.c.b16 %v9227, %v9219
    %v10428 = vpack.c.b16 %v9228, %v9220
    %v10429 = vpack.c.b16 %v9237, %v9229
    %v10430 = vpack.c.b16 %v9238, %v9230
    %v10431 = vpack.c.b16 %v9239, %v9231
    %v10432 = vpack.c.b16 %v9240, %v9232
    %v10433 = vpack.c.b16 %v9241, %v9233
    %v10434 = vpack.c.b16 %v9242, %v9234
    %v10435 = vpack.c.b16 %v9243, %v9235
    %v10436 = vpack.c.b16 %v9244, %v9236
    %v10437 = vpack.c.b16 %v9253, %v9245
    %v10438 = vpack.c.b16 %v9254, %v9246
    %v10439 = vpack.c.b16 %v9255, %v9247
    %v10440 = vpack.c.b16 %v9256, %v9248
    %v10441 = vpack.c.b16 %v9257, %v9249
    %v10442 = vpack.c.b16 %v9258, %v9250
    %v10443 = vpack.c.b16 %v9259, %v9251
    %v10444 = vpack.c.b16 %v9260, %v9252
    %v10445 = vpack.c.b16 %v9269, %v9261
    %v10446 = vpack.c.b16 %v9270, %v9262
    %v10447 = vpack.c.b16 %v9271, %v9263
    %v10448 = vpack.c.b16 %v9272, %v9264
    %v10449 = vpack.c.b16 %v9273, %v9265
    %v10450 = vpack.c.b16 %v9274, %v9266
    %v10451 = vpack.c.b16 %v9275, %v9267
    %v10452 = vpack.c.b16 %v9276, %v9268
    %v10453 = vpack.c.b16 %v9285, %v9277
    %v10454 = vpack.c.b16 %v9286, %v9278
    %v10455 = vpack.c.b16 %v9287, %v9279
    %v10456 = vpack.c.b16 %v9288, %v9280
    %v10457 = vpack.c.b16 %v9289, %v9281
    %v10458 = vpack.c.b16 %v9290, %v9282
    %v10459 = vpack.c.b16 %v9291, %v9283
    %v10460 = vpack.c.b16 %v9292, %v9284
    %v10461 = vpack.c.b16 %v9301, %v9293
    %v10462 = vpack.c.b16 %v9302, %v9294
    %v10463 = vpack.c.b16 %v9303, %v9295
    %v10464 = vpack.c.b16 %v9304, %v9296
    %v10465 = vpack.c.b16 %v9305, %v9297
    %v10466 = vpack.c.b16 %v9306, %v9298
    %v10467 = vpack.c.b16 %v9307, %v9299
    %v10468 = vpack.c.b16 %v9308, %v9300
    %v10469 = vpack.c.b16 %v9317, %v9309
    %v10470 = vpack.c.b16 %v9318, %v9310
    %v10471 = vpack.c.b16 %v9319, %v9311
    %v10472 = vpack.c.b16 %v9320, %v9312
    %v10473 = vpack.c.b16 %v9321, %v9313
    %v10474 = vpack.c.b16 %v9322, %v9314
    %v10475 = vpack.c.b16 %v9323, %v9315
    %v10476 = vpack.c.b16 %v9324, %v9316
    %v10477 = vpack.c.b16 %v9333, %v9325
    %v10478 = vpack.c.b16 %v9334, %v9326
    %v10479 = vpack.c.b16 %v9335, %v9327
    %v10480 = vpack.c.b16 %v9336, %v9328
    %v10481 = vpack.c.b16 %v9337, %v9329
    %v10482 = vpack.c.b16 %v9338, %v9330
    %v10483 = vpack.c.b16 %v9339, %v9331
    %v10484 = vpack.c.b16 %v9340, %v9332
    %v10485 = vpack.c.b16 %v9349, %v9341
    %v10486 = vpack.c.b16 %v9350, %v9342
    %v10487 = vpack.c.b16 %v9351, %v9343
    %v10488 = vpack.c.b16 %v9352, %v9344
    %v10489 = vpack.c.b16 %v9353, %v9345
    %v10490 = vpack.c.b16 %v9354, %v9346
    %v10491 = vpack.c.b16 %v9355, %v9347
    %v10492 = vpack.c.b16 %v9356, %v9348
    %v10493 = vpack.c.b16 %v9365, %v9357
    %v10494 = vpack.c.b16 %v9366, %v9358
    %v10495 = vpack.c.b16 %v9367, %v9359
    %v10496 = vpack.c.b16 %v9368, %v9360
    %v10497 = vpack.c.b16 %v9369, %v9361
    %v10498 = vpack.c.b16 %v9370, %v9362
    %v10499 = vpack.c.b16 %v9371, %v9363
    %v10500 = vpack.c.b16 %v9372, %v9364
    %v10501 = vpack.c.b16 %v9381, %v9373
    %v10502 = vpack.c.b16 %v9382, %v9374
    %v10503 = vpack.c.b16 %v9383, %v9375
    %v10504 = vpack.c.b16 %v9384, %v9376
    %v10505 = vpack.c.b16 %v9385, %v9377
    %v10506 = vpack.c.b16 %v9386, %v9378
    %v10507 = vpack.c.b16 %v9387, %v9379
    %v10508 = vpack.c.b16 %v9388, %v9380
    %v10509 = vpack.c.b16 %v9397, %v9389
    %v10510 = vpack.c.b16 %v9398, %v9390
    %v10511 = vpack.c.b16 %v9399, %v9391
    %v10512 = vpack.c.b16 %v9400, %v9392
    %v10513 = vpack.c.b16 %v9401, %v9393
    %v10514 = vpack.c.b16 %v9402, %v9394
    %v10515 = vpack.c.b16 %v9403, %v9395
    %v10516 = vpack.c.b16 %v9404, %v9396
    %v10517 = vpack.c.b16 %v9413, %v9405
    %v10518 = vpack.c.b16 %v9414, %v9406
    %v10519 = vpack.c.b16 %v9415, %v9407
    %v10520 = vpack.c.b16 %v9416, %v9408
    %v10521 = vpack.c.b16 %v9417, %v9409
    %v10522 = vpack.c.b16 %v9418, %v9410
    %v10523 = vpack.c.b16 %v9419, %v9411
    %v10524 = vpack.c.b16 %v9420, %v9412
    %v10525 = vpack.c.b16 %v9429, %v9421
    %v10526 = vpack.c.b16 %v9430, %v9422
    %v10527 = vpack.c.b16 %v9431, %v9423
    %v10528 = vpack.c.b16 %v9432, %v9424
    %v10529 = vpack.c.b16 %v9433, %v9425
    %v10530 = vpack.c.b16 %v9434, %v9426
    %v10531 = vpack.c.b16 %v9435, %v9427
    %v10532 = vpack.c.b16 %v9436, %v9428
    %v10533 = vpack.c.b16 %v9445, %v9437
    %v10534 = vpack.c.b16 %v9446, %v9438
    %v10535 = vpack.c.b16 %v9447, %v9439
    %v10536 = vpack.c.b16 %v9448, %v9440
    %v10537 = vpack.c.b16 %v9449, %v9441
    %v10538 = vpack.c.b16 %v9450, %v9442
    %v10539 = vpack.c.b16 %v9451, %v9443
    %v10540 = vpack.c.b16 %v9452, %v9444
    %v10541 = vpack.c.b16 %v9461, %v9453
    %v10542 = vpack.c.b16 %v9462, %v9454
    %v10543 = vpack.c.b16 %v9463, %v9455
    %v10544 = vpack.c.b16 %v9464, %v9456
    %v10545 = vpack.c.b16 %v9465, %v9457
    %v10546 = vpack.c.b16 %v9466, %v9458
    %v10547 = vpack.c.b16 %v9467, %v9459
    %v10548 = vpack.c.b16 %v9468, %v9460
    %v10549 = vpack.c.b16 %v9477, %v9469
    %v10550 = vpack.c.b16 %v9478, %v9470
    %v10551 = vpack.c.b16 %v9479, %v9471
    %v10552 = vpack.c.b16 %v9480, %v9472
    %v10553 = vpack.c.b16 %v9481, %v9473
    %v10554 = vpack.c.b16 %v9482, %v9474
    %v10555 = vpack.c.b16 %v9483, %v9475
    %v10556 = vpack.c.b16 %v9484, %v9476
    %v10557 = vpack.c.b16 %v9493, %v9485
    %v10558 = vpack.c.b16 %v9494, %v9486
    %v10559 = vpack.c.b16 %v9495, %v9487
    %v10560 = vpack.c.b16 %v9496, %v9488
    %v10561 = vpack.c.b16 %v9497, %v9489
    %v10562 = vpack.c.b16 %v9498, %v9490
    %v10563 = vpack.c.b16 %v9499, %v9491
    %v10564 = vpack.c.b16 %v9500, %v9492
    %v10565 = vpack.c.b16 %v9509, %v9501
    %v10566 = vpack.c.b16 %v9510, %v9502
    %v10567 = vpack.c.b16 %v9511, %v9503
    %v10568 = vpack.c.b16 %v9512, %v9504
    %v10569 = vpack.c.b16 %v9513, %v9505
    %v10570 = vpack.c.b16 %v9514, %v9506
    %v10571 = vpack.c.b16 %v9515, %v9507
    %v10572 = vpack.c.b16 %v9516, %v9508
    %v10573 = vpack.c.b16 %v9525, %v9517
    %v10574 = vpack.c.b16 %v9526, %v9518
    %v10575 = vpack.c.b16 %v9527, %v9519
    %v10576 = vpack.c.b16 %v9528, %v9520
    %v10577 = vpack.c.b16 %v9529, %v9521
    %v10578 = vpack.c.b16 %v9530, %v9522
    %v10579 = vpack.c.b16 %v9531, %v9523
    %v10580 = vpack.c.b16 %v9532, %v9524
    %v10581 = vpack.c.b16 %v9541, %v9533
    %v10582 = vpack.c.b16 %v9542, %v9534
    %v10583 = vpack.c.b16 %v9543, %v9535
    %v10584 = vpack.c.b16 %v9544, %v9536
    %v10585 = vpack.c.b16 %v9545, %v9537
    %v10586 = vpack.c.b16 %v9546, %v9538
    %v10587 = vpack.c.b16 %v9547, %v9539
    %v10588 = vpack.c.b16 %v9548, %v9540
    %v10589 = vpack.c.b16 %v9557, %v9549
    %v10590 = vpack.c.b16 %v9558, %v9550
    %v10591 = vpack.c.b16 %v9559, %v9551
    %v10592 = vpack.c.b16 %v9560, %v9552
    %v10593 = vpack.c.b16 %v9561, %v9553
    %v10594 = vpack.c.b16 %v9562, %v9554
    %v10595 = vpack.c.b16 %v9563, %v9555
    %v10596 = vpack.c.b16 %v9564, %v9556
    %v10597 = vpack.c.b16 %v9573, %v9565
    %v10598 = vpack.c.b16 %v9574, %v9566
    %v10599 = vpack.c.b16 %v9575, %v9567
    %v10600 = vpack.c.b16 %v9576, %v9568
    %v10601 = vpack.c.b16 %v9577, %v9569
    %v10602 = vpack.c.b16 %v9578, %v9570
    %v10603 = vpack.c.b16 %v9579, %v9571
    %v10604 = vpack.c.b16 %v9580, %v9572
    %11629 = vmatpush.bf16.msra.mxu0 %v9637
    %11630 = vmatpush.bf16.msra.mxu0 %v9629
    %11631 = vmatpush.bf16.msra.mxu0 %v9621
    %11632 = vmatpush.bf16.msra.mxu0 %v9613
    %11633 = vmatpush.bf16.msra.mxu0 %v9605
    %11634 = vmatpush.bf16.msra.mxu0 %v9597
    %11635 = vmatpush.bf16.msra.mxu0 %v9589
    %11636 = vmatpush.bf16.msra.mxu0 %v9581
    %11637 = vmatmul.bf16.gmra.mxu0 %v5451
    %v11638 = vpop.f32.mrf.mxu0
    %v11639 = vadd.f32 %v6493, %v11638
    %v11640 = vpop.f32.mrf.mxu0
    %11641 = vdwg.mxu0
    %11642 = vmatpush.bf16.msra.mxu0 %v9701
    %11643 = vmatpush.bf16.msra.mxu0 %v9693
    %11644 = vmatpush.bf16.msra.mxu0 %v9685
    %11645 = vmatpush.bf16.msra.mxu0 %v9677
    %11646 = vmatpush.bf16.msra.mxu0 %v9669
    %11647 = vmatpush.bf16.msra.mxu0 %v9661
    %11648 = vmatpush.bf16.msra.mxu0 %v9653
    %11649 = vmatpush.bf16.msra.mxu0 %v9645
    %11650 = vmatmul.bf16.gmra.mxu0 %v5452
    %v11651 = vpop.f32.mrf.mxu0
    %v11652 = vadd.f32 %v11639, %v11651
    %v11653 = vpop.f32.mrf.mxu0
    %11654 = vdwg.mxu0
    %11655 = vmatpush.bf16.msra.mxu0 %v9765
    %11656 = vmatpush.bf16.msra.mxu0 %v9757
    %11657 = vmatpush.bf16.msra.mxu0 %v9749
    %11658 = vmatpush.bf16.msra.mxu0 %v9741
    %11659 = vmatpush.bf16.msra.mxu0 %v9733
    %11660 = vmatpush.bf16.msra.mxu0 %v9725
    %11661 = vmatpush.bf16.msra.mxu0 %v9717
    %11662 = vmatpush.bf16.msra.mxu0 %v9709
    %11663 = vmatmul.bf16.gmra.mxu0 %v5453
    %v11664 = vpop.f32.mrf.mxu0
    %v11665 = vadd.f32 %v11652, %v11664
    %v11666 = vpop.f32.mrf.mxu0
    %11667 = vdwg.mxu0
    %11668 = vmatpush.bf16.msra.mxu0 %v9829
    %11669 = vmatpush.bf16.msra.mxu0 %v9821
    %11670 = vmatpush.bf16.msra.mxu0 %v9813
    %11671 = vmatpush.bf16.msra.mxu0 %v9805
    %11672 = vmatpush.bf16.msra.mxu0 %v9797
    %11673 = vmatpush.bf16.msra.mxu0 %v9789
    %11674 = vmatpush.bf16.msra.mxu0 %v9781
    %11675 = vmatpush.bf16.msra.mxu0 %v9773
    %11676 = vmatmul.bf16.gmra.mxu0 %v5454
    %v11677 = vpop.f32.mrf.mxu0
    %v11678 = vadd.f32 %v11665, %v11677
    %v11679 = vpop.f32.mrf.mxu0
    %11680 = vdwg.mxu0
    %11681 = vmatpush.bf16.msra.mxu0 %v9893
    %11682 = vmatpush.bf16.msra.mxu0 %v9885
    %11683 = vmatpush.bf16.msra.mxu0 %v9877
    %11684 = vmatpush.bf16.msra.mxu0 %v9869
    %11685 = vmatpush.bf16.msra.mxu0 %v9861
    %11686 = vmatpush.bf16.msra.mxu0 %v9853
    %11687 = vmatpush.bf16.msra.mxu0 %v9845
    %11688 = vmatpush.bf16.msra.mxu0 %v9837
    %11689 = vmatmul.bf16.gmra.mxu0 %v5455
    %v11690 = vpop.f32.mrf.mxu0
    %v11691 = vadd.f32 %v11678, %v11690
    %v11692 = vpop.f32.mrf.mxu0
    %11693 = vdwg.mxu0
    %11694 = vmatpush.bf16.msra.mxu0 %v9957
    %11695 = vmatpush.bf16.msra.mxu0 %v9949
    %11696 = vmatpush.bf16.msra.mxu0 %v9941
    %11697 = vmatpush.bf16.msra.mxu0 %v9933
    %11698 = vmatpush.bf16.msra.mxu0 %v9925
    %11699 = vmatpush.bf16.msra.mxu0 %v9917
    %11700 = vmatpush.bf16.msra.mxu0 %v9909
    %11701 = vmatpush.bf16.msra.mxu0 %v9901
    %11702 = vmatmul.bf16.gmra.mxu0 %v5456
    %v11703 = vpop.f32.mrf.mxu0
    %v11704 = vadd.f32 %v11691, %v11703
    %v11705 = vpop.f32.mrf.mxu0
    %11706 = vdwg.mxu0
    %11707 = vmatpush.bf16.msra.mxu0 %v10021
    %11708 = vmatpush.bf16.msra.mxu0 %v10013
    %11709 = vmatpush.bf16.msra.mxu0 %v10005
    %11710 = vmatpush.bf16.msra.mxu0 %v9997
    %11711 = vmatpush.bf16.msra.mxu0 %v9989
    %11712 = vmatpush.bf16.msra.mxu0 %v9981
    %11713 = vmatpush.bf16.msra.mxu0 %v9973
    %11714 = vmatpush.bf16.msra.mxu0 %v9965
    %11715 = vmatmul.bf16.gmra.mxu0 %v5457
    %v11716 = vpop.f32.mrf.mxu0
    %v11717 = vadd.f32 %v11704, %v11716
    %v11718 = vpop.f32.mrf.mxu0
    %11719 = vdwg.mxu0
    %11720 = vmatpush.bf16.msra.mxu0 %v10085
    %11721 = vmatpush.bf16.msra.mxu0 %v10077
    %11722 = vmatpush.bf16.msra.mxu0 %v10069
    %11723 = vmatpush.bf16.msra.mxu0 %v10061
    %11724 = vmatpush.bf16.msra.mxu0 %v10053
    %11725 = vmatpush.bf16.msra.mxu0 %v10045
    %11726 = vmatpush.bf16.msra.mxu0 %v10037
    %11727 = vmatpush.bf16.msra.mxu0 %v10029
    %11728 = vmatmul.bf16.gmra.mxu0 %v5458
    %v11729 = vpop.f32.mrf.mxu0
    %v11730 = vadd.f32 %v11717, %v11729
    %v11731 = vpop.f32.mrf.mxu0
    %11732 = vdwg.mxu0
    %11733 = vmatpush.bf16.msra.mxu0 %v10149
    %11734 = vmatpush.bf16.msra.mxu0 %v10141
    %11735 = vmatpush.bf16.msra.mxu0 %v10133
    %11736 = vmatpush.bf16.msra.mxu0 %v10125
    %11737 = vmatpush.bf16.msra.mxu0 %v10117
    %11738 = vmatpush.bf16.msra.mxu0 %v10109
    %11739 = vmatpush.bf16.msra.mxu0 %v10101
    %11740 = vmatpush.bf16.msra.mxu0 %v10093
    %11741 = vmatmul.bf16.gmra.mxu0 %v5459
    %v11742 = vpop.f32.mrf.mxu0
    %v11743 = vadd.f32 %v11730, %v11742
    %v11744 = vpop.f32.mrf.mxu0
    %11745 = vdwg.mxu0
    %11746 = vmatpush.bf16.msra.mxu0 %v10213
    %11747 = vmatpush.bf16.msra.mxu0 %v10205
    %11748 = vmatpush.bf16.msra.mxu0 %v10197
    %11749 = vmatpush.bf16.msra.mxu0 %v10189
    %11750 = vmatpush.bf16.msra.mxu0 %v10181
    %11751 = vmatpush.bf16.msra.mxu0 %v10173
    %11752 = vmatpush.bf16.msra.mxu0 %v10165
    %11753 = vmatpush.bf16.msra.mxu0 %v10157
    %11754 = vmatmul.bf16.gmra.mxu0 %v5460
    %v11755 = vpop.f32.mrf.mxu0
    %v11756 = vadd.f32 %v11743, %v11755
    %v11757 = vpop.f32.mrf.mxu0
    %11758 = vdwg.mxu0
    %11759 = vmatpush.bf16.msra.mxu0 %v10277
    %11760 = vmatpush.bf16.msra.mxu0 %v10269
    %11761 = vmatpush.bf16.msra.mxu0 %v10261
    %11762 = vmatpush.bf16.msra.mxu0 %v10253
    %11763 = vmatpush.bf16.msra.mxu0 %v10245
    %11764 = vmatpush.bf16.msra.mxu0 %v10237
    %11765 = vmatpush.bf16.msra.mxu0 %v10229
    %11766 = vmatpush.bf16.msra.mxu0 %v10221
    %11767 = vmatmul.bf16.gmra.mxu0 %v5461
    %v11768 = vpop.f32.mrf.mxu0
    %v11769 = vadd.f32 %v11756, %v11768
    %v11770 = vpop.f32.mrf.mxu0
    %11771 = vdwg.mxu0
    %11772 = vmatpush.bf16.msra.mxu0 %v10341
    %11773 = vmatpush.bf16.msra.mxu0 %v10333
    %11774 = vmatpush.bf16.msra.mxu0 %v10325
    %11775 = vmatpush.bf16.msra.mxu0 %v10317
    %11776 = vmatpush.bf16.msra.mxu0 %v10309
    %11777 = vmatpush.bf16.msra.mxu0 %v10301
    %11778 = vmatpush.bf16.msra.mxu0 %v10293
    %11779 = vmatpush.bf16.msra.mxu0 %v10285
    %11780 = vmatmul.bf16.gmra.mxu0 %v5462
    %v11781 = vpop.f32.mrf.mxu0
    %v11782 = vadd.f32 %v11769, %v11781
    %v11783 = vpop.f32.mrf.mxu0
    %11784 = vdwg.mxu0
    %11785 = vmatpush.bf16.msra.mxu0 %v10405
    %11786 = vmatpush.bf16.msra.mxu0 %v10397
    %11787 = vmatpush.bf16.msra.mxu0 %v10389
    %11788 = vmatpush.bf16.msra.mxu0 %v10381
    %11789 = vmatpush.bf16.msra.mxu0 %v10373
    %11790 = vmatpush.bf16.msra.mxu0 %v10365
    %11791 = vmatpush.bf16.msra.mxu0 %v10357
    %11792 = vmatpush.bf16.msra.mxu0 %v10349
    %11793 = vmatmul.bf16.gmra.mxu0 %v5463
    %v11794 = vpop.f32.mrf.mxu0
    %v11795 = vadd.f32 %v11782, %v11794
    %v11796 = vpop.f32.mrf.mxu0
    %11797 = vdwg.mxu0
    %11798 = vmatpush.bf16.msra.mxu0 %v10469
    %11799 = vmatpush.bf16.msra.mxu0 %v10461
    %11800 = vmatpush.bf16.msra.mxu0 %v10453
    %11801 = vmatpush.bf16.msra.mxu0 %v10445
    %11802 = vmatpush.bf16.msra.mxu0 %v10437
    %11803 = vmatpush.bf16.msra.mxu0 %v10429
    %11804 = vmatpush.bf16.msra.mxu0 %v10421
    %11805 = vmatpush.bf16.msra.mxu0 %v10413
    %11806 = vmatmul.bf16.gmra.mxu0 %v5464
    %v11807 = vpop.f32.mrf.mxu0
    %v11808 = vadd.f32 %v11795, %v11807
    %v11809 = vpop.f32.mrf.mxu0
    %11810 = vdwg.mxu0
    %11811 = vmatpush.bf16.msra.mxu0 %v10533
    %11812 = vmatpush.bf16.msra.mxu0 %v10525
    %11813 = vmatpush.bf16.msra.mxu0 %v10517
    %11814 = vmatpush.bf16.msra.mxu0 %v10509
    %11815 = vmatpush.bf16.msra.mxu0 %v10501
    %11816 = vmatpush.bf16.msra.mxu0 %v10493
    %11817 = vmatpush.bf16.msra.mxu0 %v10485
    %11818 = vmatpush.bf16.msra.mxu0 %v10477
    %11819 = vmatmul.bf16.gmra.mxu0 %v5465
    %v11820 = vpop.f32.mrf.mxu0
    %v11821 = vadd.f32 %v11808, %v11820
    %v11822 = vpop.f32.mrf.mxu0
    %11823 = vdwg.mxu0
    %11824 = vmatpush.bf16.msra.mxu0 %v10597
    %11825 = vmatpush.bf16.msra.mxu0 %v10589
    %11826 = vmatpush.bf16.msra.mxu0 %v10581
    %11827 = vmatpush.bf16.msra.mxu0 %v10573
    %11828 = vmatpush.bf16.msra.mxu0 %v10565
    %11829 = vmatpush.bf16.msra.mxu0 %v10557
    %11830 = vmatpush.bf16.msra.mxu0 %v10549
    %11831 = vmatpush.bf16.msra.mxu0 %v10541
    %11832 = vmatmul.bf16.gmra.mxu0 %v5466
    %v11833 = vpop.f32.mrf.mxu0
    %v11834 = vadd.f32 %v11821, %v11833
    %v11835 = vpop.f32.mrf.mxu0
    %11836 = vdwg.mxu0
    %11837 = vmatpush.bf16.msra.mxu0 %v9638
    %11838 = vmatpush.bf16.msra.mxu0 %v9630
    %11839 = vmatpush.bf16.msra.mxu0 %v9622
    %11840 = vmatpush.bf16.msra.mxu0 %v9614
    %11841 = vmatpush.bf16.msra.mxu0 %v9606
    %11842 = vmatpush.bf16.msra.mxu0 %v9598
    %11843 = vmatpush.bf16.msra.mxu0 %v9590
    %11844 = vmatpush.bf16.msra.mxu0 %v9582
    %11845 = vmatmul.bf16.gmra.mxu0 %v5451
    %v11846 = vpop.f32.mrf.mxu0
    %v11847 = vadd.f32 %v6494, %v11846
    %v11848 = vpop.f32.mrf.mxu0
    %11849 = vdwg.mxu0
    %11850 = vmatpush.bf16.msra.mxu0 %v9702
    %11851 = vmatpush.bf16.msra.mxu0 %v9694
    %11852 = vmatpush.bf16.msra.mxu0 %v9686
    %11853 = vmatpush.bf16.msra.mxu0 %v9678
    %11854 = vmatpush.bf16.msra.mxu0 %v9670
    %11855 = vmatpush.bf16.msra.mxu0 %v9662
    %11856 = vmatpush.bf16.msra.mxu0 %v9654
    %11857 = vmatpush.bf16.msra.mxu0 %v9646
    %11858 = vmatmul.bf16.gmra.mxu0 %v5452
    %v11859 = vpop.f32.mrf.mxu0
    %v11860 = vadd.f32 %v11847, %v11859
    %v11861 = vpop.f32.mrf.mxu0
    %11862 = vdwg.mxu0
    %11863 = vmatpush.bf16.msra.mxu0 %v9766
    %11864 = vmatpush.bf16.msra.mxu0 %v9758
    %11865 = vmatpush.bf16.msra.mxu0 %v9750
    %11866 = vmatpush.bf16.msra.mxu0 %v9742
    %11867 = vmatpush.bf16.msra.mxu0 %v9734
    %11868 = vmatpush.bf16.msra.mxu0 %v9726
    %11869 = vmatpush.bf16.msra.mxu0 %v9718
    %11870 = vmatpush.bf16.msra.mxu0 %v9710
    %11871 = vmatmul.bf16.gmra.mxu0 %v5453
    %v11872 = vpop.f32.mrf.mxu0
    %v11873 = vadd.f32 %v11860, %v11872
    %v11874 = vpop.f32.mrf.mxu0
    %11875 = vdwg.mxu0
    %11876 = vmatpush.bf16.msra.mxu0 %v9830
    %11877 = vmatpush.bf16.msra.mxu0 %v9822
    %11878 = vmatpush.bf16.msra.mxu0 %v9814
    %11879 = vmatpush.bf16.msra.mxu0 %v9806
    %11880 = vmatpush.bf16.msra.mxu0 %v9798
    %11881 = vmatpush.bf16.msra.mxu0 %v9790
    %11882 = vmatpush.bf16.msra.mxu0 %v9782
    %11883 = vmatpush.bf16.msra.mxu0 %v9774
    %11884 = vmatmul.bf16.gmra.mxu0 %v5454
    %v11885 = vpop.f32.mrf.mxu0
    %v11886 = vadd.f32 %v11873, %v11885
    %v11887 = vpop.f32.mrf.mxu0
    %11888 = vdwg.mxu0
    %11889 = vmatpush.bf16.msra.mxu0 %v9894
    %11890 = vmatpush.bf16.msra.mxu0 %v9886
    %11891 = vmatpush.bf16.msra.mxu0 %v9878
    %11892 = vmatpush.bf16.msra.mxu0 %v9870
    %11893 = vmatpush.bf16.msra.mxu0 %v9862
    %11894 = vmatpush.bf16.msra.mxu0 %v9854
    %11895 = vmatpush.bf16.msra.mxu0 %v9846
    %11896 = vmatpush.bf16.msra.mxu0 %v9838
    %11897 = vmatmul.bf16.gmra.mxu0 %v5455
    %v11898 = vpop.f32.mrf.mxu0
    %v11899 = vadd.f32 %v11886, %v11898
    %v11900 = vpop.f32.mrf.mxu0
    %11901 = vdwg.mxu0
    %11902 = vmatpush.bf16.msra.mxu0 %v9958
    %11903 = vmatpush.bf16.msra.mxu0 %v9950
    %11904 = vmatpush.bf16.msra.mxu0 %v9942
    %11905 = vmatpush.bf16.msra.mxu0 %v9934
    %11906 = vmatpush.bf16.msra.mxu0 %v9926
    %11907 = vmatpush.bf16.msra.mxu0 %v9918
    %11908 = vmatpush.bf16.msra.mxu0 %v9910
    %11909 = vmatpush.bf16.msra.mxu0 %v9902
    %11910 = vmatmul.bf16.gmra.mxu0 %v5456
    %v11911 = vpop.f32.mrf.mxu0
    %v11912 = vadd.f32 %v11899, %v11911
    %v11913 = vpop.f32.mrf.mxu0
    %11914 = vdwg.mxu0
    %11915 = vmatpush.bf16.msra.mxu0 %v10022
    %11916 = vmatpush.bf16.msra.mxu0 %v10014
    %11917 = vmatpush.bf16.msra.mxu0 %v10006
    %11918 = vmatpush.bf16.msra.mxu0 %v9998
    %11919 = vmatpush.bf16.msra.mxu0 %v9990
    %11920 = vmatpush.bf16.msra.mxu0 %v9982
    %11921 = vmatpush.bf16.msra.mxu0 %v9974
    %11922 = vmatpush.bf16.msra.mxu0 %v9966
    %11923 = vmatmul.bf16.gmra.mxu0 %v5457
    %v11924 = vpop.f32.mrf.mxu0
    %v11925 = vadd.f32 %v11912, %v11924
    %v11926 = vpop.f32.mrf.mxu0
    %11927 = vdwg.mxu0
    %11928 = vmatpush.bf16.msra.mxu0 %v10086
    %11929 = vmatpush.bf16.msra.mxu0 %v10078
    %11930 = vmatpush.bf16.msra.mxu0 %v10070
    %11931 = vmatpush.bf16.msra.mxu0 %v10062
    %11932 = vmatpush.bf16.msra.mxu0 %v10054
    %11933 = vmatpush.bf16.msra.mxu0 %v10046
    %11934 = vmatpush.bf16.msra.mxu0 %v10038
    %11935 = vmatpush.bf16.msra.mxu0 %v10030
    %11936 = vmatmul.bf16.gmra.mxu0 %v5458
    %v11937 = vpop.f32.mrf.mxu0
    %v11938 = vadd.f32 %v11925, %v11937
    %v11939 = vpop.f32.mrf.mxu0
    %11940 = vdwg.mxu0
    %11941 = vmatpush.bf16.msra.mxu0 %v10150
    %11942 = vmatpush.bf16.msra.mxu0 %v10142
    %11943 = vmatpush.bf16.msra.mxu0 %v10134
    %11944 = vmatpush.bf16.msra.mxu0 %v10126
    %11945 = vmatpush.bf16.msra.mxu0 %v10118
    %11946 = vmatpush.bf16.msra.mxu0 %v10110
    %11947 = vmatpush.bf16.msra.mxu0 %v10102
    %11948 = vmatpush.bf16.msra.mxu0 %v10094
    %11949 = vmatmul.bf16.gmra.mxu0 %v5459
    %v11950 = vpop.f32.mrf.mxu0
    %v11951 = vadd.f32 %v11938, %v11950
    %v11952 = vpop.f32.mrf.mxu0
    %11953 = vdwg.mxu0
    %11954 = vmatpush.bf16.msra.mxu0 %v10214
    %11955 = vmatpush.bf16.msra.mxu0 %v10206
    %11956 = vmatpush.bf16.msra.mxu0 %v10198
    %11957 = vmatpush.bf16.msra.mxu0 %v10190
    %11958 = vmatpush.bf16.msra.mxu0 %v10182
    %11959 = vmatpush.bf16.msra.mxu0 %v10174
    %11960 = vmatpush.bf16.msra.mxu0 %v10166
    %11961 = vmatpush.bf16.msra.mxu0 %v10158
    %11962 = vmatmul.bf16.gmra.mxu0 %v5460
    %v11963 = vpop.f32.mrf.mxu0
    %v11964 = vadd.f32 %v11951, %v11963
    %v11965 = vpop.f32.mrf.mxu0
    %11966 = vdwg.mxu0
    %11967 = vmatpush.bf16.msra.mxu0 %v10278
    %11968 = vmatpush.bf16.msra.mxu0 %v10270
    %11969 = vmatpush.bf16.msra.mxu0 %v10262
    %11970 = vmatpush.bf16.msra.mxu0 %v10254
    %11971 = vmatpush.bf16.msra.mxu0 %v10246
    %11972 = vmatpush.bf16.msra.mxu0 %v10238
    %11973 = vmatpush.bf16.msra.mxu0 %v10230
    %11974 = vmatpush.bf16.msra.mxu0 %v10222
    %11975 = vmatmul.bf16.gmra.mxu0 %v5461
    %v11976 = vpop.f32.mrf.mxu0
    %v11977 = vadd.f32 %v11964, %v11976
    %v11978 = vpop.f32.mrf.mxu0
    %11979 = vdwg.mxu0
    %11980 = vmatpush.bf16.msra.mxu0 %v10342
    %11981 = vmatpush.bf16.msra.mxu0 %v10334
    %11982 = vmatpush.bf16.msra.mxu0 %v10326
    %11983 = vmatpush.bf16.msra.mxu0 %v10318
    %11984 = vmatpush.bf16.msra.mxu0 %v10310
    %11985 = vmatpush.bf16.msra.mxu0 %v10302
    %11986 = vmatpush.bf16.msra.mxu0 %v10294
    %11987 = vmatpush.bf16.msra.mxu0 %v10286
    %11988 = vmatmul.bf16.gmra.mxu0 %v5462
    %v11989 = vpop.f32.mrf.mxu0
    %v11990 = vadd.f32 %v11977, %v11989
    %v11991 = vpop.f32.mrf.mxu0
    %11992 = vdwg.mxu0
    %11993 = vmatpush.bf16.msra.mxu0 %v10406
    %11994 = vmatpush.bf16.msra.mxu0 %v10398
    %11995 = vmatpush.bf16.msra.mxu0 %v10390
    %11996 = vmatpush.bf16.msra.mxu0 %v10382
    %11997 = vmatpush.bf16.msra.mxu0 %v10374
    %11998 = vmatpush.bf16.msra.mxu0 %v10366
    %11999 = vmatpush.bf16.msra.mxu0 %v10358
    %12000 = vmatpush.bf16.msra.mxu0 %v10350
    %12001 = vmatmul.bf16.gmra.mxu0 %v5463
    %v12002 = vpop.f32.mrf.mxu0
    %v12003 = vadd.f32 %v11990, %v12002
    %v12004 = vpop.f32.mrf.mxu0
    %12005 = vdwg.mxu0
    %12006 = vmatpush.bf16.msra.mxu0 %v10470
    %12007 = vmatpush.bf16.msra.mxu0 %v10462
    %12008 = vmatpush.bf16.msra.mxu0 %v10454
    %12009 = vmatpush.bf16.msra.mxu0 %v10446
    %12010 = vmatpush.bf16.msra.mxu0 %v10438
    %12011 = vmatpush.bf16.msra.mxu0 %v10430
    %12012 = vmatpush.bf16.msra.mxu0 %v10422
    %12013 = vmatpush.bf16.msra.mxu0 %v10414
    %12014 = vmatmul.bf16.gmra.mxu0 %v5464
    %v12015 = vpop.f32.mrf.mxu0
    %v12016 = vadd.f32 %v12003, %v12015
    %v12017 = vpop.f32.mrf.mxu0
    %12018 = vdwg.mxu0
    %12019 = vmatpush.bf16.msra.mxu0 %v10534
    %12020 = vmatpush.bf16.msra.mxu0 %v10526
    %12021 = vmatpush.bf16.msra.mxu0 %v10518
    %12022 = vmatpush.bf16.msra.mxu0 %v10510
    %12023 = vmatpush.bf16.msra.mxu0 %v10502
    %12024 = vmatpush.bf16.msra.mxu0 %v10494
    %12025 = vmatpush.bf16.msra.mxu0 %v10486
    %12026 = vmatpush.bf16.msra.mxu0 %v10478
    %12027 = vmatmul.bf16.gmra.mxu0 %v5465
    %v12028 = vpop.f32.mrf.mxu0
    %v12029 = vadd.f32 %v12016, %v12028
    %v12030 = vpop.f32.mrf.mxu0
    %12031 = vdwg.mxu0
    %12032 = vmatpush.bf16.msra.mxu0 %v10598
    %12033 = vmatpush.bf16.msra.mxu0 %v10590
    %12034 = vmatpush.bf16.msra.mxu0 %v10582
    %12035 = vmatpush.bf16.msra.mxu0 %v10574
    %12036 = vmatpush.bf16.msra.mxu0 %v10566
    %12037 = vmatpush.bf16.msra.mxu0 %v10558
    %12038 = vmatpush.bf16.msra.mxu0 %v10550
    %12039 = vmatpush.bf16.msra.mxu0 %v10542
    %12040 = vmatmul.bf16.gmra.mxu0 %v5466
    %v12041 = vpop.f32.mrf.mxu0
    %v12042 = vadd.f32 %v12029, %v12041
    %v12043 = vpop.f32.mrf.mxu0
    %12044 = vdwg.mxu0
    %12045 = vmatpush.bf16.msra.mxu0 %v9639
    %12046 = vmatpush.bf16.msra.mxu0 %v9631
    %12047 = vmatpush.bf16.msra.mxu0 %v9623
    %12048 = vmatpush.bf16.msra.mxu0 %v9615
    %12049 = vmatpush.bf16.msra.mxu0 %v9607
    %12050 = vmatpush.bf16.msra.mxu0 %v9599
    %12051 = vmatpush.bf16.msra.mxu0 %v9591
    %12052 = vmatpush.bf16.msra.mxu0 %v9583
    %12053 = vmatmul.bf16.gmra.mxu0 %v5451
    %v12054 = vpop.f32.mrf.mxu0
    %v12055 = vadd.f32 %v6495, %v12054
    %v12056 = vpop.f32.mrf.mxu0
    %12057 = vdwg.mxu0
    %12058 = vmatpush.bf16.msra.mxu0 %v9703
    %12059 = vmatpush.bf16.msra.mxu0 %v9695
    %12060 = vmatpush.bf16.msra.mxu0 %v9687
    %12061 = vmatpush.bf16.msra.mxu0 %v9679
    %12062 = vmatpush.bf16.msra.mxu0 %v9671
    %12063 = vmatpush.bf16.msra.mxu0 %v9663
    %12064 = vmatpush.bf16.msra.mxu0 %v9655
    %12065 = vmatpush.bf16.msra.mxu0 %v9647
    %12066 = vmatmul.bf16.gmra.mxu0 %v5452
    %v12067 = vpop.f32.mrf.mxu0
    %v12068 = vadd.f32 %v12055, %v12067
    %v12069 = vpop.f32.mrf.mxu0
    %12070 = vdwg.mxu0
    %12071 = vmatpush.bf16.msra.mxu0 %v9767
    %12072 = vmatpush.bf16.msra.mxu0 %v9759
    %12073 = vmatpush.bf16.msra.mxu0 %v9751
    %12074 = vmatpush.bf16.msra.mxu0 %v9743
    %12075 = vmatpush.bf16.msra.mxu0 %v9735
    %12076 = vmatpush.bf16.msra.mxu0 %v9727
    %12077 = vmatpush.bf16.msra.mxu0 %v9719
    %12078 = vmatpush.bf16.msra.mxu0 %v9711
    %12079 = vmatmul.bf16.gmra.mxu0 %v5453
    %v12080 = vpop.f32.mrf.mxu0
    %v12081 = vadd.f32 %v12068, %v12080
    %v12082 = vpop.f32.mrf.mxu0
    %12083 = vdwg.mxu0
    %12084 = vmatpush.bf16.msra.mxu0 %v9831
    %12085 = vmatpush.bf16.msra.mxu0 %v9823
    %12086 = vmatpush.bf16.msra.mxu0 %v9815
    %12087 = vmatpush.bf16.msra.mxu0 %v9807
    %12088 = vmatpush.bf16.msra.mxu0 %v9799
    %12089 = vmatpush.bf16.msra.mxu0 %v9791
    %12090 = vmatpush.bf16.msra.mxu0 %v9783
    %12091 = vmatpush.bf16.msra.mxu0 %v9775
    %12092 = vmatmul.bf16.gmra.mxu0 %v5454
    %v12093 = vpop.f32.mrf.mxu0
    %v12094 = vadd.f32 %v12081, %v12093
    %v12095 = vpop.f32.mrf.mxu0
    %12096 = vdwg.mxu0
    %12097 = vmatpush.bf16.msra.mxu0 %v9895
    %12098 = vmatpush.bf16.msra.mxu0 %v9887
    %12099 = vmatpush.bf16.msra.mxu0 %v9879
    %12100 = vmatpush.bf16.msra.mxu0 %v9871
    %12101 = vmatpush.bf16.msra.mxu0 %v9863
    %12102 = vmatpush.bf16.msra.mxu0 %v9855
    %12103 = vmatpush.bf16.msra.mxu0 %v9847
    %12104 = vmatpush.bf16.msra.mxu0 %v9839
    %12105 = vmatmul.bf16.gmra.mxu0 %v5455
    %v12106 = vpop.f32.mrf.mxu0
    %v12107 = vadd.f32 %v12094, %v12106
    %v12108 = vpop.f32.mrf.mxu0
    %12109 = vdwg.mxu0
    %12110 = vmatpush.bf16.msra.mxu0 %v9959
    %12111 = vmatpush.bf16.msra.mxu0 %v9951
    %12112 = vmatpush.bf16.msra.mxu0 %v9943
    %12113 = vmatpush.bf16.msra.mxu0 %v9935
    %12114 = vmatpush.bf16.msra.mxu0 %v9927
    %12115 = vmatpush.bf16.msra.mxu0 %v9919
    %12116 = vmatpush.bf16.msra.mxu0 %v9911
    %12117 = vmatpush.bf16.msra.mxu0 %v9903
    %12118 = vmatmul.bf16.gmra.mxu0 %v5456
    %v12119 = vpop.f32.mrf.mxu0
    %v12120 = vadd.f32 %v12107, %v12119
    %v12121 = vpop.f32.mrf.mxu0
    %12122 = vdwg.mxu0
    %12123 = vmatpush.bf16.msra.mxu0 %v10023
    %12124 = vmatpush.bf16.msra.mxu0 %v10015
    %12125 = vmatpush.bf16.msra.mxu0 %v10007
    %12126 = vmatpush.bf16.msra.mxu0 %v9999
    %12127 = vmatpush.bf16.msra.mxu0 %v9991
    %12128 = vmatpush.bf16.msra.mxu0 %v9983
    %12129 = vmatpush.bf16.msra.mxu0 %v9975
    %12130 = vmatpush.bf16.msra.mxu0 %v9967
    %12131 = vmatmul.bf16.gmra.mxu0 %v5457
    %v12132 = vpop.f32.mrf.mxu0
    %v12133 = vadd.f32 %v12120, %v12132
    %v12134 = vpop.f32.mrf.mxu0
    %12135 = vdwg.mxu0
    %12136 = vmatpush.bf16.msra.mxu0 %v10087
    %12137 = vmatpush.bf16.msra.mxu0 %v10079
    %12138 = vmatpush.bf16.msra.mxu0 %v10071
    %12139 = vmatpush.bf16.msra.mxu0 %v10063
    %12140 = vmatpush.bf16.msra.mxu0 %v10055
    %12141 = vmatpush.bf16.msra.mxu0 %v10047
    %12142 = vmatpush.bf16.msra.mxu0 %v10039
    %12143 = vmatpush.bf16.msra.mxu0 %v10031
    %12144 = vmatmul.bf16.gmra.mxu0 %v5458
    %v12145 = vpop.f32.mrf.mxu0
    %v12146 = vadd.f32 %v12133, %v12145
    %v12147 = vpop.f32.mrf.mxu0
    %12148 = vdwg.mxu0
    %12149 = vmatpush.bf16.msra.mxu0 %v10151
    %12150 = vmatpush.bf16.msra.mxu0 %v10143
    %12151 = vmatpush.bf16.msra.mxu0 %v10135
    %12152 = vmatpush.bf16.msra.mxu0 %v10127
    %12153 = vmatpush.bf16.msra.mxu0 %v10119
    %12154 = vmatpush.bf16.msra.mxu0 %v10111
    %12155 = vmatpush.bf16.msra.mxu0 %v10103
    %12156 = vmatpush.bf16.msra.mxu0 %v10095
    %12157 = vmatmul.bf16.gmra.mxu0 %v5459
    %v12158 = vpop.f32.mrf.mxu0
    %v12159 = vadd.f32 %v12146, %v12158
    %v12160 = vpop.f32.mrf.mxu0
    %12161 = vdwg.mxu0
    %12162 = vmatpush.bf16.msra.mxu0 %v10215
    %12163 = vmatpush.bf16.msra.mxu0 %v10207
    %12164 = vmatpush.bf16.msra.mxu0 %v10199
    %12165 = vmatpush.bf16.msra.mxu0 %v10191
    %12166 = vmatpush.bf16.msra.mxu0 %v10183
    %12167 = vmatpush.bf16.msra.mxu0 %v10175
    %12168 = vmatpush.bf16.msra.mxu0 %v10167
    %12169 = vmatpush.bf16.msra.mxu0 %v10159
    %12170 = vmatmul.bf16.gmra.mxu0 %v5460
    %v12171 = vpop.f32.mrf.mxu0
    %v12172 = vadd.f32 %v12159, %v12171
    %v12173 = vpop.f32.mrf.mxu0
    %12174 = vdwg.mxu0
    %12175 = vmatpush.bf16.msra.mxu0 %v10279
    %12176 = vmatpush.bf16.msra.mxu0 %v10271
    %12177 = vmatpush.bf16.msra.mxu0 %v10263
    %12178 = vmatpush.bf16.msra.mxu0 %v10255
    %12179 = vmatpush.bf16.msra.mxu0 %v10247
    %12180 = vmatpush.bf16.msra.mxu0 %v10239
    %12181 = vmatpush.bf16.msra.mxu0 %v10231
    %12182 = vmatpush.bf16.msra.mxu0 %v10223
    %12183 = vmatmul.bf16.gmra.mxu0 %v5461
    %v12184 = vpop.f32.mrf.mxu0
    %v12185 = vadd.f32 %v12172, %v12184
    %v12186 = vpop.f32.mrf.mxu0
    %12187 = vdwg.mxu0
    %12188 = vmatpush.bf16.msra.mxu0 %v10343
    %12189 = vmatpush.bf16.msra.mxu0 %v10335
    %12190 = vmatpush.bf16.msra.mxu0 %v10327
    %12191 = vmatpush.bf16.msra.mxu0 %v10319
    %12192 = vmatpush.bf16.msra.mxu0 %v10311
    %12193 = vmatpush.bf16.msra.mxu0 %v10303
    %12194 = vmatpush.bf16.msra.mxu0 %v10295
    %12195 = vmatpush.bf16.msra.mxu0 %v10287
    %12196 = vmatmul.bf16.gmra.mxu0 %v5462
    %v12197 = vpop.f32.mrf.mxu0
    %v12198 = vadd.f32 %v12185, %v12197
    %v12199 = vpop.f32.mrf.mxu0
    %12200 = vdwg.mxu0
    %12201 = vmatpush.bf16.msra.mxu0 %v10407
    %12202 = vmatpush.bf16.msra.mxu0 %v10399
    %12203 = vmatpush.bf16.msra.mxu0 %v10391
    %12204 = vmatpush.bf16.msra.mxu0 %v10383
    %12205 = vmatpush.bf16.msra.mxu0 %v10375
    %12206 = vmatpush.bf16.msra.mxu0 %v10367
    %12207 = vmatpush.bf16.msra.mxu0 %v10359
    %12208 = vmatpush.bf16.msra.mxu0 %v10351
    %12209 = vmatmul.bf16.gmra.mxu0 %v5463
    %v12210 = vpop.f32.mrf.mxu0
    %v12211 = vadd.f32 %v12198, %v12210
    %v12212 = vpop.f32.mrf.mxu0
    %12213 = vdwg.mxu0
    %12214 = vmatpush.bf16.msra.mxu0 %v10471
    %12215 = vmatpush.bf16.msra.mxu0 %v10463
    %12216 = vmatpush.bf16.msra.mxu0 %v10455
    %12217 = vmatpush.bf16.msra.mxu0 %v10447
    %12218 = vmatpush.bf16.msra.mxu0 %v10439
    %12219 = vmatpush.bf16.msra.mxu0 %v10431
    %12220 = vmatpush.bf16.msra.mxu0 %v10423
    %12221 = vmatpush.bf16.msra.mxu0 %v10415
    %12222 = vmatmul.bf16.gmra.mxu0 %v5464
    %v12223 = vpop.f32.mrf.mxu0
    %v12224 = vadd.f32 %v12211, %v12223
    %v12225 = vpop.f32.mrf.mxu0
    %12226 = vdwg.mxu0
    %12227 = vmatpush.bf16.msra.mxu0 %v10535
    %12228 = vmatpush.bf16.msra.mxu0 %v10527
    %12229 = vmatpush.bf16.msra.mxu0 %v10519
    %12230 = vmatpush.bf16.msra.mxu0 %v10511
    %12231 = vmatpush.bf16.msra.mxu0 %v10503
    %12232 = vmatpush.bf16.msra.mxu0 %v10495
    %12233 = vmatpush.bf16.msra.mxu0 %v10487
    %12234 = vmatpush.bf16.msra.mxu0 %v10479
    %12235 = vmatmul.bf16.gmra.mxu0 %v5465
    %v12236 = vpop.f32.mrf.mxu0
    %v12237 = vadd.f32 %v12224, %v12236
    %v12238 = vpop.f32.mrf.mxu0
    %12239 = vdwg.mxu0
    %12240 = vmatpush.bf16.msra.mxu0 %v10599
    %12241 = vmatpush.bf16.msra.mxu0 %v10591
    %12242 = vmatpush.bf16.msra.mxu0 %v10583
    %12243 = vmatpush.bf16.msra.mxu0 %v10575
    %12244 = vmatpush.bf16.msra.mxu0 %v10567
    %12245 = vmatpush.bf16.msra.mxu0 %v10559
    %12246 = vmatpush.bf16.msra.mxu0 %v10551
    %12247 = vmatpush.bf16.msra.mxu0 %v10543
    %12248 = vmatmul.bf16.gmra.mxu0 %v5466
    %v12249 = vpop.f32.mrf.mxu0
    %v12250 = vadd.f32 %v12237, %v12249
    %v12251 = vpop.f32.mrf.mxu0
    %12252 = vdwg.mxu0
    %12253 = vmatpush.bf16.msra.mxu0 %v9640
    %12254 = vmatpush.bf16.msra.mxu0 %v9632
    %12255 = vmatpush.bf16.msra.mxu0 %v9624
    %12256 = vmatpush.bf16.msra.mxu0 %v9616
    %12257 = vmatpush.bf16.msra.mxu0 %v9608
    %12258 = vmatpush.bf16.msra.mxu0 %v9600
    %12259 = vmatpush.bf16.msra.mxu0 %v9592
    %12260 = vmatpush.bf16.msra.mxu0 %v9584
    %12261 = vmatmul.bf16.gmra.mxu0 %v5451
    %v12262 = vpop.f32.mrf.mxu0
    %v12263 = vadd.f32 %v6496, %v12262
    %v12264 = vpop.f32.mrf.mxu0
    %12265 = vdwg.mxu0
    %12266 = vmatpush.bf16.msra.mxu0 %v9704
    %12267 = vmatpush.bf16.msra.mxu0 %v9696
    %12268 = vmatpush.bf16.msra.mxu0 %v9688
    %12269 = vmatpush.bf16.msra.mxu0 %v9680
    %12270 = vmatpush.bf16.msra.mxu0 %v9672
    %12271 = vmatpush.bf16.msra.mxu0 %v9664
    %12272 = vmatpush.bf16.msra.mxu0 %v9656
    %12273 = vmatpush.bf16.msra.mxu0 %v9648
    %12274 = vmatmul.bf16.gmra.mxu0 %v5452
    %v12275 = vpop.f32.mrf.mxu0
    %v12276 = vadd.f32 %v12263, %v12275
    %v12277 = vpop.f32.mrf.mxu0
    %12278 = vdwg.mxu0
    %12279 = vmatpush.bf16.msra.mxu0 %v9768
    %12280 = vmatpush.bf16.msra.mxu0 %v9760
    %12281 = vmatpush.bf16.msra.mxu0 %v9752
    %12282 = vmatpush.bf16.msra.mxu0 %v9744
    %12283 = vmatpush.bf16.msra.mxu0 %v9736
    %12284 = vmatpush.bf16.msra.mxu0 %v9728
    %12285 = vmatpush.bf16.msra.mxu0 %v9720
    %12286 = vmatpush.bf16.msra.mxu0 %v9712
    %12287 = vmatmul.bf16.gmra.mxu0 %v5453
    %v12288 = vpop.f32.mrf.mxu0
    %v12289 = vadd.f32 %v12276, %v12288
    %v12290 = vpop.f32.mrf.mxu0
    %12291 = vdwg.mxu0
    %12292 = vmatpush.bf16.msra.mxu0 %v9832
    %12293 = vmatpush.bf16.msra.mxu0 %v9824
    %12294 = vmatpush.bf16.msra.mxu0 %v9816
    %12295 = vmatpush.bf16.msra.mxu0 %v9808
    %12296 = vmatpush.bf16.msra.mxu0 %v9800
    %12297 = vmatpush.bf16.msra.mxu0 %v9792
    %12298 = vmatpush.bf16.msra.mxu0 %v9784
    %12299 = vmatpush.bf16.msra.mxu0 %v9776
    %12300 = vmatmul.bf16.gmra.mxu0 %v5454
    %v12301 = vpop.f32.mrf.mxu0
    %v12302 = vadd.f32 %v12289, %v12301
    %v12303 = vpop.f32.mrf.mxu0
    %12304 = vdwg.mxu0
    %12305 = vmatpush.bf16.msra.mxu0 %v9896
    %12306 = vmatpush.bf16.msra.mxu0 %v9888
    %12307 = vmatpush.bf16.msra.mxu0 %v9880
    %12308 = vmatpush.bf16.msra.mxu0 %v9872
    %12309 = vmatpush.bf16.msra.mxu0 %v9864
    %12310 = vmatpush.bf16.msra.mxu0 %v9856
    %12311 = vmatpush.bf16.msra.mxu0 %v9848
    %12312 = vmatpush.bf16.msra.mxu0 %v9840
    %12313 = vmatmul.bf16.gmra.mxu0 %v5455
    %v12314 = vpop.f32.mrf.mxu0
    %v12315 = vadd.f32 %v12302, %v12314
    %v12316 = vpop.f32.mrf.mxu0
    %12317 = vdwg.mxu0
    %12318 = vmatpush.bf16.msra.mxu0 %v9960
    %12319 = vmatpush.bf16.msra.mxu0 %v9952
    %12320 = vmatpush.bf16.msra.mxu0 %v9944
    %12321 = vmatpush.bf16.msra.mxu0 %v9936
    %12322 = vmatpush.bf16.msra.mxu0 %v9928
    %12323 = vmatpush.bf16.msra.mxu0 %v9920
    %12324 = vmatpush.bf16.msra.mxu0 %v9912
    %12325 = vmatpush.bf16.msra.mxu0 %v9904
    %12326 = vmatmul.bf16.gmra.mxu0 %v5456
    %v12327 = vpop.f32.mrf.mxu0
    %v12328 = vadd.f32 %v12315, %v12327
    %v12329 = vpop.f32.mrf.mxu0
    %12330 = vdwg.mxu0
    %12331 = vmatpush.bf16.msra.mxu0 %v10024
    %12332 = vmatpush.bf16.msra.mxu0 %v10016
    %12333 = vmatpush.bf16.msra.mxu0 %v10008
    %12334 = vmatpush.bf16.msra.mxu0 %v10000
    %12335 = vmatpush.bf16.msra.mxu0 %v9992
    %12336 = vmatpush.bf16.msra.mxu0 %v9984
    %12337 = vmatpush.bf16.msra.mxu0 %v9976
    %12338 = vmatpush.bf16.msra.mxu0 %v9968
    %12339 = vmatmul.bf16.gmra.mxu0 %v5457
    %v12340 = vpop.f32.mrf.mxu0
    %v12341 = vadd.f32 %v12328, %v12340
    %v12342 = vpop.f32.mrf.mxu0
    %12343 = vdwg.mxu0
    %12344 = vmatpush.bf16.msra.mxu0 %v10088
    %12345 = vmatpush.bf16.msra.mxu0 %v10080
    %12346 = vmatpush.bf16.msra.mxu0 %v10072
    %12347 = vmatpush.bf16.msra.mxu0 %v10064
    %12348 = vmatpush.bf16.msra.mxu0 %v10056
    %12349 = vmatpush.bf16.msra.mxu0 %v10048
    %12350 = vmatpush.bf16.msra.mxu0 %v10040
    %12351 = vmatpush.bf16.msra.mxu0 %v10032
    %12352 = vmatmul.bf16.gmra.mxu0 %v5458
    %v12353 = vpop.f32.mrf.mxu0
    %v12354 = vadd.f32 %v12341, %v12353
    %v12355 = vpop.f32.mrf.mxu0
    %12356 = vdwg.mxu0
    %12357 = vmatpush.bf16.msra.mxu0 %v10152
    %12358 = vmatpush.bf16.msra.mxu0 %v10144
    %12359 = vmatpush.bf16.msra.mxu0 %v10136
    %12360 = vmatpush.bf16.msra.mxu0 %v10128
    %12361 = vmatpush.bf16.msra.mxu0 %v10120
    %12362 = vmatpush.bf16.msra.mxu0 %v10112
    %12363 = vmatpush.bf16.msra.mxu0 %v10104
    %12364 = vmatpush.bf16.msra.mxu0 %v10096
    %12365 = vmatmul.bf16.gmra.mxu0 %v5459
    %v12366 = vpop.f32.mrf.mxu0
    %v12367 = vadd.f32 %v12354, %v12366
    %v12368 = vpop.f32.mrf.mxu0
    %12369 = vdwg.mxu0
    %12370 = vmatpush.bf16.msra.mxu0 %v10216
    %12371 = vmatpush.bf16.msra.mxu0 %v10208
    %12372 = vmatpush.bf16.msra.mxu0 %v10200
    %12373 = vmatpush.bf16.msra.mxu0 %v10192
    %12374 = vmatpush.bf16.msra.mxu0 %v10184
    %12375 = vmatpush.bf16.msra.mxu0 %v10176
    %12376 = vmatpush.bf16.msra.mxu0 %v10168
    %12377 = vmatpush.bf16.msra.mxu0 %v10160
    %12378 = vmatmul.bf16.gmra.mxu0 %v5460
    %v12379 = vpop.f32.mrf.mxu0
    %v12380 = vadd.f32 %v12367, %v12379
    %v12381 = vpop.f32.mrf.mxu0
    %12382 = vdwg.mxu0
    %12383 = vmatpush.bf16.msra.mxu0 %v10280
    %12384 = vmatpush.bf16.msra.mxu0 %v10272
    %12385 = vmatpush.bf16.msra.mxu0 %v10264
    %12386 = vmatpush.bf16.msra.mxu0 %v10256
    %12387 = vmatpush.bf16.msra.mxu0 %v10248
    %12388 = vmatpush.bf16.msra.mxu0 %v10240
    %12389 = vmatpush.bf16.msra.mxu0 %v10232
    %12390 = vmatpush.bf16.msra.mxu0 %v10224
    %12391 = vmatmul.bf16.gmra.mxu0 %v5461
    %v12392 = vpop.f32.mrf.mxu0
    %v12393 = vadd.f32 %v12380, %v12392
    %v12394 = vpop.f32.mrf.mxu0
    %12395 = vdwg.mxu0
    %12396 = vmatpush.bf16.msra.mxu0 %v10344
    %12397 = vmatpush.bf16.msra.mxu0 %v10336
    %12398 = vmatpush.bf16.msra.mxu0 %v10328
    %12399 = vmatpush.bf16.msra.mxu0 %v10320
    %12400 = vmatpush.bf16.msra.mxu0 %v10312
    %12401 = vmatpush.bf16.msra.mxu0 %v10304
    %12402 = vmatpush.bf16.msra.mxu0 %v10296
    %12403 = vmatpush.bf16.msra.mxu0 %v10288
    %12404 = vmatmul.bf16.gmra.mxu0 %v5462
    %v12405 = vpop.f32.mrf.mxu0
    %v12406 = vadd.f32 %v12393, %v12405
    %v12407 = vpop.f32.mrf.mxu0
    %12408 = vdwg.mxu0
    %12409 = vmatpush.bf16.msra.mxu0 %v10408
    %12410 = vmatpush.bf16.msra.mxu0 %v10400
    %12411 = vmatpush.bf16.msra.mxu0 %v10392
    %12412 = vmatpush.bf16.msra.mxu0 %v10384
    %12413 = vmatpush.bf16.msra.mxu0 %v10376
    %12414 = vmatpush.bf16.msra.mxu0 %v10368
    %12415 = vmatpush.bf16.msra.mxu0 %v10360
    %12416 = vmatpush.bf16.msra.mxu0 %v10352
    %12417 = vmatmul.bf16.gmra.mxu0 %v5463
    %v12418 = vpop.f32.mrf.mxu0
    %v12419 = vadd.f32 %v12406, %v12418
    %v12420 = vpop.f32.mrf.mxu0
    %12421 = vdwg.mxu0
    %12422 = vmatpush.bf16.msra.mxu0 %v10472
    %12423 = vmatpush.bf16.msra.mxu0 %v10464
    %12424 = vmatpush.bf16.msra.mxu0 %v10456
    %12425 = vmatpush.bf16.msra.mxu0 %v10448
    %12426 = vmatpush.bf16.msra.mxu0 %v10440
    %12427 = vmatpush.bf16.msra.mxu0 %v10432
    %12428 = vmatpush.bf16.msra.mxu0 %v10424
    %12429 = vmatpush.bf16.msra.mxu0 %v10416
    %12430 = vmatmul.bf16.gmra.mxu0 %v5464
    %v12431 = vpop.f32.mrf.mxu0
    %v12432 = vadd.f32 %v12419, %v12431
    %v12433 = vpop.f32.mrf.mxu0
    %12434 = vdwg.mxu0
    %12435 = vmatpush.bf16.msra.mxu0 %v10536
    %12436 = vmatpush.bf16.msra.mxu0 %v10528
    %12437 = vmatpush.bf16.msra.mxu0 %v10520
    %12438 = vmatpush.bf16.msra.mxu0 %v10512
    %12439 = vmatpush.bf16.msra.mxu0 %v10504
    %12440 = vmatpush.bf16.msra.mxu0 %v10496
    %12441 = vmatpush.bf16.msra.mxu0 %v10488
    %12442 = vmatpush.bf16.msra.mxu0 %v10480
    %12443 = vmatmul.bf16.gmra.mxu0 %v5465
    %v12444 = vpop.f32.mrf.mxu0
    %v12445 = vadd.f32 %v12432, %v12444
    %v12446 = vpop.f32.mrf.mxu0
    %12447 = vdwg.mxu0
    %12448 = vmatpush.bf16.msra.mxu0 %v10600
    %12449 = vmatpush.bf16.msra.mxu0 %v10592
    %12450 = vmatpush.bf16.msra.mxu0 %v10584
    %12451 = vmatpush.bf16.msra.mxu0 %v10576
    %12452 = vmatpush.bf16.msra.mxu0 %v10568
    %12453 = vmatpush.bf16.msra.mxu0 %v10560
    %12454 = vmatpush.bf16.msra.mxu0 %v10552
    %12455 = vmatpush.bf16.msra.mxu0 %v10544
    %12456 = vmatmul.bf16.gmra.mxu0 %v5466
    %v12457 = vpop.f32.mrf.mxu0
    %v12458 = vadd.f32 %v12445, %v12457
    %v12459 = vpop.f32.mrf.mxu0
    %12460 = vdwg.mxu0
    %12461 = vmatpush.bf16.msra.mxu0 %v9641
    %12462 = vmatpush.bf16.msra.mxu0 %v9633
    %12463 = vmatpush.bf16.msra.mxu0 %v9625
    %12464 = vmatpush.bf16.msra.mxu0 %v9617
    %12465 = vmatpush.bf16.msra.mxu0 %v9609
    %12466 = vmatpush.bf16.msra.mxu0 %v9601
    %12467 = vmatpush.bf16.msra.mxu0 %v9593
    %12468 = vmatpush.bf16.msra.mxu0 %v9585
    %12469 = vmatmul.bf16.gmra.mxu0 %v5451
    %v12470 = vpop.f32.mrf.mxu0
    %v12471 = vadd.f32 %v6497, %v12470
    %v12472 = vpop.f32.mrf.mxu0
    %12473 = vdwg.mxu0
    %12474 = vmatpush.bf16.msra.mxu0 %v9705
    %12475 = vmatpush.bf16.msra.mxu0 %v9697
    %12476 = vmatpush.bf16.msra.mxu0 %v9689
    %12477 = vmatpush.bf16.msra.mxu0 %v9681
    %12478 = vmatpush.bf16.msra.mxu0 %v9673
    %12479 = vmatpush.bf16.msra.mxu0 %v9665
    %12480 = vmatpush.bf16.msra.mxu0 %v9657
    %12481 = vmatpush.bf16.msra.mxu0 %v9649
    %12482 = vmatmul.bf16.gmra.mxu0 %v5452
    %v12483 = vpop.f32.mrf.mxu0
    %v12484 = vadd.f32 %v12471, %v12483
    %v12485 = vpop.f32.mrf.mxu0
    %12486 = vdwg.mxu0
    %12487 = vmatpush.bf16.msra.mxu0 %v9769
    %12488 = vmatpush.bf16.msra.mxu0 %v9761
    %12489 = vmatpush.bf16.msra.mxu0 %v9753
    %12490 = vmatpush.bf16.msra.mxu0 %v9745
    %12491 = vmatpush.bf16.msra.mxu0 %v9737
    %12492 = vmatpush.bf16.msra.mxu0 %v9729
    %12493 = vmatpush.bf16.msra.mxu0 %v9721
    %12494 = vmatpush.bf16.msra.mxu0 %v9713
    %12495 = vmatmul.bf16.gmra.mxu0 %v5453
    %v12496 = vpop.f32.mrf.mxu0
    %v12497 = vadd.f32 %v12484, %v12496
    %v12498 = vpop.f32.mrf.mxu0
    %12499 = vdwg.mxu0
    %12500 = vmatpush.bf16.msra.mxu0 %v9833
    %12501 = vmatpush.bf16.msra.mxu0 %v9825
    %12502 = vmatpush.bf16.msra.mxu0 %v9817
    %12503 = vmatpush.bf16.msra.mxu0 %v9809
    %12504 = vmatpush.bf16.msra.mxu0 %v9801
    %12505 = vmatpush.bf16.msra.mxu0 %v9793
    %12506 = vmatpush.bf16.msra.mxu0 %v9785
    %12507 = vmatpush.bf16.msra.mxu0 %v9777
    %12508 = vmatmul.bf16.gmra.mxu0 %v5454
    %v12509 = vpop.f32.mrf.mxu0
    %v12510 = vadd.f32 %v12497, %v12509
    %v12511 = vpop.f32.mrf.mxu0
    %12512 = vdwg.mxu0
    %12513 = vmatpush.bf16.msra.mxu0 %v9897
    %12514 = vmatpush.bf16.msra.mxu0 %v9889
    %12515 = vmatpush.bf16.msra.mxu0 %v9881
    %12516 = vmatpush.bf16.msra.mxu0 %v9873
    %12517 = vmatpush.bf16.msra.mxu0 %v9865
    %12518 = vmatpush.bf16.msra.mxu0 %v9857
    %12519 = vmatpush.bf16.msra.mxu0 %v9849
    %12520 = vmatpush.bf16.msra.mxu0 %v9841
    %12521 = vmatmul.bf16.gmra.mxu0 %v5455
    %v12522 = vpop.f32.mrf.mxu0
    %v12523 = vadd.f32 %v12510, %v12522
    %v12524 = vpop.f32.mrf.mxu0
    %12525 = vdwg.mxu0
    %12526 = vmatpush.bf16.msra.mxu0 %v9961
    %12527 = vmatpush.bf16.msra.mxu0 %v9953
    %12528 = vmatpush.bf16.msra.mxu0 %v9945
    %12529 = vmatpush.bf16.msra.mxu0 %v9937
    %12530 = vmatpush.bf16.msra.mxu0 %v9929
    %12531 = vmatpush.bf16.msra.mxu0 %v9921
    %12532 = vmatpush.bf16.msra.mxu0 %v9913
    %12533 = vmatpush.bf16.msra.mxu0 %v9905
    %12534 = vmatmul.bf16.gmra.mxu0 %v5456
    %v12535 = vpop.f32.mrf.mxu0
    %v12536 = vadd.f32 %v12523, %v12535
    %v12537 = vpop.f32.mrf.mxu0
    %12538 = vdwg.mxu0
    %12539 = vmatpush.bf16.msra.mxu0 %v10025
    %12540 = vmatpush.bf16.msra.mxu0 %v10017
    %12541 = vmatpush.bf16.msra.mxu0 %v10009
    %12542 = vmatpush.bf16.msra.mxu0 %v10001
    %12543 = vmatpush.bf16.msra.mxu0 %v9993
    %12544 = vmatpush.bf16.msra.mxu0 %v9985
    %12545 = vmatpush.bf16.msra.mxu0 %v9977
    %12546 = vmatpush.bf16.msra.mxu0 %v9969
    %12547 = vmatmul.bf16.gmra.mxu0 %v5457
    %v12548 = vpop.f32.mrf.mxu0
    %v12549 = vadd.f32 %v12536, %v12548
    %v12550 = vpop.f32.mrf.mxu0
    %12551 = vdwg.mxu0
    %12552 = vmatpush.bf16.msra.mxu0 %v10089
    %12553 = vmatpush.bf16.msra.mxu0 %v10081
    %12554 = vmatpush.bf16.msra.mxu0 %v10073
    %12555 = vmatpush.bf16.msra.mxu0 %v10065
    %12556 = vmatpush.bf16.msra.mxu0 %v10057
    %12557 = vmatpush.bf16.msra.mxu0 %v10049
    %12558 = vmatpush.bf16.msra.mxu0 %v10041
    %12559 = vmatpush.bf16.msra.mxu0 %v10033
    %12560 = vmatmul.bf16.gmra.mxu0 %v5458
    %v12561 = vpop.f32.mrf.mxu0
    %v12562 = vadd.f32 %v12549, %v12561
    %v12563 = vpop.f32.mrf.mxu0
    %12564 = vdwg.mxu0
    %12565 = vmatpush.bf16.msra.mxu0 %v10153
    %12566 = vmatpush.bf16.msra.mxu0 %v10145
    %12567 = vmatpush.bf16.msra.mxu0 %v10137
    %12568 = vmatpush.bf16.msra.mxu0 %v10129
    %12569 = vmatpush.bf16.msra.mxu0 %v10121
    %12570 = vmatpush.bf16.msra.mxu0 %v10113
    %12571 = vmatpush.bf16.msra.mxu0 %v10105
    %12572 = vmatpush.bf16.msra.mxu0 %v10097
    %12573 = vmatmul.bf16.gmra.mxu0 %v5459
    %v12574 = vpop.f32.mrf.mxu0
    %v12575 = vadd.f32 %v12562, %v12574
    %v12576 = vpop.f32.mrf.mxu0
    %12577 = vdwg.mxu0
    %12578 = vmatpush.bf16.msra.mxu0 %v10217
    %12579 = vmatpush.bf16.msra.mxu0 %v10209
    %12580 = vmatpush.bf16.msra.mxu0 %v10201
    %12581 = vmatpush.bf16.msra.mxu0 %v10193
    %12582 = vmatpush.bf16.msra.mxu0 %v10185
    %12583 = vmatpush.bf16.msra.mxu0 %v10177
    %12584 = vmatpush.bf16.msra.mxu0 %v10169
    %12585 = vmatpush.bf16.msra.mxu0 %v10161
    %12586 = vmatmul.bf16.gmra.mxu0 %v5460
    %v12587 = vpop.f32.mrf.mxu0
    %v12588 = vadd.f32 %v12575, %v12587
    %v12589 = vpop.f32.mrf.mxu0
    %12590 = vdwg.mxu0
    %12591 = vmatpush.bf16.msra.mxu0 %v10281
    %12592 = vmatpush.bf16.msra.mxu0 %v10273
    %12593 = vmatpush.bf16.msra.mxu0 %v10265
    %12594 = vmatpush.bf16.msra.mxu0 %v10257
    %12595 = vmatpush.bf16.msra.mxu0 %v10249
    %12596 = vmatpush.bf16.msra.mxu0 %v10241
    %12597 = vmatpush.bf16.msra.mxu0 %v10233
    %12598 = vmatpush.bf16.msra.mxu0 %v10225
    %12599 = vmatmul.bf16.gmra.mxu0 %v5461
    %v12600 = vpop.f32.mrf.mxu0
    %v12601 = vadd.f32 %v12588, %v12600
    %v12602 = vpop.f32.mrf.mxu0
    %12603 = vdwg.mxu0
    %12604 = vmatpush.bf16.msra.mxu0 %v10345
    %12605 = vmatpush.bf16.msra.mxu0 %v10337
    %12606 = vmatpush.bf16.msra.mxu0 %v10329
    %12607 = vmatpush.bf16.msra.mxu0 %v10321
    %12608 = vmatpush.bf16.msra.mxu0 %v10313
    %12609 = vmatpush.bf16.msra.mxu0 %v10305
    %12610 = vmatpush.bf16.msra.mxu0 %v10297
    %12611 = vmatpush.bf16.msra.mxu0 %v10289
    %12612 = vmatmul.bf16.gmra.mxu0 %v5462
    %v12613 = vpop.f32.mrf.mxu0
    %v12614 = vadd.f32 %v12601, %v12613
    %v12615 = vpop.f32.mrf.mxu0
    %12616 = vdwg.mxu0
    %12617 = vmatpush.bf16.msra.mxu0 %v10409
    %12618 = vmatpush.bf16.msra.mxu0 %v10401
    %12619 = vmatpush.bf16.msra.mxu0 %v10393
    %12620 = vmatpush.bf16.msra.mxu0 %v10385
    %12621 = vmatpush.bf16.msra.mxu0 %v10377
    %12622 = vmatpush.bf16.msra.mxu0 %v10369
    %12623 = vmatpush.bf16.msra.mxu0 %v10361
    %12624 = vmatpush.bf16.msra.mxu0 %v10353
    %12625 = vmatmul.bf16.gmra.mxu0 %v5463
    %v12626 = vpop.f32.mrf.mxu0
    %v12627 = vadd.f32 %v12614, %v12626
    %v12628 = vpop.f32.mrf.mxu0
    %12629 = vdwg.mxu0
    %12630 = vmatpush.bf16.msra.mxu0 %v10473
    %12631 = vmatpush.bf16.msra.mxu0 %v10465
    %12632 = vmatpush.bf16.msra.mxu0 %v10457
    %12633 = vmatpush.bf16.msra.mxu0 %v10449
    %12634 = vmatpush.bf16.msra.mxu0 %v10441
    %12635 = vmatpush.bf16.msra.mxu0 %v10433
    %12636 = vmatpush.bf16.msra.mxu0 %v10425
    %12637 = vmatpush.bf16.msra.mxu0 %v10417
    %12638 = vmatmul.bf16.gmra.mxu0 %v5464
    %v12639 = vpop.f32.mrf.mxu0
    %v12640 = vadd.f32 %v12627, %v12639
    %v12641 = vpop.f32.mrf.mxu0
    %12642 = vdwg.mxu0
    %12643 = vmatpush.bf16.msra.mxu0 %v10537
    %12644 = vmatpush.bf16.msra.mxu0 %v10529
    %12645 = vmatpush.bf16.msra.mxu0 %v10521
    %12646 = vmatpush.bf16.msra.mxu0 %v10513
    %12647 = vmatpush.bf16.msra.mxu0 %v10505
    %12648 = vmatpush.bf16.msra.mxu0 %v10497
    %12649 = vmatpush.bf16.msra.mxu0 %v10489
    %12650 = vmatpush.bf16.msra.mxu0 %v10481
    %12651 = vmatmul.bf16.gmra.mxu0 %v5465
    %v12652 = vpop.f32.mrf.mxu0
    %v12653 = vadd.f32 %v12640, %v12652
    %v12654 = vpop.f32.mrf.mxu0
    %12655 = vdwg.mxu0
    %12656 = vmatpush.bf16.msra.mxu0 %v10601
    %12657 = vmatpush.bf16.msra.mxu0 %v10593
    %12658 = vmatpush.bf16.msra.mxu0 %v10585
    %12659 = vmatpush.bf16.msra.mxu0 %v10577
    %12660 = vmatpush.bf16.msra.mxu0 %v10569
    %12661 = vmatpush.bf16.msra.mxu0 %v10561
    %12662 = vmatpush.bf16.msra.mxu0 %v10553
    %12663 = vmatpush.bf16.msra.mxu0 %v10545
    %12664 = vmatmul.bf16.gmra.mxu0 %v5466
    %v12665 = vpop.f32.mrf.mxu0
    %v12666 = vadd.f32 %v12653, %v12665
    %v12667 = vpop.f32.mrf.mxu0
    %12668 = vdwg.mxu0
    %12669 = vmatpush.bf16.msra.mxu0 %v9642
    %12670 = vmatpush.bf16.msra.mxu0 %v9634
    %12671 = vmatpush.bf16.msra.mxu0 %v9626
    %12672 = vmatpush.bf16.msra.mxu0 %v9618
    %12673 = vmatpush.bf16.msra.mxu0 %v9610
    %12674 = vmatpush.bf16.msra.mxu0 %v9602
    %12675 = vmatpush.bf16.msra.mxu0 %v9594
    %12676 = vmatpush.bf16.msra.mxu0 %v9586
    %12677 = vmatmul.bf16.gmra.mxu0 %v5451
    %v12678 = vpop.f32.mrf.mxu0
    %v12679 = vadd.f32 %v6498, %v12678
    %v12680 = vpop.f32.mrf.mxu0
    %12681 = vdwg.mxu0
    %12682 = vmatpush.bf16.msra.mxu0 %v9706
    %12683 = vmatpush.bf16.msra.mxu0 %v9698
    %12684 = vmatpush.bf16.msra.mxu0 %v9690
    %12685 = vmatpush.bf16.msra.mxu0 %v9682
    %12686 = vmatpush.bf16.msra.mxu0 %v9674
    %12687 = vmatpush.bf16.msra.mxu0 %v9666
    %12688 = vmatpush.bf16.msra.mxu0 %v9658
    %12689 = vmatpush.bf16.msra.mxu0 %v9650
    %12690 = vmatmul.bf16.gmra.mxu0 %v5452
    %v12691 = vpop.f32.mrf.mxu0
    %v12692 = vadd.f32 %v12679, %v12691
    %v12693 = vpop.f32.mrf.mxu0
    %12694 = vdwg.mxu0
    %12695 = vmatpush.bf16.msra.mxu0 %v9770
    %12696 = vmatpush.bf16.msra.mxu0 %v9762
    %12697 = vmatpush.bf16.msra.mxu0 %v9754
    %12698 = vmatpush.bf16.msra.mxu0 %v9746
    %12699 = vmatpush.bf16.msra.mxu0 %v9738
    %12700 = vmatpush.bf16.msra.mxu0 %v9730
    %12701 = vmatpush.bf16.msra.mxu0 %v9722
    %12702 = vmatpush.bf16.msra.mxu0 %v9714
    %12703 = vmatmul.bf16.gmra.mxu0 %v5453
    %v12704 = vpop.f32.mrf.mxu0
    %v12705 = vadd.f32 %v12692, %v12704
    %v12706 = vpop.f32.mrf.mxu0
    %12707 = vdwg.mxu0
    %12708 = vmatpush.bf16.msra.mxu0 %v9834
    %12709 = vmatpush.bf16.msra.mxu0 %v9826
    %12710 = vmatpush.bf16.msra.mxu0 %v9818
    %12711 = vmatpush.bf16.msra.mxu0 %v9810
    %12712 = vmatpush.bf16.msra.mxu0 %v9802
    %12713 = vmatpush.bf16.msra.mxu0 %v9794
    %12714 = vmatpush.bf16.msra.mxu0 %v9786
    %12715 = vmatpush.bf16.msra.mxu0 %v9778
    %12716 = vmatmul.bf16.gmra.mxu0 %v5454
    %v12717 = vpop.f32.mrf.mxu0
    %v12718 = vadd.f32 %v12705, %v12717
    %v12719 = vpop.f32.mrf.mxu0
    %12720 = vdwg.mxu0
    %12721 = vmatpush.bf16.msra.mxu0 %v9898
    %12722 = vmatpush.bf16.msra.mxu0 %v9890
    %12723 = vmatpush.bf16.msra.mxu0 %v9882
    %12724 = vmatpush.bf16.msra.mxu0 %v9874
    %12725 = vmatpush.bf16.msra.mxu0 %v9866
    %12726 = vmatpush.bf16.msra.mxu0 %v9858
    %12727 = vmatpush.bf16.msra.mxu0 %v9850
    %12728 = vmatpush.bf16.msra.mxu0 %v9842
    %12729 = vmatmul.bf16.gmra.mxu0 %v5455
    %v12730 = vpop.f32.mrf.mxu0
    %v12731 = vadd.f32 %v12718, %v12730
    %v12732 = vpop.f32.mrf.mxu0
    %12733 = vdwg.mxu0
    %12734 = vmatpush.bf16.msra.mxu0 %v9962
    %12735 = vmatpush.bf16.msra.mxu0 %v9954
    %12736 = vmatpush.bf16.msra.mxu0 %v9946
    %12737 = vmatpush.bf16.msra.mxu0 %v9938
    %12738 = vmatpush.bf16.msra.mxu0 %v9930
    %12739 = vmatpush.bf16.msra.mxu0 %v9922
    %12740 = vmatpush.bf16.msra.mxu0 %v9914
    %12741 = vmatpush.bf16.msra.mxu0 %v9906
    %12742 = vmatmul.bf16.gmra.mxu0 %v5456
    %v12743 = vpop.f32.mrf.mxu0
    %v12744 = vadd.f32 %v12731, %v12743
    %v12745 = vpop.f32.mrf.mxu0
    %12746 = vdwg.mxu0
    %12747 = vmatpush.bf16.msra.mxu0 %v10026
    %12748 = vmatpush.bf16.msra.mxu0 %v10018
    %12749 = vmatpush.bf16.msra.mxu0 %v10010
    %12750 = vmatpush.bf16.msra.mxu0 %v10002
    %12751 = vmatpush.bf16.msra.mxu0 %v9994
    %12752 = vmatpush.bf16.msra.mxu0 %v9986
    %12753 = vmatpush.bf16.msra.mxu0 %v9978
    %12754 = vmatpush.bf16.msra.mxu0 %v9970
    %12755 = vmatmul.bf16.gmra.mxu0 %v5457
    %v12756 = vpop.f32.mrf.mxu0
    %v12757 = vadd.f32 %v12744, %v12756
    %v12758 = vpop.f32.mrf.mxu0
    %12759 = vdwg.mxu0
    %12760 = vmatpush.bf16.msra.mxu0 %v10090
    %12761 = vmatpush.bf16.msra.mxu0 %v10082
    %12762 = vmatpush.bf16.msra.mxu0 %v10074
    %12763 = vmatpush.bf16.msra.mxu0 %v10066
    %12764 = vmatpush.bf16.msra.mxu0 %v10058
    %12765 = vmatpush.bf16.msra.mxu0 %v10050
    %12766 = vmatpush.bf16.msra.mxu0 %v10042
    %12767 = vmatpush.bf16.msra.mxu0 %v10034
    %12768 = vmatmul.bf16.gmra.mxu0 %v5458
    %v12769 = vpop.f32.mrf.mxu0
    %v12770 = vadd.f32 %v12757, %v12769
    %v12771 = vpop.f32.mrf.mxu0
    %12772 = vdwg.mxu0
    %12773 = vmatpush.bf16.msra.mxu0 %v10154
    %12774 = vmatpush.bf16.msra.mxu0 %v10146
    %12775 = vmatpush.bf16.msra.mxu0 %v10138
    %12776 = vmatpush.bf16.msra.mxu0 %v10130
    %12777 = vmatpush.bf16.msra.mxu0 %v10122
    %12778 = vmatpush.bf16.msra.mxu0 %v10114
    %12779 = vmatpush.bf16.msra.mxu0 %v10106
    %12780 = vmatpush.bf16.msra.mxu0 %v10098
    %12781 = vmatmul.bf16.gmra.mxu0 %v5459
    %v12782 = vpop.f32.mrf.mxu0
    %v12783 = vadd.f32 %v12770, %v12782
    %v12784 = vpop.f32.mrf.mxu0
    %12785 = vdwg.mxu0
    %12786 = vmatpush.bf16.msra.mxu0 %v10218
    %12787 = vmatpush.bf16.msra.mxu0 %v10210
    %12788 = vmatpush.bf16.msra.mxu0 %v10202
    %12789 = vmatpush.bf16.msra.mxu0 %v10194
    %12790 = vmatpush.bf16.msra.mxu0 %v10186
    %12791 = vmatpush.bf16.msra.mxu0 %v10178
    %12792 = vmatpush.bf16.msra.mxu0 %v10170
    %12793 = vmatpush.bf16.msra.mxu0 %v10162
    %12794 = vmatmul.bf16.gmra.mxu0 %v5460
    %v12795 = vpop.f32.mrf.mxu0
    %v12796 = vadd.f32 %v12783, %v12795
    %v12797 = vpop.f32.mrf.mxu0
    %12798 = vdwg.mxu0
    %12799 = vmatpush.bf16.msra.mxu0 %v10282
    %12800 = vmatpush.bf16.msra.mxu0 %v10274
    %12801 = vmatpush.bf16.msra.mxu0 %v10266
    %12802 = vmatpush.bf16.msra.mxu0 %v10258
    %12803 = vmatpush.bf16.msra.mxu0 %v10250
    %12804 = vmatpush.bf16.msra.mxu0 %v10242
    %12805 = vmatpush.bf16.msra.mxu0 %v10234
    %12806 = vmatpush.bf16.msra.mxu0 %v10226
    %12807 = vmatmul.bf16.gmra.mxu0 %v5461
    %v12808 = vpop.f32.mrf.mxu0
    %v12809 = vadd.f32 %v12796, %v12808
    %v12810 = vpop.f32.mrf.mxu0
    %12811 = vdwg.mxu0
    %12812 = vmatpush.bf16.msra.mxu0 %v10346
    %12813 = vmatpush.bf16.msra.mxu0 %v10338
    %12814 = vmatpush.bf16.msra.mxu0 %v10330
    %12815 = vmatpush.bf16.msra.mxu0 %v10322
    %12816 = vmatpush.bf16.msra.mxu0 %v10314
    %12817 = vmatpush.bf16.msra.mxu0 %v10306
    %12818 = vmatpush.bf16.msra.mxu0 %v10298
    %12819 = vmatpush.bf16.msra.mxu0 %v10290
    %12820 = vmatmul.bf16.gmra.mxu0 %v5462
    %v12821 = vpop.f32.mrf.mxu0
    %v12822 = vadd.f32 %v12809, %v12821
    %v12823 = vpop.f32.mrf.mxu0
    %12824 = vdwg.mxu0
    %12825 = vmatpush.bf16.msra.mxu0 %v10410
    %12826 = vmatpush.bf16.msra.mxu0 %v10402
    %12827 = vmatpush.bf16.msra.mxu0 %v10394
    %12828 = vmatpush.bf16.msra.mxu0 %v10386
    %12829 = vmatpush.bf16.msra.mxu0 %v10378
    %12830 = vmatpush.bf16.msra.mxu0 %v10370
    %12831 = vmatpush.bf16.msra.mxu0 %v10362
    %12832 = vmatpush.bf16.msra.mxu0 %v10354
    %12833 = vmatmul.bf16.gmra.mxu0 %v5463
    %v12834 = vpop.f32.mrf.mxu0
    %v12835 = vadd.f32 %v12822, %v12834
    %v12836 = vpop.f32.mrf.mxu0
    %12837 = vdwg.mxu0
    %12838 = vmatpush.bf16.msra.mxu0 %v10474
    %12839 = vmatpush.bf16.msra.mxu0 %v10466
    %12840 = vmatpush.bf16.msra.mxu0 %v10458
    %12841 = vmatpush.bf16.msra.mxu0 %v10450
    %12842 = vmatpush.bf16.msra.mxu0 %v10442
    %12843 = vmatpush.bf16.msra.mxu0 %v10434
    %12844 = vmatpush.bf16.msra.mxu0 %v10426
    %12845 = vmatpush.bf16.msra.mxu0 %v10418
    %12846 = vmatmul.bf16.gmra.mxu0 %v5464
    %v12847 = vpop.f32.mrf.mxu0
    %v12848 = vadd.f32 %v12835, %v12847
    %v12849 = vpop.f32.mrf.mxu0
    %12850 = vdwg.mxu0
    %12851 = vmatpush.bf16.msra.mxu0 %v10538
    %12852 = vmatpush.bf16.msra.mxu0 %v10530
    %12853 = vmatpush.bf16.msra.mxu0 %v10522
    %12854 = vmatpush.bf16.msra.mxu0 %v10514
    %12855 = vmatpush.bf16.msra.mxu0 %v10506
    %12856 = vmatpush.bf16.msra.mxu0 %v10498
    %12857 = vmatpush.bf16.msra.mxu0 %v10490
    %12858 = vmatpush.bf16.msra.mxu0 %v10482
    %12859 = vmatmul.bf16.gmra.mxu0 %v5465
    %v12860 = vpop.f32.mrf.mxu0
    %v12861 = vadd.f32 %v12848, %v12860
    %v12862 = vpop.f32.mrf.mxu0
    %12863 = vdwg.mxu0
    %12864 = vmatpush.bf16.msra.mxu0 %v10602
    %12865 = vmatpush.bf16.msra.mxu0 %v10594
    %12866 = vmatpush.bf16.msra.mxu0 %v10586
    %12867 = vmatpush.bf16.msra.mxu0 %v10578
    %12868 = vmatpush.bf16.msra.mxu0 %v10570
    %12869 = vmatpush.bf16.msra.mxu0 %v10562
    %12870 = vmatpush.bf16.msra.mxu0 %v10554
    %12871 = vmatpush.bf16.msra.mxu0 %v10546
    %12872 = vmatmul.bf16.gmra.mxu0 %v5466
    %v12873 = vpop.f32.mrf.mxu0
    %v12874 = vadd.f32 %v12861, %v12873
    %v12875 = vpop.f32.mrf.mxu0
    %12876 = vdwg.mxu0
    %12877 = vmatpush.bf16.msra.mxu0 %v9643
    %12878 = vmatpush.bf16.msra.mxu0 %v9635
    %12879 = vmatpush.bf16.msra.mxu0 %v9627
    %12880 = vmatpush.bf16.msra.mxu0 %v9619
    %12881 = vmatpush.bf16.msra.mxu0 %v9611
    %12882 = vmatpush.bf16.msra.mxu0 %v9603
    %12883 = vmatpush.bf16.msra.mxu0 %v9595
    %12884 = vmatpush.bf16.msra.mxu0 %v9587
    %12885 = vmatmul.bf16.gmra.mxu0 %v5451
    %v12886 = vpop.f32.mrf.mxu0
    %v12887 = vadd.f32 %v6499, %v12886
    %v12888 = vpop.f32.mrf.mxu0
    %12889 = vdwg.mxu0
    %12890 = vmatpush.bf16.msra.mxu0 %v9707
    %12891 = vmatpush.bf16.msra.mxu0 %v9699
    %12892 = vmatpush.bf16.msra.mxu0 %v9691
    %12893 = vmatpush.bf16.msra.mxu0 %v9683
    %12894 = vmatpush.bf16.msra.mxu0 %v9675
    %12895 = vmatpush.bf16.msra.mxu0 %v9667
    %12896 = vmatpush.bf16.msra.mxu0 %v9659
    %12897 = vmatpush.bf16.msra.mxu0 %v9651
    %12898 = vmatmul.bf16.gmra.mxu0 %v5452
    %v12899 = vpop.f32.mrf.mxu0
    %v12900 = vadd.f32 %v12887, %v12899
    %v12901 = vpop.f32.mrf.mxu0
    %12902 = vdwg.mxu0
    %12903 = vmatpush.bf16.msra.mxu0 %v9771
    %12904 = vmatpush.bf16.msra.mxu0 %v9763
    %12905 = vmatpush.bf16.msra.mxu0 %v9755
    %12906 = vmatpush.bf16.msra.mxu0 %v9747
    %12907 = vmatpush.bf16.msra.mxu0 %v9739
    %12908 = vmatpush.bf16.msra.mxu0 %v9731
    %12909 = vmatpush.bf16.msra.mxu0 %v9723
    %12910 = vmatpush.bf16.msra.mxu0 %v9715
    %12911 = vmatmul.bf16.gmra.mxu0 %v5453
    %v12912 = vpop.f32.mrf.mxu0
    %v12913 = vadd.f32 %v12900, %v12912
    %v12914 = vpop.f32.mrf.mxu0
    %12915 = vdwg.mxu0
    %12916 = vmatpush.bf16.msra.mxu0 %v9835
    %12917 = vmatpush.bf16.msra.mxu0 %v9827
    %12918 = vmatpush.bf16.msra.mxu0 %v9819
    %12919 = vmatpush.bf16.msra.mxu0 %v9811
    %12920 = vmatpush.bf16.msra.mxu0 %v9803
    %12921 = vmatpush.bf16.msra.mxu0 %v9795
    %12922 = vmatpush.bf16.msra.mxu0 %v9787
    %12923 = vmatpush.bf16.msra.mxu0 %v9779
    %12924 = vmatmul.bf16.gmra.mxu0 %v5454
    %v12925 = vpop.f32.mrf.mxu0
    %v12926 = vadd.f32 %v12913, %v12925
    %v12927 = vpop.f32.mrf.mxu0
    %12928 = vdwg.mxu0
    %12929 = vmatpush.bf16.msra.mxu0 %v9899
    %12930 = vmatpush.bf16.msra.mxu0 %v9891
    %12931 = vmatpush.bf16.msra.mxu0 %v9883
    %12932 = vmatpush.bf16.msra.mxu0 %v9875
    %12933 = vmatpush.bf16.msra.mxu0 %v9867
    %12934 = vmatpush.bf16.msra.mxu0 %v9859
    %12935 = vmatpush.bf16.msra.mxu0 %v9851
    %12936 = vmatpush.bf16.msra.mxu0 %v9843
    %12937 = vmatmul.bf16.gmra.mxu0 %v5455
    %v12938 = vpop.f32.mrf.mxu0
    %v12939 = vadd.f32 %v12926, %v12938
    %v12940 = vpop.f32.mrf.mxu0
    %12941 = vdwg.mxu0
    %12942 = vmatpush.bf16.msra.mxu0 %v9963
    %12943 = vmatpush.bf16.msra.mxu0 %v9955
    %12944 = vmatpush.bf16.msra.mxu0 %v9947
    %12945 = vmatpush.bf16.msra.mxu0 %v9939
    %12946 = vmatpush.bf16.msra.mxu0 %v9931
    %12947 = vmatpush.bf16.msra.mxu0 %v9923
    %12948 = vmatpush.bf16.msra.mxu0 %v9915
    %12949 = vmatpush.bf16.msra.mxu0 %v9907
    %12950 = vmatmul.bf16.gmra.mxu0 %v5456
    %v12951 = vpop.f32.mrf.mxu0
    %v12952 = vadd.f32 %v12939, %v12951
    %v12953 = vpop.f32.mrf.mxu0
    %12954 = vdwg.mxu0
    %12955 = vmatpush.bf16.msra.mxu0 %v10027
    %12956 = vmatpush.bf16.msra.mxu0 %v10019
    %12957 = vmatpush.bf16.msra.mxu0 %v10011
    %12958 = vmatpush.bf16.msra.mxu0 %v10003
    %12959 = vmatpush.bf16.msra.mxu0 %v9995
    %12960 = vmatpush.bf16.msra.mxu0 %v9987
    %12961 = vmatpush.bf16.msra.mxu0 %v9979
    %12962 = vmatpush.bf16.msra.mxu0 %v9971
    %12963 = vmatmul.bf16.gmra.mxu0 %v5457
    %v12964 = vpop.f32.mrf.mxu0
    %v12965 = vadd.f32 %v12952, %v12964
    %v12966 = vpop.f32.mrf.mxu0
    %12967 = vdwg.mxu0
    %12968 = vmatpush.bf16.msra.mxu0 %v10091
    %12969 = vmatpush.bf16.msra.mxu0 %v10083
    %12970 = vmatpush.bf16.msra.mxu0 %v10075
    %12971 = vmatpush.bf16.msra.mxu0 %v10067
    %12972 = vmatpush.bf16.msra.mxu0 %v10059
    %12973 = vmatpush.bf16.msra.mxu0 %v10051
    %12974 = vmatpush.bf16.msra.mxu0 %v10043
    %12975 = vmatpush.bf16.msra.mxu0 %v10035
    %12976 = vmatmul.bf16.gmra.mxu0 %v5458
    %v12977 = vpop.f32.mrf.mxu0
    %v12978 = vadd.f32 %v12965, %v12977
    %v12979 = vpop.f32.mrf.mxu0
    %12980 = vdwg.mxu0
    %12981 = vmatpush.bf16.msra.mxu0 %v10155
    %12982 = vmatpush.bf16.msra.mxu0 %v10147
    %12983 = vmatpush.bf16.msra.mxu0 %v10139
    %12984 = vmatpush.bf16.msra.mxu0 %v10131
    %12985 = vmatpush.bf16.msra.mxu0 %v10123
    %12986 = vmatpush.bf16.msra.mxu0 %v10115
    %12987 = vmatpush.bf16.msra.mxu0 %v10107
    %12988 = vmatpush.bf16.msra.mxu0 %v10099
    %12989 = vmatmul.bf16.gmra.mxu0 %v5459
    %v12990 = vpop.f32.mrf.mxu0
    %v12991 = vadd.f32 %v12978, %v12990
    %v12992 = vpop.f32.mrf.mxu0
    %12993 = vdwg.mxu0
    %12994 = vmatpush.bf16.msra.mxu0 %v10219
    %12995 = vmatpush.bf16.msra.mxu0 %v10211
    %12996 = vmatpush.bf16.msra.mxu0 %v10203
    %12997 = vmatpush.bf16.msra.mxu0 %v10195
    %12998 = vmatpush.bf16.msra.mxu0 %v10187
    %12999 = vmatpush.bf16.msra.mxu0 %v10179
    %13000 = vmatpush.bf16.msra.mxu0 %v10171
    %13001 = vmatpush.bf16.msra.mxu0 %v10163
    %13002 = vmatmul.bf16.gmra.mxu0 %v5460
    %v13003 = vpop.f32.mrf.mxu0
    %v13004 = vadd.f32 %v12991, %v13003
    %v13005 = vpop.f32.mrf.mxu0
    %13006 = vdwg.mxu0
    %13007 = vmatpush.bf16.msra.mxu0 %v10283
    %13008 = vmatpush.bf16.msra.mxu0 %v10275
    %13009 = vmatpush.bf16.msra.mxu0 %v10267
    %13010 = vmatpush.bf16.msra.mxu0 %v10259
    %13011 = vmatpush.bf16.msra.mxu0 %v10251
    %13012 = vmatpush.bf16.msra.mxu0 %v10243
    %13013 = vmatpush.bf16.msra.mxu0 %v10235
    %13014 = vmatpush.bf16.msra.mxu0 %v10227
    %13015 = vmatmul.bf16.gmra.mxu0 %v5461
    %v13016 = vpop.f32.mrf.mxu0
    %v13017 = vadd.f32 %v13004, %v13016
    %v13018 = vpop.f32.mrf.mxu0
    %13019 = vdwg.mxu0
    %13020 = vmatpush.bf16.msra.mxu0 %v10347
    %13021 = vmatpush.bf16.msra.mxu0 %v10339
    %13022 = vmatpush.bf16.msra.mxu0 %v10331
    %13023 = vmatpush.bf16.msra.mxu0 %v10323
    %13024 = vmatpush.bf16.msra.mxu0 %v10315
    %13025 = vmatpush.bf16.msra.mxu0 %v10307
    %13026 = vmatpush.bf16.msra.mxu0 %v10299
    %13027 = vmatpush.bf16.msra.mxu0 %v10291
    %13028 = vmatmul.bf16.gmra.mxu0 %v5462
    %v13029 = vpop.f32.mrf.mxu0
    %v13030 = vadd.f32 %v13017, %v13029
    %v13031 = vpop.f32.mrf.mxu0
    %13032 = vdwg.mxu0
    %13033 = vmatpush.bf16.msra.mxu0 %v10411
    %13034 = vmatpush.bf16.msra.mxu0 %v10403
    %13035 = vmatpush.bf16.msra.mxu0 %v10395
    %13036 = vmatpush.bf16.msra.mxu0 %v10387
    %13037 = vmatpush.bf16.msra.mxu0 %v10379
    %13038 = vmatpush.bf16.msra.mxu0 %v10371
    %13039 = vmatpush.bf16.msra.mxu0 %v10363
    %13040 = vmatpush.bf16.msra.mxu0 %v10355
    %13041 = vmatmul.bf16.gmra.mxu0 %v5463
    %v13042 = vpop.f32.mrf.mxu0
    %v13043 = vadd.f32 %v13030, %v13042
    %v13044 = vpop.f32.mrf.mxu0
    %13045 = vdwg.mxu0
    %13046 = vmatpush.bf16.msra.mxu0 %v10475
    %13047 = vmatpush.bf16.msra.mxu0 %v10467
    %13048 = vmatpush.bf16.msra.mxu0 %v10459
    %13049 = vmatpush.bf16.msra.mxu0 %v10451
    %13050 = vmatpush.bf16.msra.mxu0 %v10443
    %13051 = vmatpush.bf16.msra.mxu0 %v10435
    %13052 = vmatpush.bf16.msra.mxu0 %v10427
    %13053 = vmatpush.bf16.msra.mxu0 %v10419
    %13054 = vmatmul.bf16.gmra.mxu0 %v5464
    %v13055 = vpop.f32.mrf.mxu0
    %v13056 = vadd.f32 %v13043, %v13055
    %v13057 = vpop.f32.mrf.mxu0
    %13058 = vdwg.mxu0
    %13059 = vmatpush.bf16.msra.mxu0 %v10539
    %13060 = vmatpush.bf16.msra.mxu0 %v10531
    %13061 = vmatpush.bf16.msra.mxu0 %v10523
    %13062 = vmatpush.bf16.msra.mxu0 %v10515
    %13063 = vmatpush.bf16.msra.mxu0 %v10507
    %13064 = vmatpush.bf16.msra.mxu0 %v10499
    %13065 = vmatpush.bf16.msra.mxu0 %v10491
    %13066 = vmatpush.bf16.msra.mxu0 %v10483
    %13067 = vmatmul.bf16.gmra.mxu0 %v5465
    %v13068 = vpop.f32.mrf.mxu0
    %v13069 = vadd.f32 %v13056, %v13068
    %v13070 = vpop.f32.mrf.mxu0
    %13071 = vdwg.mxu0
    %13072 = vmatpush.bf16.msra.mxu0 %v10603
    %13073 = vmatpush.bf16.msra.mxu0 %v10595
    %13074 = vmatpush.bf16.msra.mxu0 %v10587
    %13075 = vmatpush.bf16.msra.mxu0 %v10579
    %13076 = vmatpush.bf16.msra.mxu0 %v10571
    %13077 = vmatpush.bf16.msra.mxu0 %v10563
    %13078 = vmatpush.bf16.msra.mxu0 %v10555
    %13079 = vmatpush.bf16.msra.mxu0 %v10547
    %13080 = vmatmul.bf16.gmra.mxu0 %v5466
    %v13081 = vpop.f32.mrf.mxu0
    %v13082 = vadd.f32 %v13069, %v13081
    %v13083 = vpop.f32.mrf.mxu0
    %13084 = vdwg.mxu0
    %13085 = vmatpush.bf16.msra.mxu0 %v9644
    %13086 = vmatpush.bf16.msra.mxu0 %v9636
    %13087 = vmatpush.bf16.msra.mxu0 %v9628
    %13088 = vmatpush.bf16.msra.mxu0 %v9620
    %13089 = vmatpush.bf16.msra.mxu0 %v9612
    %13090 = vmatpush.bf16.msra.mxu0 %v9604
    %13091 = vmatpush.bf16.msra.mxu0 %v9596
    %13092 = vmatpush.bf16.msra.mxu0 %v9588
    %13093 = vmatmul.bf16.gmra.mxu0 %v5451
    %v13094 = vpop.f32.mrf.mxu0
    %v13095 = vadd.f32 %v6500, %v13094
    %v13096 = vpop.f32.mrf.mxu0
    %13097 = vdwg.mxu0
    %13098 = vmatpush.bf16.msra.mxu0 %v9708
    %13099 = vmatpush.bf16.msra.mxu0 %v9700
    %13100 = vmatpush.bf16.msra.mxu0 %v9692
    %13101 = vmatpush.bf16.msra.mxu0 %v9684
    %13102 = vmatpush.bf16.msra.mxu0 %v9676
    %13103 = vmatpush.bf16.msra.mxu0 %v9668
    %13104 = vmatpush.bf16.msra.mxu0 %v9660
    %13105 = vmatpush.bf16.msra.mxu0 %v9652
    %13106 = vmatmul.bf16.gmra.mxu0 %v5452
    %v13107 = vpop.f32.mrf.mxu0
    %v13108 = vadd.f32 %v13095, %v13107
    %v13109 = vpop.f32.mrf.mxu0
    %13110 = vdwg.mxu0
    %13111 = vmatpush.bf16.msra.mxu0 %v9772
    %13112 = vmatpush.bf16.msra.mxu0 %v9764
    %13113 = vmatpush.bf16.msra.mxu0 %v9756
    %13114 = vmatpush.bf16.msra.mxu0 %v9748
    %13115 = vmatpush.bf16.msra.mxu0 %v9740
    %13116 = vmatpush.bf16.msra.mxu0 %v9732
    %13117 = vmatpush.bf16.msra.mxu0 %v9724
    %13118 = vmatpush.bf16.msra.mxu0 %v9716
    %13119 = vmatmul.bf16.gmra.mxu0 %v5453
    %v13120 = vpop.f32.mrf.mxu0
    %v13121 = vadd.f32 %v13108, %v13120
    %v13122 = vpop.f32.mrf.mxu0
    %13123 = vdwg.mxu0
    %13124 = vmatpush.bf16.msra.mxu0 %v9836
    %13125 = vmatpush.bf16.msra.mxu0 %v9828
    %13126 = vmatpush.bf16.msra.mxu0 %v9820
    %13127 = vmatpush.bf16.msra.mxu0 %v9812
    %13128 = vmatpush.bf16.msra.mxu0 %v9804
    %13129 = vmatpush.bf16.msra.mxu0 %v9796
    %13130 = vmatpush.bf16.msra.mxu0 %v9788
    %13131 = vmatpush.bf16.msra.mxu0 %v9780
    %13132 = vmatmul.bf16.gmra.mxu0 %v5454
    %v13133 = vpop.f32.mrf.mxu0
    %v13134 = vadd.f32 %v13121, %v13133
    %v13135 = vpop.f32.mrf.mxu0
    %13136 = vdwg.mxu0
    %13137 = vmatpush.bf16.msra.mxu0 %v9900
    %13138 = vmatpush.bf16.msra.mxu0 %v9892
    %13139 = vmatpush.bf16.msra.mxu0 %v9884
    %13140 = vmatpush.bf16.msra.mxu0 %v9876
    %13141 = vmatpush.bf16.msra.mxu0 %v9868
    %13142 = vmatpush.bf16.msra.mxu0 %v9860
    %13143 = vmatpush.bf16.msra.mxu0 %v9852
    %13144 = vmatpush.bf16.msra.mxu0 %v9844
    %13145 = vmatmul.bf16.gmra.mxu0 %v5455
    %v13146 = vpop.f32.mrf.mxu0
    %v13147 = vadd.f32 %v13134, %v13146
    %v13148 = vpop.f32.mrf.mxu0
    %13149 = vdwg.mxu0
    %13150 = vmatpush.bf16.msra.mxu0 %v9964
    %13151 = vmatpush.bf16.msra.mxu0 %v9956
    %13152 = vmatpush.bf16.msra.mxu0 %v9948
    %13153 = vmatpush.bf16.msra.mxu0 %v9940
    %13154 = vmatpush.bf16.msra.mxu0 %v9932
    %13155 = vmatpush.bf16.msra.mxu0 %v9924
    %13156 = vmatpush.bf16.msra.mxu0 %v9916
    %13157 = vmatpush.bf16.msra.mxu0 %v9908
    %13158 = vmatmul.bf16.gmra.mxu0 %v5456
    %v13159 = vpop.f32.mrf.mxu0
    %v13160 = vadd.f32 %v13147, %v13159
    %v13161 = vpop.f32.mrf.mxu0
    %13162 = vdwg.mxu0
    %13163 = vmatpush.bf16.msra.mxu0 %v10028
    %13164 = vmatpush.bf16.msra.mxu0 %v10020
    %13165 = vmatpush.bf16.msra.mxu0 %v10012
    %13166 = vmatpush.bf16.msra.mxu0 %v10004
    %13167 = vmatpush.bf16.msra.mxu0 %v9996
    %13168 = vmatpush.bf16.msra.mxu0 %v9988
    %13169 = vmatpush.bf16.msra.mxu0 %v9980
    %13170 = vmatpush.bf16.msra.mxu0 %v9972
    %13171 = vmatmul.bf16.gmra.mxu0 %v5457
    %v13172 = vpop.f32.mrf.mxu0
    %v13173 = vadd.f32 %v13160, %v13172
    %v13174 = vpop.f32.mrf.mxu0
    %13175 = vdwg.mxu0
    %13176 = vmatpush.bf16.msra.mxu0 %v10092
    %13177 = vmatpush.bf16.msra.mxu0 %v10084
    %13178 = vmatpush.bf16.msra.mxu0 %v10076
    %13179 = vmatpush.bf16.msra.mxu0 %v10068
    %13180 = vmatpush.bf16.msra.mxu0 %v10060
    %13181 = vmatpush.bf16.msra.mxu0 %v10052
    %13182 = vmatpush.bf16.msra.mxu0 %v10044
    %13183 = vmatpush.bf16.msra.mxu0 %v10036
    %13184 = vmatmul.bf16.gmra.mxu0 %v5458
    %v13185 = vpop.f32.mrf.mxu0
    %v13186 = vadd.f32 %v13173, %v13185
    %v13187 = vpop.f32.mrf.mxu0
    %13188 = vdwg.mxu0
    %13189 = vmatpush.bf16.msra.mxu0 %v10156
    %13190 = vmatpush.bf16.msra.mxu0 %v10148
    %13191 = vmatpush.bf16.msra.mxu0 %v10140
    %13192 = vmatpush.bf16.msra.mxu0 %v10132
    %13193 = vmatpush.bf16.msra.mxu0 %v10124
    %13194 = vmatpush.bf16.msra.mxu0 %v10116
    %13195 = vmatpush.bf16.msra.mxu0 %v10108
    %13196 = vmatpush.bf16.msra.mxu0 %v10100
    %13197 = vmatmul.bf16.gmra.mxu0 %v5459
    %v13198 = vpop.f32.mrf.mxu0
    %v13199 = vadd.f32 %v13186, %v13198
    %v13200 = vpop.f32.mrf.mxu0
    %13201 = vdwg.mxu0
    %13202 = vmatpush.bf16.msra.mxu0 %v10220
    %13203 = vmatpush.bf16.msra.mxu0 %v10212
    %13204 = vmatpush.bf16.msra.mxu0 %v10204
    %13205 = vmatpush.bf16.msra.mxu0 %v10196
    %13206 = vmatpush.bf16.msra.mxu0 %v10188
    %13207 = vmatpush.bf16.msra.mxu0 %v10180
    %13208 = vmatpush.bf16.msra.mxu0 %v10172
    %13209 = vmatpush.bf16.msra.mxu0 %v10164
    %13210 = vmatmul.bf16.gmra.mxu0 %v5460
    %v13211 = vpop.f32.mrf.mxu0
    %v13212 = vadd.f32 %v13199, %v13211
    %v13213 = vpop.f32.mrf.mxu0
    %13214 = vdwg.mxu0
    %13215 = vmatpush.bf16.msra.mxu0 %v10284
    %13216 = vmatpush.bf16.msra.mxu0 %v10276
    %13217 = vmatpush.bf16.msra.mxu0 %v10268
    %13218 = vmatpush.bf16.msra.mxu0 %v10260
    %13219 = vmatpush.bf16.msra.mxu0 %v10252
    %13220 = vmatpush.bf16.msra.mxu0 %v10244
    %13221 = vmatpush.bf16.msra.mxu0 %v10236
    %13222 = vmatpush.bf16.msra.mxu0 %v10228
    %13223 = vmatmul.bf16.gmra.mxu0 %v5461
    %v13224 = vpop.f32.mrf.mxu0
    %v13225 = vadd.f32 %v13212, %v13224
    %v13226 = vpop.f32.mrf.mxu0
    %13227 = vdwg.mxu0
    %13228 = vmatpush.bf16.msra.mxu0 %v10348
    %13229 = vmatpush.bf16.msra.mxu0 %v10340
    %13230 = vmatpush.bf16.msra.mxu0 %v10332
    %13231 = vmatpush.bf16.msra.mxu0 %v10324
    %13232 = vmatpush.bf16.msra.mxu0 %v10316
    %13233 = vmatpush.bf16.msra.mxu0 %v10308
    %13234 = vmatpush.bf16.msra.mxu0 %v10300
    %13235 = vmatpush.bf16.msra.mxu0 %v10292
    %13236 = vmatmul.bf16.gmra.mxu0 %v5462
    %v13237 = vpop.f32.mrf.mxu0
    %v13238 = vadd.f32 %v13225, %v13237
    %v13239 = vpop.f32.mrf.mxu0
    %13240 = vdwg.mxu0
    %13241 = vmatpush.bf16.msra.mxu0 %v10412
    %13242 = vmatpush.bf16.msra.mxu0 %v10404
    %13243 = vmatpush.bf16.msra.mxu0 %v10396
    %13244 = vmatpush.bf16.msra.mxu0 %v10388
    %13245 = vmatpush.bf16.msra.mxu0 %v10380
    %13246 = vmatpush.bf16.msra.mxu0 %v10372
    %13247 = vmatpush.bf16.msra.mxu0 %v10364
    %13248 = vmatpush.bf16.msra.mxu0 %v10356
    %13249 = vmatmul.bf16.gmra.mxu0 %v5463
    %v13250 = vpop.f32.mrf.mxu0
    %v13251 = vadd.f32 %v13238, %v13250
    %v13252 = vpop.f32.mrf.mxu0
    %13253 = vdwg.mxu0
    %13254 = vmatpush.bf16.msra.mxu0 %v10476
    %13255 = vmatpush.bf16.msra.mxu0 %v10468
    %13256 = vmatpush.bf16.msra.mxu0 %v10460
    %13257 = vmatpush.bf16.msra.mxu0 %v10452
    %13258 = vmatpush.bf16.msra.mxu0 %v10444
    %13259 = vmatpush.bf16.msra.mxu0 %v10436
    %13260 = vmatpush.bf16.msra.mxu0 %v10428
    %13261 = vmatpush.bf16.msra.mxu0 %v10420
    %13262 = vmatmul.bf16.gmra.mxu0 %v5464
    %v13263 = vpop.f32.mrf.mxu0
    %v13264 = vadd.f32 %v13251, %v13263
    %v13265 = vpop.f32.mrf.mxu0
    %13266 = vdwg.mxu0
    %13267 = vmatpush.bf16.msra.mxu0 %v10540
    %13268 = vmatpush.bf16.msra.mxu0 %v10532
    %13269 = vmatpush.bf16.msra.mxu0 %v10524
    %13270 = vmatpush.bf16.msra.mxu0 %v10516
    %13271 = vmatpush.bf16.msra.mxu0 %v10508
    %13272 = vmatpush.bf16.msra.mxu0 %v10500
    %13273 = vmatpush.bf16.msra.mxu0 %v10492
    %13274 = vmatpush.bf16.msra.mxu0 %v10484
    %13275 = vmatmul.bf16.gmra.mxu0 %v5465
    %v13276 = vpop.f32.mrf.mxu0
    %v13277 = vadd.f32 %v13264, %v13276
    %v13278 = vpop.f32.mrf.mxu0
    %13279 = vdwg.mxu0
    %13280 = vmatpush.bf16.msra.mxu0 %v10604
    %13281 = vmatpush.bf16.msra.mxu0 %v10596
    %13282 = vmatpush.bf16.msra.mxu0 %v10588
    %13283 = vmatpush.bf16.msra.mxu0 %v10580
    %13284 = vmatpush.bf16.msra.mxu0 %v10572
    %13285 = vmatpush.bf16.msra.mxu0 %v10564
    %13286 = vmatpush.bf16.msra.mxu0 %v10556
    %13287 = vmatpush.bf16.msra.mxu0 %v10548
    %13288 = vmatmul.bf16.gmra.mxu0 %v5466
    %v13289 = vpop.f32.mrf.mxu0
    %v13290 = vadd.f32 %v13277, %v13289
    %v13291 = vpop.f32.mrf.mxu0
    %13292 = vdwg.mxu0
    %v13293 = vmax.f32 %v11834, 0.0
    %v13294 = vmax.f32 %v12042, 0.0
    %v13295 = vmax.f32 %v12250, 0.0
    %v13296 = vmax.f32 %v12458, 0.0
    %v13297 = vmax.f32 %v12666, 0.0
    %v13298 = vmax.f32 %v12874, 0.0
    %v13299 = vmax.f32 %v13082, 0.0
    %v13300 = vmax.f32 %v13290, 0.0
    %s13301 = smul.u32 4, 128
    %s13302 = smul.u32 %s13301, 1
    %s13303 = sshll.u32 %s13302, 4
    %13304 = dma.done %s124, %s13303
    %v13305 = vpack.c.bf16 %v13293, %v13293
    %v13306 = vpack.c.bf16 %v13294, %v13294
    %v13307 = vpack.c.bf16 %v13295, %v13295
    %v13308 = vpack.c.bf16 %v13296, %v13296
    %v13309 = vpack.c.bf16 %v13297, %v13297
    %v13310 = vpack.c.bf16 %v13298, %v13298
    %v13311 = vpack.c.bf16 %v13299, %v13299
    %v13312 = vpack.c.bf16 %v13300, %v13300
    %v13313 = vld [vmem:[#allocation4] sm:$0xf]
    %v13314 = vld [vmem:[#allocation4 + $0x4] sm:$0xf]
    %v13315 = vld [vmem:[#allocation4 + $0x8] sm:$0xf]
    %v13316 = vld [vmem:[#allocation4 + $0xc] sm:$0xf]
    %v13317 = vld [vmem:[#allocation4 + $0x10] sm:$0xf]
    %v13318 = vld [vmem:[#allocation4 + $0x14] sm:$0xf]
    %v13319 = vld [vmem:[#allocation4 + $0x18] sm:$0xf]
    %v13320 = vld [vmem:[#allocation4 + $0x1c] sm:$0xf]
    %v13321 = vld [vmem:[#allocation4 + $0x20] sm:$0xf]
    %v13322 = vld [vmem:[#allocation4 + $0x24] sm:$0xf]
    %v13323 = vld [vmem:[#allocation4 + $0x28] sm:$0xf]
    %v13324 = vld [vmem:[#allocation4 + $0x2c] sm:$0xf]
    %v13325 = vld [vmem:[#allocation4 + $0x30] sm:$0xf]
    %v13326 = vld [vmem:[#allocation4 + $0x34] sm:$0xf]
    %v13327 = vld [vmem:[#allocation4 + $0x38] sm:$0xf]
    %v13328 = vld [vmem:[#allocation4 + $0x3c] sm:$0xf]
    %v13329 = vld [vmem:[#allocation4 + $0x40] sm:$0xf]
    %v13330 = vld [vmem:[#allocation4 + $0x44] sm:$0xf]
    %v13331 = vld [vmem:[#allocation4 + $0x48] sm:$0xf]
    %v13332 = vld [vmem:[#allocation4 + $0x4c] sm:$0xf]
    %v13333 = vld [vmem:[#allocation4 + $0x50] sm:$0xf]
    %v13334 = vld [vmem:[#allocation4 + $0x54] sm:$0xf]
    %v13335 = vld [vmem:[#allocation4 + $0x58] sm:$0xf]
    %v13336 = vld [vmem:[#allocation4 + $0x5c] sm:$0xf]
    %v13337 = vld [vmem:[#allocation4 + $0x60] sm:$0xf]
    %v13338 = vld [vmem:[#allocation4 + $0x64] sm:$0xf]
    %v13339 = vld [vmem:[#allocation4 + $0x68] sm:$0xf]
    %v13340 = vld [vmem:[#allocation4 + $0x6c] sm:$0xf]
    %v13341 = vld [vmem:[#allocation4 + $0x70] sm:$0xf]
    %v13342 = vld [vmem:[#allocation4 + $0x74] sm:$0xf]
    %v13343 = vld [vmem:[#allocation4 + $0x78] sm:$0xf]
    %v13344 = vld [vmem:[#allocation4 + $0x7c] sm:$0xf]
    %v13345 = vld [vmem:[#allocation4 + $0x80] sm:$0xf]
    %v13346 = vld [vmem:[#allocation4 + $0x84] sm:$0xf]
    %v13347 = vld [vmem:[#allocation4 + $0x88] sm:$0xf]
    %v13348 = vld [vmem:[#allocation4 + $0x8c] sm:$0xf]
    %v13349 = vld [vmem:[#allocation4 + $0x90] sm:$0xf]
    %v13350 = vld [vmem:[#allocation4 + $0x94] sm:$0xf]
    %v13351 = vld [vmem:[#allocation4 + $0x98] sm:$0xf]
    %v13352 = vld [vmem:[#allocation4 + $0x9c] sm:$0xf]
    %v13353 = vld [vmem:[#allocation4 + $0xa0] sm:$0xf]
    %v13354 = vld [vmem:[#allocation4 + $0xa4] sm:$0xf]
    %v13355 = vld [vmem:[#allocation4 + $0xa8] sm:$0xf]
    %v13356 = vld [vmem:[#allocation4 + $0xac] sm:$0xf]
    %v13357 = vld [vmem:[#allocation4 + $0xb0] sm:$0xf]
    %v13358 = vld [vmem:[#allocation4 + $0xb4] sm:$0xf]
    %v13359 = vld [vmem:[#allocation4 + $0xb8] sm:$0xf]
    %v13360 = vld [vmem:[#allocation4 + $0xbc] sm:$0xf]
    %v13361 = vld [vmem:[#allocation4 + $0xc0] sm:$0xf]
    %v13362 = vld [vmem:[#allocation4 + $0xc4] sm:$0xf]
    %v13363 = vld [vmem:[#allocation4 + $0xc8] sm:$0xf]
    %v13364 = vld [vmem:[#allocation4 + $0xcc] sm:$0xf]
    %v13365 = vld [vmem:[#allocation4 + $0xd0] sm:$0xf]
    %v13366 = vld [vmem:[#allocation4 + $0xd4] sm:$0xf]
    %v13367 = vld [vmem:[#allocation4 + $0xd8] sm:$0xf]
    %v13368 = vld [vmem:[#allocation4 + $0xdc] sm:$0xf]
    %v13369 = vld [vmem:[#allocation4 + $0xe0] sm:$0xf]
    %v13370 = vld [vmem:[#allocation4 + $0xe4] sm:$0xf]
    %v13371 = vld [vmem:[#allocation4 + $0xe8] sm:$0xf]
    %v13372 = vld [vmem:[#allocation4 + $0xec] sm:$0xf]
    %v13373 = vld [vmem:[#allocation4 + $0xf0] sm:$0xf]
    %v13374 = vld [vmem:[#allocation4 + $0xf4] sm:$0xf]
    %v13375 = vld [vmem:[#allocation4 + $0xf8] sm:$0xf]
    %v13376 = vld [vmem:[#allocation4 + $0xfc] sm:$0xf]
    %v13377 = vld [vmem:[#allocation4 + $0x100] sm:$0xf]
    %v13378 = vld [vmem:[#allocation4 + $0x104] sm:$0xf]
    %v13379 = vld [vmem:[#allocation4 + $0x108] sm:$0xf]
    %v13380 = vld [vmem:[#allocation4 + $0x10c] sm:$0xf]
    %v13381 = vld [vmem:[#allocation4 + $0x110] sm:$0xf]
    %v13382 = vld [vmem:[#allocation4 + $0x114] sm:$0xf]
    %v13383 = vld [vmem:[#allocation4 + $0x118] sm:$0xf]
    %v13384 = vld [vmem:[#allocation4 + $0x11c] sm:$0xf]
    %v13385 = vld [vmem:[#allocation4 + $0x120] sm:$0xf]
    %v13386 = vld [vmem:[#allocation4 + $0x124] sm:$0xf]
    %v13387 = vld [vmem:[#allocation4 + $0x128] sm:$0xf]
    %v13388 = vld [vmem:[#allocation4 + $0x12c] sm:$0xf]
    %v13389 = vld [vmem:[#allocation4 + $0x130] sm:$0xf]
    %v13390 = vld [vmem:[#allocation4 + $0x134] sm:$0xf]
    %v13391 = vld [vmem:[#allocation4 + $0x138] sm:$0xf]
    %v13392 = vld [vmem:[#allocation4 + $0x13c] sm:$0xf]
    %v13393 = vld [vmem:[#allocation4 + $0x140] sm:$0xf]
    %v13394 = vld [vmem:[#allocation4 + $0x144] sm:$0xf]
    %v13395 = vld [vmem:[#allocation4 + $0x148] sm:$0xf]
    %v13396 = vld [vmem:[#allocation4 + $0x14c] sm:$0xf]
    %v13397 = vld [vmem:[#allocation4 + $0x150] sm:$0xf]
    %v13398 = vld [vmem:[#allocation4 + $0x154] sm:$0xf]
    %v13399 = vld [vmem:[#allocation4 + $0x158] sm:$0xf]
    %v13400 = vld [vmem:[#allocation4 + $0x15c] sm:$0xf]
    %v13401 = vld [vmem:[#allocation4 + $0x160] sm:$0xf]
    %v13402 = vld [vmem:[#allocation4 + $0x164] sm:$0xf]
    %v13403 = vld [vmem:[#allocation4 + $0x168] sm:$0xf]
    %v13404 = vld [vmem:[#allocation4 + $0x16c] sm:$0xf]
    %v13405 = vld [vmem:[#allocation4 + $0x170] sm:$0xf]
    %v13406 = vld [vmem:[#allocation4 + $0x174] sm:$0xf]
    %v13407 = vld [vmem:[#allocation4 + $0x178] sm:$0xf]
    %v13408 = vld [vmem:[#allocation4 + $0x17c] sm:$0xf]
    %v13409 = vld [vmem:[#allocation4 + $0x180] sm:$0xf]
    %v13410 = vld [vmem:[#allocation4 + $0x184] sm:$0xf]
    %v13411 = vld [vmem:[#allocation4 + $0x188] sm:$0xf]
    %v13412 = vld [vmem:[#allocation4 + $0x18c] sm:$0xf]
    %v13413 = vld [vmem:[#allocation4 + $0x190] sm:$0xf]
    %v13414 = vld [vmem:[#allocation4 + $0x194] sm:$0xf]
    %v13415 = vld [vmem:[#allocation4 + $0x198] sm:$0xf]
    %v13416 = vld [vmem:[#allocation4 + $0x19c] sm:$0xf]
    %v13417 = vld [vmem:[#allocation4 + $0x1a0] sm:$0xf]
    %v13418 = vld [vmem:[#allocation4 + $0x1a4] sm:$0xf]
    %v13419 = vld [vmem:[#allocation4 + $0x1a8] sm:$0xf]
    %v13420 = vld [vmem:[#allocation4 + $0x1ac] sm:$0xf]
    %v13421 = vld [vmem:[#allocation4 + $0x1b0] sm:$0xf]
    %v13422 = vld [vmem:[#allocation4 + $0x1b4] sm:$0xf]
    %v13423 = vld [vmem:[#allocation4 + $0x1b8] sm:$0xf]
    %v13424 = vld [vmem:[#allocation4 + $0x1bc] sm:$0xf]
    %v13425 = vld [vmem:[#allocation4 + $0x1c0] sm:$0xf]
    %v13426 = vld [vmem:[#allocation4 + $0x1c4] sm:$0xf]
    %v13427 = vld [vmem:[#allocation4 + $0x1c8] sm:$0xf]
    %v13428 = vld [vmem:[#allocation4 + $0x1cc] sm:$0xf]
    %v13429 = vld [vmem:[#allocation4 + $0x1d0] sm:$0xf]
    %v13430 = vld [vmem:[#allocation4 + $0x1d4] sm:$0xf]
    %v13431 = vld [vmem:[#allocation4 + $0x1d8] sm:$0xf]
    %v13432 = vld [vmem:[#allocation4 + $0x1dc] sm:$0xf]
    %v13433 = vld [vmem:[#allocation4 + $0x1e0] sm:$0xf]
    %v13434 = vld [vmem:[#allocation4 + $0x1e4] sm:$0xf]
    %v13435 = vld [vmem:[#allocation4 + $0x1e8] sm:$0xf]
    %v13436 = vld [vmem:[#allocation4 + $0x1ec] sm:$0xf]
    %v13437 = vld [vmem:[#allocation4 + $0x1f0] sm:$0xf]
    %v13438 = vld [vmem:[#allocation4 + $0x1f4] sm:$0xf]
    %v13439 = vld [vmem:[#allocation4 + $0x1f8] sm:$0xf]
    %v13440 = vld [vmem:[#allocation4 + $0x1fc] sm:$0xf]
    %v13441 = vld [vmem:[#allocation19] sm:$0x1]
    %v13443 = vperm.slane %v13441, 0
    %v13573 = vunpack.c.l.b16 %v13313
    %v13574 = vunpack.c.l.b16 %v13314
    %v13575 = vunpack.c.l.b16 %v13315
    %v13576 = vunpack.c.l.b16 %v13316
    %v13577 = vunpack.c.l.b16 %v13317
    %v13578 = vunpack.c.l.b16 %v13318
    %v13579 = vunpack.c.l.b16 %v13319
    %v13580 = vunpack.c.l.b16 %v13320
    %v13581 = vunpack.c.l.b16 %v13321
    %v13582 = vunpack.c.l.b16 %v13322
    %v13583 = vunpack.c.l.b16 %v13323
    %v13584 = vunpack.c.l.b16 %v13324
    %v13585 = vunpack.c.l.b16 %v13325
    %v13586 = vunpack.c.l.b16 %v13326
    %v13587 = vunpack.c.l.b16 %v13327
    %v13588 = vunpack.c.l.b16 %v13328
    %v13589 = vunpack.c.l.b16 %v13329
    %v13590 = vunpack.c.l.b16 %v13330
    %v13591 = vunpack.c.l.b16 %v13331
    %v13592 = vunpack.c.l.b16 %v13332
    %v13593 = vunpack.c.l.b16 %v13333
    %v13594 = vunpack.c.l.b16 %v13334
    %v13595 = vunpack.c.l.b16 %v13335
    %v13596 = vunpack.c.l.b16 %v13336
    %v13597 = vunpack.c.l.b16 %v13337
    %v13598 = vunpack.c.l.b16 %v13338
    %v13599 = vunpack.c.l.b16 %v13339
    %v13600 = vunpack.c.l.b16 %v13340
    %v13601 = vunpack.c.l.b16 %v13341
    %v13602 = vunpack.c.l.b16 %v13342
    %v13603 = vunpack.c.l.b16 %v13343
    %v13604 = vunpack.c.l.b16 %v13344
    %v13605 = vunpack.c.l.b16 %v13345
    %v13606 = vunpack.c.l.b16 %v13346
    %v13607 = vunpack.c.l.b16 %v13347
    %v13608 = vunpack.c.l.b16 %v13348
    %v13609 = vunpack.c.l.b16 %v13349
    %v13610 = vunpack.c.l.b16 %v13350
    %v13611 = vunpack.c.l.b16 %v13351
    %v13612 = vunpack.c.l.b16 %v13352
    %v13613 = vunpack.c.l.b16 %v13353
    %v13614 = vunpack.c.l.b16 %v13354
    %v13615 = vunpack.c.l.b16 %v13355
    %v13616 = vunpack.c.l.b16 %v13356
    %v13617 = vunpack.c.l.b16 %v13357
    %v13618 = vunpack.c.l.b16 %v13358
    %v13619 = vunpack.c.l.b16 %v13359
    %v13620 = vunpack.c.l.b16 %v13360
    %v13621 = vunpack.c.l.b16 %v13361
    %v13622 = vunpack.c.l.b16 %v13362
    %v13623 = vunpack.c.l.b16 %v13363
    %v13624 = vunpack.c.l.b16 %v13364
    %v13625 = vunpack.c.l.b16 %v13365
    %v13626 = vunpack.c.l.b16 %v13366
    %v13627 = vunpack.c.l.b16 %v13367
    %v13628 = vunpack.c.l.b16 %v13368
    %v13629 = vunpack.c.l.b16 %v13369
    %v13630 = vunpack.c.l.b16 %v13370
    %v13631 = vunpack.c.l.b16 %v13371
    %v13632 = vunpack.c.l.b16 %v13372
    %v13633 = vunpack.c.l.b16 %v13373
    %v13634 = vunpack.c.l.b16 %v13374
    %v13635 = vunpack.c.l.b16 %v13375
    %v13636 = vunpack.c.l.b16 %v13376
    %v13637 = vunpack.c.l.b16 %v13377
    %v13638 = vunpack.c.l.b16 %v13378
    %v13639 = vunpack.c.l.b16 %v13379
    %v13640 = vunpack.c.l.b16 %v13380
    %v13641 = vunpack.c.l.b16 %v13381
    %v13642 = vunpack.c.l.b16 %v13382
    %v13643 = vunpack.c.l.b16 %v13383
    %v13644 = vunpack.c.l.b16 %v13384
    %v13645 = vunpack.c.l.b16 %v13385
    %v13646 = vunpack.c.l.b16 %v13386
    %v13647 = vunpack.c.l.b16 %v13387
    %v13648 = vunpack.c.l.b16 %v13388
    %v13649 = vunpack.c.l.b16 %v13389
    %v13650 = vunpack.c.l.b16 %v13390
    %v13651 = vunpack.c.l.b16 %v13391
    %v13652 = vunpack.c.l.b16 %v13392
    %v13653 = vunpack.c.l.b16 %v13393
    %v13654 = vunpack.c.l.b16 %v13394
    %v13655 = vunpack.c.l.b16 %v13395
    %v13656 = vunpack.c.l.b16 %v13396
    %v13657 = vunpack.c.l.b16 %v13397
    %v13658 = vunpack.c.l.b16 %v13398
    %v13659 = vunpack.c.l.b16 %v13399
    %v13660 = vunpack.c.l.b16 %v13400
    %v13661 = vunpack.c.l.b16 %v13401
    %v13662 = vunpack.c.l.b16 %v13402
    %v13663 = vunpack.c.l.b16 %v13403
    %v13664 = vunpack.c.l.b16 %v13404
    %v13665 = vunpack.c.l.b16 %v13405
    %v13666 = vunpack.c.l.b16 %v13406
    %v13667 = vunpack.c.l.b16 %v13407
    %v13668 = vunpack.c.l.b16 %v13408
    %v13669 = vunpack.c.l.b16 %v13409
    %v13670 = vunpack.c.l.b16 %v13410
    %v13671 = vunpack.c.l.b16 %v13411
    %v13672 = vunpack.c.l.b16 %v13412
    %v13673 = vunpack.c.l.b16 %v13413
    %v13674 = vunpack.c.l.b16 %v13414
    %v13675 = vunpack.c.l.b16 %v13415
    %v13676 = vunpack.c.l.b16 %v13416
    %v13677 = vunpack.c.l.b16 %v13417
    %v13678 = vunpack.c.l.b16 %v13418
    %v13679 = vunpack.c.l.b16 %v13419
    %v13680 = vunpack.c.l.b16 %v13420
    %v13681 = vunpack.c.l.b16 %v13421
    %v13682 = vunpack.c.l.b16 %v13422
    %v13683 = vunpack.c.l.b16 %v13423
    %v13684 = vunpack.c.l.b16 %v13424
    %v13685 = vunpack.c.l.b16 %v13425
    %v13686 = vunpack.c.l.b16 %v13426
    %v13687 = vunpack.c.l.b16 %v13427
    %v13688 = vunpack.c.l.b16 %v13428
    %v13689 = vunpack.c.l.b16 %v13429
    %v13690 = vunpack.c.l.b16 %v13430
    %v13691 = vunpack.c.l.b16 %v13431
    %v13692 = vunpack.c.l.b16 %v13432
    %v13693 = vunpack.c.l.b16 %v13433
    %v13694 = vunpack.c.l.b16 %v13434
    %v13695 = vunpack.c.l.b16 %v13435
    %v13696 = vunpack.c.l.b16 %v13436
    %v13697 = vunpack.c.l.b16 %v13437
    %v13698 = vunpack.c.l.b16 %v13438
    %v13699 = vunpack.c.l.b16 %v13439
    %v13700 = vunpack.c.l.b16 %v13440
    %v13701 = vpack.c.b16 %v13574, %v13573
    %v13702 = vpack.c.b16 %v13576, %v13575
    %v13703 = vpack.c.b16 %v13578, %v13577
    %v13704 = vpack.c.b16 %v13580, %v13579
    %v13705 = vpack.c.b16 %v13582, %v13581
    %v13706 = vpack.c.b16 %v13584, %v13583
    %v13707 = vpack.c.b16 %v13586, %v13585
    %v13708 = vpack.c.b16 %v13588, %v13587
    %v13709 = vpack.c.b16 %v13590, %v13589
    %v13710 = vpack.c.b16 %v13592, %v13591
    %v13711 = vpack.c.b16 %v13594, %v13593
    %v13712 = vpack.c.b16 %v13596, %v13595
    %v13713 = vpack.c.b16 %v13598, %v13597
    %v13714 = vpack.c.b16 %v13600, %v13599
    %v13715 = vpack.c.b16 %v13602, %v13601
    %v13716 = vpack.c.b16 %v13604, %v13603
    %v13717 = vpack.c.b16 %v13606, %v13605
    %v13718 = vpack.c.b16 %v13608, %v13607
    %v13719 = vpack.c.b16 %v13610, %v13609
    %v13720 = vpack.c.b16 %v13612, %v13611
    %v13721 = vpack.c.b16 %v13614, %v13613
    %v13722 = vpack.c.b16 %v13616, %v13615
    %v13723 = vpack.c.b16 %v13618, %v13617
    %v13724 = vpack.c.b16 %v13620, %v13619
    %v13725 = vpack.c.b16 %v13622, %v13621
    %v13726 = vpack.c.b16 %v13624, %v13623
    %v13727 = vpack.c.b16 %v13626, %v13625
    %v13728 = vpack.c.b16 %v13628, %v13627
    %v13729 = vpack.c.b16 %v13630, %v13629
    %v13730 = vpack.c.b16 %v13632, %v13631
    %v13731 = vpack.c.b16 %v13634, %v13633
    %v13732 = vpack.c.b16 %v13636, %v13635
    %v13733 = vpack.c.b16 %v13638, %v13637
    %v13734 = vpack.c.b16 %v13640, %v13639
    %v13735 = vpack.c.b16 %v13642, %v13641
    %v13736 = vpack.c.b16 %v13644, %v13643
    %v13737 = vpack.c.b16 %v13646, %v13645
    %v13738 = vpack.c.b16 %v13648, %v13647
    %v13739 = vpack.c.b16 %v13650, %v13649
    %v13740 = vpack.c.b16 %v13652, %v13651
    %v13741 = vpack.c.b16 %v13654, %v13653
    %v13742 = vpack.c.b16 %v13656, %v13655
    %v13743 = vpack.c.b16 %v13658, %v13657
    %v13744 = vpack.c.b16 %v13660, %v13659
    %v13745 = vpack.c.b16 %v13662, %v13661
    %v13746 = vpack.c.b16 %v13664, %v13663
    %v13747 = vpack.c.b16 %v13666, %v13665
    %v13748 = vpack.c.b16 %v13668, %v13667
    %v13749 = vpack.c.b16 %v13670, %v13669
    %v13750 = vpack.c.b16 %v13672, %v13671
    %v13751 = vpack.c.b16 %v13674, %v13673
    %v13752 = vpack.c.b16 %v13676, %v13675
    %v13753 = vpack.c.b16 %v13678, %v13677
    %v13754 = vpack.c.b16 %v13680, %v13679
    %v13755 = vpack.c.b16 %v13682, %v13681
    %v13756 = vpack.c.b16 %v13684, %v13683
    %v13757 = vpack.c.b16 %v13686, %v13685
    %v13758 = vpack.c.b16 %v13688, %v13687
    %v13759 = vpack.c.b16 %v13690, %v13689
    %v13760 = vpack.c.b16 %v13692, %v13691
    %v13761 = vpack.c.b16 %v13694, %v13693
    %v13762 = vpack.c.b16 %v13696, %v13695
    %v13763 = vpack.c.b16 %v13698, %v13697
    %v13764 = vpack.c.b16 %v13700, %v13699
    %13829 = vmatpush.bf16.msra.mxu0 %v13708
    %13830 = vmatpush.bf16.msra.mxu0 %v13707
    %13831 = vmatpush.bf16.msra.mxu0 %v13706
    %13832 = vmatpush.bf16.msra.mxu0 %v13705
    %13833 = vmatpush.bf16.msra.mxu0 %v13704
    %13834 = vmatpush.bf16.msra.mxu0 %v13703
    %13835 = vmatpush.bf16.msra.mxu0 %v13702
    %13836 = vmatpush.bf16.msra.mxu0 %v13701
    %13837 = vmatmul.bf16.gmra.mxu0 %v13305
    %v13838 = vpop.f32.mrf.mxu0
    %v13839 = vadd.f32 %v13443, %v13838
    %v13840 = vpop.f32.mrf.mxu0
    %13841 = vdwg.mxu0
    %13842 = vmatpush.bf16.msra.mxu0 %v13716
    %13843 = vmatpush.bf16.msra.mxu0 %v13715
    %13844 = vmatpush.bf16.msra.mxu0 %v13714
    %13845 = vmatpush.bf16.msra.mxu0 %v13713
    %13846 = vmatpush.bf16.msra.mxu0 %v13712
    %13847 = vmatpush.bf16.msra.mxu0 %v13711
    %13848 = vmatpush.bf16.msra.mxu0 %v13710
    %13849 = vmatpush.bf16.msra.mxu0 %v13709
    %13850 = vmatmul.bf16.gmra.mxu0 %v13306
    %v13851 = vpop.f32.mrf.mxu0
    %v13852 = vadd.f32 %v13839, %v13851
    %v13853 = vpop.f32.mrf.mxu0
    %13854 = vdwg.mxu0
    %13855 = vmatpush.bf16.msra.mxu0 %v13724
    %13856 = vmatpush.bf16.msra.mxu0 %v13723
    %13857 = vmatpush.bf16.msra.mxu0 %v13722
    %13858 = vmatpush.bf16.msra.mxu0 %v13721
    %13859 = vmatpush.bf16.msra.mxu0 %v13720
    %13860 = vmatpush.bf16.msra.mxu0 %v13719
    %13861 = vmatpush.bf16.msra.mxu0 %v13718
    %13862 = vmatpush.bf16.msra.mxu0 %v13717
    %13863 = vmatmul.bf16.gmra.mxu0 %v13307
    %v13864 = vpop.f32.mrf.mxu0
    %v13865 = vadd.f32 %v13852, %v13864
    %v13866 = vpop.f32.mrf.mxu0
    %13867 = vdwg.mxu0
    %13868 = vmatpush.bf16.msra.mxu0 %v13732
    %13869 = vmatpush.bf16.msra.mxu0 %v13731
    %13870 = vmatpush.bf16.msra.mxu0 %v13730
    %13871 = vmatpush.bf16.msra.mxu0 %v13729
    %13872 = vmatpush.bf16.msra.mxu0 %v13728
    %13873 = vmatpush.bf16.msra.mxu0 %v13727
    %13874 = vmatpush.bf16.msra.mxu0 %v13726
    %13875 = vmatpush.bf16.msra.mxu0 %v13725
    %13876 = vmatmul.bf16.gmra.mxu0 %v13308
    %v13877 = vpop.f32.mrf.mxu0
    %v13878 = vadd.f32 %v13865, %v13877
    %v13879 = vpop.f32.mrf.mxu0
    %13880 = vdwg.mxu0
    %13881 = vmatpush.bf16.msra.mxu0 %v13740
    %13882 = vmatpush.bf16.msra.mxu0 %v13739
    %13883 = vmatpush.bf16.msra.mxu0 %v13738
    %13884 = vmatpush.bf16.msra.mxu0 %v13737
    %13885 = vmatpush.bf16.msra.mxu0 %v13736
    %13886 = vmatpush.bf16.msra.mxu0 %v13735
    %13887 = vmatpush.bf16.msra.mxu0 %v13734
    %13888 = vmatpush.bf16.msra.mxu0 %v13733
    %13889 = vmatmul.bf16.gmra.mxu0 %v13309
    %v13890 = vpop.f32.mrf.mxu0
    %v13891 = vadd.f32 %v13878, %v13890
    %v13892 = vpop.f32.mrf.mxu0
    %13893 = vdwg.mxu0
    %13894 = vmatpush.bf16.msra.mxu0 %v13748
    %13895 = vmatpush.bf16.msra.mxu0 %v13747
    %13896 = vmatpush.bf16.msra.mxu0 %v13746
    %13897 = vmatpush.bf16.msra.mxu0 %v13745
    %13898 = vmatpush.bf16.msra.mxu0 %v13744
    %13899 = vmatpush.bf16.msra.mxu0 %v13743
    %13900 = vmatpush.bf16.msra.mxu0 %v13742
    %13901 = vmatpush.bf16.msra.mxu0 %v13741
    %13902 = vmatmul.bf16.gmra.mxu0 %v13310
    %v13903 = vpop.f32.mrf.mxu0
    %v13904 = vadd.f32 %v13891, %v13903
    %v13905 = vpop.f32.mrf.mxu0
    %13906 = vdwg.mxu0
    %13907 = vmatpush.bf16.msra.mxu0 %v13756
    %13908 = vmatpush.bf16.msra.mxu0 %v13755
    %13909 = vmatpush.bf16.msra.mxu0 %v13754
    %13910 = vmatpush.bf16.msra.mxu0 %v13753
    %13911 = vmatpush.bf16.msra.mxu0 %v13752
    %13912 = vmatpush.bf16.msra.mxu0 %v13751
    %13913 = vmatpush.bf16.msra.mxu0 %v13750
    %13914 = vmatpush.bf16.msra.mxu0 %v13749
    %13915 = vmatmul.bf16.gmra.mxu0 %v13311
    %v13916 = vpop.f32.mrf.mxu0
    %v13917 = vadd.f32 %v13904, %v13916
    %v13918 = vpop.f32.mrf.mxu0
    %13919 = vdwg.mxu0
    %13920 = vmatpush.bf16.msra.mxu0 %v13764
    %13921 = vmatpush.bf16.msra.mxu0 %v13763
    %13922 = vmatpush.bf16.msra.mxu0 %v13762
    %13923 = vmatpush.bf16.msra.mxu0 %v13761
    %13924 = vmatpush.bf16.msra.mxu0 %v13760
    %13925 = vmatpush.bf16.msra.mxu0 %v13759
    %13926 = vmatpush.bf16.msra.mxu0 %v13758
    %13927 = vmatpush.bf16.msra.mxu0 %v13757
    %13928 = vmatmul.bf16.gmra.mxu0 %v13312
    %v13929 = vpop.f32.mrf.mxu0
    %v13930 = vadd.f32 %v13917, %v13929
    %v13931 = vpop.f32.mrf.mxu0
    %13932 = vdwg.mxu0
    %13933 = vst [vmem:[#allocation20] sm:$0x3] %v13930
    // Predicated region
    $region58: #{cnn_forward.1} parent=1 // pred_check
      _
    $region59: #{cnn_forward.1} parent=1 // pred_check_branch
      %13935 = sbr.rel (0) target = $region61
    $region60: #{cnn_forward.1} parent=1 // pred_region
      %13937 = vsyncadd [#allocation13], 0
      %s13939 = sshll.u32 [#allocation20], 4
      %s13940 = int_to_ptr.vmem [resolvable:$true] %s13939
      %s13941 = sshll.u32 %s9, 4
      %s13942 = int_to_ptr.hbm [resolvable:$true] %s13941
      %13944 = dma.vmem_to_hbm [thread:$0]  %s13940, 32, %s13942, [#allocation13]
    $region61: #{cnn_forward.1} parent=1 // pred_fallthru
      _
    // Predicated region
    $region62: #{cnn_forward.1} parent=1 // pred_check
      _
    $region63: #{cnn_forward.1} parent=1 // pred_check_branch
      %13946 = sbr.rel (0) target = $region65
    $region64: #{cnn_forward.1} parent=1 // pred_region
      %13948 = dma.done [#allocation13], 32
    $region65: #{cnn_forward.1} parent=1 // pred_fallthru
      _
    %13949 = vsyncpa [#allocation12], 1
    %13950 = vsyncpa [#allocation15], 1
    %13951 = vsyncpa [#allocation18], 1
    %13952 = vsyncpa [#allocation13], 1
  %13953 = vsyncmov [#allocation5]
  %s13954 = vpop.sfrf %13953
  %p13955 = scmp.eq.s32.totalorder %s13954, 0
  %p13956 = pneg %p13955
  %13958 = shalt.err (%p13956)
  %s13959 = scalar_lea.sflag [#allocation5], 1
  %13960 = vsyncmov %s13959
  %s13961 = vpop.sfrf %13960
  %p13962 = scmp.eq.s32.totalorder %s13961, 0
  %p13963 = pneg %p13962
  %13965 = shalt.err (%p13963)
  %s13966 = scalar_lea.sflag [#allocation5], 2
  %13967 = vsyncmov %s13966
  %s13968 = vpop.sfrf %13967
  %p13969 = scmp.eq.s32.totalorder %s13968, 0
  %p13970 = pneg %p13969
  %13972 = shalt.err (%p13970)

</llo_original>
